<compile_context>
chip_gen: v7x
topology: tpu7x:2x2x1
jax: 0.10.0
libtpu: 0.0.40
codegen_flags: <defaults>
</compile_context>

<pallas_src>
import functools

import jax
import jax.numpy as jnp
from jax import lax
from jax.experimental import pallas as pl
from jax.experimental.pallas import tpu as pltpu

LN_EPS = 1e-5
NEG_BIG = -1e30  # finite "minus infinity" for key-padding mask (NaN-safe for all-pad rows)


# -----------------------------------------------------------------------------
# helpers
# -----------------------------------------------------------------------------
def _round_up(x, m):
    return ((x + m - 1) // m) * m


def _pick_q_tile(n, prefs=(256, 128)):
    for p in prefs:
        if n % p == 0:
            return p
    return n


def _layer_norm(x, w_row, b_row, eps=LN_EPS):
    mean = jnp.mean(x, axis=-1, keepdims=True)
    var = jnp.mean(jnp.square(x - mean), axis=-1, keepdims=True)
    return (x - mean) * lax.rsqrt(var + eps) * w_row + b_row


def _prep_w(w, dtype=jnp.bfloat16):
    """PyTorch nn.Linear weight (Cout, Cin) -> (Cin, Cout) so matmuls contract the last dim."""
    return jnp.asarray(w, jnp.float32).T.astype(dtype)


def _prep_row(v, n):
    if v is None:
        return jnp.zeros((1, n), jnp.float32)
    return jnp.asarray(v, jnp.float32).reshape(1, n)


def _compiler_params(dims):
    kw = dict(dimension_semantics=dims)
    try:  # per-generation scoped-VMEM budget (v5e/v6e: 128 MiB, v7x: 64 MiB physical)
        cap = pltpu.get_tpu_info().vmem_capacity_bytes
        kw["vmem_limit_bytes"] = int(cap * 3 // 4)
    except Exception:
        pass
    return pltpu.CompilerParams(**kw)


# -----------------------------------------------------------------------------
# Kernel 1: fused multi-head attention block (LN -> QKV -> attn -> out-proj -> +res)
# -----------------------------------------------------------------------------
def _mha_block_kernel(*refs, num_heads, head_dim, scale, has_kv, ln_kv, has_bias, prenorm):
    refs = list(refs)
    o_ref = refs.pop()
    it = iter(refs)
    xq_ref = next(it)
    xkv_ref = next(it) if has_kv else None
    mask_ref = next(it)
    bias_ref = next(it) if has_bias else None
    lnw_ref, lnb_ref = next(it), next(it)
    wq_ref, bq_ref = next(it), next(it)
    wk_ref, bk_ref = next(it), next(it)
    wv_ref, bv_ref = next(it), next(it)
    wo_ref, bo_ref = next(it), next(it)

    lnw, lnb = lnw_ref[...], lnb_ref[...]
    xq = xq_ref[0]                                               # (tq, C) f32, residual source
    xn = _layer_norm(xq, lnw, lnb) if prenorm else xq
    q_in = xn.astype(jnp.bfloat16)
    if has_kv:
        xkv = xkv_ref[0]                                         # (Tk, C)
        kv_in = (_layer_norm(xkv, lnw, lnb) if ln_kv else xkv).astype(jnp.bfloat16)
    else:
        kv_in = q_in                                             # self-attn, single q tile

    # projections: bf16 operands, f32 accumulation, weights already (Cin, Cout) -> no .T
    q = jnp.dot(q_in, wq_ref[...], preferred_element_type=jnp.float32) + bq_ref[...]
    k = jnp.dot(kv_in, wk_ref[...], preferred_element_type=jnp.float32) + bk_ref[...]
    v = jnp.dot(kv_in, wv_ref[...], preferred_element_type=jnp.float32) + bv_ref[...]
    q = q * scale                                                # fairseq scales q post-proj

    masked = mask_ref[0] != 0.0                                  # (1, Tk), nonzero = padded key
    bias = bias_ref[0] if has_bias else None                     # (tq, Tk) additive attn mask

    ctx_heads = []
    for h in range(num_heads):
        lo = h * head_dim
        hi = lo + head_dim
        qh = q[:, lo:hi].astype(jnp.bfloat16)
        kh = k[:, lo:hi].astype(jnp.bfloat16)
        vh = v[:, lo:hi].astype(jnp.bfloat16)
        # scores: contract last dim of both operands (no in-kernel transpose)
        s = lax.dot_general(qh, kh, (((1,), (1,)), ((), ())),
                            preferred_element_type=jnp.float32)  # (tq, Tk)
        if has_bias:
            s = s + bias
        s = jnp.where(masked, jnp.float32(NEG_BIG), s)
        s_max = jnp.max(s, axis=-1, keepdims=True)
        p = jnp.exp(s - s_max)
        denom = jnp.sum(p, axis=-1, keepdims=True)
        p = p * pl.reciprocal(denom)                             # EUP reciprocal (exact)
        ctx_heads.append(jnp.dot(p.astype(jnp.bfloat16), vh,
                                 preferred_element_type=jnp.float32))
    # one K=C out-projection instead of H K=Dh matmuls against Wo slices
    ctx = jnp.concatenate(ctx_heads, axis=-1).astype(jnp.bfloat16)      # (tq, C)
    attn_out = jnp.dot(ctx, wo_ref[...], preferred_element_type=jnp.float32) + bo_ref[...]
    out = xq + attn_out
    if not prenorm:
        out = _layer_norm(out, lnw, lnb)
    o_ref[0] = out


def fused_mha_block(x_q, x_kv, key_pad_mask, attn_bias, ln, attn_p, *,
                    num_heads, self_attn, prenorm=True):
    """x_q: (Bb, Tq, C); x_kv: (Bb, Tk, C) or None for self-attn; key_pad_mask: (Bb, Tk)
    (nonzero = padded). attn_bias: None, (Tq, Tk), or (nb, Tq, Tk) additive (nb divides Bb).
    Returns residual-added block output (Bb, Tq, C)."""
    Bb, Tq, C = x_q.shape
    Tk = Tq if self_attn else x_kv.shape[1]
    assert C % num_heads == 0
    Dh = C // num_heads
    scale = Dh ** -0.5

    tq = _pick_q_tile(Tq)                 # q-tile axis: parallel slices for v7x's 2 TCs
    n_qt = Tq // tq
    has_kv = (not self_attn) or (n_qt > 1)
    ln_kv = self_attn and prenorm         # in self-attn, k/v see the same pre-LN as q
    has_bias = attn_bias is not None

    mask3 = key_pad_mask.astype(jnp.float32).reshape(Bb, 1, Tk)

    lnw, lnb = _prep_row(ln["w"], C), _prep_row(ln["b"], C)
    wq, bq = _prep_w(attn_p["q"]["w"]), _prep_row(attn_p["q"]["b"], C)
    wk, bk = _prep_w(attn_p["k"]["w"]), _prep_row(attn_p["k"]["b"], C)
    wv, bv = _prep_w(attn_p["v"]["w"]), _prep_row(attn_p["v"]["b"], C)
    wo, bo = _prep_w(attn_p["o"]["w"]), _prep_row(attn_p["o"]["b"], C)

    args = [x_q.astype(jnp.float32)]
    in_specs = [pl.BlockSpec((1, tq, C), lambda b, qi: (b, qi, 0))]
    if has_kv:
        kv_arr = x_q if self_attn else x_kv
        args.append(kv_arr.astype(jnp.float32))
        in_specs.append(pl.BlockSpec((1, Tk, C), lambda b, qi: (b, 0, 0)))
    args.append(mask3)
    in_specs.append(pl.BlockSpec((1, 1, Tk), lambda b, qi: (b, 0, 0)))
    if has_bias:
        bias = jnp.asarray(attn_bias, jnp.float32)
        if bias.ndim == 2:
            bias = bias.reshape(1, Tq, Tk)
        nb = bias.shape[0]
        assert Bb % nb == 0
        grp = Bb // nb
        if nb == 1:
            bmap = lambda b, qi: (0, qi, 0)
        elif nb == Bb:
            bmap = lambda b, qi: (b, qi, 0)
        else:                              # e.g. (prev, post) stack shared over batch halves
            bmap = lambda b, qi: (b // grp, qi, 0)
        args.append(bias)
        in_specs.append(pl.BlockSpec((1, tq, Tk), bmap))

    const2 = lambda r, c: pl.BlockSpec((r, c), lambda b, qi: (0, 0))
    args += [lnw, lnb, wq, bq, wk, bk, wv, bv, wo, bo]
    in_specs += [const2(1, C), const2(1, C),
                 const2(C, C), const2(1, C), const2(C, C), const2(1, C),
                 const2(C, C), const2(1, C), const2(C, C), const2(1, C)]

    kernel = functools.partial(_mha_block_kernel, num_heads=num_heads, head_dim=Dh,
                               scale=scale, has_kv=has_kv, ln_kv=ln_kv,
                               has_bias=has_bias, prenorm=prenorm)
    return pl.pallas_call(
        kernel,
        out_shape=jax.ShapeDtypeStruct((Bb, Tq, C), jnp.float32),
        grid=(Bb, n_qt),
        in_specs=in_specs,
        out_specs=pl.BlockSpec((1, tq, C), lambda b, qi: (b, qi, 0)),
        compiler_params=_compiler_params(("parallel", "parallel")),
    )(*args)


# -----------------------------------------------------------------------------
# Kernel 2: fused feed-forward block (LN -> fc1 + relu -> fc2 -> +residual)
# -----------------------------------------------------------------------------
def _ffn_block_kernel(x_ref, lnw_ref, lnb_ref, w1_ref, b1_ref, w2_ref, b2_ref, o_ref,
                      *, prenorm):
    x = x_ref[...]                                               # (tile, C) f32
    xn = _layer_norm(x, lnw_ref[...], lnb_ref[...]) if prenorm else x
    h = jnp.dot(xn.astype(jnp.bfloat16), w1_ref[...],
                preferred_element_type=jnp.float32) + b1_ref[...]
    h = jnp.maximum(h, 0.0)
    y = jnp.dot(h.astype(jnp.bfloat16), w2_ref[...],
                preferred_element_type=jnp.float32) + b2_ref[...]
    out = x + y
    if not prenorm:
        out = _layer_norm(out, lnw_ref[...], lnb_ref[...])
    o_ref[...] = out


def fused_ffn_block(x2d, ln, fc1, fc2, *, prenorm=True, row_tile=256):
    N, C = x2d.shape
    tile = min(row_tile, _round_up(N, 8))      # big tile; no `tile = N` fallback
    n_pad = _round_up(N, tile)
    x_p = x2d.astype(jnp.float32)
    if n_pad != N:
        x_p = jnp.pad(x_p, ((0, n_pad - N), (0, 0)))

    w1 = _prep_w(fc1["w"])
    F = w1.shape[1]
    b1 = _prep_row(fc1["b"], F)
    w2 = _prep_w(fc2["w"])
    b2 = _prep_row(fc2["b"], C)
    lnw, lnb = _prep_row(ln["w"], C), _prep_row(ln["b"], C)

    row_spec = pl.BlockSpec((tile, C), lambda i: (i, 0))
    const = lambda r, c: pl.BlockSpec((r, c), lambda i: (0, 0))
    out = pl.pallas_call(
        functools.partial(_ffn_block_kernel, prenorm=prenorm),
        out_shape=jax.ShapeDtypeStruct((n_pad, C), jnp.float32),
        grid=(n_pad // tile,),
        in_specs=[row_spec, const(1, C), const(1, C),
                  const(C, F), const(1, F), const(F, C), const(1, C)],
        out_specs=row_spec,
        compiler_params=_compiler_params(("parallel",)),
    )(x_p, lnw, lnb, w1, b1, w2, b2)
    return out[:N] if n_pad != N else out


# -----------------------------------------------------------------------------
# Kernel 3: fused CLSR gate (eval): G_fc1+relu -> G (VPU+lane reduce) -> hard gate ->
#           prev_W/post_W mix -> padding-mask mix (all in one kernel)
# -----------------------------------------------------------------------------
def _clsr_kernel(curr_ref, prev_ref, post_ref, pm_ref, qm_ref,
                 wg1_ref, bg1_ref, wg2_ref, wprev_ref, wpost_ref,
                 clsr_ref, mask_ref):
    curr = curr_ref[...]                                         # (tile, C) f32
    h = jnp.dot(curr.astype(jnp.bfloat16), wg1_ref[...],
                preferred_element_type=jnp.float32) + bg1_ref[...]
    h = jnp.maximum(h, 0.0)
    # G_fc2 (Hg -> 1, no bias) as a VPU multiply + lane reduction instead of an N=1 MXU pass
    G = jnp.sum(h * wg2_ref[...], axis=-1, keepdims=True)        # (tile, 1) f32
    g = (G > 0.0).astype(jnp.float32)                            # hard gate (eval), f32 threshold
    hp = jnp.dot(prev_ref[...].astype(jnp.bfloat16), wprev_ref[...],
                 preferred_element_type=jnp.float32)             # prev_W, no bias
    hq = jnp.dot(post_ref[...].astype(jnp.bfloat16), wpost_ref[...],
                 preferred_element_type=jnp.float32)             # post_W, no bias
    clsr_ref[...] = g * hp + (1.0 - g) * hq
    mask_ref[...] = g * pm_ref[...] + (1.0 - g) * qm_ref[...]    # fused padding-mask mix


def fused_clsr(curr2d, prev2d, post2d, prev_mask_flat, post_mask_flat, params, *,
               row_tile=256):
    N, C = curr2d.shape
    tile = min(row_tile, _round_up(N, 8))
    n_pad = _round_up(N, tile)

    def padrows(a):
        return jnp.pad(a, ((0, n_pad - N), (0, 0))) if n_pad != N else a

    curr_p = padrows(curr2d.astype(jnp.float32))
    prev_p = padrows(prev2d.astype(jnp.float32))
    post_p = padrows(post2d.astype(jnp.float32))
    pm = padrows(prev_mask_flat.astype(jnp.float32).reshape(N, 1))
    qm = padrows(post_mask_flat.astype(jnp.float32).reshape(N, 1))

    wg1 = _prep_w(params["G_fc1"]["w"])                          # (C, Hg) bf16
    Hg = wg1.shape[1]
    bg1 = _prep_row(params["G_fc1"]["b"], Hg)
    wg2 = jnp.asarray(params["G_fc2"]["w"], jnp.float32).reshape(1, Hg)  # f32 row, no bias
    wprev = _prep_w(params["prev_W"]["w"])                       # (C, C) bf16
    wpost = _prep_w(params["post_W"]["w"])                       # (C, C) bf16

    row_spec = pl.BlockSpec((tile, C), lambda i: (i, 0))
    m_spec = pl.BlockSpec((tile, 1), lambda i: (i, 0))
    const = lambda r, c: pl.BlockSpec((r, c), lambda i: (0, 0))
    clsr, mix = pl.pallas_call(
        _clsr_kernel,
        out_shape=(jax.ShapeDtypeStruct((n_pad, C), jnp.float32),
                   jax.ShapeDtypeStruct((n_pad, 1), jnp.float32)),
        grid=(n_pad // tile,),
        in_specs=[row_spec, row_spec, row_spec, m_spec, m_spec,
                  const(C, Hg), const(1, Hg), const(1, Hg),
                  const(C, C), const(C, C)],
        out_specs=(row_spec, m_spec),
        compiler_params=_compiler_params(("parallel",)),
    )(curr_p, prev_p, post_p, pm, qm, wg1, bg1, wg2, wprev, wpost)
    if n_pad != N:
        clsr, mix = clsr[:N], mix[:N]
    return clsr, mix


# -----------------------------------------------------------------------------
# Module glue (plain JAX only for transposes / reshapes / tiny mask math)
# -----------------------------------------------------------------------------
def _prep_attn_bias(m):
    """attn_mask.masked_fill(attn_mask.to(bool), -1e8) -> additive bias, or None."""
    if m is None:
        return None
    mf = jnp.asarray(m, jnp.float32)
    return jnp.where(mf != 0.0, jnp.float32(-1e8), mf)


def transformer_encoder_layer(x_btc, pad_mask, attn_bias, p, *, num_heads, prenorm):
    """fairseq TransformerEncoderLayer (relu, eval). x_btc: (Bb, T, C)."""
    x = fused_mha_block(x_btc, None, pad_mask, attn_bias, p["ln1"], p["attn"],
                        num_heads=num_heads, self_attn=True, prenorm=prenorm)
    Bb, T, C = x.shape
    y = fused_ffn_block(x.reshape(Bb * T, C), p["ln2"], p["fc1"], p["fc2"], prenorm=prenorm)
    return y.reshape(Bb, T, C)


def autoformer_encoder_layer_forward(params, curr_x, prev_x, post_x,
                                     curr_mask, prev_mask, post_mask,
                                     curr_attn_mask=None, prev_attn_mask=None,
                                     post_attn_mask=None,
                                     num_heads=4, normalize_before=True):
    T, B, C = curr_x.shape
    pre = normalize_before

    # (T, B, C) -> (B, T, C) once; everything downstream uses batch-major layout.
    curr = jnp.transpose(curr_x, (1, 0, 2)).astype(jnp.float32)
    prev = jnp.transpose(prev_x, (1, 0, 2)).astype(jnp.float32)
    post = jnp.transpose(post_x, (1, 0, 2)).astype(jnp.float32)

    curr_mask_f = curr_mask.astype(jnp.float32)
    prev_mask_f = prev_mask.astype(jnp.float32)
    post_mask_f = post_mask.astype(jnp.float32)

    # ---------------- Self-Attention (one fused kernel, no duplicate kv DMA) -------------
    curr = fused_mha_block(curr, None, curr_mask_f, _prep_attn_bias(curr_attn_mask),
                           params["self_ln"], params["self_attn"],
                           num_heads=num_heads, self_attn=True, prenorm=pre)

    # ---------------- Context encoder on prev & post (batched along batch: 2B) -----------
    ctx_in = jnp.concatenate([prev, post], axis=0)
    ctx_mask = jnp.concatenate([prev_mask_f, post_mask_f], axis=0)
    if prev_attn_mask is None and post_attn_mask is None:
        ctx_bias = None                                  # bias input omitted entirely
    else:
        zeros = jnp.zeros((1, T, T), jnp.float32)
        pb = _prep_attn_bias(prev_attn_mask)
        qb = _prep_attn_bias(post_attn_mask)
        pb = zeros if pb is None else pb.reshape(1, T, T)
        qb = zeros if qb is None else qb.reshape(1, T, T)
        ctx_bias = jnp.concatenate([pb, qb], axis=0)     # (2,T,T): grouped index_map, no B bcast
    ctx_out = transformer_encoder_layer(ctx_in, ctx_mask, ctx_bias, params["ctx"],
                                        num_heads=num_heads, prenorm=pre)
    prev_y, post_y = ctx_out[:B], ctx_out[B:]

    # ---------------- CLSR gate (eval branch, one fused kernel incl. mask mix) -----------
    N = B * T
    clsr_flat, mix_mask = fused_clsr(curr.reshape(N, C), prev_y.reshape(N, C),
                                     post_y.reshape(N, C),
                                     prev_mask_f.reshape(N), post_mask_f.reshape(N), params)
    clsr_ctx = clsr_flat.reshape(B, T, C)
    clsr_ctx_padding_mask = mix_mask.reshape(B, T)

    # ---------------- Cross-Attention (one fused kernel, no bias input) ------------------
    # NB: in the post-norm branch the reference re-applies self_attn_layer_norm here.
    ln_cross = params["cross_ln"] if pre else params["self_ln"]
    curr = fused_mha_block(curr, clsr_ctx, clsr_ctx_padding_mask, None,
                           ln_cross, params["cross_attn"], num_heads=num_heads,
                           self_attn=False, prenorm=pre)

    # ---------------- Feed-Forward (one fused kernel) ------------------------------------
    curr = fused_ffn_block(curr.reshape(N, C), params["final_ln"],
                           params["fc1"], params["fc2"], prenorm=pre).reshape(B, T, C)

    # back to fairseq (T, B, C) layout
    to_tbc = lambda a: jnp.transpose(a, (1, 0, 2))
    return to_tbc(curr), to_tbc(prev_y), to_tbc(post_y)


# -----------------------------------------------------------------------------
# Deterministic parameter init (PyTorch nn.Linear layout: weight (Cout, Cin))
# -----------------------------------------------------------------------------
def init_params(key, embed_dim, ffn_dim):
    keys = iter(jax.random.split(key, 128))

    def lin(cout, cin, bias=True):
        w = jax.random.normal(next(keys), (cout, cin), jnp.float32) * 0.05
        b = jax.random.normal(next(keys), (cout,), jnp.float32) * 0.05 if bias else None
        return {"w": w, "b": b}

    def ln(c):
        w = 1.0 + 0.1 * jax.random.normal(next(keys), (c,), jnp.float32)
        b = 0.1 * jax.random.normal(next(keys), (c,), jnp.float32)
        return {"w": w, "b": b}

    def attn(c):
        return {"q": lin(c, c), "k": lin(c, c), "v": lin(c, c), "o": lin(c, c)}

    C, F = embed_dim, ffn_dim
    return {
        "self_attn": attn(C), "self_ln": ln(C),
        "ctx": {"attn": attn(C), "ln1": ln(C),
                "fc1": lin(F, C), "fc2": lin(C, F), "ln2": ln(C)},
        "cross_attn": attn(C), "cross_ln": ln(C),
        "G_fc1": lin(128, C), "G_fc2": lin(1, 128, bias=False),
        "prev_W": lin(C, C, bias=False), "post_W": lin(C, C, bias=False),
        "fc1": lin(F, C), "fc2": lin(C, F), "final_ln": ln(C),
    }


# -----------------------------------------------------------------------------
if __name__ == "__main__":
    T, B, C, H, FFN = 8, 2, 32, 4, 64   # seq, batch, embed_dim, heads, ffn_dim

    root = jax.random.PRNGKey(0)
    kp, k1, k2, k3 = jax.random.split(root, 4)
    params = init_params(kp, C, FFN)

    curr_x = jax.random.normal(k1, (T, B, C), jnp.float32)
    prev_x = jax.random.normal(k2, (T, B, C), jnp.float32)
    post_x = jax.random.normal(k3, (T, B, C), jnp.float32)

    # boolean key-padding masks, (B, T), True = padded position
    curr_mask = jnp.zeros((B, T), bool).at[1, -1].set(True)
    prev_mask = jnp.zeros((B, T), bool).at[0, -2:].set(True)
    post_mask = jnp.zeros((B, T), bool).at[1, -3:].set(True)

    fwd = jax.jit(lambda p, a, b_, c, m1, m2, m3:
                  autoformer_encoder_layer_forward(p, a, b_, c, m1, m2, m3,
                                                   num_heads=H, normalize_before=True))
    curr_out, prev_out, post_out = fwd(params, curr_x, prev_x, post_x,
                                       curr_mask, prev_mask, post_mask)
    jax.block_until_ready((curr_out, prev_out, post_out))

    assert curr_out.shape == (T, B, C)
    assert prev_out.shape == (T, B, C)
    assert post_out.shape == (T, B, C)
    assert bool(jnp.all(jnp.isfinite(curr_out)))
    assert bool(jnp.all(jnp.isfinite(prev_out)))
    assert bool(jnp.all(jnp.isfinite(post_out)))
    print("KERNEL_OK")
</pallas_src>

<mosaic_0001>
module attributes {stable_mosaic.version = 11 : i64} {
  func.func @_mha_block_kernel(%arg0: i32, %arg1: i32, %arg2: memref<1x8x32xf32, #tpu.memory_space<vmem>>, %arg3: memref<1x1x8xf32, #tpu.memory_space<vmem>>, %arg4: memref<1x32xf32, #tpu.memory_space<vmem>>, %arg5: memref<1x32xf32, #tpu.memory_space<vmem>>, %arg6: memref<32x32xbf16, #tpu.memory_space<vmem>>, %arg7: memref<1x32xf32, #tpu.memory_space<vmem>>, %arg8: memref<32x32xbf16, #tpu.memory_space<vmem>>, %arg9: memref<1x32xf32, #tpu.memory_space<vmem>>, %arg10: memref<32x32xbf16, #tpu.memory_space<vmem>>, %arg11: memref<1x32xf32, #tpu.memory_space<vmem>>, %arg12: memref<32x32xbf16, #tpu.memory_space<vmem>>, %arg13: memref<1x32xf32, #tpu.memory_space<vmem>>, %arg14: memref<1x8x32xf32, #tpu.memory_space<vmem>>) attributes {dimension_semantics = [#tpu.dimension_semantics<parallel>, #tpu.dimension_semantics<parallel>], iteration_bounds = array<i64: 4, 1>, scalar_prefetch = 0 : i64, scratch_operands = 0 : i64, tpu.core_type = #tpu.core_type<tc>, window_params = [{transform_indices = @transform_0, window_bounds = array<i64: 1, 8, 32>}, {transform_indices = @transform_1, window_bounds = array<i64: 1, 1, 8>}, {pipeline_mode = #tpu.pipeline_mode<synchronous>, transform_indices = @transform_2, window_bounds = array<i64: 1, 32>}, {pipeline_mode = #tpu.pipeline_mode<synchronous>, transform_indices = @transform_3, window_bounds = array<i64: 1, 32>}, {pipeline_mode = #tpu.pipeline_mode<synchronous>, transform_indices = @transform_4, window_bounds = array<i64: 32, 32>}, {pipeline_mode = #tpu.pipeline_mode<synchronous>, transform_indices = @transform_5, window_bounds = array<i64: 1, 32>}, {pipeline_mode = #tpu.pipeline_mode<synchronous>, transform_indices = @transform_6, window_bounds = array<i64: 32, 32>}, {pipeline_mode = #tpu.pipeline_mode<synchronous>, transform_indices = @transform_7, window_bounds = array<i64: 1, 32>}, {pipeline_mode = #tpu.pipeline_mode<synchronous>, transform_indices = @transform_8, window_bounds = array<i64: 32, 32>}, {pipeline_mode = #tpu.pipeline_mode<synchronous>, transform_indices = @transform_9, window_bounds = array<i64: 1, 32>}, {pipeline_mode = #tpu.pipeline_mode<synchronous>, transform_indices = @transform_10, window_bounds = array<i64: 32, 32>}, {pipeline_mode = #tpu.pipeline_mode<synchronous>, transform_indices = @transform_11, window_bounds = array<i64: 1, 32>}, {transform_indices = @transform_12, window_bounds = array<i64: 1, 8, 32>}]} {
    %c0 = arith.constant 0 : index
    %c0_0 = arith.constant 0 : index
    %0 = vector.load %arg4[%c0, %c0_0] : memref<1x32xf32, #tpu.memory_space<vmem>>, vector<1x32xf32>
    %c0_1 = arith.constant 0 : index
    %c0_2 = arith.constant 0 : index
    %1 = vector.load %arg5[%c0_1, %c0_2] : memref<1x32xf32, #tpu.memory_space<vmem>>, vector<1x32xf32>
    %c0_3 = arith.constant 0 : index
    %c0_4 = arith.constant 0 : index
    %c0_5 = arith.constant 0 : index
    %2 = vector.load %arg2[%c0_3, %c0_4, %c0_5] : memref<1x8x32xf32, #tpu.memory_space<vmem>>, vector<1x8x32xf32>
    %3 = vector.shape_cast %2 : vector<1x8x32xf32> to vector<8x32xf32>
    %cst = arith.constant dense<0.000000e+00> : vector<8xf32>
    %4 = vector.multi_reduction <add>, %3, %cst [1] : vector<8x32xf32> to vector<8xf32>
    %5 = vector.shape_cast %4 : vector<8xf32> to vector<8x1xf32>
    %cst_6 = arith.constant 3.200000e+01 : f32
    %6 = vector.broadcast %cst_6 : f32 to vector<8x1xf32>
    %7 = arith.divf %5, %6 : vector<8x1xf32>
    %8 = vector.broadcast %7 : vector<8x1xf32> to vector<8x32xf32>
    %9 = arith.subf %3, %8 : vector<8x32xf32>
    %10 = arith.mulf %9, %9 : vector<8x32xf32>
    %cst_7 = arith.constant dense<0.000000e+00> : vector<8xf32>
    %11 = vector.multi_reduction <add>, %10, %cst_7 [1] : vector<8x32xf32> to vector<8xf32>
    %12 = vector.shape_cast %11 : vector<8xf32> to vector<8x1xf32>
    %cst_8 = arith.constant 3.200000e+01 : f32
    %13 = vector.broadcast %cst_8 : f32 to vector<8x1xf32>
    %14 = arith.divf %12, %13 : vector<8x1xf32>
    %15 = vector.broadcast %7 : vector<8x1xf32> to vector<8x32xf32>
    %16 = arith.subf %3, %15 : vector<8x32xf32>
    %cst_9 = arith.constant 9.99999974E-6 : f32
    %17 = vector.broadcast %cst_9 : f32 to vector<8x1xf32>
    %18 = arith.addf %14, %17 : vector<8x1xf32>
    %19 = math.rsqrt %18 : vector<8x1xf32>
    %20 = vector.broadcast %19 : vector<8x1xf32> to vector<8x32xf32>
    %21 = arith.mulf %16, %20 : vector<8x32xf32>
    %22 = vector.broadcast %0 : vector<1x32xf32> to vector<8x32xf32>
    %23 = arith.mulf %21, %22 : vector<8x32xf32>
    %24 = vector.broadcast %1 : vector<1x32xf32> to vector<8x32xf32>
    %25 = arith.addf %23, %24 : vector<8x32xf32>
    %26 = arith.truncf %25 : vector<8x32xf32> to vector<8x32xbf16>
    %c0_10 = arith.constant 0 : index
    %c0_11 = arith.constant 0 : index
    %27 = vector.load %arg6[%c0_10, %c0_11] : memref<32x32xbf16, #tpu.memory_space<vmem>>, vector<32x32xbf16>
    %cst_12 = arith.constant dense<0.000000e+00> : vector<8x32xf32>
    %28 = tpu.matmul %26, %27, %cst_12 {dimension_numbers = #tpu.dot_dimension_numbers<[1], [0], [0], [1], [0, 0, 1, 1], [], []>} : vector<8x32xbf16>, vector<32x32xbf16>, vector<8x32xf32> -> vector<8x32xf32>
    %c0_13 = arith.constant 0 : index
    %c0_14 = arith.constant 0 : index
    %29 = vector.load %arg7[%c0_13, %c0_14] : memref<1x32xf32, #tpu.memory_space<vmem>>, vector<1x32xf32>
    %30 = vector.broadcast %29 : vector<1x32xf32> to vector<8x32xf32>
    %31 = arith.addf %28, %30 : vector<8x32xf32>
    %c0_15 = arith.constant 0 : index
    %c0_16 = arith.constant 0 : index
    %32 = vector.load %arg8[%c0_15, %c0_16] : memref<32x32xbf16, #tpu.memory_space<vmem>>, vector<32x32xbf16>
    %cst_17 = arith.constant dense<0.000000e+00> : vector<8x32xf32>
    %33 = tpu.matmul %26, %32, %cst_17 {dimension_numbers = #tpu.dot_dimension_numbers<[1], [0], [0], [1], [0, 0, 1, 1], [], []>} : vector<8x32xbf16>, vector<32x32xbf16>, vector<8x32xf32> -> vector<8x32xf32>
    %c0_18 = arith.constant 0 : index
    %c0_19 = arith.constant 0 : index
    %34 = vector.load %arg9[%c0_18, %c0_19] : memref<1x32xf32, #tpu.memory_space<vmem>>, vector<1x32xf32>
    %35 = vector.broadcast %34 : vector<1x32xf32> to vector<8x32xf32>
    %36 = arith.addf %33, %35 : vector<8x32xf32>
    %c0_20 = arith.constant 0 : index
    %c0_21 = arith.constant 0 : index
    %37 = vector.load %arg10[%c0_20, %c0_21] : memref<32x32xbf16, #tpu.memory_space<vmem>>, vector<32x32xbf16>
    %cst_22 = arith.constant dense<0.000000e+00> : vector<8x32xf32>
    %38 = tpu.matmul %26, %37, %cst_22 {dimension_numbers = #tpu.dot_dimension_numbers<[1], [0], [0], [1], [0, 0, 1, 1], [], []>} : vector<8x32xbf16>, vector<32x32xbf16>, vector<8x32xf32> -> vector<8x32xf32>
    %c0_23 = arith.constant 0 : index
    %c0_24 = arith.constant 0 : index
    %39 = vector.load %arg11[%c0_23, %c0_24] : memref<1x32xf32, #tpu.memory_space<vmem>>, vector<1x32xf32>
    %40 = vector.broadcast %39 : vector<1x32xf32> to vector<8x32xf32>
    %41 = arith.addf %38, %40 : vector<8x32xf32>
    %cst_25 = arith.constant 0.353553385 : f32
    %42 = vector.broadcast %cst_25 : f32 to vector<8x32xf32>
    %43 = arith.mulf %31, %42 : vector<8x32xf32>
    %c0_26 = arith.constant 0 : index
    %c0_27 = arith.constant 0 : index
    %c0_28 = arith.constant 0 : index
    %44 = vector.load %arg3[%c0_26, %c0_27, %c0_28] : memref<1x1x8xf32, #tpu.memory_space<vmem>>, vector<1x1x8xf32>
    %45 = vector.shape_cast %44 : vector<1x1x8xf32> to vector<1x8xf32>
    %cst_29 = arith.constant 0.000000e+00 : f32
    %46 = vector.broadcast %cst_29 : f32 to vector<1x8xf32>
    %47 = arith.cmpf one, %45, %46 : vector<1x8xf32>
    %48 = vector.extract_strided_slice %43 {offsets = [0, 0], sizes = [8, 8], strides = [1, 1]} : vector<8x32xf32> to vector<8x8xf32>
    %49 = arith.truncf %48 : vector<8x8xf32> to vector<8x8xbf16>
    %50 = vector.extract_strided_slice %36 {offsets = [0, 0], sizes = [8, 8], strides = [1, 1]} : vector<8x32xf32> to vector<8x8xf32>
    %51 = arith.truncf %50 : vector<8x8xf32> to vector<8x8xbf16>
    %52 = vector.extract_strided_slice %41 {offsets = [0, 0], sizes = [8, 8], strides = [1, 1]} : vector<8x32xf32> to vector<8x8xf32>
    %53 = arith.truncf %52 : vector<8x8xf32> to vector<8x8xbf16>
    %cst_30 = arith.constant dense<0.000000e+00> : vector<8x8xf32>
    %54 = tpu.matmul %49, %51, %cst_30 {dimension_numbers = #tpu.dot_dimension_numbers<[1], [1], [0], [0], [0, 0, 1, 0], [], []>} : vector<8x8xbf16>, vector<8x8xbf16>, vector<8x8xf32> -> vector<8x8xf32>
    %cst_31 = arith.constant -1.000000e+30 : f32
    %55 = vector.shape_cast %47 : vector<1x8xi1> to vector<1x8xi1>
    %56 = vector.broadcast %55 : vector<1x8xi1> to vector<8x8xi1>
    %57 = vector.broadcast %cst_31 : f32 to vector<8x8xf32>
    %58 = arith.select %56, %57, %54 : vector<8x8xi1>, vector<8x8xf32>
    %cst_32 = arith.constant dense<0xFF800000> : vector<8xf32>
    %59 = vector.multi_reduction <maximumf>, %58, %cst_32 [1] : vector<8x8xf32> to vector<8xf32>
    %60 = vector.shape_cast %59 : vector<8xf32> to vector<8x1xf32>
    %61 = vector.broadcast %60 : vector<8x1xf32> to vector<8x8xf32>
    %62 = arith.subf %58, %61 : vector<8x8xf32>
    %63 = math.exp %62 : vector<8x8xf32>
    %cst_33 = arith.constant dense<0.000000e+00> : vector<8xf32>
    %64 = vector.multi_reduction <add>, %63, %cst_33 [1] : vector<8x8xf32> to vector<8xf32>
    %65 = vector.shape_cast %64 : vector<8xf32> to vector<8x1xf32>
    %66 = tpu.reciprocal %65 : vector<8x1xf32> -> vector<8x1xf32>
    %67 = vector.broadcast %66 : vector<8x1xf32> to vector<8x8xf32>
    %68 = arith.mulf %63, %67 : vector<8x8xf32>
    %69 = arith.truncf %68 : vector<8x8xf32> to vector<8x8xbf16>
    %cst_34 = arith.constant dense<0.000000e+00> : vector<8x8xf32>
    %70 = tpu.matmul %69, %53, %cst_34 {dimension_numbers = #tpu.dot_dimension_numbers<[1], [0], [0], [1], [0, 0, 1, 1], [], []>} : vector<8x8xbf16>, vector<8x8xbf16>, vector<8x8xf32> -> vector<8x8xf32>
    %71 = vector.extract_strided_slice %43 {offsets = [0, 8], sizes = [8, 8], strides = [1, 1]} : vector<8x32xf32> to vector<8x8xf32>
    %72 = arith.truncf %71 : vector<8x8xf32> to vector<8x8xbf16>
    %73 = vector.extract_strided_slice %36 {offsets = [0, 8], sizes = [8, 8], strides = [1, 1]} : vector<8x32xf32> to vector<8x8xf32>
    %74 = arith.truncf %73 : vector<8x8xf32> to vector<8x8xbf16>
    %75 = vector.extract_strided_slice %41 {offsets = [0, 8], sizes = [8, 8], strides = [1, 1]} : vector<8x32xf32> to vector<8x8xf32>
    %76 = arith.truncf %75 : vector<8x8xf32> to vector<8x8xbf16>
    %cst_35 = arith.constant dense<0.000000e+00> : vector<8x8xf32>
    %77 = tpu.matmul %72, %74, %cst_35 {dimension_numbers = #tpu.dot_dimension_numbers<[1], [1], [0], [0], [0, 0, 1, 0], [], []>} : vector<8x8xbf16>, vector<8x8xbf16>, vector<8x8xf32> -> vector<8x8xf32>
    %cst_36 = arith.constant -1.000000e+30 : f32
    %78 = vector.shape_cast %47 : vector<1x8xi1> to vector<1x8xi1>
    %79 = vector.broadcast %78 : vector<1x8xi1> to vector<8x8xi1>
    %80 = vector.broadcast %cst_36 : f32 to vector<8x8xf32>
    %81 = arith.select %79, %80, %77 : vector<8x8xi1>, vector<8x8xf32>
    %cst_37 = arith.constant dense<0xFF800000> : vector<8xf32>
    %82 = vector.multi_reduction <maximumf>, %81, %cst_37 [1] : vector<8x8xf32> to vector<8xf32>
    %83 = vector.shape_cast %82 : vector<8xf32> to vector<8x1xf32>
    %84 = vector.broadcast %83 : vector<8x1xf32> to vector<8x8xf32>
    %85 = arith.subf %81, %84 : vector<8x8xf32>
    %86 = math.exp %85 : vector<8x8xf32>
    %cst_38 = arith.constant dense<0.000000e+00> : vector<8xf32>
    %87 = vector.multi_reduction <add>, %86, %cst_38 [1] : vector<8x8xf32> to vector<8xf32>
    %88 = vector.shape_cast %87 : vector<8xf32> to vector<8x1xf32>
    %89 = tpu.reciprocal %88 : vector<8x1xf32> -> vector<8x1xf32>
    %90 = vector.broadcast %89 : vector<8x1xf32> to vector<8x8xf32>
    %91 = arith.mulf %86, %90 : vector<8x8xf32>
    %92 = arith.truncf %91 : vector<8x8xf32> to vector<8x8xbf16>
    %cst_39 = arith.constant dense<0.000000e+00> : vector<8x8xf32>
    %93 = tpu.matmul %92, %76, %cst_39 {dimension_numbers = #tpu.dot_dimension_numbers<[1], [0], [0], [1], [0, 0, 1, 1], [], []>} : vector<8x8xbf16>, vector<8x8xbf16>, vector<8x8xf32> -> vector<8x8xf32>
    %94 = vector.extract_strided_slice %43 {offsets = [0, 16], sizes = [8, 8], strides = [1, 1]} : vector<8x32xf32> to vector<8x8xf32>
    %95 = arith.truncf %94 : vector<8x8xf32> to vector<8x8xbf16>
    %96 = vector.extract_strided_slice %36 {offsets = [0, 16], sizes = [8, 8], strides = [1, 1]} : vector<8x32xf32> to vector<8x8xf32>
    %97 = arith.truncf %96 : vector<8x8xf32> to vector<8x8xbf16>
    %98 = vector.extract_strided_slice %41 {offsets = [0, 16], sizes = [8, 8], strides = [1, 1]} : vector<8x32xf32> to vector<8x8xf32>
    %99 = arith.truncf %98 : vector<8x8xf32> to vector<8x8xbf16>
    %cst_40 = arith.constant dense<0.000000e+00> : vector<8x8xf32>
    %100 = tpu.matmul %95, %97, %cst_40 {dimension_numbers = #tpu.dot_dimension_numbers<[1], [1], [0], [0], [0, 0, 1, 0], [], []>} : vector<8x8xbf16>, vector<8x8xbf16>, vector<8x8xf32> -> vector<8x8xf32>
    %cst_41 = arith.constant -1.000000e+30 : f32
    %101 = vector.shape_cast %47 : vector<1x8xi1> to vector<1x8xi1>
    %102 = vector.broadcast %101 : vector<1x8xi1> to vector<8x8xi1>
    %103 = vector.broadcast %cst_41 : f32 to vector<8x8xf32>
    %104 = arith.select %102, %103, %100 : vector<8x8xi1>, vector<8x8xf32>
    %cst_42 = arith.constant dense<0xFF800000> : vector<8xf32>
    %105 = vector.multi_reduction <maximumf>, %104, %cst_42 [1] : vector<8x8xf32> to vector<8xf32>
    %106 = vector.shape_cast %105 : vector<8xf32> to vector<8x1xf32>
    %107 = vector.broadcast %106 : vector<8x1xf32> to vector<8x8xf32>
    %108 = arith.subf %104, %107 : vector<8x8xf32>
    %109 = math.exp %108 : vector<8x8xf32>
    %cst_43 = arith.constant dense<0.000000e+00> : vector<8xf32>
    %110 = vector.multi_reduction <add>, %109, %cst_43 [1] : vector<8x8xf32> to vector<8xf32>
    %111 = vector.shape_cast %110 : vector<8xf32> to vector<8x1xf32>
    %112 = tpu.reciprocal %111 : vector<8x1xf32> -> vector<8x1xf32>
    %113 = vector.broadcast %112 : vector<8x1xf32> to vector<8x8xf32>
    %114 = arith.mulf %109, %113 : vector<8x8xf32>
    %115 = arith.truncf %114 : vector<8x8xf32> to vector<8x8xbf16>
    %cst_44 = arith.constant dense<0.000000e+00> : vector<8x8xf32>
    %116 = tpu.matmul %115, %99, %cst_44 {dimension_numbers = #tpu.dot_dimension_numbers<[1], [0], [0], [1], [0, 0, 1, 1], [], []>} : vector<8x8xbf16>, vector<8x8xbf16>, vector<8x8xf32> -> vector<8x8xf32>
    %117 = vector.extract_strided_slice %43 {offsets = [0, 24], sizes = [8, 8], strides = [1, 1]} : vector<8x32xf32> to vector<8x8xf32>
    %118 = arith.truncf %117 : vector<8x8xf32> to vector<8x8xbf16>
    %119 = vector.extract_strided_slice %36 {offsets = [0, 24], sizes = [8, 8], strides = [1, 1]} : vector<8x32xf32> to vector<8x8xf32>
    %120 = arith.truncf %119 : vector<8x8xf32> to vector<8x8xbf16>
    %121 = vector.extract_strided_slice %41 {offsets = [0, 24], sizes = [8, 8], strides = [1, 1]} : vector<8x32xf32> to vector<8x8xf32>
    %122 = arith.truncf %121 : vector<8x8xf32> to vector<8x8xbf16>
    %cst_45 = arith.constant dense<0.000000e+00> : vector<8x8xf32>
    %123 = tpu.matmul %118, %120, %cst_45 {dimension_numbers = #tpu.dot_dimension_numbers<[1], [1], [0], [0], [0, 0, 1, 0], [], []>} : vector<8x8xbf16>, vector<8x8xbf16>, vector<8x8xf32> -> vector<8x8xf32>
    %cst_46 = arith.constant -1.000000e+30 : f32
    %124 = vector.shape_cast %47 : vector<1x8xi1> to vector<1x8xi1>
    %125 = vector.broadcast %124 : vector<1x8xi1> to vector<8x8xi1>
    %126 = vector.broadcast %cst_46 : f32 to vector<8x8xf32>
    %127 = arith.select %125, %126, %123 : vector<8x8xi1>, vector<8x8xf32>
    %cst_47 = arith.constant dense<0xFF800000> : vector<8xf32>
    %128 = vector.multi_reduction <maximumf>, %127, %cst_47 [1] : vector<8x8xf32> to vector<8xf32>
    %129 = vector.shape_cast %128 : vector<8xf32> to vector<8x1xf32>
    %130 = vector.broadcast %129 : vector<8x1xf32> to vector<8x8xf32>
    %131 = arith.subf %127, %130 : vector<8x8xf32>
    %132 = math.exp %131 : vector<8x8xf32>
    %cst_48 = arith.constant dense<0.000000e+00> : vector<8xf32>
    %133 = vector.multi_reduction <add>, %132, %cst_48 [1] : vector<8x8xf32> to vector<8xf32>
    %134 = vector.shape_cast %133 : vector<8xf32> to vector<8x1xf32>
    %135 = tpu.reciprocal %134 : vector<8x1xf32> -> vector<8x1xf32>
    %136 = vector.broadcast %135 : vector<8x1xf32> to vector<8x8xf32>
    %137 = arith.mulf %132, %136 : vector<8x8xf32>
    %138 = arith.truncf %137 : vector<8x8xf32> to vector<8x8xbf16>
    %cst_49 = arith.constant dense<0.000000e+00> : vector<8x8xf32>
    %139 = tpu.matmul %138, %122, %cst_49 {dimension_numbers = #tpu.dot_dimension_numbers<[1], [0], [0], [1], [0, 0, 1, 1], [], []>} : vector<8x8xbf16>, vector<8x8xbf16>, vector<8x8xf32> -> vector<8x8xf32>
    %140 = tpu.concatenate %70, %93, %116, %139 in 1 : vector<8x8xf32>, vector<8x8xf32>, vector<8x8xf32>, vector<8x8xf32> -> vector<8x32xf32>
    %141 = arith.truncf %140 : vector<8x32xf32> to vector<8x32xbf16>
    %c0_50 = arith.constant 0 : index
    %c0_51 = arith.constant 0 : index
    %142 = vector.load %arg12[%c0_50, %c0_51] : memref<32x32xbf16, #tpu.memory_space<vmem>>, vector<32x32xbf16>
    %cst_52 = arith.constant dense<0.000000e+00> : vector<8x32xf32>
    %143 = tpu.matmul %141, %142, %cst_52 {dimension_numbers = #tpu.dot_dimension_numbers<[1], [0], [0], [1], [0, 0, 1, 1], [], []>} : vector<8x32xbf16>, vector<32x32xbf16>, vector<8x32xf32> -> vector<8x32xf32>
    %c0_53 = arith.constant 0 : index
    %c0_54 = arith.constant 0 : index
    %144 = vector.load %arg13[%c0_53, %c0_54] : memref<1x32xf32, #tpu.memory_space<vmem>>, vector<1x32xf32>
    %145 = vector.broadcast %144 : vector<1x32xf32> to vector<8x32xf32>
    %146 = arith.addf %143, %145 : vector<8x32xf32>
    %147 = arith.addf %3, %146 : vector<8x32xf32>
    %c0_55 = arith.constant 0 : index
    %c0_56 = arith.constant 0 : index
    %c0_57 = arith.constant 0 : index
    %148 = vector.load %arg14[%c0_55, %c0_56, %c0_57] : memref<1x8x32xf32, #tpu.memory_space<vmem>>, vector<1x8x32xf32>
    %149 = vector.shape_cast %148 : vector<1x8x32xf32> to vector<8x32xf32>
    %150 = vector.shape_cast %147 : vector<8x32xf32> to vector<1x8x32xf32>
    tpu.vector_store %arg14[%c0_55, %c0_56, %c0_57], %150 {strides = array<i32>} : memref<1x8x32xf32, #tpu.memory_space<vmem>>, vector<1x8x32xf32>,
    return
  }
  func.func @transform_0(%arg0: i32, %arg1: i32) -> (i32, i32, i32) {
    %c0_i32 = arith.constant 0 : i32
    %c0_i32_0 = arith.constant 0 : i32
    return %arg0, %arg1, %c0_i32 : i32, i32, i32
  }
  func.func @transform_1(%arg0: i32, %arg1: i32) -> (i32, i32, i32) {
    %c0_i32 = arith.constant 0 : i32
    %c0_i32_0 = arith.constant 0 : i32
    %c0_i32_1 = arith.constant 0 : i32
    return %arg0, %c0_i32, %c0_i32_0 : i32, i32, i32
  }
  func.func @transform_2(%arg0: i32, %arg1: i32) -> (i32, i32) {
    %c0_i32 = arith.constant 0 : i32
    %c0_i32_0 = arith.constant 0 : i32
    %c0_i32_1 = arith.constant 0 : i32
    return %c0_i32, %c0_i32_0 : i32, i32
  }
  func.func @transform_3(%arg0: i32, %arg1: i32) -> (i32, i32) {
    %c0_i32 = arith.constant 0 : i32
    %c0_i32_0 = arith.constant 0 : i32
    %c0_i32_1 = arith.constant 0 : i32
    return %c0_i32, %c0_i32_0 : i32, i32
  }
  func.func @transform_4(%arg0: i32, %arg1: i32) -> (i32, i32) {
    %c0_i32 = arith.constant 0 : i32
    %c0_i32_0 = arith.constant 0 : i32
    %c0_i32_1 = arith.constant 0 : i32
    return %c0_i32, %c0_i32_0 : i32, i32
  }
  func.func @transform_5(%arg0: i32, %arg1: i32) -> (i32, i32) {
    %c0_i32 = arith.constant 0 : i32
    %c0_i32_0 = arith.constant 0 : i32
    %c0_i32_1 = arith.constant 0 : i32
    return %c0_i32, %c0_i32_0 : i32, i32
  }
  func.func @transform_6(%arg0: i32, %arg1: i32) -> (i32, i32) {
    %c0_i32 = arith.constant 0 : i32
    %c0_i32_0 = arith.constant 0 : i32
    %c0_i32_1 = arith.constant 0 : i32
    return %c0_i32, %c0_i32_0 : i32, i32
  }
  func.func @transform_7(%arg0: i32, %arg1: i32) -> (i32, i32) {
    %c0_i32 = arith.constant 0 : i32
    %c0_i32_0 = arith.constant 0 : i32
    %c0_i32_1 = arith.constant 0 : i32
    return %c0_i32, %c0_i32_0 : i32, i32
  }
  func.func @transform_8(%arg0: i32, %arg1: i32) -> (i32, i32) {
    %c0_i32 = arith.constant 0 : i32
    %c0_i32_0 = arith.constant 0 : i32
    %c0_i32_1 = arith.constant 0 : i32
    return %c0_i32, %c0_i32_0 : i32, i32
  }
  func.func @transform_9(%arg0: i32, %arg1: i32) -> (i32, i32) {
    %c0_i32 = arith.constant 0 : i32
    %c0_i32_0 = arith.constant 0 : i32
    %c0_i32_1 = arith.constant 0 : i32
    return %c0_i32, %c0_i32_0 : i32, i32
  }
  func.func @transform_10(%arg0: i32, %arg1: i32) -> (i32, i32) {
    %c0_i32 = arith.constant 0 : i32
    %c0_i32_0 = arith.constant 0 : i32
    %c0_i32_1 = arith.constant 0 : i32
    return %c0_i32, %c0_i32_0 : i32, i32
  }
  func.func @transform_11(%arg0: i32, %arg1: i32) -> (i32, i32) {
    %c0_i32 = arith.constant 0 : i32
    %c0_i32_0 = arith.constant 0 : i32
    %c0_i32_1 = arith.constant 0 : i32
    return %c0_i32, %c0_i32_0 : i32, i32
  }
  func.func @transform_12(%arg0: i32, %arg1: i32) -> (i32, i32, i32) {
    %c0_i32 = arith.constant 0 : i32
    %c0_i32_0 = arith.constant 0 : i32
    return %arg0, %arg1, %c0_i32 : i32, i32, i32
  }
}

module attributes {stable_mosaic.version = 11 : i64} {
  func.func @_ffn_block_kernel(%arg0: i32, %arg1: memref<32x32xf32, #tpu.memory_space<vmem>>, %arg2: memref<1x32xf32, #tpu.memory_space<vmem>>, %arg3: memref<1x32xf32, #tpu.memory_space<vmem>>, %arg4: memref<32x64xbf16, #tpu.memory_space<vmem>>, %arg5: memref<1x64xf32, #tpu.memory_space<vmem>>, %arg6: memref<64x32xbf16, #tpu.memory_space<vmem>>, %arg7: memref<1x32xf32, #tpu.memory_space<vmem>>, %arg8: memref<32x32xf32, #tpu.memory_space<vmem>>) attributes {dimension_semantics = [#tpu.dimension_semantics<parallel>], iteration_bounds = array<i64: 1>, scalar_prefetch = 0 : i64, scratch_operands = 0 : i64, tpu.core_type = #tpu.core_type<tc>, window_params = [{transform_indices = @transform_0, window_bounds = array<i64: 32, 32>}, {pipeline_mode = #tpu.pipeline_mode<synchronous>, transform_indices = @transform_1, window_bounds = array<i64: 1, 32>}, {pipeline_mode = #tpu.pipeline_mode<synchronous>, transform_indices = @transform_2, window_bounds = array<i64: 1, 32>}, {pipeline_mode = #tpu.pipeline_mode<synchronous>, transform_indices = @transform_3, window_bounds = array<i64: 32, 64>}, {pipeline_mode = #tpu.pipeline_mode<synchronous>, transform_indices = @transform_4, window_bounds = array<i64: 1, 64>}, {pipeline_mode = #tpu.pipeline_mode<synchronous>, transform_indices = @transform_5, window_bounds = array<i64: 64, 32>}, {pipeline_mode = #tpu.pipeline_mode<synchronous>, transform_indices = @transform_6, window_bounds = array<i64: 1, 32>}, {transform_indices = @transform_7, window_bounds = array<i64: 32, 32>}]} {
    %c0 = arith.constant 0 : index
    %c0_0 = arith.constant 0 : index
    %0 = vector.load %arg1[%c0, %c0_0] : memref<32x32xf32, #tpu.memory_space<vmem>>, vector<32x32xf32>
    %c0_1 = arith.constant 0 : index
    %c0_2 = arith.constant 0 : index
    %1 = vector.load %arg2[%c0_1, %c0_2] : memref<1x32xf32, #tpu.memory_space<vmem>>, vector<1x32xf32>
    %c0_3 = arith.constant 0 : index
    %c0_4 = arith.constant 0 : index
    %2 = vector.load %arg3[%c0_3, %c0_4] : memref<1x32xf32, #tpu.memory_space<vmem>>, vector<1x32xf32>
    %cst = arith.constant dense<0.000000e+00> : vector<32xf32>
    %3 = vector.multi_reduction <add>, %0, %cst [1] : vector<32x32xf32> to vector<32xf32>
    %4 = vector.shape_cast %3 : vector<32xf32> to vector<32x1xf32>
    %cst_5 = arith.constant 3.200000e+01 : f32
    %5 = vector.broadcast %cst_5 : f32 to vector<32x1xf32>
    %6 = arith.divf %4, %5 : vector<32x1xf32>
    %7 = vector.broadcast %6 : vector<32x1xf32> to vector<32x32xf32>
    %8 = arith.subf %0, %7 : vector<32x32xf32>
    %9 = arith.mulf %8, %8 : vector<32x32xf32>
    %cst_6 = arith.constant dense<0.000000e+00> : vector<32xf32>
    %10 = vector.multi_reduction <add>, %9, %cst_6 [1] : vector<32x32xf32> to vector<32xf32>
    %11 = vector.shape_cast %10 : vector<32xf32> to vector<32x1xf32>
    %cst_7 = arith.constant 3.200000e+01 : f32
    %12 = vector.broadcast %cst_7 : f32 to vector<32x1xf32>
    %13 = arith.divf %11, %12 : vector<32x1xf32>
    %14 = vector.broadcast %6 : vector<32x1xf32> to vector<32x32xf32>
    %15 = arith.subf %0, %14 : vector<32x32xf32>
    %cst_8 = arith.constant 9.99999974E-6 : f32
    %16 = vector.broadcast %cst_8 : f32 to vector<32x1xf32>
    %17 = arith.addf %13, %16 : vector<32x1xf32>
    %18 = math.rsqrt %17 : vector<32x1xf32>
    %19 = vector.broadcast %18 : vector<32x1xf32> to vector<32x32xf32>
    %20 = arith.mulf %15, %19 : vector<32x32xf32>
    %21 = vector.broadcast %1 : vector<1x32xf32> to vector<32x32xf32>
    %22 = arith.mulf %20, %21 : vector<32x32xf32>
    %23 = vector.broadcast %2 : vector<1x32xf32> to vector<32x32xf32>
    %24 = arith.addf %22, %23 : vector<32x32xf32>
    %25 = arith.truncf %24 : vector<32x32xf32> to vector<32x32xbf16>
    %c0_9 = arith.constant 0 : index
    %c0_10 = arith.constant 0 : index
    %26 = vector.load %arg4[%c0_9, %c0_10] : memref<32x64xbf16, #tpu.memory_space<vmem>>, vector<32x64xbf16>
    %cst_11 = arith.constant dense<0.000000e+00> : vector<32x64xf32>
    %27 = tpu.matmul %25, %26, %cst_11 {dimension_numbers = #tpu.dot_dimension_numbers<[1], [0], [0], [1], [0, 0, 1, 1], [], []>} : vector<32x32xbf16>, vector<32x64xbf16>, vector<32x64xf32> -> vector<32x64xf32>
    %c0_12 = arith.constant 0 : index
    %c0_13 = arith.constant 0 : index
    %28 = vector.load %arg5[%c0_12, %c0_13] : memref<1x64xf32, #tpu.memory_space<vmem>>, vector<1x64xf32>
    %29 = vector.broadcast %28 : vector<1x64xf32> to vector<32x64xf32>
    %30 = arith.addf %27, %29 : vector<32x64xf32>
    %cst_14 = arith.constant 0.000000e+00 : f32
    %31 = vector.broadcast %cst_14 : f32 to vector<32x64xf32>
    %32 = arith.maximumf %30, %31 : vector<32x64xf32>
    %33 = arith.truncf %32 : vector<32x64xf32> to vector<32x64xbf16>
    %c0_15 = arith.constant 0 : index
    %c0_16 = arith.constant 0 : index
    %34 = vector.load %arg6[%c0_15, %c0_16] : memref<64x32xbf16, #tpu.memory_space<vmem>>, vector<64x32xbf16>
    %cst_17 = arith.constant dense<0.000000e+00> : vector<32x32xf32>
    %35 = tpu.matmul %33, %34, %cst_17 {dimension_numbers = #tpu.dot_dimension_numbers<[1], [0], [0], [1], [0, 0, 1, 1], [], []>} : vector<32x64xbf16>, vector<64x32xbf16>, vector<32x32xf32> -> vector<32x32xf32>
    %c0_18 = arith.constant 0 : index
    %c0_19 = arith.constant 0 : index
    %36 = vector.load %arg7[%c0_18, %c0_19] : memref<1x32xf32, #tpu.memory_space<vmem>>, vector<1x32xf32>
    %37 = vector.broadcast %36 : vector<1x32xf32> to vector<32x32xf32>
    %38 = arith.addf %35, %37 : vector<32x32xf32>
    %39 = arith.addf %0, %38 : vector<32x32xf32>
    %c0_20 = arith.constant 0 : index
    %c0_21 = arith.constant 0 : index
    %40 = vector.load %arg8[%c0_20, %c0_21] : memref<32x32xf32, #tpu.memory_space<vmem>>, vector<32x32xf32>
    tpu.vector_store %arg8[%c0_20, %c0_21], %39 {strides = array<i32>} : memref<32x32xf32, #tpu.memory_space<vmem>>, vector<32x32xf32>,
    return
  }
  func.func @transform_0(%arg0: i32) -> (i32, i32) {
    %c0_i32 = arith.constant 0 : i32
    %c0_i32_0 = arith.constant 0 : i32
    return %arg0, %c0_i32 : i32, i32
  }
  func.func @transform_1(%arg0: i32) -> (i32, i32) {
    %c0_i32 = arith.constant 0 : i32
    %c0_i32_0 = arith.constant 0 : i32
    %c0_i32_1 = arith.constant 0 : i32
    return %c0_i32, %c0_i32_0 : i32, i32
  }
  func.func @transform_2(%arg0: i32) -> (i32, i32) {
    %c0_i32 = arith.constant 0 : i32
    %c0_i32_0 = arith.constant 0 : i32
    %c0_i32_1 = arith.constant 0 : i32
    return %c0_i32, %c0_i32_0 : i32, i32
  }
  func.func @transform_3(%arg0: i32) -> (i32, i32) {
    %c0_i32 = arith.constant 0 : i32
    %c0_i32_0 = arith.constant 0 : i32
    %c0_i32_1 = arith.constant 0 : i32
    return %c0_i32, %c0_i32_0 : i32, i32
  }
  func.func @transform_4(%arg0: i32) -> (i32, i32) {
    %c0_i32 = arith.constant 0 : i32
    %c0_i32_0 = arith.constant 0 : i32
    %c0_i32_1 = arith.constant 0 : i32
    return %c0_i32, %c0_i32_0 : i32, i32
  }
  func.func @transform_5(%arg0: i32) -> (i32, i32) {
    %c0_i32 = arith.constant 0 : i32
    %c0_i32_0 = arith.constant 0 : i32
    %c0_i32_1 = arith.constant 0 : i32
    return %c0_i32, %c0_i32_0 : i32, i32
  }
  func.func @transform_6(%arg0: i32) -> (i32, i32) {
    %c0_i32 = arith.constant 0 : i32
    %c0_i32_0 = arith.constant 0 : i32
    %c0_i32_1 = arith.constant 0 : i32
    return %c0_i32, %c0_i32_0 : i32, i32
  }
  func.func @transform_7(%arg0: i32) -> (i32, i32) {
    %c0_i32 = arith.constant 0 : i32
    %c0_i32_0 = arith.constant 0 : i32
    return %arg0, %c0_i32 : i32, i32
  }
}

module attributes {stable_mosaic.version = 11 : i64} {
  func.func @_mha_block_kernel(%arg0: i32, %arg1: i32, %arg2: memref<1x8x32xf32, #tpu.memory_space<vmem>>, %arg3: memref<1x1x8xf32, #tpu.memory_space<vmem>>, %arg4: memref<1x32xf32, #tpu.memory_space<vmem>>, %arg5: memref<1x32xf32, #tpu.memory_space<vmem>>, %arg6: memref<32x32xbf16, #tpu.memory_space<vmem>>, %arg7: memref<1x32xf32, #tpu.memory_space<vmem>>, %arg8: memref<32x32xbf16, #tpu.memory_space<vmem>>, %arg9: memref<1x32xf32, #tpu.memory_space<vmem>>, %arg10: memref<32x32xbf16, #tpu.memory_space<vmem>>, %arg11: memref<1x32xf32, #tpu.memory_space<vmem>>, %arg12: memref<32x32xbf16, #tpu.memory_space<vmem>>, %arg13: memref<1x32xf32, #tpu.memory_space<vmem>>, %arg14: memref<1x8x32xf32, #tpu.memory_space<vmem>>) attributes {dimension_semantics = [#tpu.dimension_semantics<parallel>, #tpu.dimension_semantics<parallel>], iteration_bounds = array<i64: 2, 1>, scalar_prefetch = 0 : i64, scratch_operands = 0 : i64, tpu.core_type = #tpu.core_type<tc>, window_params = [{transform_indices = @transform_0, window_bounds = array<i64: 1, 8, 32>}, {transform_indices = @transform_1, window_bounds = array<i64: 1, 1, 8>}, {pipeline_mode = #tpu.pipeline_mode<synchronous>, transform_indices = @transform_2, window_bounds = array<i64: 1, 32>}, {pipeline_mode = #tpu.pipeline_mode<synchronous>, transform_indices = @transform_3, window_bounds = array<i64: 1, 32>}, {pipeline_mode = #tpu.pipeline_mode<synchronous>, transform_indices = @transform_4, window_bounds = array<i64: 32, 32>}, {pipeline_mode = #tpu.pipeline_mode<synchronous>, transform_indices = @transform_5, window_bounds = array<i64: 1, 32>}, {pipeline_mode = #tpu.pipeline_mode<synchronous>, transform_indices = @transform_6, window_bounds = array<i64: 32, 32>}, {pipeline_mode = #tpu.pipeline_mode<synchronous>, transform_indices = @transform_7, window_bounds = array<i64: 1, 32>}, {pipeline_mode = #tpu.pipeline_mode<synchronous>, transform_indices = @transform_8, window_bounds = array<i64: 32, 32>}, {pipeline_mode = #tpu.pipeline_mode<synchronous>, transform_indices = @transform_9, window_bounds = array<i64: 1, 32>}, {pipeline_mode = #tpu.pipeline_mode<synchronous>, transform_indices = @transform_10, window_bounds = array<i64: 32, 32>}, {pipeline_mode = #tpu.pipeline_mode<synchronous>, transform_indices = @transform_11, window_bounds = array<i64: 1, 32>}, {transform_indices = @transform_12, window_bounds = array<i64: 1, 8, 32>}]} {
    %c0 = arith.constant 0 : index
    %c0_0 = arith.constant 0 : index
    %0 = vector.load %arg4[%c0, %c0_0] : memref<1x32xf32, #tpu.memory_space<vmem>>, vector<1x32xf32>
    %c0_1 = arith.constant 0 : index
    %c0_2 = arith.constant 0 : index
    %1 = vector.load %arg5[%c0_1, %c0_2] : memref<1x32xf32, #tpu.memory_space<vmem>>, vector<1x32xf32>
    %c0_3 = arith.constant 0 : index
    %c0_4 = arith.constant 0 : index
    %c0_5 = arith.constant 0 : index
    %2 = vector.load %arg2[%c0_3, %c0_4, %c0_5] : memref<1x8x32xf32, #tpu.memory_space<vmem>>, vector<1x8x32xf32>
    %3 = vector.shape_cast %2 : vector<1x8x32xf32> to vector<8x32xf32>
    %cst = arith.constant dense<0.000000e+00> : vector<8xf32>
    %4 = vector.multi_reduction <add>, %3, %cst [1] : vector<8x32xf32> to vector<8xf32>
    %5 = vector.shape_cast %4 : vector<8xf32> to vector<8x1xf32>
    %cst_6 = arith.constant 3.200000e+01 : f32
    %6 = vector.broadcast %cst_6 : f32 to vector<8x1xf32>
    %7 = arith.divf %5, %6 : vector<8x1xf32>
    %8 = vector.broadcast %7 : vector<8x1xf32> to vector<8x32xf32>
    %9 = arith.subf %3, %8 : vector<8x32xf32>
    %10 = arith.mulf %9, %9 : vector<8x32xf32>
    %cst_7 = arith.constant dense<0.000000e+00> : vector<8xf32>
    %11 = vector.multi_reduction <add>, %10, %cst_7 [1] : vector<8x32xf32> to vector<8xf32>
    %12 = vector.shape_cast %11 : vector<8xf32> to vector<8x1xf32>
    %cst_8 = arith.constant 3.200000e+01 : f32
    %13 = vector.broadcast %cst_8 : f32 to vector<8x1xf32>
    %14 = arith.divf %12, %13 : vector<8x1xf32>
    %15 = vector.broadcast %7 : vector<8x1xf32> to vector<8x32xf32>
    %16 = arith.subf %3, %15 : vector<8x32xf32>
    %cst_9 = arith.constant 9.99999974E-6 : f32
    %17 = vector.broadcast %cst_9 : f32 to vector<8x1xf32>
    %18 = arith.addf %14, %17 : vector<8x1xf32>
    %19 = math.rsqrt %18 : vector<8x1xf32>
    %20 = vector.broadcast %19 : vector<8x1xf32> to vector<8x32xf32>
    %21 = arith.mulf %16, %20 : vector<8x32xf32>
    %22 = vector.broadcast %0 : vector<1x32xf32> to vector<8x32xf32>
    %23 = arith.mulf %21, %22 : vector<8x32xf32>
    %24 = vector.broadcast %1 : vector<1x32xf32> to vector<8x32xf32>
    %25 = arith.addf %23, %24 : vector<8x32xf32>
    %26 = arith.truncf %25 : vector<8x32xf32> to vector<8x32xbf16>
    %c0_10 = arith.constant 0 : index
    %c0_11 = arith.constant 0 : index
    %27 = vector.load %arg6[%c0_10, %c0_11] : memref<32x32xbf16, #tpu.memory_space<vmem>>, vector<32x32xbf16>
    %cst_12 = arith.constant dense<0.000000e+00> : vector<8x32xf32>
    %28 = tpu.matmul %26, %27, %cst_12 {dimension_numbers = #tpu.dot_dimension_numbers<[1], [0], [0], [1], [0, 0, 1, 1], [], []>} : vector<8x32xbf16>, vector<32x32xbf16>, vector<8x32xf32> -> vector<8x32xf32>
    %c0_13 = arith.constant 0 : index
    %c0_14 = arith.constant 0 : index
    %29 = vector.load %arg7[%c0_13, %c0_14] : memref<1x32xf32, #tpu.memory_space<vmem>>, vector<1x32xf32>
    %30 = vector.broadcast %29 : vector<1x32xf32> to vector<8x32xf32>
    %31 = arith.addf %28, %30 : vector<8x32xf32>
    %c0_15 = arith.constant 0 : index
    %c0_16 = arith.constant 0 : index
    %32 = vector.load %arg8[%c0_15, %c0_16] : memref<32x32xbf16, #tpu.memory_space<vmem>>, vector<32x32xbf16>
    %cst_17 = arith.constant dense<0.000000e+00> : vector<8x32xf32>
    %33 = tpu.matmul %26, %32, %cst_17 {dimension_numbers = #tpu.dot_dimension_numbers<[1], [0], [0], [1], [0, 0, 1, 1], [], []>} : vector<8x32xbf16>, vector<32x32xbf16>, vector<8x32xf32> -> vector<8x32xf32>
    %c0_18 = arith.constant 0 : index
    %c0_19 = arith.constant 0 : index
    %34 = vector.load %arg9[%c0_18, %c0_19] : memref<1x32xf32, #tpu.memory_space<vmem>>, vector<1x32xf32>
    %35 = vector.broadcast %34 : vector<1x32xf32> to vector<8x32xf32>
    %36 = arith.addf %33, %35 : vector<8x32xf32>
    %c0_20 = arith.constant 0 : index
    %c0_21 = arith.constant 0 : index
    %37 = vector.load %arg10[%c0_20, %c0_21] : memref<32x32xbf16, #tpu.memory_space<vmem>>, vector<32x32xbf16>
    %cst_22 = arith.constant dense<0.000000e+00> : vector<8x32xf32>
    %38 = tpu.matmul %26, %37, %cst_22 {dimension_numbers = #tpu.dot_dimension_numbers<[1], [0], [0], [1], [0, 0, 1, 1], [], []>} : vector<8x32xbf16>, vector<32x32xbf16>, vector<8x32xf32> -> vector<8x32xf32>
    %c0_23 = arith.constant 0 : index
    %c0_24 = arith.constant 0 : index
    %39 = vector.load %arg11[%c0_23, %c0_24] : memref<1x32xf32, #tpu.memory_space<vmem>>, vector<1x32xf32>
    %40 = vector.broadcast %39 : vector<1x32xf32> to vector<8x32xf32>
    %41 = arith.addf %38, %40 : vector<8x32xf32>
    %cst_25 = arith.constant 0.353553385 : f32
    %42 = vector.broadcast %cst_25 : f32 to vector<8x32xf32>
    %43 = arith.mulf %31, %42 : vector<8x32xf32>
    %c0_26 = arith.constant 0 : index
    %c0_27 = arith.constant 0 : index
    %c0_28 = arith.constant 0 : index
    %44 = vector.load %arg3[%c0_26, %c0_27, %c0_28] : memref<1x1x8xf32, #tpu.memory_space<vmem>>, vector<1x1x8xf32>
    %45 = vector.shape_cast %44 : vector<1x1x8xf32> to vector<1x8xf32>
    %cst_29 = arith.constant 0.000000e+00 : f32
    %46 = vector.broadcast %cst_29 : f32 to vector<1x8xf32>
    %47 = arith.cmpf one, %45, %46 : vector<1x8xf32>
    %48 = vector.extract_strided_slice %43 {offsets = [0, 0], sizes = [8, 8], strides = [1, 1]} : vector<8x32xf32> to vector<8x8xf32>
    %49 = arith.truncf %48 : vector<8x8xf32> to vector<8x8xbf16>
    %50 = vector.extract_strided_slice %36 {offsets = [0, 0], sizes = [8, 8], strides = [1, 1]} : vector<8x32xf32> to vector<8x8xf32>
    %51 = arith.truncf %50 : vector<8x8xf32> to vector<8x8xbf16>
    %52 = vector.extract_strided_slice %41 {offsets = [0, 0], sizes = [8, 8], strides = [1, 1]} : vector<8x32xf32> to vector<8x8xf32>
    %53 = arith.truncf %52 : vector<8x8xf32> to vector<8x8xbf16>
    %cst_30 = arith.constant dense<0.000000e+00> : vector<8x8xf32>
    %54 = tpu.matmul %49, %51, %cst_30 {dimension_numbers = #tpu.dot_dimension_numbers<[1], [1], [0], [0], [0, 0, 1, 0], [], []>} : vector<8x8xbf16>, vector<8x8xbf16>, vector<8x8xf32> -> vector<8x8xf32>
    %cst_31 = arith.constant -1.000000e+30 : f32
    %55 = vector.shape_cast %47 : vector<1x8xi1> to vector<1x8xi1>
    %56 = vector.broadcast %55 : vector<1x8xi1> to vector<8x8xi1>
    %57 = vector.broadcast %cst_31 : f32 to vector<8x8xf32>
    %58 = arith.select %56, %57, %54 : vector<8x8xi1>, vector<8x8xf32>
    %cst_32 = arith.constant dense<0xFF800000> : vector<8xf32>
    %59 = vector.multi_reduction <maximumf>, %58, %cst_32 [1] : vector<8x8xf32> to vector<8xf32>
    %60 = vector.shape_cast %59 : vector<8xf32> to vector<8x1xf32>
    %61 = vector.broadcast %60 : vector<8x1xf32> to vector<8x8xf32>
    %62 = arith.subf %58, %61 : vector<8x8xf32>
    %63 = math.exp %62 : vector<8x8xf32>
    %cst_33 = arith.constant dense<0.000000e+00> : vector<8xf32>
    %64 = vector.multi_reduction <add>, %63, %cst_33 [1] : vector<8x8xf32> to vector<8xf32>
    %65 = vector.shape_cast %64 : vector<8xf32> to vector<8x1xf32>
    %66 = tpu.reciprocal %65 : vector<8x1xf32> -> vector<8x1xf32>
    %67 = vector.broadcast %66 : vector<8x1xf32> to vector<8x8xf32>
    %68 = arith.mulf %63, %67 : vector<8x8xf32>
    %69 = arith.truncf %68 : vector<8x8xf32> to vector<8x8xbf16>
    %cst_34 = arith.constant dense<0.000000e+00> : vector<8x8xf32>
    %70 = tpu.matmul %69, %53, %cst_34 {dimension_numbers = #tpu.dot_dimension_numbers<[1], [0], [0], [1], [0, 0, 1, 1], [], []>} : vector<8x8xbf16>, vector<8x8xbf16>, vector<8x8xf32> -> vector<8x8xf32>
    %71 = vector.extract_strided_slice %43 {offsets = [0, 8], sizes = [8, 8], strides = [1, 1]} : vector<8x32xf32> to vector<8x8xf32>
    %72 = arith.truncf %71 : vector<8x8xf32> to vector<8x8xbf16>
    %73 = vector.extract_strided_slice %36 {offsets = [0, 8], sizes = [8, 8], strides = [1, 1]} : vector<8x32xf32> to vector<8x8xf32>
    %74 = arith.truncf %73 : vector<8x8xf32> to vector<8x8xbf16>
    %75 = vector.extract_strided_slice %41 {offsets = [0, 8], sizes = [8, 8], strides = [1, 1]} : vector<8x32xf32> to vector<8x8xf32>
    %76 = arith.truncf %75 : vector<8x8xf32> to vector<8x8xbf16>
    %cst_35 = arith.constant dense<0.000000e+00> : vector<8x8xf32>
    %77 = tpu.matmul %72, %74, %cst_35 {dimension_numbers = #tpu.dot_dimension_numbers<[1], [1], [0], [0], [0, 0, 1, 0], [], []>} : vector<8x8xbf16>, vector<8x8xbf16>, vector<8x8xf32> -> vector<8x8xf32>
    %cst_36 = arith.constant -1.000000e+30 : f32
    %78 = vector.shape_cast %47 : vector<1x8xi1> to vector<1x8xi1>
    %79 = vector.broadcast %78 : vector<1x8xi1> to vector<8x8xi1>
    %80 = vector.broadcast %cst_36 : f32 to vector<8x8xf32>
    %81 = arith.select %79, %80, %77 : vector<8x8xi1>, vector<8x8xf32>
    %cst_37 = arith.constant dense<0xFF800000> : vector<8xf32>
    %82 = vector.multi_reduction <maximumf>, %81, %cst_37 [1] : vector<8x8xf32> to vector<8xf32>
    %83 = vector.shape_cast %82 : vector<8xf32> to vector<8x1xf32>
    %84 = vector.broadcast %83 : vector<8x1xf32> to vector<8x8xf32>
    %85 = arith.subf %81, %84 : vector<8x8xf32>
    %86 = math.exp %85 : vector<8x8xf32>
    %cst_38 = arith.constant dense<0.000000e+00> : vector<8xf32>
    %87 = vector.multi_reduction <add>, %86, %cst_38 [1] : vector<8x8xf32> to vector<8xf32>
    %88 = vector.shape_cast %87 : vector<8xf32> to vector<8x1xf32>
    %89 = tpu.reciprocal %88 : vector<8x1xf32> -> vector<8x1xf32>
    %90 = vector.broadcast %89 : vector<8x1xf32> to vector<8x8xf32>
    %91 = arith.mulf %86, %90 : vector<8x8xf32>
    %92 = arith.truncf %91 : vector<8x8xf32> to vector<8x8xbf16>
    %cst_39 = arith.constant dense<0.000000e+00> : vector<8x8xf32>
    %93 = tpu.matmul %92, %76, %cst_39 {dimension_numbers = #tpu.dot_dimension_numbers<[1], [0], [0], [1], [0, 0, 1, 1], [], []>} : vector<8x8xbf16>, vector<8x8xbf16>, vector<8x8xf32> -> vector<8x8xf32>
    %94 = vector.extract_strided_slice %43 {offsets = [0, 16], sizes = [8, 8], strides = [1, 1]} : vector<8x32xf32> to vector<8x8xf32>
    %95 = arith.truncf %94 : vector<8x8xf32> to vector<8x8xbf16>
    %96 = vector.extract_strided_slice %36 {offsets = [0, 16], sizes = [8, 8], strides = [1, 1]} : vector<8x32xf32> to vector<8x8xf32>
    %97 = arith.truncf %96 : vector<8x8xf32> to vector<8x8xbf16>
    %98 = vector.extract_strided_slice %41 {offsets = [0, 16], sizes = [8, 8], strides = [1, 1]} : vector<8x32xf32> to vector<8x8xf32>
    %99 = arith.truncf %98 : vector<8x8xf32> to vector<8x8xbf16>
    %cst_40 = arith.constant dense<0.000000e+00> : vector<8x8xf32>
    %100 = tpu.matmul %95, %97, %cst_40 {dimension_numbers = #tpu.dot_dimension_numbers<[1], [1], [0], [0], [0, 0, 1, 0], [], []>} : vector<8x8xbf16>, vector<8x8xbf16>, vector<8x8xf32> -> vector<8x8xf32>
    %cst_41 = arith.constant -1.000000e+30 : f32
    %101 = vector.shape_cast %47 : vector<1x8xi1> to vector<1x8xi1>
    %102 = vector.broadcast %101 : vector<1x8xi1> to vector<8x8xi1>
    %103 = vector.broadcast %cst_41 : f32 to vector<8x8xf32>
    %104 = arith.select %102, %103, %100 : vector<8x8xi1>, vector<8x8xf32>
    %cst_42 = arith.constant dense<0xFF800000> : vector<8xf32>
    %105 = vector.multi_reduction <maximumf>, %104, %cst_42 [1] : vector<8x8xf32> to vector<8xf32>
    %106 = vector.shape_cast %105 : vector<8xf32> to vector<8x1xf32>
    %107 = vector.broadcast %106 : vector<8x1xf32> to vector<8x8xf32>
    %108 = arith.subf %104, %107 : vector<8x8xf32>
    %109 = math.exp %108 : vector<8x8xf32>
    %cst_43 = arith.constant dense<0.000000e+00> : vector<8xf32>
    %110 = vector.multi_reduction <add>, %109, %cst_43 [1] : vector<8x8xf32> to vector<8xf32>
    %111 = vector.shape_cast %110 : vector<8xf32> to vector<8x1xf32>
    %112 = tpu.reciprocal %111 : vector<8x1xf32> -> vector<8x1xf32>
    %113 = vector.broadcast %112 : vector<8x1xf32> to vector<8x8xf32>
    %114 = arith.mulf %109, %113 : vector<8x8xf32>
    %115 = arith.truncf %114 : vector<8x8xf32> to vector<8x8xbf16>
    %cst_44 = arith.constant dense<0.000000e+00> : vector<8x8xf32>
    %116 = tpu.matmul %115, %99, %cst_44 {dimension_numbers = #tpu.dot_dimension_numbers<[1], [0], [0], [1], [0, 0, 1, 1], [], []>} : vector<8x8xbf16>, vector<8x8xbf16>, vector<8x8xf32> -> vector<8x8xf32>
    %117 = vector.extract_strided_slice %43 {offsets = [0, 24], sizes = [8, 8], strides = [1, 1]} : vector<8x32xf32> to vector<8x8xf32>
    %118 = arith.truncf %117 : vector<8x8xf32> to vector<8x8xbf16>
    %119 = vector.extract_strided_slice %36 {offsets = [0, 24], sizes = [8, 8], strides = [1, 1]} : vector<8x32xf32> to vector<8x8xf32>
    %120 = arith.truncf %119 : vector<8x8xf32> to vector<8x8xbf16>
    %121 = vector.extract_strided_slice %41 {offsets = [0, 24], sizes = [8, 8], strides = [1, 1]} : vector<8x32xf32> to vector<8x8xf32>
    %122 = arith.truncf %121 : vector<8x8xf32> to vector<8x8xbf16>
    %cst_45 = arith.constant dense<0.000000e+00> : vector<8x8xf32>
    %123 = tpu.matmul %118, %120, %cst_45 {dimension_numbers = #tpu.dot_dimension_numbers<[1], [1], [0], [0], [0, 0, 1, 0], [], []>} : vector<8x8xbf16>, vector<8x8xbf16>, vector<8x8xf32> -> vector<8x8xf32>
    %cst_46 = arith.constant -1.000000e+30 : f32
    %124 = vector.shape_cast %47 : vector<1x8xi1> to vector<1x8xi1>
    %125 = vector.broadcast %124 : vector<1x8xi1> to vector<8x8xi1>
    %126 = vector.broadcast %cst_46 : f32 to vector<8x8xf32>
    %127 = arith.select %125, %126, %123 : vector<8x8xi1>, vector<8x8xf32>
    %cst_47 = arith.constant dense<0xFF800000> : vector<8xf32>
    %128 = vector.multi_reduction <maximumf>, %127, %cst_47 [1] : vector<8x8xf32> to vector<8xf32>
    %129 = vector.shape_cast %128 : vector<8xf32> to vector<8x1xf32>
    %130 = vector.broadcast %129 : vector<8x1xf32> to vector<8x8xf32>
    %131 = arith.subf %127, %130 : vector<8x8xf32>
    %132 = math.exp %131 : vector<8x8xf32>
    %cst_48 = arith.constant dense<0.000000e+00> : vector<8xf32>
    %133 = vector.multi_reduction <add>, %132, %cst_48 [1] : vector<8x8xf32> to vector<8xf32>
    %134 = vector.shape_cast %133 : vector<8xf32> to vector<8x1xf32>
    %135 = tpu.reciprocal %134 : vector<8x1xf32> -> vector<8x1xf32>
    %136 = vector.broadcast %135 : vector<8x1xf32> to vector<8x8xf32>
    %137 = arith.mulf %132, %136 : vector<8x8xf32>
    %138 = arith.truncf %137 : vector<8x8xf32> to vector<8x8xbf16>
    %cst_49 = arith.constant dense<0.000000e+00> : vector<8x8xf32>
    %139 = tpu.matmul %138, %122, %cst_49 {dimension_numbers = #tpu.dot_dimension_numbers<[1], [0], [0], [1], [0, 0, 1, 1], [], []>} : vector<8x8xbf16>, vector<8x8xbf16>, vector<8x8xf32> -> vector<8x8xf32>
    %140 = tpu.concatenate %70, %93, %116, %139 in 1 : vector<8x8xf32>, vector<8x8xf32>, vector<8x8xf32>, vector<8x8xf32> -> vector<8x32xf32>
    %141 = arith.truncf %140 : vector<8x32xf32> to vector<8x32xbf16>
    %c0_50 = arith.constant 0 : index
    %c0_51 = arith.constant 0 : index
    %142 = vector.load %arg12[%c0_50, %c0_51] : memref<32x32xbf16, #tpu.memory_space<vmem>>, vector<32x32xbf16>
    %cst_52 = arith.constant dense<0.000000e+00> : vector<8x32xf32>
    %143 = tpu.matmul %141, %142, %cst_52 {dimension_numbers = #tpu.dot_dimension_numbers<[1], [0], [0], [1], [0, 0, 1, 1], [], []>} : vector<8x32xbf16>, vector<32x32xbf16>, vector<8x32xf32> -> vector<8x32xf32>
    %c0_53 = arith.constant 0 : index
    %c0_54 = arith.constant 0 : index
    %144 = vector.load %arg13[%c0_53, %c0_54] : memref<1x32xf32, #tpu.memory_space<vmem>>, vector<1x32xf32>
    %145 = vector.broadcast %144 : vector<1x32xf32> to vector<8x32xf32>
    %146 = arith.addf %143, %145 : vector<8x32xf32>
    %147 = arith.addf %3, %146 : vector<8x32xf32>
    %c0_55 = arith.constant 0 : index
    %c0_56 = arith.constant 0 : index
    %c0_57 = arith.constant 0 : index
    %148 = vector.load %arg14[%c0_55, %c0_56, %c0_57] : memref<1x8x32xf32, #tpu.memory_space<vmem>>, vector<1x8x32xf32>
    %149 = vector.shape_cast %148 : vector<1x8x32xf32> to vector<8x32xf32>
    %150 = vector.shape_cast %147 : vector<8x32xf32> to vector<1x8x32xf32>
    tpu.vector_store %arg14[%c0_55, %c0_56, %c0_57], %150 {strides = array<i32>} : memref<1x8x32xf32, #tpu.memory_space<vmem>>, vector<1x8x32xf32>,
    return
  }
  func.func @transform_0(%arg0: i32, %arg1: i32) -> (i32, i32, i32) {
    %c0_i32 = arith.constant 0 : i32
    %c0_i32_0 = arith.constant 0 : i32
    return %arg0, %arg1, %c0_i32 : i32, i32, i32
  }
  func.func @transform_1(%arg0: i32, %arg1: i32) -> (i32, i32, i32) {
    %c0_i32 = arith.constant 0 : i32
    %c0_i32_0 = arith.constant 0 : i32
    %c0_i32_1 = arith.constant 0 : i32
    return %arg0, %c0_i32, %c0_i32_0 : i32, i32, i32
  }
  func.func @transform_2(%arg0: i32, %arg1: i32) -> (i32, i32) {
    %c0_i32 = arith.constant 0 : i32
    %c0_i32_0 = arith.constant 0 : i32
    %c0_i32_1 = arith.constant 0 : i32
    return %c0_i32, %c0_i32_0 : i32, i32
  }
  func.func @transform_3(%arg0: i32, %arg1: i32) -> (i32, i32) {
    %c0_i32 = arith.constant 0 : i32
    %c0_i32_0 = arith.constant 0 : i32
    %c0_i32_1 = arith.constant 0 : i32
    return %c0_i32, %c0_i32_0 : i32, i32
  }
  func.func @transform_4(%arg0: i32, %arg1: i32) -> (i32, i32) {
    %c0_i32 = arith.constant 0 : i32
    %c0_i32_0 = arith.constant 0 : i32
    %c0_i32_1 = arith.constant 0 : i32
    return %c0_i32, %c0_i32_0 : i32, i32
  }
  func.func @transform_5(%arg0: i32, %arg1: i32) -> (i32, i32) {
    %c0_i32 = arith.constant 0 : i32
    %c0_i32_0 = arith.constant 0 : i32
    %c0_i32_1 = arith.constant 0 : i32
    return %c0_i32, %c0_i32_0 : i32, i32
  }
  func.func @transform_6(%arg0: i32, %arg1: i32) -> (i32, i32) {
    %c0_i32 = arith.constant 0 : i32
    %c0_i32_0 = arith.constant 0 : i32
    %c0_i32_1 = arith.constant 0 : i32
    return %c0_i32, %c0_i32_0 : i32, i32
  }
  func.func @transform_7(%arg0: i32, %arg1: i32) -> (i32, i32) {
    %c0_i32 = arith.constant 0 : i32
    %c0_i32_0 = arith.constant 0 : i32
    %c0_i32_1 = arith.constant 0 : i32
    return %c0_i32, %c0_i32_0 : i32, i32
  }
  func.func @transform_8(%arg0: i32, %arg1: i32) -> (i32, i32) {
    %c0_i32 = arith.constant 0 : i32
    %c0_i32_0 = arith.constant 0 : i32
    %c0_i32_1 = arith.constant 0 : i32
    return %c0_i32, %c0_i32_0 : i32, i32
  }
  func.func @transform_9(%arg0: i32, %arg1: i32) -> (i32, i32) {
    %c0_i32 = arith.constant 0 : i32
    %c0_i32_0 = arith.constant 0 : i32
    %c0_i32_1 = arith.constant 0 : i32
    return %c0_i32, %c0_i32_0 : i32, i32
  }
  func.func @transform_10(%arg0: i32, %arg1: i32) -> (i32, i32) {
    %c0_i32 = arith.constant 0 : i32
    %c0_i32_0 = arith.constant 0 : i32
    %c0_i32_1 = arith.constant 0 : i32
    return %c0_i32, %c0_i32_0 : i32, i32
  }
  func.func @transform_11(%arg0: i32, %arg1: i32) -> (i32, i32) {
    %c0_i32 = arith.constant 0 : i32
    %c0_i32_0 = arith.constant 0 : i32
    %c0_i32_1 = arith.constant 0 : i32
    return %c0_i32, %c0_i32_0 : i32, i32
  }
  func.func @transform_12(%arg0: i32, %arg1: i32) -> (i32, i32, i32) {
    %c0_i32 = arith.constant 0 : i32
    %c0_i32_0 = arith.constant 0 : i32
    return %arg0, %arg1, %c0_i32 : i32, i32, i32
  }
}

module attributes {stable_mosaic.version = 11 : i64} {
  func.func @_clsr_kernel(%arg0: i32, %arg1: memref<16x32xf32, #tpu.memory_space<vmem>>, %arg2: memref<16x32xf32, #tpu.memory_space<vmem>>, %arg3: memref<16x32xf32, #tpu.memory_space<vmem>>, %arg4: memref<16x1xf32, #tpu.memory_space<vmem>>, %arg5: memref<16x1xf32, #tpu.memory_space<vmem>>, %arg6: memref<32x128xbf16, #tpu.memory_space<vmem>>, %arg7: memref<1x128xf32, #tpu.memory_space<vmem>>, %arg8: memref<1x128xf32, #tpu.memory_space<vmem>>, %arg9: memref<32x32xbf16, #tpu.memory_space<vmem>>, %arg10: memref<32x32xbf16, #tpu.memory_space<vmem>>, %arg11: memref<16x32xf32, #tpu.memory_space<vmem>>, %arg12: memref<16x1xf32, #tpu.memory_space<vmem>>) attributes {dimension_semantics = [#tpu.dimension_semantics<parallel>], iteration_bounds = array<i64: 1>, scalar_prefetch = 0 : i64, scratch_operands = 0 : i64, tpu.core_type = #tpu.core_type<tc>, window_params = [{transform_indices = @transform_0, window_bounds = array<i64: 16, 32>}, {transform_indices = @transform_1, window_bounds = array<i64: 16, 32>}, {transform_indices = @transform_2, window_bounds = array<i64: 16, 32>}, {transform_indices = @transform_3, window_bounds = array<i64: 16, 1>}, {transform_indices = @transform_4, window_bounds = array<i64: 16, 1>}, {pipeline_mode = #tpu.pipeline_mode<synchronous>, transform_indices = @transform_5, window_bounds = array<i64: 32, 128>}, {pipeline_mode = #tpu.pipeline_mode<synchronous>, transform_indices = @transform_6, window_bounds = array<i64: 1, 128>}, {pipeline_mode = #tpu.pipeline_mode<synchronous>, transform_indices = @transform_7, window_bounds = array<i64: 1, 128>}, {pipeline_mode = #tpu.pipeline_mode<synchronous>, transform_indices = @transform_8, window_bounds = array<i64: 32, 32>}, {pipeline_mode = #tpu.pipeline_mode<synchronous>, transform_indices = @transform_9, window_bounds = array<i64: 32, 32>}, {transform_indices = @transform_10, window_bounds = array<i64: 16, 32>}, {transform_indices = @transform_11, window_bounds = array<i64: 16, 1>}]} {
    %c0 = arith.constant 0 : index
    %c0_0 = arith.constant 0 : index
    %0 = vector.load %arg1[%c0, %c0_0] : memref<16x32xf32, #tpu.memory_space<vmem>>, vector<16x32xf32>
    %1 = arith.truncf %0 : vector<16x32xf32> to vector<16x32xbf16>
    %c0_1 = arith.constant 0 : index
    %c0_2 = arith.constant 0 : index
    %2 = vector.load %arg6[%c0_1, %c0_2] : memref<32x128xbf16, #tpu.memory_space<vmem>>, vector<32x128xbf16>
    %cst = arith.constant dense<0.000000e+00> : vector<16x128xf32>
    %3 = tpu.matmul %1, %2, %cst {dimension_numbers = #tpu.dot_dimension_numbers<[1], [0], [0], [1], [0, 0, 1, 1], [], []>} : vector<16x32xbf16>, vector<32x128xbf16>, vector<16x128xf32> -> vector<16x128xf32>
    %c0_3 = arith.constant 0 : index
    %c0_4 = arith.constant 0 : index
    %4 = vector.load %arg7[%c0_3, %c0_4] : memref<1x128xf32, #tpu.memory_space<vmem>>, vector<1x128xf32>
    %5 = vector.broadcast %4 : vector<1x128xf32> to vector<16x128xf32>
    %6 = arith.addf %3, %5 : vector<16x128xf32>
    %cst_5 = arith.constant 0.000000e+00 : f32
    %7 = vector.broadcast %cst_5 : f32 to vector<16x128xf32>
    %8 = arith.maximumf %6, %7 : vector<16x128xf32>
    %c0_6 = arith.constant 0 : index
    %c0_7 = arith.constant 0 : index
    %9 = vector.load %arg8[%c0_6, %c0_7] : memref<1x128xf32, #tpu.memory_space<vmem>>, vector<1x128xf32>
    %10 = vector.broadcast %9 : vector<1x128xf32> to vector<16x128xf32>
    %11 = arith.mulf %8, %10 : vector<16x128xf32>
    %cst_8 = arith.constant dense<0.000000e+00> : vector<16xf32>
    %12 = vector.multi_reduction <add>, %11, %cst_8 [1] : vector<16x128xf32> to vector<16xf32>
    %13 = vector.shape_cast %12 : vector<16xf32> to vector<16x1xf32>
    %cst_9 = arith.constant 0.000000e+00 : f32
    %14 = vector.broadcast %cst_9 : f32 to vector<16x1xf32>
    %15 = arith.cmpf ogt, %13, %14 : vector<16x1xf32>
    %16 = arith.extui %15 : vector<16x1xi1> to vector<16x1xi32>
    %17 = arith.sitofp %16 : vector<16x1xi32> to vector<16x1xf32>
    %c0_10 = arith.constant 0 : index
    %c0_11 = arith.constant 0 : index
    %18 = vector.load %arg2[%c0_10, %c0_11] : memref<16x32xf32, #tpu.memory_space<vmem>>, vector<16x32xf32>
    %19 = arith.truncf %18 : vector<16x32xf32> to vector<16x32xbf16>
    %c0_12 = arith.constant 0 : index
    %c0_13 = arith.constant 0 : index
    %20 = vector.load %arg9[%c0_12, %c0_13] : memref<32x32xbf16, #tpu.memory_space<vmem>>, vector<32x32xbf16>
    %cst_14 = arith.constant dense<0.000000e+00> : vector<16x32xf32>
    %21 = tpu.matmul %19, %20, %cst_14 {dimension_numbers = #tpu.dot_dimension_numbers<[1], [0], [0], [1], [0, 0, 1, 1], [], []>} : vector<16x32xbf16>, vector<32x32xbf16>, vector<16x32xf32> -> vector<16x32xf32>
    %c0_15 = arith.constant 0 : index
    %c0_16 = arith.constant 0 : index
    %22 = vector.load %arg3[%c0_15, %c0_16] : memref<16x32xf32, #tpu.memory_space<vmem>>, vector<16x32xf32>
    %23 = arith.truncf %22 : vector<16x32xf32> to vector<16x32xbf16>
    %c0_17 = arith.constant 0 : index
    %c0_18 = arith.constant 0 : index
    %24 = vector.load %arg10[%c0_17, %c0_18] : memref<32x32xbf16, #tpu.memory_space<vmem>>, vector<32x32xbf16>
    %cst_19 = arith.constant dense<0.000000e+00> : vector<16x32xf32>
    %25 = tpu.matmul %23, %24, %cst_19 {dimension_numbers = #tpu.dot_dimension_numbers<[1], [0], [0], [1], [0, 0, 1, 1], [], []>} : vector<16x32xbf16>, vector<32x32xbf16>, vector<16x32xf32> -> vector<16x32xf32>
    %26 = vector.broadcast %17 : vector<16x1xf32> to vector<16x32xf32>
    %27 = arith.mulf %26, %21 : vector<16x32xf32>
    %cst_20 = arith.constant 1.000000e+00 : f32
    %28 = vector.broadcast %cst_20 : f32 to vector<16x1xf32>
    %29 = arith.subf %28, %17 : vector<16x1xf32>
    %30 = vector.broadcast %29 : vector<16x1xf32> to vector<16x32xf32>
    %31 = arith.mulf %30, %25 : vector<16x32xf32>
    %32 = arith.addf %27, %31 : vector<16x32xf32>
    %c0_21 = arith.constant 0 : index
    %c0_22 = arith.constant 0 : index
    %33 = vector.load %arg11[%c0_21, %c0_22] : memref<16x32xf32, #tpu.memory_space<vmem>>, vector<16x32xf32>
    tpu.vector_store %arg11[%c0_21, %c0_22], %32 {strides = array<i32>} : memref<16x32xf32, #tpu.memory_space<vmem>>, vector<16x32xf32>,
    %c0_23 = arith.constant 0 : index
    %c0_24 = arith.constant 0 : index
    %34 = vector.load %arg4[%c0_23, %c0_24] : memref<16x1xf32, #tpu.memory_space<vmem>>, vector<16x1xf32>
    %35 = arith.mulf %17, %34 : vector<16x1xf32>
    %cst_25 = arith.constant 1.000000e+00 : f32
    %36 = vector.broadcast %cst_25 : f32 to vector<16x1xf32>
    %37 = arith.subf %36, %17 : vector<16x1xf32>
    %c0_26 = arith.constant 0 : index
    %c0_27 = arith.constant 0 : index
    %38 = vector.load %arg5[%c0_26, %c0_27] : memref<16x1xf32, #tpu.memory_space<vmem>>, vector<16x1xf32>
    %39 = arith.mulf %37, %38 : vector<16x1xf32>
    %40 = arith.addf %35, %39 : vector<16x1xf32>
    %c0_28 = arith.constant 0 : index
    %c0_29 = arith.constant 0 : index
    %41 = vector.load %arg12[%c0_28, %c0_29] : memref<16x1xf32, #tpu.memory_space<vmem>>, vector<16x1xf32>
    tpu.vector_store %arg12[%c0_28, %c0_29], %40 {strides = array<i32>} : memref<16x1xf32, #tpu.memory_space<vmem>>, vector<16x1xf32>,
    return
  }
  func.func @transform_0(%arg0: i32) -> (i32, i32) {
    %c0_i32 = arith.constant 0 : i32
    %c0_i32_0 = arith.constant 0 : i32
    return %arg0, %c0_i32 : i32, i32
  }
  func.func @transform_1(%arg0: i32) -> (i32, i32) {
    %c0_i32 = arith.constant 0 : i32
    %c0_i32_0 = arith.constant 0 : i32
    return %arg0, %c0_i32 : i32, i32
  }
  func.func @transform_2(%arg0: i32) -> (i32, i32) {
    %c0_i32 = arith.constant 0 : i32
    %c0_i32_0 = arith.constant 0 : i32
    return %arg0, %c0_i32 : i32, i32
  }
  func.func @transform_3(%arg0: i32) -> (i32, i32) {
    %c0_i32 = arith.constant 0 : i32
    %c0_i32_0 = arith.constant 0 : i32
    return %arg0, %c0_i32 : i32, i32
  }
  func.func @transform_4(%arg0: i32) -> (i32, i32) {
    %c0_i32 = arith.constant 0 : i32
    %c0_i32_0 = arith.constant 0 : i32
    return %arg0, %c0_i32 : i32, i32
  }
  func.func @transform_5(%arg0: i32) -> (i32, i32) {
    %c0_i32 = arith.constant 0 : i32
    %c0_i32_0 = arith.constant 0 : i32
    %c0_i32_1 = arith.constant 0 : i32
    return %c0_i32, %c0_i32_0 : i32, i32
  }
  func.func @transform_6(%arg0: i32) -> (i32, i32) {
    %c0_i32 = arith.constant 0 : i32
    %c0_i32_0 = arith.constant 0 : i32
    %c0_i32_1 = arith.constant 0 : i32
    return %c0_i32, %c0_i32_0 : i32, i32
  }
  func.func @transform_7(%arg0: i32) -> (i32, i32) {
    %c0_i32 = arith.constant 0 : i32
    %c0_i32_0 = arith.constant 0 : i32
    %c0_i32_1 = arith.constant 0 : i32
    return %c0_i32, %c0_i32_0 : i32, i32
  }
  func.func @transform_8(%arg0: i32) -> (i32, i32) {
    %c0_i32 = arith.constant 0 : i32
    %c0_i32_0 = arith.constant 0 : i32
    %c0_i32_1 = arith.constant 0 : i32
    return %c0_i32, %c0_i32_0 : i32, i32
  }
  func.func @transform_9(%arg0: i32) -> (i32, i32) {
    %c0_i32 = arith.constant 0 : i32
    %c0_i32_0 = arith.constant 0 : i32
    %c0_i32_1 = arith.constant 0 : i32
    return %c0_i32, %c0_i32_0 : i32, i32
  }
  func.func @transform_10(%arg0: i32) -> (i32, i32) {
    %c0_i32 = arith.constant 0 : i32
    %c0_i32_0 = arith.constant 0 : i32
    return %arg0, %c0_i32 : i32, i32
  }
  func.func @transform_11(%arg0: i32) -> (i32, i32) {
    %c0_i32 = arith.constant 0 : i32
    %c0_i32_0 = arith.constant 0 : i32
    return %arg0, %c0_i32 : i32, i32
  }
}

module attributes {stable_mosaic.version = 11 : i64} {
  func.func @_ffn_block_kernel(%arg0: i32, %arg1: memref<16x32xf32, #tpu.memory_space<vmem>>, %arg2: memref<1x32xf32, #tpu.memory_space<vmem>>, %arg3: memref<1x32xf32, #tpu.memory_space<vmem>>, %arg4: memref<32x64xbf16, #tpu.memory_space<vmem>>, %arg5: memref<1x64xf32, #tpu.memory_space<vmem>>, %arg6: memref<64x32xbf16, #tpu.memory_space<vmem>>, %arg7: memref<1x32xf32, #tpu.memory_space<vmem>>, %arg8: memref<16x32xf32, #tpu.memory_space<vmem>>) attributes {dimension_semantics = [#tpu.dimension_semantics<parallel>], iteration_bounds = array<i64: 1>, scalar_prefetch = 0 : i64, scratch_operands = 0 : i64, tpu.core_type = #tpu.core_type<tc>, window_params = [{transform_indices = @transform_0, window_bounds = array<i64: 16, 32>}, {pipeline_mode = #tpu.pipeline_mode<synchronous>, transform_indices = @transform_1, window_bounds = array<i64: 1, 32>}, {pipeline_mode = #tpu.pipeline_mode<synchronous>, transform_indices = @transform_2, window_bounds = array<i64: 1, 32>}, {pipeline_mode = #tpu.pipeline_mode<synchronous>, transform_indices = @transform_3, window_bounds = array<i64: 32, 64>}, {pipeline_mode = #tpu.pipeline_mode<synchronous>, transform_indices = @transform_4, window_bounds = array<i64: 1, 64>}, {pipeline_mode = #tpu.pipeline_mode<synchronous>, transform_indices = @transform_5, window_bounds = array<i64: 64, 32>}, {pipeline_mode = #tpu.pipeline_mode<synchronous>, transform_indices = @transform_6, window_bounds = array<i64: 1, 32>}, {transform_indices = @transform_7, window_bounds = array<i64: 16, 32>}]} {
    %c0 = arith.constant 0 : index
    %c0_0 = arith.constant 0 : index
    %0 = vector.load %arg1[%c0, %c0_0] : memref<16x32xf32, #tpu.memory_space<vmem>>, vector<16x32xf32>
    %c0_1 = arith.constant 0 : index
    %c0_2 = arith.constant 0 : index
    %1 = vector.load %arg2[%c0_1, %c0_2] : memref<1x32xf32, #tpu.memory_space<vmem>>, vector<1x32xf32>
    %c0_3 = arith.constant 0 : index
    %c0_4 = arith.constant 0 : index
    %2 = vector.load %arg3[%c0_3, %c0_4] : memref<1x32xf32, #tpu.memory_space<vmem>>, vector<1x32xf32>
    %cst = arith.constant dense<0.000000e+00> : vector<16xf32>
    %3 = vector.multi_reduction <add>, %0, %cst [1] : vector<16x32xf32> to vector<16xf32>
    %4 = vector.shape_cast %3 : vector<16xf32> to vector<16x1xf32>
    %cst_5 = arith.constant 3.200000e+01 : f32
    %5 = vector.broadcast %cst_5 : f32 to vector<16x1xf32>
    %6 = arith.divf %4, %5 : vector<16x1xf32>
    %7 = vector.broadcast %6 : vector<16x1xf32> to vector<16x32xf32>
    %8 = arith.subf %0, %7 : vector<16x32xf32>
    %9 = arith.mulf %8, %8 : vector<16x32xf32>
    %cst_6 = arith.constant dense<0.000000e+00> : vector<16xf32>
    %10 = vector.multi_reduction <add>, %9, %cst_6 [1] : vector<16x32xf32> to vector<16xf32>
    %11 = vector.shape_cast %10 : vector<16xf32> to vector<16x1xf32>
    %cst_7 = arith.constant 3.200000e+01 : f32
    %12 = vector.broadcast %cst_7 : f32 to vector<16x1xf32>
    %13 = arith.divf %11, %12 : vector<16x1xf32>
    %14 = vector.broadcast %6 : vector<16x1xf32> to vector<16x32xf32>
    %15 = arith.subf %0, %14 : vector<16x32xf32>
    %cst_8 = arith.constant 9.99999974E-6 : f32
    %16 = vector.broadcast %cst_8 : f32 to vector<16x1xf32>
    %17 = arith.addf %13, %16 : vector<16x1xf32>
    %18 = math.rsqrt %17 : vector<16x1xf32>
    %19 = vector.broadcast %18 : vector<16x1xf32> to vector<16x32xf32>
    %20 = arith.mulf %15, %19 : vector<16x32xf32>
    %21 = vector.broadcast %1 : vector<1x32xf32> to vector<16x32xf32>
    %22 = arith.mulf %20, %21 : vector<16x32xf32>
    %23 = vector.broadcast %2 : vector<1x32xf32> to vector<16x32xf32>
    %24 = arith.addf %22, %23 : vector<16x32xf32>
    %25 = arith.truncf %24 : vector<16x32xf32> to vector<16x32xbf16>
    %c0_9 = arith.constant 0 : index
    %c0_10 = arith.constant 0 : index
    %26 = vector.load %arg4[%c0_9, %c0_10] : memref<32x64xbf16, #tpu.memory_space<vmem>>, vector<32x64xbf16>
    %cst_11 = arith.constant dense<0.000000e+00> : vector<16x64xf32>
    %27 = tpu.matmul %25, %26, %cst_11 {dimension_numbers = #tpu.dot_dimension_numbers<[1], [0], [0], [1], [0, 0, 1, 1], [], []>} : vector<16x32xbf16>, vector<32x64xbf16>, vector<16x64xf32> -> vector<16x64xf32>
    %c0_12 = arith.constant 0 : index
    %c0_13 = arith.constant 0 : index
    %28 = vector.load %arg5[%c0_12, %c0_13] : memref<1x64xf32, #tpu.memory_space<vmem>>, vector<1x64xf32>
    %29 = vector.broadcast %28 : vector<1x64xf32> to vector<16x64xf32>
    %30 = arith.addf %27, %29 : vector<16x64xf32>
    %cst_14 = arith.constant 0.000000e+00 : f32
    %31 = vector.broadcast %cst_14 : f32 to vector<16x64xf32>
    %32 = arith.maximumf %30, %31 : vector<16x64xf32>
    %33 = arith.truncf %32 : vector<16x64xf32> to vector<16x64xbf16>
    %c0_15 = arith.constant 0 : index
    %c0_16 = arith.constant 0 : index
    %34 = vector.load %arg6[%c0_15, %c0_16] : memref<64x32xbf16, #tpu.memory_space<vmem>>, vector<64x32xbf16>
    %cst_17 = arith.constant dense<0.000000e+00> : vector<16x32xf32>
    %35 = tpu.matmul %33, %34, %cst_17 {dimension_numbers = #tpu.dot_dimension_numbers<[1], [0], [0], [1], [0, 0, 1, 1], [], []>} : vector<16x64xbf16>, vector<64x32xbf16>, vector<16x32xf32> -> vector<16x32xf32>
    %c0_18 = arith.constant 0 : index
    %c0_19 = arith.constant 0 : index
    %36 = vector.load %arg7[%c0_18, %c0_19] : memref<1x32xf32, #tpu.memory_space<vmem>>, vector<1x32xf32>
    %37 = vector.broadcast %36 : vector<1x32xf32> to vector<16x32xf32>
    %38 = arith.addf %35, %37 : vector<16x32xf32>
    %39 = arith.addf %0, %38 : vector<16x32xf32>
    %c0_20 = arith.constant 0 : index
    %c0_21 = arith.constant 0 : index
    %40 = vector.load %arg8[%c0_20, %c0_21] : memref<16x32xf32, #tpu.memory_space<vmem>>, vector<16x32xf32>
    tpu.vector_store %arg8[%c0_20, %c0_21], %39 {strides = array<i32>} : memref<16x32xf32, #tpu.memory_space<vmem>>, vector<16x32xf32>,
    return
  }
  func.func @transform_0(%arg0: i32) -> (i32, i32) {
    %c0_i32 = arith.constant 0 : i32
    %c0_i32_0 = arith.constant 0 : i32
    return %arg0, %c0_i32 : i32, i32
  }
  func.func @transform_1(%arg0: i32) -> (i32, i32) {
    %c0_i32 = arith.constant 0 : i32
    %c0_i32_0 = arith.constant 0 : i32
    %c0_i32_1 = arith.constant 0 : i32
    return %c0_i32, %c0_i32_0 : i32, i32
  }
  func.func @transform_2(%arg0: i32) -> (i32, i32) {
    %c0_i32 = arith.constant 0 : i32
    %c0_i32_0 = arith.constant 0 : i32
    %c0_i32_1 = arith.constant 0 : i32
    return %c0_i32, %c0_i32_0 : i32, i32
  }
  func.func @transform_3(%arg0: i32) -> (i32, i32) {
    %c0_i32 = arith.constant 0 : i32
    %c0_i32_0 = arith.constant 0 : i32
    %c0_i32_1 = arith.constant 0 : i32
    return %c0_i32, %c0_i32_0 : i32, i32
  }
  func.func @transform_4(%arg0: i32) -> (i32, i32) {
    %c0_i32 = arith.constant 0 : i32
    %c0_i32_0 = arith.constant 0 : i32
    %c0_i32_1 = arith.constant 0 : i32
    return %c0_i32, %c0_i32_0 : i32, i32
  }
  func.func @transform_5(%arg0: i32) -> (i32, i32) {
    %c0_i32 = arith.constant 0 : i32
    %c0_i32_0 = arith.constant 0 : i32
    %c0_i32_1 = arith.constant 0 : i32
    return %c0_i32, %c0_i32_0 : i32, i32
  }
  func.func @transform_6(%arg0: i32) -> (i32, i32) {
    %c0_i32 = arith.constant 0 : i32
    %c0_i32_0 = arith.constant 0 : i32
    %c0_i32_1 = arith.constant 0 : i32
    return %c0_i32, %c0_i32_0 : i32, i32
  }
  func.func @transform_7(%arg0: i32) -> (i32, i32) {
    %c0_i32 = arith.constant 0 : i32
    %c0_i32_0 = arith.constant 0 : i32
    return %arg0, %c0_i32 : i32, i32
  }
}

module attributes {stable_mosaic.version = 11 : i64} {
  func.func @_mha_block_kernel(%arg0: i32, %arg1: i32, %arg2: memref<1x8x32xf32, #tpu.memory_space<vmem>>, %arg3: memref<1x8x32xf32, #tpu.memory_space<vmem>>, %arg4: memref<1x1x8xf32, #tpu.memory_space<vmem>>, %arg5: memref<1x32xf32, #tpu.memory_space<vmem>>, %arg6: memref<1x32xf32, #tpu.memory_space<vmem>>, %arg7: memref<32x32xbf16, #tpu.memory_space<vmem>>, %arg8: memref<1x32xf32, #tpu.memory_space<vmem>>, %arg9: memref<32x32xbf16, #tpu.memory_space<vmem>>, %arg10: memref<1x32xf32, #tpu.memory_space<vmem>>, %arg11: memref<32x32xbf16, #tpu.memory_space<vmem>>, %arg12: memref<1x32xf32, #tpu.memory_space<vmem>>, %arg13: memref<32x32xbf16, #tpu.memory_space<vmem>>, %arg14: memref<1x32xf32, #tpu.memory_space<vmem>>, %arg15: memref<1x8x32xf32, #tpu.memory_space<vmem>>) attributes {dimension_semantics = [#tpu.dimension_semantics<parallel>, #tpu.dimension_semantics<parallel>], iteration_bounds = array<i64: 2, 1>, scalar_prefetch = 0 : i64, scratch_operands = 0 : i64, tpu.core_type = #tpu.core_type<tc>, window_params = [{transform_indices = @transform_0, window_bounds = array<i64: 1, 8, 32>}, {transform_indices = @transform_1, window_bounds = array<i64: 1, 8, 32>}, {transform_indices = @transform_2, window_bounds = array<i64: 1, 1, 8>}, {pipeline_mode = #tpu.pipeline_mode<synchronous>, transform_indices = @transform_3, window_bounds = array<i64: 1, 32>}, {pipeline_mode = #tpu.pipeline_mode<synchronous>, transform_indices = @transform_4, window_bounds = array<i64: 1, 32>}, {pipeline_mode = #tpu.pipeline_mode<synchronous>, transform_indices = @transform_5, window_bounds = array<i64: 32, 32>}, {pipeline_mode = #tpu.pipeline_mode<synchronous>, transform_indices = @transform_6, window_bounds = array<i64: 1, 32>}, {pipeline_mode = #tpu.pipeline_mode<synchronous>, transform_indices = @transform_7, window_bounds = array<i64: 32, 32>}, {pipeline_mode = #tpu.pipeline_mode<synchronous>, transform_indices = @transform_8, window_bounds = array<i64: 1, 32>}, {pipeline_mode = #tpu.pipeline_mode<synchronous>, transform_indices = @transform_9, window_bounds = array<i64: 32, 32>}, {pipeline_mode = #tpu.pipeline_mode<synchronous>, transform_indices = @transform_10, window_bounds = array<i64: 1, 32>}, {pipeline_mode = #tpu.pipeline_mode<synchronous>, transform_indices = @transform_11, window_bounds = array<i64: 32, 32>}, {pipeline_mode = #tpu.pipeline_mode<synchronous>, transform_indices = @transform_12, window_bounds = array<i64: 1, 32>}, {transform_indices = @transform_13, window_bounds = array<i64: 1, 8, 32>}]} {
    %c0 = arith.constant 0 : index
    %c0_0 = arith.constant 0 : index
    %0 = vector.load %arg5[%c0, %c0_0] : memref<1x32xf32, #tpu.memory_space<vmem>>, vector<1x32xf32>
    %c0_1 = arith.constant 0 : index
    %c0_2 = arith.constant 0 : index
    %1 = vector.load %arg6[%c0_1, %c0_2] : memref<1x32xf32, #tpu.memory_space<vmem>>, vector<1x32xf32>
    %c0_3 = arith.constant 0 : index
    %c0_4 = arith.constant 0 : index
    %c0_5 = arith.constant 0 : index
    %2 = vector.load %arg2[%c0_3, %c0_4, %c0_5] : memref<1x8x32xf32, #tpu.memory_space<vmem>>, vector<1x8x32xf32>
    %3 = vector.shape_cast %2 : vector<1x8x32xf32> to vector<8x32xf32>
    %cst = arith.constant dense<0.000000e+00> : vector<8xf32>
    %4 = vector.multi_reduction <add>, %3, %cst [1] : vector<8x32xf32> to vector<8xf32>
    %5 = vector.shape_cast %4 : vector<8xf32> to vector<8x1xf32>
    %cst_6 = arith.constant 3.200000e+01 : f32
    %6 = vector.broadcast %cst_6 : f32 to vector<8x1xf32>
    %7 = arith.divf %5, %6 : vector<8x1xf32>
    %8 = vector.broadcast %7 : vector<8x1xf32> to vector<8x32xf32>
    %9 = arith.subf %3, %8 : vector<8x32xf32>
    %10 = arith.mulf %9, %9 : vector<8x32xf32>
    %cst_7 = arith.constant dense<0.000000e+00> : vector<8xf32>
    %11 = vector.multi_reduction <add>, %10, %cst_7 [1] : vector<8x32xf32> to vector<8xf32>
    %12 = vector.shape_cast %11 : vector<8xf32> to vector<8x1xf32>
    %cst_8 = arith.constant 3.200000e+01 : f32
    %13 = vector.broadcast %cst_8 : f32 to vector<8x1xf32>
    %14 = arith.divf %12, %13 : vector<8x1xf32>
    %15 = vector.broadcast %7 : vector<8x1xf32> to vector<8x32xf32>
    %16 = arith.subf %3, %15 : vector<8x32xf32>
    %cst_9 = arith.constant 9.99999974E-6 : f32
    %17 = vector.broadcast %cst_9 : f32 to vector<8x1xf32>
    %18 = arith.addf %14, %17 : vector<8x1xf32>
    %19 = math.rsqrt %18 : vector<8x1xf32>
    %20 = vector.broadcast %19 : vector<8x1xf32> to vector<8x32xf32>
    %21 = arith.mulf %16, %20 : vector<8x32xf32>
    %22 = vector.broadcast %0 : vector<1x32xf32> to vector<8x32xf32>
    %23 = arith.mulf %21, %22 : vector<8x32xf32>
    %24 = vector.broadcast %1 : vector<1x32xf32> to vector<8x32xf32>
    %25 = arith.addf %23, %24 : vector<8x32xf32>
    %26 = arith.truncf %25 : vector<8x32xf32> to vector<8x32xbf16>
    %c0_10 = arith.constant 0 : index
    %c0_11 = arith.constant 0 : index
    %c0_12 = arith.constant 0 : index
    %27 = vector.load %arg3[%c0_10, %c0_11, %c0_12] : memref<1x8x32xf32, #tpu.memory_space<vmem>>, vector<1x8x32xf32>
    %28 = vector.shape_cast %27 : vector<1x8x32xf32> to vector<8x32xf32>
    %29 = arith.truncf %28 : vector<8x32xf32> to vector<8x32xbf16>
    %c0_13 = arith.constant 0 : index
    %c0_14 = arith.constant 0 : index
    %30 = vector.load %arg7[%c0_13, %c0_14] : memref<32x32xbf16, #tpu.memory_space<vmem>>, vector<32x32xbf16>
    %cst_15 = arith.constant dense<0.000000e+00> : vector<8x32xf32>
    %31 = tpu.matmul %26, %30, %cst_15 {dimension_numbers = #tpu.dot_dimension_numbers<[1], [0], [0], [1], [0, 0, 1, 1], [], []>} : vector<8x32xbf16>, vector<32x32xbf16>, vector<8x32xf32> -> vector<8x32xf32>
    %c0_16 = arith.constant 0 : index
    %c0_17 = arith.constant 0 : index
    %32 = vector.load %arg8[%c0_16, %c0_17] : memref<1x32xf32, #tpu.memory_space<vmem>>, vector<1x32xf32>
    %33 = vector.broadcast %32 : vector<1x32xf32> to vector<8x32xf32>
    %34 = arith.addf %31, %33 : vector<8x32xf32>
    %c0_18 = arith.constant 0 : index
    %c0_19 = arith.constant 0 : index
    %35 = vector.load %arg9[%c0_18, %c0_19] : memref<32x32xbf16, #tpu.memory_space<vmem>>, vector<32x32xbf16>
    %cst_20 = arith.constant dense<0.000000e+00> : vector<8x32xf32>
    %36 = tpu.matmul %29, %35, %cst_20 {dimension_numbers = #tpu.dot_dimension_numbers<[1], [0], [0], [1], [0, 0, 1, 1], [], []>} : vector<8x32xbf16>, vector<32x32xbf16>, vector<8x32xf32> -> vector<8x32xf32>
    %c0_21 = arith.constant 0 : index
    %c0_22 = arith.constant 0 : index
    %37 = vector.load %arg10[%c0_21, %c0_22] : memref<1x32xf32, #tpu.memory_space<vmem>>, vector<1x32xf32>
    %38 = vector.broadcast %37 : vector<1x32xf32> to vector<8x32xf32>
    %39 = arith.addf %36, %38 : vector<8x32xf32>
    %c0_23 = arith.constant 0 : index
    %c0_24 = arith.constant 0 : index
    %40 = vector.load %arg11[%c0_23, %c0_24] : memref<32x32xbf16, #tpu.memory_space<vmem>>, vector<32x32xbf16>
    %cst_25 = arith.constant dense<0.000000e+00> : vector<8x32xf32>
    %41 = tpu.matmul %29, %40, %cst_25 {dimension_numbers = #tpu.dot_dimension_numbers<[1], [0], [0], [1], [0, 0, 1, 1], [], []>} : vector<8x32xbf16>, vector<32x32xbf16>, vector<8x32xf32> -> vector<8x32xf32>
    %c0_26 = arith.constant 0 : index
    %c0_27 = arith.constant 0 : index
    %42 = vector.load %arg12[%c0_26, %c0_27] : memref<1x32xf32, #tpu.memory_space<vmem>>, vector<1x32xf32>
    %43 = vector.broadcast %42 : vector<1x32xf32> to vector<8x32xf32>
    %44 = arith.addf %41, %43 : vector<8x32xf32>
    %cst_28 = arith.constant 0.353553385 : f32
    %45 = vector.broadcast %cst_28 : f32 to vector<8x32xf32>
    %46 = arith.mulf %34, %45 : vector<8x32xf32>
    %c0_29 = arith.constant 0 : index
    %c0_30 = arith.constant 0 : index
    %c0_31 = arith.constant 0 : index
    %47 = vector.load %arg4[%c0_29, %c0_30, %c0_31] : memref<1x1x8xf32, #tpu.memory_space<vmem>>, vector<1x1x8xf32>
    %48 = vector.shape_cast %47 : vector<1x1x8xf32> to vector<1x8xf32>
    %cst_32 = arith.constant 0.000000e+00 : f32
    %49 = vector.broadcast %cst_32 : f32 to vector<1x8xf32>
    %50 = arith.cmpf one, %48, %49 : vector<1x8xf32>
    %51 = vector.extract_strided_slice %46 {offsets = [0, 0], sizes = [8, 8], strides = [1, 1]} : vector<8x32xf32> to vector<8x8xf32>
    %52 = arith.truncf %51 : vector<8x8xf32> to vector<8x8xbf16>
    %53 = vector.extract_strided_slice %39 {offsets = [0, 0], sizes = [8, 8], strides = [1, 1]} : vector<8x32xf32> to vector<8x8xf32>
    %54 = arith.truncf %53 : vector<8x8xf32> to vector<8x8xbf16>
    %55 = vector.extract_strided_slice %44 {offsets = [0, 0], sizes = [8, 8], strides = [1, 1]} : vector<8x32xf32> to vector<8x8xf32>
    %56 = arith.truncf %55 : vector<8x8xf32> to vector<8x8xbf16>
    %cst_33 = arith.constant dense<0.000000e+00> : vector<8x8xf32>
    %57 = tpu.matmul %52, %54, %cst_33 {dimension_numbers = #tpu.dot_dimension_numbers<[1], [1], [0], [0], [0, 0, 1, 0], [], []>} : vector<8x8xbf16>, vector<8x8xbf16>, vector<8x8xf32> -> vector<8x8xf32>
    %cst_34 = arith.constant -1.000000e+30 : f32
    %58 = vector.shape_cast %50 : vector<1x8xi1> to vector<1x8xi1>
    %59 = vector.broadcast %58 : vector<1x8xi1> to vector<8x8xi1>
    %60 = vector.broadcast %cst_34 : f32 to vector<8x8xf32>
    %61 = arith.select %59, %60, %57 : vector<8x8xi1>, vector<8x8xf32>
    %cst_35 = arith.constant dense<0xFF800000> : vector<8xf32>
    %62 = vector.multi_reduction <maximumf>, %61, %cst_35 [1] : vector<8x8xf32> to vector<8xf32>
    %63 = vector.shape_cast %62 : vector<8xf32> to vector<8x1xf32>
    %64 = vector.broadcast %63 : vector<8x1xf32> to vector<8x8xf32>
    %65 = arith.subf %61, %64 : vector<8x8xf32>
    %66 = math.exp %65 : vector<8x8xf32>
    %cst_36 = arith.constant dense<0.000000e+00> : vector<8xf32>
    %67 = vector.multi_reduction <add>, %66, %cst_36 [1] : vector<8x8xf32> to vector<8xf32>
    %68 = vector.shape_cast %67 : vector<8xf32> to vector<8x1xf32>
    %69 = tpu.reciprocal %68 : vector<8x1xf32> -> vector<8x1xf32>
    %70 = vector.broadcast %69 : vector<8x1xf32> to vector<8x8xf32>
    %71 = arith.mulf %66, %70 : vector<8x8xf32>
    %72 = arith.truncf %71 : vector<8x8xf32> to vector<8x8xbf16>
    %cst_37 = arith.constant dense<0.000000e+00> : vector<8x8xf32>
    %73 = tpu.matmul %72, %56, %cst_37 {dimension_numbers = #tpu.dot_dimension_numbers<[1], [0], [0], [1], [0, 0, 1, 1], [], []>} : vector<8x8xbf16>, vector<8x8xbf16>, vector<8x8xf32> -> vector<8x8xf32>
    %74 = vector.extract_strided_slice %46 {offsets = [0, 8], sizes = [8, 8], strides = [1, 1]} : vector<8x32xf32> to vector<8x8xf32>
    %75 = arith.truncf %74 : vector<8x8xf32> to vector<8x8xbf16>
    %76 = vector.extract_strided_slice %39 {offsets = [0, 8], sizes = [8, 8], strides = [1, 1]} : vector<8x32xf32> to vector<8x8xf32>
    %77 = arith.truncf %76 : vector<8x8xf32> to vector<8x8xbf16>
    %78 = vector.extract_strided_slice %44 {offsets = [0, 8], sizes = [8, 8], strides = [1, 1]} : vector<8x32xf32> to vector<8x8xf32>
    %79 = arith.truncf %78 : vector<8x8xf32> to vector<8x8xbf16>
    %cst_38 = arith.constant dense<0.000000e+00> : vector<8x8xf32>
    %80 = tpu.matmul %75, %77, %cst_38 {dimension_numbers = #tpu.dot_dimension_numbers<[1], [1], [0], [0], [0, 0, 1, 0], [], []>} : vector<8x8xbf16>, vector<8x8xbf16>, vector<8x8xf32> -> vector<8x8xf32>
    %cst_39 = arith.constant -1.000000e+30 : f32
    %81 = vector.shape_cast %50 : vector<1x8xi1> to vector<1x8xi1>
    %82 = vector.broadcast %81 : vector<1x8xi1> to vector<8x8xi1>
    %83 = vector.broadcast %cst_39 : f32 to vector<8x8xf32>
    %84 = arith.select %82, %83, %80 : vector<8x8xi1>, vector<8x8xf32>
    %cst_40 = arith.constant dense<0xFF800000> : vector<8xf32>
    %85 = vector.multi_reduction <maximumf>, %84, %cst_40 [1] : vector<8x8xf32> to vector<8xf32>
    %86 = vector.shape_cast %85 : vector<8xf32> to vector<8x1xf32>
    %87 = vector.broadcast %86 : vector<8x1xf32> to vector<8x8xf32>
    %88 = arith.subf %84, %87 : vector<8x8xf32>
    %89 = math.exp %88 : vector<8x8xf32>
    %cst_41 = arith.constant dense<0.000000e+00> : vector<8xf32>
    %90 = vector.multi_reduction <add>, %89, %cst_41 [1] : vector<8x8xf32> to vector<8xf32>
    %91 = vector.shape_cast %90 : vector<8xf32> to vector<8x1xf32>
    %92 = tpu.reciprocal %91 : vector<8x1xf32> -> vector<8x1xf32>
    %93 = vector.broadcast %92 : vector<8x1xf32> to vector<8x8xf32>
    %94 = arith.mulf %89, %93 : vector<8x8xf32>
    %95 = arith.truncf %94 : vector<8x8xf32> to vector<8x8xbf16>
    %cst_42 = arith.constant dense<0.000000e+00> : vector<8x8xf32>
    %96 = tpu.matmul %95, %79, %cst_42 {dimension_numbers = #tpu.dot_dimension_numbers<[1], [0], [0], [1], [0, 0, 1, 1], [], []>} : vector<8x8xbf16>, vector<8x8xbf16>, vector<8x8xf32> -> vector<8x8xf32>
    %97 = vector.extract_strided_slice %46 {offsets = [0, 16], sizes = [8, 8], strides = [1, 1]} : vector<8x32xf32> to vector<8x8xf32>
    %98 = arith.truncf %97 : vector<8x8xf32> to vector<8x8xbf16>
    %99 = vector.extract_strided_slice %39 {offsets = [0, 16], sizes = [8, 8], strides = [1, 1]} : vector<8x32xf32> to vector<8x8xf32>
    %100 = arith.truncf %99 : vector<8x8xf32> to vector<8x8xbf16>
    %101 = vector.extract_strided_slice %44 {offsets = [0, 16], sizes = [8, 8], strides = [1, 1]} : vector<8x32xf32> to vector<8x8xf32>
    %102 = arith.truncf %101 : vector<8x8xf32> to vector<8x8xbf16>
    %cst_43 = arith.constant dense<0.000000e+00> : vector<8x8xf32>
    %103 = tpu.matmul %98, %100, %cst_43 {dimension_numbers = #tpu.dot_dimension_numbers<[1], [1], [0], [0], [0, 0, 1, 0], [], []>} : vector<8x8xbf16>, vector<8x8xbf16>, vector<8x8xf32> -> vector<8x8xf32>
    %cst_44 = arith.constant -1.000000e+30 : f32
    %104 = vector.shape_cast %50 : vector<1x8xi1> to vector<1x8xi1>
    %105 = vector.broadcast %104 : vector<1x8xi1> to vector<8x8xi1>
    %106 = vector.broadcast %cst_44 : f32 to vector<8x8xf32>
    %107 = arith.select %105, %106, %103 : vector<8x8xi1>, vector<8x8xf32>
    %cst_45 = arith.constant dense<0xFF800000> : vector<8xf32>
    %108 = vector.multi_reduction <maximumf>, %107, %cst_45 [1] : vector<8x8xf32> to vector<8xf32>
    %109 = vector.shape_cast %108 : vector<8xf32> to vector<8x1xf32>
    %110 = vector.broadcast %109 : vector<8x1xf32> to vector<8x8xf32>
    %111 = arith.subf %107, %110 : vector<8x8xf32>
    %112 = math.exp %111 : vector<8x8xf32>
    %cst_46 = arith.constant dense<0.000000e+00> : vector<8xf32>
    %113 = vector.multi_reduction <add>, %112, %cst_46 [1] : vector<8x8xf32> to vector<8xf32>
    %114 = vector.shape_cast %113 : vector<8xf32> to vector<8x1xf32>
    %115 = tpu.reciprocal %114 : vector<8x1xf32> -> vector<8x1xf32>
    %116 = vector.broadcast %115 : vector<8x1xf32> to vector<8x8xf32>
    %117 = arith.mulf %112, %116 : vector<8x8xf32>
    %118 = arith.truncf %117 : vector<8x8xf32> to vector<8x8xbf16>
    %cst_47 = arith.constant dense<0.000000e+00> : vector<8x8xf32>
    %119 = tpu.matmul %118, %102, %cst_47 {dimension_numbers = #tpu.dot_dimension_numbers<[1], [0], [0], [1], [0, 0, 1, 1], [], []>} : vector<8x8xbf16>, vector<8x8xbf16>, vector<8x8xf32> -> vector<8x8xf32>
    %120 = vector.extract_strided_slice %46 {offsets = [0, 24], sizes = [8, 8], strides = [1, 1]} : vector<8x32xf32> to vector<8x8xf32>
    %121 = arith.truncf %120 : vector<8x8xf32> to vector<8x8xbf16>
    %122 = vector.extract_strided_slice %39 {offsets = [0, 24], sizes = [8, 8], strides = [1, 1]} : vector<8x32xf32> to vector<8x8xf32>
    %123 = arith.truncf %122 : vector<8x8xf32> to vector<8x8xbf16>
    %124 = vector.extract_strided_slice %44 {offsets = [0, 24], sizes = [8, 8], strides = [1, 1]} : vector<8x32xf32> to vector<8x8xf32>
    %125 = arith.truncf %124 : vector<8x8xf32> to vector<8x8xbf16>
    %cst_48 = arith.constant dense<0.000000e+00> : vector<8x8xf32>
    %126 = tpu.matmul %121, %123, %cst_48 {dimension_numbers = #tpu.dot_dimension_numbers<[1], [1], [0], [0], [0, 0, 1, 0], [], []>} : vector<8x8xbf16>, vector<8x8xbf16>, vector<8x8xf32> -> vector<8x8xf32>
    %cst_49 = arith.constant -1.000000e+30 : f32
    %127 = vector.shape_cast %50 : vector<1x8xi1> to vector<1x8xi1>
    %128 = vector.broadcast %127 : vector<1x8xi1> to vector<8x8xi1>
    %129 = vector.broadcast %cst_49 : f32 to vector<8x8xf32>
    %130 = arith.select %128, %129, %126 : vector<8x8xi1>, vector<8x8xf32>
    %cst_50 = arith.constant dense<0xFF800000> : vector<8xf32>
    %131 = vector.multi_reduction <maximumf>, %130, %cst_50 [1] : vector<8x8xf32> to vector<8xf32>
    %132 = vector.shape_cast %131 : vector<8xf32> to vector<8x1xf32>
    %133 = vector.broadcast %132 : vector<8x1xf32> to vector<8x8xf32>
    %134 = arith.subf %130, %133 : vector<8x8xf32>
    %135 = math.exp %134 : vector<8x8xf32>
    %cst_51 = arith.constant dense<0.000000e+00> : vector<8xf32>
    %136 = vector.multi_reduction <add>, %135, %cst_51 [1] : vector<8x8xf32> to vector<8xf32>
    %137 = vector.shape_cast %136 : vector<8xf32> to vector<8x1xf32>
    %138 = tpu.reciprocal %137 : vector<8x1xf32> -> vector<8x1xf32>
    %139 = vector.broadcast %138 : vector<8x1xf32> to vector<8x8xf32>
    %140 = arith.mulf %135, %139 : vector<8x8xf32>
    %141 = arith.truncf %140 : vector<8x8xf32> to vector<8x8xbf16>
    %cst_52 = arith.constant dense<0.000000e+00> : vector<8x8xf32>
    %142 = tpu.matmul %141, %125, %cst_52 {dimension_numbers = #tpu.dot_dimension_numbers<[1], [0], [0], [1], [0, 0, 1, 1], [], []>} : vector<8x8xbf16>, vector<8x8xbf16>, vector<8x8xf32> -> vector<8x8xf32>
    %143 = tpu.concatenate %73, %96, %119, %142 in 1 : vector<8x8xf32>, vector<8x8xf32>, vector<8x8xf32>, vector<8x8xf32> -> vector<8x32xf32>
    %144 = arith.truncf %143 : vector<8x32xf32> to vector<8x32xbf16>
    %c0_53 = arith.constant 0 : index
    %c0_54 = arith.constant 0 : index
    %145 = vector.load %arg13[%c0_53, %c0_54] : memref<32x32xbf16, #tpu.memory_space<vmem>>, vector<32x32xbf16>
    %cst_55 = arith.constant dense<0.000000e+00> : vector<8x32xf32>
    %146 = tpu.matmul %144, %145, %cst_55 {dimension_numbers = #tpu.dot_dimension_numbers<[1], [0], [0], [1], [0, 0, 1, 1], [], []>} : vector<8x32xbf16>, vector<32x32xbf16>, vector<8x32xf32> -> vector<8x32xf32>
    %c0_56 = arith.constant 0 : index
    %c0_57 = arith.constant 0 : index
    %147 = vector.load %arg14[%c0_56, %c0_57] : memref<1x32xf32, #tpu.memory_space<vmem>>, vector<1x32xf32>
    %148 = vector.broadcast %147 : vector<1x32xf32> to vector<8x32xf32>
    %149 = arith.addf %146, %148 : vector<8x32xf32>
    %150 = arith.addf %3, %149 : vector<8x32xf32>
    %c0_58 = arith.constant 0 : index
    %c0_59 = arith.constant 0 : index
    %c0_60 = arith.constant 0 : index
    %151 = vector.load %arg15[%c0_58, %c0_59, %c0_60] : memref<1x8x32xf32, #tpu.memory_space<vmem>>, vector<1x8x32xf32>
    %152 = vector.shape_cast %151 : vector<1x8x32xf32> to vector<8x32xf32>
    %153 = vector.shape_cast %150 : vector<8x32xf32> to vector<1x8x32xf32>
    tpu.vector_store %arg15[%c0_58, %c0_59, %c0_60], %153 {strides = array<i32>} : memref<1x8x32xf32, #tpu.memory_space<vmem>>, vector<1x8x32xf32>,
    return
  }
  func.func @transform_0(%arg0: i32, %arg1: i32) -> (i32, i32, i32) {
    %c0_i32 = arith.constant 0 : i32
    %c0_i32_0 = arith.constant 0 : i32
    return %arg0, %arg1, %c0_i32 : i32, i32, i32
  }
  func.func @transform_1(%arg0: i32, %arg1: i32) -> (i32, i32, i32) {
    %c0_i32 = arith.constant 0 : i32
    %c0_i32_0 = arith.constant 0 : i32
    %c0_i32_1 = arith.constant 0 : i32
    return %arg0, %c0_i32, %c0_i32_0 : i32, i32, i32
  }
  func.func @transform_2(%arg0: i32, %arg1: i32) -> (i32, i32, i32) {
    %c0_i32 = arith.constant 0 : i32
    %c0_i32_0 = arith.constant 0 : i32
    %c0_i32_1 = arith.constant 0 : i32
    return %arg0, %c0_i32, %c0_i32_0 : i32, i32, i32
  }
  func.func @transform_3(%arg0: i32, %arg1: i32) -> (i32, i32) {
    %c0_i32 = arith.constant 0 : i32
    %c0_i32_0 = arith.constant 0 : i32
    %c0_i32_1 = arith.constant 0 : i32
    return %c0_i32, %c0_i32_0 : i32, i32
  }
  func.func @transform_4(%arg0: i32, %arg1: i32) -> (i32, i32) {
    %c0_i32 = arith.constant 0 : i32
    %c0_i32_0 = arith.constant 0 : i32
    %c0_i32_1 = arith.constant 0 : i32
    return %c0_i32, %c0_i32_0 : i32, i32
  }
  func.func @transform_5(%arg0: i32, %arg1: i32) -> (i32, i32) {
    %c0_i32 = arith.constant 0 : i32
    %c0_i32_0 = arith.constant 0 : i32
    %c0_i32_1 = arith.constant 0 : i32
    return %c0_i32, %c0_i32_0 : i32, i32
  }
  func.func @transform_6(%arg0: i32, %arg1: i32) -> (i32, i32) {
    %c0_i32 = arith.constant 0 : i32
    %c0_i32_0 = arith.constant 0 : i32
    %c0_i32_1 = arith.constant 0 : i32
    return %c0_i32, %c0_i32_0 : i32, i32
  }
  func.func @transform_7(%arg0: i32, %arg1: i32) -> (i32, i32) {
    %c0_i32 = arith.constant 0 : i32
    %c0_i32_0 = arith.constant 0 : i32
    %c0_i32_1 = arith.constant 0 : i32
    return %c0_i32, %c0_i32_0 : i32, i32
  }
  func.func @transform_8(%arg0: i32, %arg1: i32) -> (i32, i32) {
    %c0_i32 = arith.constant 0 : i32
    %c0_i32_0 = arith.constant 0 : i32
    %c0_i32_1 = arith.constant 0 : i32
    return %c0_i32, %c0_i32_0 : i32, i32
  }
  func.func @transform_9(%arg0: i32, %arg1: i32) -> (i32, i32) {
    %c0_i32 = arith.constant 0 : i32
    %c0_i32_0 = arith.constant 0 : i32
    %c0_i32_1 = arith.constant 0 : i32
    return %c0_i32, %c0_i32_0 : i32, i32
  }
  func.func @transform_10(%arg0: i32, %arg1: i32) -> (i32, i32) {
    %c0_i32 = arith.constant 0 : i32
    %c0_i32_0 = arith.constant 0 : i32
    %c0_i32_1 = arith.constant 0 : i32
    return %c0_i32, %c0_i32_0 : i32, i32
  }
  func.func @transform_11(%arg0: i32, %arg1: i32) -> (i32, i32) {
    %c0_i32 = arith.constant 0 : i32
    %c0_i32_0 = arith.constant 0 : i32
    %c0_i32_1 = arith.constant 0 : i32
    return %c0_i32, %c0_i32_0 : i32, i32
  }
  func.func @transform_12(%arg0: i32, %arg1: i32) -> (i32, i32) {
    %c0_i32 = arith.constant 0 : i32
    %c0_i32_0 = arith.constant 0 : i32
    %c0_i32_1 = arith.constant 0 : i32
    return %c0_i32, %c0_i32_0 : i32, i32
  }
  func.func @transform_13(%arg0: i32, %arg1: i32) -> (i32, i32, i32) {
    %c0_i32 = arith.constant 0 : i32
    %c0_i32_0 = arith.constant 0 : i32
    return %arg0, %arg1, %c0_i32 : i32, i32, i32
  }
}

</mosaic_0001>

<llo_original>
// kernel: _lambda_.8
$region0: #{_lambda_.8}
  #allocation0 [shape = 'u32[]', space=smem, size = 0x4, offset = 0x4, fixed_abs, tag = 'smem constant byte address 0x4 - core index']
  #allocation1 [shape = 'u32[144,128]{1,0:T(1,128)}', space=vmem, size = 0x12000, scoped, tag = 'internal scratch']
  %s0 = inlined_call_operand.vmem [shape: f32[32,32], index: 0, kind: input, shape index: {}]
  %s1 = inlined_call_operand.vmem [shape: f32[1,32], index: 1, kind: input, shape index: {}]
  %s2 = inlined_call_operand.vmem [shape: f32[1,32], index: 2, kind: input, shape index: {}]
  %s3 = inlined_call_operand.vmem [shape: bf16[32,64], index: 3, kind: input, shape index: {}]
  %s4 = inlined_call_operand.vmem [shape: f32[1,64], index: 4, kind: input, shape index: {}]
  %s5 = inlined_call_operand.vmem [shape: bf16[64,32], index: 5, kind: input, shape index: {}]
  %s6 = inlined_call_operand.vmem [shape: f32[1,32], index: 6, kind: input, shape index: {}]
  %s7 = inlined_call_operand.vmem [shape: f32[32,32], index: 7, kind: output, shape index: {}]
  %s8 = sld [smem:[#allocation0]]
  $region38: #{_lambda_.8} parent=0
    _
  %s10 = ssub.s32 1, %s8
  %s11 = scalar_select 0, %s10, %s8
  // Predicated region
  $region2: #{_lambda_.8} parent=0 // pred_check
    _
  $region3: #{_lambda_.8} parent=0 // pred_check_branch
    %13 = sbr.rel (0) target = $region5
  $region4: #{_lambda_.8} parent=0 // pred_region
    _
  $region5: #{_lambda_.8} parent=0 // pred_fallthru
    _
  // Predicated region
  $region6: #{_lambda_.8} parent=0 // pred_check
    _
  $region7: #{_lambda_.8} parent=0 // pred_check_branch
    %15 = sbr.rel (0) target = $region9
  $region8: #{_lambda_.8} parent=0 // pred_region
    _
  $region9: #{_lambda_.8} parent=0 // pred_fallthru
    _
  // Predicated region
  $region10: #{_lambda_.8} parent=0 // pred_check
    _
  $region11: #{_lambda_.8} parent=0 // pred_check_branch
    %17 = sbr.rel (0) target = $region13
  $region12: #{_lambda_.8} parent=0 // pred_region
    _
  $region13: #{_lambda_.8} parent=0 // pred_fallthru
    _
  // Predicated region
  $region14: #{_lambda_.8} parent=0 // pred_check
    _
  $region15: #{_lambda_.8} parent=0 // pred_check_branch
    %19 = sbr.rel (0) target = $region17
  $region16: #{_lambda_.8} parent=0 // pred_region
    _
  $region17: #{_lambda_.8} parent=0 // pred_fallthru
    _
  // Predicated region
  $region18: #{_lambda_.8} parent=0 // pred_check
    _
  $region19: #{_lambda_.8} parent=0 // pred_check_branch
    %21 = sbr.rel (0) target = $region21
  $region20: #{_lambda_.8} parent=0 // pred_region
    _
  $region21: #{_lambda_.8} parent=0 // pred_fallthru
    _
  // Predicated region
  $region22: #{_lambda_.8} parent=0 // pred_check
    _
  $region23: #{_lambda_.8} parent=0 // pred_check_branch
    %23 = sbr.rel (0) target = $region25
  $region24: #{_lambda_.8} parent=0 // pred_region
    _
  $region25: #{_lambda_.8} parent=0 // pred_fallthru
    _
  // Predicated region
  $region26: #{_lambda_.8} parent=0 // pred_check
    _
  $region27: #{_lambda_.8} parent=0 // pred_check_branch
    %25 = sbr.rel (0) target = $region29
  $region28: #{_lambda_.8} parent=0 // pred_region
    _
  $region29: #{_lambda_.8} parent=0 // pred_fallthru
    _
  %v27 = vld [vmem:[%s0] sm:$0xff]
  %v28 = vld [vmem:[%s0 + $0x8] sm:$0xff]
  %v29 = vld [vmem:[%s0 + $0x10] sm:$0xff]
  %v30 = vld [vmem:[%s0 + $0x18] sm:$0xff]
  %v31 = vld [vmem:[%s1] sm:$0x1]
  %v32 = vld [vmem:[%s2] sm:$0x1]
  %vm33 = vcmask 261120
  %v34 = vsel %vm33, %v27, 0.0
  %35 = vadd.xlane.f32.xlu0 %v34
  %v36 = vpop.xlane.xlu0 %35
  %v37 = vsel %vm33, %v28, 0.0
  %38 = vadd.xlane.f32.xlu0 %v37
  %v39 = vpop.xlane.xlu0 %38
  %v40 = vsel %vm33, %v29, 0.0
  %41 = vadd.xlane.f32.xlu0 %v40
  %v42 = vpop.xlane.xlu0 %41
  %v43 = vsel %vm33, %v30, 0.0
  %44 = vadd.xlane.f32.xlu0 %v43
  %v45 = vpop.xlane.xlu0 %44
  %v46 = vrcp.pop 32.0
  %v47 = vmul.f32 %v36, %v46
  %v48 = vmul.f32 %v39, %v46
  %v49 = vmul.f32 %v42, %v46
  %v50 = vmul.f32 %v45, %v46
  %v51 = vsub.f32 %v27, %v47
  %v52 = vsub.f32 %v28, %v48
  %v53 = vsub.f32 %v29, %v49
  %v54 = vsub.f32 %v30, %v50
  %v55 = vmul.f32 %v51, %v51
  %v56 = vmul.f32 %v52, %v52
  %v57 = vmul.f32 %v53, %v53
  %v58 = vmul.f32 %v54, %v54
  %v59 = vsel %vm33, %v55, 0.0
  %60 = vadd.xlane.f32.xlu0 %v59
  %v61 = vpop.xlane.xlu0 %60
  %v62 = vsel %vm33, %v56, 0.0
  %63 = vadd.xlane.f32.xlu0 %v62
  %v64 = vpop.xlane.xlu0 %63
  %v65 = vsel %vm33, %v57, 0.0
  %66 = vadd.xlane.f32.xlu0 %v65
  %v67 = vpop.xlane.xlu0 %66
  %v68 = vsel %vm33, %v58, 0.0
  %69 = vadd.xlane.f32.xlu0 %v68
  %v70 = vpop.xlane.xlu0 %69
  %v71 = vmul.f32 %v61, %v46
  %v72 = vmul.f32 %v64, %v46
  %v73 = vmul.f32 %v67, %v46
  %v74 = vmul.f32 %v70, %v46
  %v75 = vadd.f32 %v71, 1e-05
  %v76 = vadd.f32 %v72, 1e-05
  %v77 = vadd.f32 %v73, 1e-05
  %v78 = vadd.f32 %v74, 1e-05
  %v79 = vrsqrt.pop %v75
  %v80 = vrsqrt.pop %v76
  %v81 = vrsqrt.pop %v77
  %v82 = vrsqrt.pop %v78
  %v83 = vmul.f32 %v51, %v79
  %v84 = vmul.f32 %v52, %v80
  %v85 = vmul.f32 %v53, %v81
  %v86 = vmul.f32 %v54, %v82
  %v88 = vlaneseq
  %v89 = vshrl.u32 %v88, 7
  %v90 = vsub.s32 0, %v89
  %v91 = vrot.slane %v31, %v90
  %v93 = vmul.f32 %v83, %v91
  %v94 = vmul.f32 %v84, %v91
  %v95 = vmul.f32 %v85, %v91
  %v96 = vmul.f32 %v86, %v91
  %v98 = vlaneseq
  %v99 = vshrl.u32 %v98, 7
  %v100 = vsub.s32 0, %v99
  %v101 = vrot.slane %v32, %v100
  %v103 = vadd.f32 %v93, %v101
  %v104 = vadd.f32 %v94, %v101
  %v105 = vadd.f32 %v95, %v101
  %v106 = vadd.f32 %v96, %v101
  %v107 = vpack.c.bf16 %v104, %v103
  %v108 = vpack.c.bf16 %v106, %v105
  %v109 = vld [vmem:[%s3] sm:$0xf]
  %v110 = vld [vmem:[%s3 + $0x4] sm:$0xf]
  %v111 = vld [vmem:[%s3 + $0x8] sm:$0xf]
  %v112 = vld [vmem:[%s3 + $0xc] sm:$0xf]
  %v113 = vld [vmem:[%s4] sm:$0x1]
  %v115 = vlaneseq
  %v116 = vshrl.u32 %v115, 7
  %v117 = vsub.s32 0, %v116
  %v118 = vrot.slane %v113, %v117
  %v124 = vunpack.c.l.b16 %v109
  %v125 = vunpack.c.l.b16 %v110
  %v126 = vunpack.c.l.b16 %v111
  %v127 = vunpack.c.l.b16 %v112
  %v128 = vpack.c.b16 %v125, %v124
  %v129 = vpack.c.b16 %v127, %v126
  %v133 = vsel %vm33, %v107, 0
  %v136 = vsel %vm33, %v108, 0
  %138 = vmatprep.subr.bf16.mxu0 0
  %139 = vmatpush1.bf16.msra.mxu0 %v128
  %140 = vmatprep.subr.bf16.mxu0 0
  %141 = vmatpush1.bf16.msra.mxu0 %v129
  %142 = vmatprep.subr.bf16.mxu0 0
  %143 = vmatpush1.bf16.msra.mxu0 0
  %144 = vmatprep.subr.bf16.mxu0 0
  %145 = vmatpush1.bf16.msra.mxu0 0
  %146 = vmatprep.subr.bf16.mxu0 0
  %147 = vmatpush1.bf16.msra.mxu0 0
  %148 = vmatprep.subr.bf16.mxu0 0
  %149 = vmatpush1.bf16.msra.mxu0 0
  %150 = vmatprep.subr.bf16.mxu0 0
  %151 = vmatpush1.bf16.msra.mxu0 0
  %152 = vmatprep.subr.bf16.mxu0 0
  %153 = vmatpush1.bf16.msra.mxu0 0
  %154 = vmatprep.subr.bf16.mxu0 0
  %155 = vmatpush1.bf16.msra.mxu0 0
  %156 = vmatprep.subr.bf16.mxu0 0
  %157 = vmatpush1.bf16.msra.mxu0 0
  %158 = vmatprep.subr.bf16.mxu0 0
  %159 = vmatpush1.bf16.msra.mxu0 0
  %160 = vmatprep.subr.bf16.mxu0 0
  %161 = vmatpush1.bf16.msra.mxu0 0
  %162 = vmatprep.subr.bf16.mxu0 0
  %163 = vmatpush1.bf16.msra.mxu0 0
  %164 = vmatprep.subr.bf16.mxu0 0
  %165 = vmatpush1.bf16.msra.mxu0 0
  %166 = vmatprep.subr.bf16.mxu0 0
  %167 = vmatpush1.bf16.msra.mxu0 0
  %168 = vmatprep.subr.bf16.mxu0 0
  %169 = vmatpush1.bf16.msra.mxu0 0
  %170 = vmatprep.mubr.bf16.mxu0 0
  %171 = vmatmul.mubr.bf16.gmra.mrb[0].mxu0 %v133
  %v172 = vpop.f32.mrb[0].mxu0
  %v173 = vadd.f32 %v118, %v172
  %v174 = vpop.f32.mrb[0].mxu0
  %v175 = vpop.f32.mrb[0].mxu0
  %v176 = vadd.f32 %v118, %v175
  %v177 = vpop.f32.mrb[0].mxu0
  %178 = vmatprep.mubr.bf16.mxu0 0
  %179 = vmatmul.mubr.bf16.gmra.mrb[0].mxu0 %v136
  %v180 = vpop.f32.mrb[0].mxu0
  %v181 = vadd.f32 %v118, %v180
  %v182 = vpop.f32.mrb[0].mxu0
  %v183 = vpop.f32.mrb[0].mxu0
  %v184 = vadd.f32 %v118, %v183
  %v185 = vpop.f32.mrb[0].mxu0
  %186 = vdwg.mxu0
  %v187 = vmax.f32 %v173, 0.0
  %v188 = vmax.f32 %v176, 0.0
  %v189 = vmax.f32 %v181, 0.0
  %v190 = vmax.f32 %v184, 0.0
  %v191 = vpack.c.bf16 %v188, %v187
  %v192 = vpack.c.bf16 %v190, %v189
  %v193 = vld [vmem:[%s5] sm:$0xf]
  %v194 = vld [vmem:[%s5 + $0x4] sm:$0xf]
  %v195 = vld [vmem:[%s5 + $0x8] sm:$0xf]
  %v196 = vld [vmem:[%s5 + $0xc] sm:$0xf]
  %v197 = vld [vmem:[%s5 + $0x10] sm:$0xf]
  %v198 = vld [vmem:[%s5 + $0x14] sm:$0xf]
  %v199 = vld [vmem:[%s5 + $0x18] sm:$0xf]
  %v200 = vld [vmem:[%s5 + $0x1c] sm:$0xf]
  %v201 = vld [vmem:[%s6] sm:$0x1]
  %v203 = vlaneseq
  %v204 = vshrl.u32 %v203, 7
  %v205 = vsub.s32 0, %v204
  %v206 = vrot.slane %v201, %v205
  %v216 = vunpack.c.l.b16 %v193
  %v217 = vunpack.c.l.b16 %v194
  %v218 = vunpack.c.l.b16 %v195
  %v219 = vunpack.c.l.b16 %v196
  %v220 = vunpack.c.l.b16 %v197
  %v221 = vunpack.c.l.b16 %v198
  %v222 = vunpack.c.l.b16 %v199
  %v223 = vunpack.c.l.b16 %v200
  %v224 = vpack.c.b16 %v217, %v216
  %v225 = vpack.c.b16 %v219, %v218
  %v226 = vpack.c.b16 %v221, %v220
  %v227 = vpack.c.b16 %v223, %v222
  %vm232 = vcmask 523264
  %v234 = vsel %vm232, %v191, 0
  %v237 = vsel %vm232, %v192, 0
  %239 = vmatprep.subr.bf16.mxu0 0
  %240 = vmatpush1.bf16.msra.mxu0 %v224
  %241 = vmatprep.subr.bf16.mxu0 0
  %242 = vmatpush1.bf16.msra.mxu0 %v225
  %243 = vmatprep.subr.bf16.mxu0 0
  %244 = vmatpush1.bf16.msra.mxu0 %v226
  %245 = vmatprep.subr.bf16.mxu0 0
  %246 = vmatpush1.bf16.msra.mxu0 %v227
  %247 = vmatprep.subr.bf16.mxu0 0
  %248 = vmatpush1.bf16.msra.mxu0 0
  %249 = vmatprep.subr.bf16.mxu0 0
  %250 = vmatpush1.bf16.msra.mxu0 0
  %251 = vmatprep.subr.bf16.mxu0 0
  %252 = vmatpush1.bf16.msra.mxu0 0
  %253 = vmatprep.subr.bf16.mxu0 0
  %254 = vmatpush1.bf16.msra.mxu0 0
  %255 = vmatprep.subr.bf16.mxu0 0
  %256 = vmatpush1.bf16.msra.mxu0 0
  %257 = vmatprep.subr.bf16.mxu0 0
  %258 = vmatpush1.bf16.msra.mxu0 0
  %259 = vmatprep.subr.bf16.mxu0 0
  %260 = vmatpush1.bf16.msra.mxu0 0
  %261 = vmatprep.subr.bf16.mxu0 0
  %262 = vmatpush1.bf16.msra.mxu0 0
  %263 = vmatprep.subr.bf16.mxu0 0
  %264 = vmatpush1.bf16.msra.mxu0 0
  %265 = vmatprep.subr.bf16.mxu0 0
  %266 = vmatpush1.bf16.msra.mxu0 0
  %267 = vmatprep.subr.bf16.mxu0 0
  %268 = vmatpush1.bf16.msra.mxu0 0
  %269 = vmatprep.subr.bf16.mxu0 0
  %270 = vmatpush1.bf16.msra.mxu0 0
  %271 = vmatprep.mubr.bf16.mxu0 0
  %272 = vmatmul.mubr.bf16.gmra.mrb[0].mxu0 %v234
  %v273 = vpop.f32.mrb[0].mxu0
  %v274 = vadd.f32 %v206, %v273
  %v275 = vpop.f32.mrb[0].mxu0
  %v276 = vpop.f32.mrb[0].mxu0
  %v277 = vadd.f32 %v206, %v276
  %v278 = vpop.f32.mrb[0].mxu0
  %279 = vmatprep.mubr.bf16.mxu0 0
  %280 = vmatmul.mubr.bf16.gmra.mrb[0].mxu0 %v237
  %v281 = vpop.f32.mrb[0].mxu0
  %v282 = vadd.f32 %v206, %v281
  %v283 = vpop.f32.mrb[0].mxu0
  %v284 = vpop.f32.mrb[0].mxu0
  %v285 = vadd.f32 %v206, %v284
  %v286 = vpop.f32.mrb[0].mxu0
  %287 = vdwg.mxu0
  %v288 = vadd.f32 %v27, %v274
  %v289 = vadd.f32 %v28, %v277
  %v290 = vadd.f32 %v29, %v282
  %v291 = vadd.f32 %v30, %v285
  %292 = vst.msk [vmem:[%s7] sm:$0xff] %vm33, %v288
  %293 = vst.msk [vmem:[%s7 + $0x8] sm:$0xff] %vm33, %v289
  %294 = vst.msk [vmem:[%s7 + $0x10] sm:$0xff] %vm33, %v290
  %295 = vst.msk [vmem:[%s7 + $0x18] sm:$0xff] %vm33, %v291
  // Predicated region
  $region30: #{_lambda_.8} parent=0 // pred_check
    _
  $region31: #{_lambda_.8} parent=0 // pred_check_branch
    %297 = sbr.rel (0) target = $region33
  $region32: #{_lambda_.8} parent=0 // pred_region
    _
  $region33: #{_lambda_.8} parent=0 // pred_fallthru
    _
  // Predicated region
  $region34: #{_lambda_.8} parent=0 // pred_check
    _
  $region35: #{_lambda_.8} parent=0 // pred_check_branch
    %299 = sbr.rel (0) target = $region37
  $region36: #{_lambda_.8} parent=0 // pred_region
    _
  $region37: #{_lambda_.8} parent=0 // pred_fallthru
    _

// kernel: _lambda_.9
$region0: #{_lambda_.9}
  #allocation0 [shape = 'u32[]', space=smem, size = 0x4, offset = 0x4, fixed_abs, tag = 'smem constant byte address 0x4 - core index']
  #allocation1 [shape = 'u32[144,128]{1,0:T(1,128)}', space=vmem, size = 0x12000, scoped, tag = 'internal scratch']
  %s0 = inlined_call_operand.vmem [shape: f32[16,32], index: 0, kind: input, shape index: {}]
  %s1 = inlined_call_operand.vmem [shape: f32[16,32], index: 1, kind: input, shape index: {}]
  %s2 = inlined_call_operand.vmem [shape: f32[16,32], index: 2, kind: input, shape index: {}]
  %s3 = inlined_call_operand.vmem [shape: f32[16,1], index: 3, kind: input, shape index: {}]
  %s4 = inlined_call_operand.vmem [shape: f32[16,1], index: 4, kind: input, shape index: {}]
  %s5 = inlined_call_operand.vmem [shape: bf16[32,128], index: 5, kind: input, shape index: {}]
  %s6 = inlined_call_operand.vmem [shape: f32[1,128], index: 6, kind: input, shape index: {}]
  %s7 = inlined_call_operand.vmem [shape: f32[1,128], index: 7, kind: input, shape index: {}]
  %s8 = inlined_call_operand.vmem [shape: bf16[32,32], index: 8, kind: input, shape index: {}]
  %s9 = inlined_call_operand.vmem [shape: bf16[32,32], index: 9, kind: input, shape index: {}]
  %s10 = inlined_call_operand.vmem [shape: f32[16,32], index: 10, kind: output, shape index: {0}]
  %s11 = inlined_call_operand.vmem [shape: f32[16,1], index: 11, kind: output, shape index: {1}]
  %12 = xla_tuple %s10, %s11
  %s13 = sld [smem:[#allocation0]]
  $region58: #{_lambda_.9} parent=0
    _
  %s15 = ssub.s32 1, %s13
  %s16 = scalar_select 0, %s15, %s13
  // Predicated region
  $region2: #{_lambda_.9} parent=0 // pred_check
    _
  $region3: #{_lambda_.9} parent=0 // pred_check_branch
    %18 = sbr.rel (0) target = $region5
  $region4: #{_lambda_.9} parent=0 // pred_region
    _
  $region5: #{_lambda_.9} parent=0 // pred_fallthru
    _
  // Predicated region
  $region6: #{_lambda_.9} parent=0 // pred_check
    _
  $region7: #{_lambda_.9} parent=0 // pred_check_branch
    %20 = sbr.rel (0) target = $region9
  $region8: #{_lambda_.9} parent=0 // pred_region
    _
  $region9: #{_lambda_.9} parent=0 // pred_fallthru
    _
  // Predicated region
  $region10: #{_lambda_.9} parent=0 // pred_check
    _
  $region11: #{_lambda_.9} parent=0 // pred_check_branch
    %22 = sbr.rel (0) target = $region13
  $region12: #{_lambda_.9} parent=0 // pred_region
    _
  $region13: #{_lambda_.9} parent=0 // pred_fallthru
    _
  // Predicated region
  $region14: #{_lambda_.9} parent=0 // pred_check
    _
  $region15: #{_lambda_.9} parent=0 // pred_check_branch
    %24 = sbr.rel (0) target = $region17
  $region16: #{_lambda_.9} parent=0 // pred_region
    _
  $region17: #{_lambda_.9} parent=0 // pred_fallthru
    _
  // Predicated region
  $region18: #{_lambda_.9} parent=0 // pred_check
    _
  $region19: #{_lambda_.9} parent=0 // pred_check_branch
    %26 = sbr.rel (0) target = $region21
  $region20: #{_lambda_.9} parent=0 // pred_region
    _
  $region21: #{_lambda_.9} parent=0 // pred_fallthru
    _
  // Predicated region
  $region22: #{_lambda_.9} parent=0 // pred_check
    _
  $region23: #{_lambda_.9} parent=0 // pred_check_branch
    %28 = sbr.rel (0) target = $region25
  $region24: #{_lambda_.9} parent=0 // pred_region
    _
  $region25: #{_lambda_.9} parent=0 // pred_fallthru
    _
  // Predicated region
  $region26: #{_lambda_.9} parent=0 // pred_check
    _
  $region27: #{_lambda_.9} parent=0 // pred_check_branch
    %30 = sbr.rel (0) target = $region29
  $region28: #{_lambda_.9} parent=0 // pred_region
    _
  $region29: #{_lambda_.9} parent=0 // pred_fallthru
    _
  // Predicated region
  $region30: #{_lambda_.9} parent=0 // pred_check
    _
  $region31: #{_lambda_.9} parent=0 // pred_check_branch
    %32 = sbr.rel (0) target = $region33
  $region32: #{_lambda_.9} parent=0 // pred_region
    _
  $region33: #{_lambda_.9} parent=0 // pred_fallthru
    _
  // Predicated region
  $region34: #{_lambda_.9} parent=0 // pred_check
    _
  $region35: #{_lambda_.9} parent=0 // pred_check_branch
    %34 = sbr.rel (0) target = $region37
  $region36: #{_lambda_.9} parent=0 // pred_region
    _
  $region37: #{_lambda_.9} parent=0 // pred_fallthru
    _
  // Predicated region
  $region38: #{_lambda_.9} parent=0 // pred_check
    _
  $region39: #{_lambda_.9} parent=0 // pred_check_branch
    %36 = sbr.rel (0) target = $region41
  $region40: #{_lambda_.9} parent=0 // pred_region
    _
  $region41: #{_lambda_.9} parent=0 // pred_fallthru
    _
  %v38 = vld [vmem:[%s0] sm:$0xff]
  %v39 = vld [vmem:[%s0 + $0x8] sm:$0xff]
  %v40 = vpack.c.bf16 %v39, %v38
  %v41 = vld [vmem:[%s5] sm:$0xf]
  %v42 = vld [vmem:[%s5 + $0x4] sm:$0xf]
  %v43 = vld [vmem:[%s5 + $0x8] sm:$0xf]
  %v44 = vld [vmem:[%s5 + $0xc] sm:$0xf]
  %v45 = vld [vmem:[%s6] sm:$0x1]
  %v47 = vlaneseq
  %v48 = vshrl.u32 %v47, 7
  %v49 = vsub.s32 0, %v48
  %v50 = vrot.slane %v45, %v49
  %v56 = vunpack.c.l.b16 %v41
  %v57 = vunpack.c.l.b16 %v42
  %v58 = vunpack.c.l.b16 %v43
  %v59 = vunpack.c.l.b16 %v44
  %v60 = vpack.c.b16 %v57, %v56
  %v61 = vpack.c.b16 %v59, %v58
  %vm64 = vcmask 261120
  %v66 = vsel %vm64, %v40, 0
  %68 = vmatprep.subr.bf16.mxu0 0
  %69 = vmatpush1.bf16.msra.mxu0 %v60
  %70 = vmatprep.subr.bf16.mxu0 0
  %71 = vmatpush1.bf16.msra.mxu0 %v61
  %72 = vmatprep.subr.bf16.mxu0 0
  %73 = vmatpush1.bf16.msra.mxu0 0
  %74 = vmatprep.subr.bf16.mxu0 0
  %75 = vmatpush1.bf16.msra.mxu0 0
  %76 = vmatprep.subr.bf16.mxu0 0
  %77 = vmatpush1.bf16.msra.mxu0 0
  %78 = vmatprep.subr.bf16.mxu0 0
  %79 = vmatpush1.bf16.msra.mxu0 0
  %80 = vmatprep.subr.bf16.mxu0 0
  %81 = vmatpush1.bf16.msra.mxu0 0
  %82 = vmatprep.subr.bf16.mxu0 0
  %83 = vmatpush1.bf16.msra.mxu0 0
  %84 = vmatprep.subr.bf16.mxu0 0
  %85 = vmatpush1.bf16.msra.mxu0 0
  %86 = vmatprep.subr.bf16.mxu0 0
  %87 = vmatpush1.bf16.msra.mxu0 0
  %88 = vmatprep.subr.bf16.mxu0 0
  %89 = vmatpush1.bf16.msra.mxu0 0
  %90 = vmatprep.subr.bf16.mxu0 0
  %91 = vmatpush1.bf16.msra.mxu0 0
  %92 = vmatprep.subr.bf16.mxu0 0
  %93 = vmatpush1.bf16.msra.mxu0 0
  %94 = vmatprep.subr.bf16.mxu0 0
  %95 = vmatpush1.bf16.msra.mxu0 0
  %96 = vmatprep.subr.bf16.mxu0 0
  %97 = vmatpush1.bf16.msra.mxu0 0
  %98 = vmatprep.subr.bf16.mxu0 0
  %99 = vmatpush1.bf16.msra.mxu0 0
  %100 = vmatprep.mubr.bf16.mxu0 0
  %101 = vmatmul.mubr.bf16.gmra.mrb[0].mxu0 %v66
  %v102 = vpop.f32.mrb[0].mxu0
  %v103 = vadd.f32 %v50, %v102
  %v104 = vpop.f32.mrb[0].mxu0
  %v105 = vpop.f32.mrb[0].mxu0
  %v106 = vadd.f32 %v50, %v105
  %v107 = vpop.f32.mrb[0].mxu0
  %108 = vdwg.mxu0
  %v109 = vmax.f32 %v103, 0.0
  %v110 = vmax.f32 %v106, 0.0
  %v111 = vld [vmem:[%s7] sm:$0x1]
  %v113 = vlaneseq
  %v114 = vshrl.u32 %v113, 7
  %v115 = vsub.s32 0, %v114
  %v116 = vrot.slane %v111, %v115
  %v118 = vmul.f32 %v109, %v116
  %v119 = vmul.f32 %v110, %v116
  %120 = vadd.xlane.f32.xlu0 %v118
  %v121 = vpop.xlane.xlu0 %120
  %122 = vadd.xlane.f32.xlu0 %v119
  %v123 = vpop.xlane.xlu0 %122
  %vm124 = vcmp.gt.f32.partialorder %v121, 0.0
  %vm125 = vcmp.gt.f32.partialorder %v123, 0.0
  %v126 = vsel %vm124, 1, 0
  %v127 = vsel %vm125, 1, 0
  %v128 = vcvt.s32.f32 %v126
  %v129 = vcvt.s32.f32 %v127
  %v130 = vld [vmem:[%s1] sm:$0xff]
  %v131 = vld [vmem:[%s1 + $0x8] sm:$0xff]
  %v132 = vpack.c.bf16 %v131, %v130
  %v133 = vld [vmem:[%s8] sm:$0xf]
  %v134 = vld [vmem:[%s8 + $0x4] sm:$0xf]
  %v135 = vld [vmem:[%s8 + $0x8] sm:$0xf]
  %v136 = vld [vmem:[%s8 + $0xc] sm:$0xf]
  %v141 = vunpack.c.l.b16 %v133
  %v142 = vunpack.c.l.b16 %v134
  %v143 = vunpack.c.l.b16 %v135
  %v144 = vunpack.c.l.b16 %v136
  %v145 = vpack.c.b16 %v142, %v141
  %v146 = vpack.c.b16 %v144, %v143
  %v150 = vsel %vm64, %v132, 0
  %152 = vmatprep.subr.bf16.mxu0 0
  %153 = vmatpush1.bf16.msra.mxu0 %v145
  %154 = vmatprep.subr.bf16.mxu0 0
  %155 = vmatpush1.bf16.msra.mxu0 %v146
  %156 = vmatprep.subr.bf16.mxu0 0
  %157 = vmatpush1.bf16.msra.mxu0 0
  %158 = vmatprep.subr.bf16.mxu0 0
  %159 = vmatpush1.bf16.msra.mxu0 0
  %160 = vmatprep.subr.bf16.mxu0 0
  %161 = vmatpush1.bf16.msra.mxu0 0
  %162 = vmatprep.subr.bf16.mxu0 0
  %163 = vmatpush1.bf16.msra.mxu0 0
  %164 = vmatprep.subr.bf16.mxu0 0
  %165 = vmatpush1.bf16.msra.mxu0 0
  %166 = vmatprep.subr.bf16.mxu0 0
  %167 = vmatpush1.bf16.msra.mxu0 0
  %168 = vmatprep.subr.bf16.mxu0 0
  %169 = vmatpush1.bf16.msra.mxu0 0
  %170 = vmatprep.subr.bf16.mxu0 0
  %171 = vmatpush1.bf16.msra.mxu0 0
  %172 = vmatprep.subr.bf16.mxu0 0
  %173 = vmatpush1.bf16.msra.mxu0 0
  %174 = vmatprep.subr.bf16.mxu0 0
  %175 = vmatpush1.bf16.msra.mxu0 0
  %176 = vmatprep.subr.bf16.mxu0 0
  %177 = vmatpush1.bf16.msra.mxu0 0
  %178 = vmatprep.subr.bf16.mxu0 0
  %179 = vmatpush1.bf16.msra.mxu0 0
  %180 = vmatprep.subr.bf16.mxu0 0
  %181 = vmatpush1.bf16.msra.mxu0 0
  %182 = vmatprep.subr.bf16.mxu0 0
  %183 = vmatpush1.bf16.msra.mxu0 0
  %184 = vmatprep.mubr.bf16.mxu0 0
  %185 = vmatmul.mubr.bf16.gmra.mrb[0].mxu0 %v150
  %v186 = vpop.f32.mrb[0].mxu0
  %v187 = vadd.f32 0.0, %v186
  %v188 = vpop.f32.mrb[0].mxu0
  %v189 = vpop.f32.mrb[0].mxu0
  %v190 = vadd.f32 0.0, %v189
  %v191 = vpop.f32.mrb[0].mxu0
  %192 = vdwg.mxu0
  %v193 = vld [vmem:[%s2] sm:$0xff]
  %v194 = vld [vmem:[%s2 + $0x8] sm:$0xff]
  %v195 = vpack.c.bf16 %v194, %v193
  %v196 = vld [vmem:[%s9] sm:$0xf]
  %v197 = vld [vmem:[%s9 + $0x4] sm:$0xf]
  %v198 = vld [vmem:[%s9 + $0x8] sm:$0xf]
  %v199 = vld [vmem:[%s9 + $0xc] sm:$0xf]
  %v204 = vunpack.c.l.b16 %v196
  %v205 = vunpack.c.l.b16 %v197
  %v206 = vunpack.c.l.b16 %v198
  %v207 = vunpack.c.l.b16 %v199
  %v208 = vpack.c.b16 %v205, %v204
  %v209 = vpack.c.b16 %v207, %v206
  %v213 = vsel %vm64, %v195, 0
  %215 = vmatprep.subr.bf16.mxu0 0
  %216 = vmatpush1.bf16.msra.mxu0 %v208
  %217 = vmatprep.subr.bf16.mxu0 0
  %218 = vmatpush1.bf16.msra.mxu0 %v209
  %219 = vmatprep.subr.bf16.mxu0 0
  %220 = vmatpush1.bf16.msra.mxu0 0
  %221 = vmatprep.subr.bf16.mxu0 0
  %222 = vmatpush1.bf16.msra.mxu0 0
  %223 = vmatprep.subr.bf16.mxu0 0
  %224 = vmatpush1.bf16.msra.mxu0 0
  %225 = vmatprep.subr.bf16.mxu0 0
  %226 = vmatpush1.bf16.msra.mxu0 0
  %227 = vmatprep.subr.bf16.mxu0 0
  %228 = vmatpush1.bf16.msra.mxu0 0
  %229 = vmatprep.subr.bf16.mxu0 0
  %230 = vmatpush1.bf16.msra.mxu0 0
  %231 = vmatprep.subr.bf16.mxu0 0
  %232 = vmatpush1.bf16.msra.mxu0 0
  %233 = vmatprep.subr.bf16.mxu0 0
  %234 = vmatpush1.bf16.msra.mxu0 0
  %235 = vmatprep.subr.bf16.mxu0 0
  %236 = vmatpush1.bf16.msra.mxu0 0
  %237 = vmatprep.subr.bf16.mxu0 0
  %238 = vmatpush1.bf16.msra.mxu0 0
  %239 = vmatprep.subr.bf16.mxu0 0
  %240 = vmatpush1.bf16.msra.mxu0 0
  %241 = vmatprep.subr.bf16.mxu0 0
  %242 = vmatpush1.bf16.msra.mxu0 0
  %243 = vmatprep.subr.bf16.mxu0 0
  %244 = vmatpush1.bf16.msra.mxu0 0
  %245 = vmatprep.subr.bf16.mxu0 0
  %246 = vmatpush1.bf16.msra.mxu0 0
  %247 = vmatprep.mubr.bf16.mxu0 0
  %248 = vmatmul.mubr.bf16.gmra.mrb[0].mxu0 %v213
  %v249 = vpop.f32.mrb[0].mxu0
  %v250 = vadd.f32 0.0, %v249
  %v251 = vpop.f32.mrb[0].mxu0
  %v252 = vpop.f32.mrb[0].mxu0
  %v253 = vadd.f32 0.0, %v252
  %v254 = vpop.f32.mrb[0].mxu0
  %255 = vdwg.mxu0
  %v256 = vmul.f32 %v128, %v187
  %v257 = vmul.f32 %v129, %v190
  %v258 = vsub.f32 1.0, %v128
  %v259 = vsub.f32 1.0, %v129
  %v260 = vmul.f32 %v258, %v250
  %v261 = vmul.f32 %v259, %v253
  %v262 = vadd.f32 %v256, %v260
  %v263 = vadd.f32 %v257, %v261
  %264 = vst.msk [vmem:[%s10] sm:$0xff] %vm64, %v262
  %265 = vst.msk [vmem:[%s10 + $0x8] sm:$0xff] %vm64, %v263
  %v266 = vld [vmem:[%s3] sm:$0xff]
  %v267 = vld [vmem:[%s3 + $0x8] sm:$0xff]
  %v268 = vmul.f32 %v128, %v266
  %v269 = vmul.f32 %v129, %v267
  %v270 = vld [vmem:[%s4] sm:$0xff]
  %v271 = vld [vmem:[%s4 + $0x8] sm:$0xff]
  %v272 = vmul.f32 %v258, %v270
  %v273 = vmul.f32 %v259, %v271
  %v274 = vadd.f32 %v268, %v272
  %v275 = vadd.f32 %v269, %v273
  %vm276 = vcmask 7168
  %277 = vst.msk [vmem:[%s11] sm:$0xff] %vm276, %v274
  %278 = vst.msk [vmem:[%s11 + $0x8] sm:$0xff] %vm276, %v275
  // Predicated region
  $region42: #{_lambda_.9} parent=0 // pred_check
    _
  $region43: #{_lambda_.9} parent=0 // pred_check_branch
    %280 = sbr.rel (0) target = $region45
  $region44: #{_lambda_.9} parent=0 // pred_region
    _
  $region45: #{_lambda_.9} parent=0 // pred_fallthru
    _
  // Predicated region
  $region46: #{_lambda_.9} parent=0 // pred_check
    _
  $region47: #{_lambda_.9} parent=0 // pred_check_branch
    %282 = sbr.rel (0) target = $region49
  $region48: #{_lambda_.9} parent=0 // pred_region
    _
  $region49: #{_lambda_.9} parent=0 // pred_fallthru
    _
  // Predicated region
  $region50: #{_lambda_.9} parent=0 // pred_check
    _
  $region51: #{_lambda_.9} parent=0 // pred_check_branch
    %284 = sbr.rel (0) target = $region53
  $region52: #{_lambda_.9} parent=0 // pred_region
    _
  $region53: #{_lambda_.9} parent=0 // pred_fallthru
    _
  // Predicated region
  $region54: #{_lambda_.9} parent=0 // pred_check
    _
  $region55: #{_lambda_.9} parent=0 // pred_check_branch
    %286 = sbr.rel (0) target = $region57
  $region56: #{_lambda_.9} parent=0 // pred_region
    _
  $region57: #{_lambda_.9} parent=0 // pred_fallthru
    _

// kernel: _lambda_.7
$region0: #{_lambda_.7}
  #allocation0 [shape = 'u32[]', space=smem, size = 0x4, offset = 0x4, fixed_abs, tag = 'smem constant byte address 0x4 - core index']
  #allocation1 [shape = 'u32[144,128]{1,0:T(1,128)}', space=vmem, size = 0x12000, scoped, tag = 'internal scratch']
  %s0 = inlined_call_operand.vmem [shape: f32[4,8,32], index: 0, kind: input, shape index: {}]
  %s1 = inlined_call_operand.vmem [shape: f32[4,1,8], index: 1, kind: input, shape index: {}]
  %s2 = inlined_call_operand.vmem [shape: f32[1,32], index: 2, kind: input, shape index: {}]
  %s3 = inlined_call_operand.vmem [shape: f32[1,32], index: 3, kind: input, shape index: {}]
  %s4 = inlined_call_operand.vmem [shape: bf16[32,32], index: 4, kind: input, shape index: {}]
  %s5 = inlined_call_operand.vmem [shape: f32[1,32], index: 5, kind: input, shape index: {}]
  %s6 = inlined_call_operand.vmem [shape: bf16[32,32], index: 6, kind: input, shape index: {}]
  %s7 = inlined_call_operand.vmem [shape: f32[1,32], index: 7, kind: input, shape index: {}]
  %s8 = inlined_call_operand.vmem [shape: bf16[32,32], index: 8, kind: input, shape index: {}]
  %s9 = inlined_call_operand.vmem [shape: f32[1,32], index: 9, kind: input, shape index: {}]
  %s10 = inlined_call_operand.vmem [shape: bf16[32,32], index: 10, kind: input, shape index: {}]
  %s11 = inlined_call_operand.vmem [shape: f32[1,32], index: 11, kind: input, shape index: {}]
  %s12 = inlined_call_operand.vmem [shape: f32[4,8,32], index: 12, kind: output, shape index: {}]
  %s13 = sld [smem:[#allocation0]]
  $region81: #{_lambda_.7} parent=0
    _
  %s15 = ssub.s32 1, %s13
  %s16 = scalar_select 0, %s15, %s13
  loop: start=0, step=1, limit=6
  $region2: #{_lambda_.7} parent=0 // loop_pre_header
    _
  $region3: #{_lambda_.7} parent=0 // loop_header
    %s18 = sphi 0, %s22
    %p19 = scmp.ge.s32.totalorder %s18, 6
    %s25 = sphi 0, %s37
    %s26 = sphi 0, %s33
    %s27 = sphi 0, %s25
    %s28 = sphi 0, %s26
    %s29 = sphi 0, %s27
    %s30 = sphi 0, %s28
    %s42 = sphi 0, %s44
    %s45 = sphi 0, %s42
    %s46 = sphi 0, %s45
    %s62 = sphi 0, %s46
    %s68 = sphi 0, %s70
    %s71 = sphi 0, %s68
    %s72 = sphi 0, %s71
    %s88 = sphi 0, %s72
    %s92 = sphi 0, %s92
    %s94 = sphi 0, %s92
    %s95 = sphi 0, %s94
    %s109 = sphi 0, %s95
    %s113 = sphi 0, %s113
    %s115 = sphi 0, %s113
    %s116 = sphi 0, %s115
    %s130 = sphi 0, %s116
    %s134 = sphi 0, %s134
    %s136 = sphi 0, %s134
    %s137 = sphi 0, %s136
    %s151 = sphi 0, %s137
    %s155 = sphi 0, %s155
    %s157 = sphi 0, %s155
    %s158 = sphi 0, %s157
    %s172 = sphi 0, %s158
    %s176 = sphi 0, %s176
    %s178 = sphi 0, %s176
    %s179 = sphi 0, %s178
    %s193 = sphi 0, %s179
    %s197 = sphi 0, %s197
    %s199 = sphi 0, %s197
    %s200 = sphi 0, %s199
    %s214 = sphi 0, %s200
    %s218 = sphi 0, %s218
    %s220 = sphi 0, %s218
    %s221 = sphi 0, %s220
    %s235 = sphi 0, %s221
    %s239 = sphi 0, %s239
    %s241 = sphi 0, %s239
    %s242 = sphi 0, %s241
    %s256 = sphi 0, %s242
    %s260 = sphi 0, %s260
    %s262 = sphi 0, %s260
    %s263 = sphi 0, %s262
    %s277 = sphi 0, %s263
    %s281 = sphi 0, %s281
    %s283 = sphi 0, %s281
    %s284 = sphi 0, %s283
    %s298 = sphi 0, %s284
    %s306 = sphi 0, %s308
    %s309 = sphi 0, %s306
    %s310 = sphi 0, %s309
    %s326 = sphi 0, %s310
  $region4: #{_lambda_.7} parent=0 // loop_header_branch
    %21 = sbr.rel (%p19) target = $region8
  $region5: #{_lambda_.7} parent=0 // loop_body
    %s23 = ssub.s32 %s18, 1
    %s24 = ssub.s32 %s18, 2
    %s31 = sadd.s32 1, %s26
    %p32 = scmp.ge.s32.totalorder %s31, 1
    %s33 = scalar_select %p32, 0, %s31
    %s34 = sadd.s32 1, %s25
    %s35 = scalar_select %p32, %s34, %s25
    %p36 = scmp.ge.s32.totalorder %s35, 4
    %s37 = scalar_select %p36, 0, %s35
    %s38 = ssub.s32 %s25, %s37
    %s39 = ssub.s32 %s26, %s33
    %s40 = sor.u32 %s38, %s39
    %p41 = scmp.eq.s32.totalorder %s40, 0
    %s43 = sadd.s32 %s42, 1
    %s44 = scalar_select %p41, %s42, %s43
    %p47 = pneg %p41
    %p48 = scmp.eq.s32.totalorder %s18, 3
    %p49 = por %p47, %p48
    %p50 = scmp.ne.s32.totalorder %s42, %s45
    %p51 = scmp.eq.s32.totalorder %s18, 0
    %p52 = por %p50, %p51
    %p53 = scmp.ne.s32.totalorder %s42, %s45
    %p54 = scmp.eq.s32.totalorder %s23, 3
    %p55 = por %p53, %p54
    %p56 = scmp.ne.s32.totalorder %s45, %s46
    %p57 = scmp.eq.s32.totalorder %s23, 0
    %p58 = por %p56, %p57
    %p59 = scmp.ne.s32.totalorder %s45, %s46
    %p60 = scmp.eq.s32.totalorder %s24, 3
    %p61 = por %p59, %p60
    %p63 = scmp.ne.s32.totalorder %s46, %s62
    %p64 = scmp.eq.s32.totalorder %s24, 0
    %p65 = por %p63, %p64
    %s66 = ssub.s32 %s25, %s37
    %p67 = scmp.eq.s32.totalorder %s66, 0
    %s69 = sadd.s32 %s68, 1
    %s70 = scalar_select %p67, %s68, %s69
    %p73 = pneg %p67
    %p74 = scmp.eq.s32.totalorder %s18, 3
    %p75 = por %p73, %p74
    %p76 = scmp.ne.s32.totalorder %s68, %s71
    %p77 = scmp.eq.s32.totalorder %s18, 0
    %p78 = por %p76, %p77
    %p79 = scmp.ne.s32.totalorder %s68, %s71
    %p80 = scmp.eq.s32.totalorder %s23, 3
    %p81 = por %p79, %p80
    %p82 = scmp.ne.s32.totalorder %s71, %s72
    %p83 = scmp.eq.s32.totalorder %s23, 0
    %p84 = por %p82, %p83
    %p85 = scmp.ne.s32.totalorder %s71, %s72
    %p86 = scmp.eq.s32.totalorder %s24, 3
    %p87 = por %p85, %p86
    %p89 = scmp.ne.s32.totalorder %s72, %s88
    %p90 = scmp.eq.s32.totalorder %s24, 0
    %p91 = por %p89, %p90
    %s93 = sadd.s32 %s92, 1
    %p96 = scmp.eq.s32.totalorder %s18, 3
    %p97 = scmp.ne.s32.totalorder %s92, %s94
    %p98 = scmp.eq.s32.totalorder %s18, 0
    %p99 = por %p97, %p98
    %p100 = scmp.ne.s32.totalorder %s92, %s94
    %p101 = scmp.eq.s32.totalorder %s23, 3
    %p102 = por %p100, %p101
    %p103 = scmp.ne.s32.totalorder %s94, %s95
    %p104 = scmp.eq.s32.totalorder %s23, 0
    %p105 = por %p103, %p104
    %p106 = scmp.ne.s32.totalorder %s94, %s95
    %p107 = scmp.eq.s32.totalorder %s24, 3
    %p108 = por %p106, %p107
    %p110 = scmp.ne.s32.totalorder %s95, %s109
    %p111 = scmp.eq.s32.totalorder %s24, 0
    %p112 = por %p110, %p111
    %s114 = sadd.s32 %s113, 1
    %p117 = scmp.eq.s32.totalorder %s18, 3
    %p118 = scmp.ne.s32.totalorder %s113, %s115
    %p119 = scmp.eq.s32.totalorder %s18, 0
    %p120 = por %p118, %p119
    %p121 = scmp.ne.s32.totalorder %s113, %s115
    %p122 = scmp.eq.s32.totalorder %s23, 3
    %p123 = por %p121, %p122
    %p124 = scmp.ne.s32.totalorder %s115, %s116
    %p125 = scmp.eq.s32.totalorder %s23, 0
    %p126 = por %p124, %p125
    %p127 = scmp.ne.s32.totalorder %s115, %s116
    %p128 = scmp.eq.s32.totalorder %s24, 3
    %p129 = por %p127, %p128
    %p131 = scmp.ne.s32.totalorder %s116, %s130
    %p132 = scmp.eq.s32.totalorder %s24, 0
    %p133 = por %p131, %p132
    %s135 = sadd.s32 %s134, 1
    %p138 = scmp.eq.s32.totalorder %s18, 3
    %p139 = scmp.ne.s32.totalorder %s134, %s136
    %p140 = scmp.eq.s32.totalorder %s18, 0
    %p141 = por %p139, %p140
    %p142 = scmp.ne.s32.totalorder %s134, %s136
    %p143 = scmp.eq.s32.totalorder %s23, 3
    %p144 = por %p142, %p143
    %p145 = scmp.ne.s32.totalorder %s136, %s137
    %p146 = scmp.eq.s32.totalorder %s23, 0
    %p147 = por %p145, %p146
    %p148 = scmp.ne.s32.totalorder %s136, %s137
    %p149 = scmp.eq.s32.totalorder %s24, 3
    %p150 = por %p148, %p149
    %p152 = scmp.ne.s32.totalorder %s137, %s151
    %p153 = scmp.eq.s32.totalorder %s24, 0
    %p154 = por %p152, %p153
    %s156 = sadd.s32 %s155, 1
    %p159 = scmp.eq.s32.totalorder %s18, 3
    %p160 = scmp.ne.s32.totalorder %s155, %s157
    %p161 = scmp.eq.s32.totalorder %s18, 0
    %p162 = por %p160, %p161
    %p163 = scmp.ne.s32.totalorder %s155, %s157
    %p164 = scmp.eq.s32.totalorder %s23, 3
    %p165 = por %p163, %p164
    %p166 = scmp.ne.s32.totalorder %s157, %s158
    %p167 = scmp.eq.s32.totalorder %s23, 0
    %p168 = por %p166, %p167
    %p169 = scmp.ne.s32.totalorder %s157, %s158
    %p170 = scmp.eq.s32.totalorder %s24, 3
    %p171 = por %p169, %p170
    %p173 = scmp.ne.s32.totalorder %s158, %s172
    %p174 = scmp.eq.s32.totalorder %s24, 0
    %p175 = por %p173, %p174
    %s177 = sadd.s32 %s176, 1
    %p180 = scmp.eq.s32.totalorder %s18, 3
    %p181 = scmp.ne.s32.totalorder %s176, %s178
    %p182 = scmp.eq.s32.totalorder %s18, 0
    %p183 = por %p181, %p182
    %p184 = scmp.ne.s32.totalorder %s176, %s178
    %p185 = scmp.eq.s32.totalorder %s23, 3
    %p186 = por %p184, %p185
    %p187 = scmp.ne.s32.totalorder %s178, %s179
    %p188 = scmp.eq.s32.totalorder %s23, 0
    %p189 = por %p187, %p188
    %p190 = scmp.ne.s32.totalorder %s178, %s179
    %p191 = scmp.eq.s32.totalorder %s24, 3
    %p192 = por %p190, %p191
    %p194 = scmp.ne.s32.totalorder %s179, %s193
    %p195 = scmp.eq.s32.totalorder %s24, 0
    %p196 = por %p194, %p195
    %s198 = sadd.s32 %s197, 1
    %p201 = scmp.eq.s32.totalorder %s18, 3
    %p202 = scmp.ne.s32.totalorder %s197, %s199
    %p203 = scmp.eq.s32.totalorder %s18, 0
    %p204 = por %p202, %p203
    %p205 = scmp.ne.s32.totalorder %s197, %s199
    %p206 = scmp.eq.s32.totalorder %s23, 3
    %p207 = por %p205, %p206
    %p208 = scmp.ne.s32.totalorder %s199, %s200
    %p209 = scmp.eq.s32.totalorder %s23, 0
    %p210 = por %p208, %p209
    %p211 = scmp.ne.s32.totalorder %s199, %s200
    %p212 = scmp.eq.s32.totalorder %s24, 3
    %p213 = por %p211, %p212
    %p215 = scmp.ne.s32.totalorder %s200, %s214
    %p216 = scmp.eq.s32.totalorder %s24, 0
    %p217 = por %p215, %p216
    %s219 = sadd.s32 %s218, 1
    %p222 = scmp.eq.s32.totalorder %s18, 3
    %p223 = scmp.ne.s32.totalorder %s218, %s220
    %p224 = scmp.eq.s32.totalorder %s18, 0
    %p225 = por %p223, %p224
    %p226 = scmp.ne.s32.totalorder %s218, %s220
    %p227 = scmp.eq.s32.totalorder %s23, 3
    %p228 = por %p226, %p227
    %p229 = scmp.ne.s32.totalorder %s220, %s221
    %p230 = scmp.eq.s32.totalorder %s23, 0
    %p231 = por %p229, %p230
    %p232 = scmp.ne.s32.totalorder %s220, %s221
    %p233 = scmp.eq.s32.totalorder %s24, 3
    %p234 = por %p232, %p233
    %p236 = scmp.ne.s32.totalorder %s221, %s235
    %p237 = scmp.eq.s32.totalorder %s24, 0
    %p238 = por %p236, %p237
    %s240 = sadd.s32 %s239, 1
    %p243 = scmp.eq.s32.totalorder %s18, 3
    %p244 = scmp.ne.s32.totalorder %s239, %s241
    %p245 = scmp.eq.s32.totalorder %s18, 0
    %p246 = por %p244, %p245
    %p247 = scmp.ne.s32.totalorder %s239, %s241
    %p248 = scmp.eq.s32.totalorder %s23, 3
    %p249 = por %p247, %p248
    %p250 = scmp.ne.s32.totalorder %s241, %s242
    %p251 = scmp.eq.s32.totalorder %s23, 0
    %p252 = por %p250, %p251
    %p253 = scmp.ne.s32.totalorder %s241, %s242
    %p254 = scmp.eq.s32.totalorder %s24, 3
    %p255 = por %p253, %p254
    %p257 = scmp.ne.s32.totalorder %s242, %s256
    %p258 = scmp.eq.s32.totalorder %s24, 0
    %p259 = por %p257, %p258
    %s261 = sadd.s32 %s260, 1
    %p264 = scmp.eq.s32.totalorder %s18, 3
    %p265 = scmp.ne.s32.totalorder %s260, %s262
    %p266 = scmp.eq.s32.totalorder %s18, 0
    %p267 = por %p265, %p266
    %p268 = scmp.ne.s32.totalorder %s260, %s262
    %p269 = scmp.eq.s32.totalorder %s23, 3
    %p270 = por %p268, %p269
    %p271 = scmp.ne.s32.totalorder %s262, %s263
    %p272 = scmp.eq.s32.totalorder %s23, 0
    %p273 = por %p271, %p272
    %p274 = scmp.ne.s32.totalorder %s262, %s263
    %p275 = scmp.eq.s32.totalorder %s24, 3
    %p276 = por %p274, %p275
    %p278 = scmp.ne.s32.totalorder %s263, %s277
    %p279 = scmp.eq.s32.totalorder %s24, 0
    %p280 = por %p278, %p279
    %s282 = sadd.s32 %s281, 1
    %p285 = scmp.eq.s32.totalorder %s18, 3
    %p286 = scmp.ne.s32.totalorder %s281, %s283
    %p287 = scmp.eq.s32.totalorder %s18, 0
    %p288 = por %p286, %p287
    %p289 = scmp.ne.s32.totalorder %s281, %s283
    %p290 = scmp.eq.s32.totalorder %s23, 3
    %p291 = por %p289, %p290
    %p292 = scmp.ne.s32.totalorder %s283, %s284
    %p293 = scmp.eq.s32.totalorder %s23, 0
    %p294 = por %p292, %p293
    %p295 = scmp.ne.s32.totalorder %s283, %s284
    %p296 = scmp.eq.s32.totalorder %s24, 3
    %p297 = por %p295, %p296
    %p299 = scmp.ne.s32.totalorder %s284, %s298
    %p300 = scmp.eq.s32.totalorder %s24, 0
    %p301 = por %p299, %p300
    %s302 = ssub.s32 %s25, %s37
    %s303 = ssub.s32 %s26, %s33
    %s304 = sor.u32 %s302, %s303
    %p305 = scmp.eq.s32.totalorder %s304, 0
    %s307 = sadd.s32 %s306, 1
    %s308 = scalar_select %p305, %s306, %s307
    %p311 = pneg %p305
    %p312 = scmp.eq.s32.totalorder %s18, 3
    %p313 = por %p311, %p312
    %p314 = scmp.ne.s32.totalorder %s306, %s309
    %p315 = scmp.eq.s32.totalorder %s18, 0
    %p316 = por %p314, %p315
    %p317 = scmp.ne.s32.totalorder %s306, %s309
    %p318 = scmp.eq.s32.totalorder %s23, 3
    %p319 = por %p317, %p318
    %p320 = scmp.ne.s32.totalorder %s309, %s310
    %p321 = scmp.eq.s32.totalorder %s23, 0
    %p322 = por %p320, %p321
    %p323 = scmp.ne.s32.totalorder %s309, %s310
    %p324 = scmp.eq.s32.totalorder %s24, 3
    %p325 = por %p323, %p324
    %p327 = scmp.ne.s32.totalorder %s310, %s326
    %p328 = scmp.eq.s32.totalorder %s24, 0
    %p329 = por %p327, %p328
    %p330 = scmp.le.s32.totalorder 1, %s18
    %p331 = scmp.lt.s32.totalorder %s18, 5
    %p332 = pnand %p330, %p331
    %p333 = pneg %p332
    // Predicated region
    $region9: #{_lambda_.7} parent=5 // pred_check
      _
    $region10: #{_lambda_.7} parent=5 // pred_check_branch
      %335 = sbr.rel (%p332) target = $region12
    $region11: #{_lambda_.7} parent=5 // pred_region
      %s336 = ssub.s32 %s18, 1
      // Predicated region
      $region13: #{_lambda_.7} parent=11 // pred_check
        %p337 = pneg %p105
      $region14: #{_lambda_.7} parent=11 // pred_check_branch
        %339 = sbr.rel (%p337) target = $region16
      $region15: #{_lambda_.7} parent=11 // pred_region
        _
      $region16: #{_lambda_.7} parent=11 // pred_fallthru
        _
      // Predicated region
      $region17: #{_lambda_.7} parent=11 // pred_check
        %p340 = pneg %p126
      $region18: #{_lambda_.7} parent=11 // pred_check_branch
        %342 = sbr.rel (%p340) target = $region20
      $region19: #{_lambda_.7} parent=11 // pred_region
        _
      $region20: #{_lambda_.7} parent=11 // pred_fallthru
        _
      // Predicated region
      $region21: #{_lambda_.7} parent=11 // pred_check
        %p343 = pneg %p147
      $region22: #{_lambda_.7} parent=11 // pred_check_branch
        %345 = sbr.rel (%p343) target = $region24
      $region23: #{_lambda_.7} parent=11 // pred_region
        _
      $region24: #{_lambda_.7} parent=11 // pred_fallthru
        _
      // Predicated region
      $region25: #{_lambda_.7} parent=11 // pred_check
        %p346 = pneg %p168
      $region26: #{_lambda_.7} parent=11 // pred_check_branch
        %348 = sbr.rel (%p346) target = $region28
      $region27: #{_lambda_.7} parent=11 // pred_region
        _
      $region28: #{_lambda_.7} parent=11 // pred_fallthru
        _
      // Predicated region
      $region29: #{_lambda_.7} parent=11 // pred_check
        %p349 = pneg %p189
      $region30: #{_lambda_.7} parent=11 // pred_check_branch
        %351 = sbr.rel (%p349) target = $region32
      $region31: #{_lambda_.7} parent=11 // pred_region
        _
      $region32: #{_lambda_.7} parent=11 // pred_fallthru
        _
      // Predicated region
      $region33: #{_lambda_.7} parent=11 // pred_check
        %p352 = pneg %p210
      $region34: #{_lambda_.7} parent=11 // pred_check_branch
        %354 = sbr.rel (%p352) target = $region36
      $region35: #{_lambda_.7} parent=11 // pred_region
        _
      $region36: #{_lambda_.7} parent=11 // pred_fallthru
        _
      // Predicated region
      $region37: #{_lambda_.7} parent=11 // pred_check
        %p355 = pneg %p231
      $region38: #{_lambda_.7} parent=11 // pred_check_branch
        %357 = sbr.rel (%p355) target = $region40
      $region39: #{_lambda_.7} parent=11 // pred_region
        _
      $region40: #{_lambda_.7} parent=11 // pred_fallthru
        _
      // Predicated region
      $region41: #{_lambda_.7} parent=11 // pred_check
        %p358 = pneg %p252
      $region42: #{_lambda_.7} parent=11 // pred_check_branch
        %360 = sbr.rel (%p358) target = $region44
      $region43: #{_lambda_.7} parent=11 // pred_region
        _
      $region44: #{_lambda_.7} parent=11 // pred_fallthru
        _
      // Predicated region
      $region45: #{_lambda_.7} parent=11 // pred_check
        %p361 = pneg %p273
      $region46: #{_lambda_.7} parent=11 // pred_check_branch
        %363 = sbr.rel (%p361) target = $region48
      $region47: #{_lambda_.7} parent=11 // pred_region
        _
      $region48: #{_lambda_.7} parent=11 // pred_fallthru
        _
      // Predicated region
      $region49: #{_lambda_.7} parent=11 // pred_check
        %p364 = pneg %p294
      $region50: #{_lambda_.7} parent=11 // pred_check_branch
        %366 = sbr.rel (%p364) target = $region52
      $region51: #{_lambda_.7} parent=11 // pred_region
        _
      $region52: #{_lambda_.7} parent=11 // pred_fallthru
        _
    $region12: #{_lambda_.7} parent=5 // pred_fallthru
      _
    %p367 = scmp.lt.s32.totalorder %s18, 4
    // Predicated region
    $region53: #{_lambda_.7} parent=5 // pred_check
      %p368 = pneg %p367
    $region54: #{_lambda_.7} parent=5 // pred_check_branch
      %370 = sbr.rel (%p368) target = $region56
    $region55: #{_lambda_.7} parent=5 // pred_region
      // Predicated region
      $region57: #{_lambda_.7} parent=55 // pred_check
        %p371 = pneg %p52
      $region58: #{_lambda_.7} parent=55 // pred_check_branch
        %373 = sbr.rel (%p371) target = $region60
      $region59: #{_lambda_.7} parent=55 // pred_region
        %p374 = scmp.lt.s32.totalorder %s25, 3
        %s375 = scalar_select %p374, %s25, 3
        %p376 = scmp.lt.s32.totalorder %s26, 0
        %s377 = scalar_select %p376, %s26, 0
        %s378 = sadd.s32 %s377, %s375
        %s379 = smul.addr %s378, 8
        %s380 = scalar_lea.vmem %s0, %s379
      $region60: #{_lambda_.7} parent=55 // pred_fallthru
        _
      // Predicated region
      $region61: #{_lambda_.7} parent=55 // pred_check
        %p381 = pneg %p78
      $region62: #{_lambda_.7} parent=55 // pred_check_branch
        %383 = sbr.rel (%p381) target = $region64
      $region63: #{_lambda_.7} parent=55 // pred_region
        %p384 = scmp.lt.s32.totalorder %s25, 3
        %s385 = scalar_select %p384, %s25, 3
        %s386 = scalar_lea.vmem %s1, %s385
      $region64: #{_lambda_.7} parent=55 // pred_fallthru
        _
    $region56: #{_lambda_.7} parent=5 // pred_fallthru
      _
    %p387 = scmp.le.s32.totalorder 1, %s18
    %p388 = scmp.lt.s32.totalorder %s18, 5
    %p389 = pnand %p387, %p388
    %p390 = pneg %p389
    // Predicated region
    $region65: #{_lambda_.7} parent=5 // pred_check
      _
    $region66: #{_lambda_.7} parent=5 // pred_check_branch
      %392 = sbr.rel (%p389) target = $region68
    $region67: #{_lambda_.7} parent=5 // pred_region
      %s393 = ssub.s32 %s18, 1
      %p394 = scmp.lt.s32.totalorder %s27, 3
      %s395 = scalar_select %p394, %s27, 3
      %p396 = scmp.lt.s32.totalorder %s28, 0
      %s397 = scalar_select %p396, %s28, 0
      %s398 = sadd.s32 %s397, %s395
      %s399 = smul.addr %s398, 8
      %s400 = scalar_lea.vmem %s0, %s399
      %p401 = pneg %p58
      %p402 = pneg %p55
      %p403 = scmp.lt.s32.totalorder %s27, 3
      %s404 = scalar_select %p403, %s27, 3
      %s405 = scalar_lea.vmem %s1, %s404
      %p406 = pneg %p84
      %p407 = pneg %p81
      %p408 = pneg %p105
      %p409 = pneg %p102
      %p410 = pneg %p126
      %p411 = pneg %p123
      %p412 = pneg %p147
      %p413 = pneg %p144
      %p414 = pneg %p168
      %p415 = pneg %p165
      %p416 = pneg %p189
      %p417 = pneg %p186
      %p418 = pneg %p210
      %p419 = pneg %p207
      %p420 = pneg %p231
      %p421 = pneg %p228
      %p422 = pneg %p252
      %p423 = pneg %p249
      %p424 = pneg %p273
      %p425 = pneg %p270
      %p426 = pneg %p294
      %p427 = pneg %p291
      %p428 = pneg %p322
      %p429 = pneg %p319
      %p430 = scmp.lt.s32.totalorder %s27, 3
      %s431 = scalar_select %p430, %s27, 3
      %p432 = scmp.lt.s32.totalorder %s28, 0
      %s433 = scalar_select %p432, %s28, 0
      %s434 = sadd.s32 %s433, %s431
      %s435 = smul.addr %s434, 8
      %s436 = scalar_lea.vmem %s12, %s435
      %p437 = scmp.lt.s32.totalorder %s27, 3
      %s438 = scalar_select %p437, %s27, 3
      %p439 = scmp.lt.s32.totalorder %s28, 0
      %s440 = scalar_select %p439, %s28, 0
      %s441 = sadd.s32 %s440, %s438
      %s442 = smul.addr %s441, 8
      %s443 = scalar_lea.vmem %s0, %s442
      %p444 = scmp.lt.s32.totalorder %s27, 3
      %s445 = scalar_select %p444, %s27, 3
      %s446 = scalar_lea.vmem %s1, %s445
      %p447 = scmp.lt.s32.totalorder %s27, 3
      %s448 = scalar_select %p447, %s27, 3
      %p449 = scmp.lt.s32.totalorder %s28, 0
      %s450 = scalar_select %p449, %s28, 0
      %s451 = sadd.s32 %s450, %s448
      %s452 = smul.addr %s451, 8
      %s453 = scalar_lea.vmem %s12, %s452
      %v455 = vld [vmem:[%s2] sm:$0x1]
      %v456 = vld [vmem:[%s3] sm:$0x1]
      %v457 = vld [vmem:[%s443] sm:$0xff]
      %vm458 = vcmask 261120
      %v459 = vsel %vm458, %v457, 0.0
      %460 = vadd.xlane.f32.xlu0 %v459
      %v461 = vpop.xlane.xlu0 %460
      %v462 = vrcp.pop 32.0
      %v463 = vmul.f32 %v461, %v462
      %v464 = vsub.f32 %v457, %v463
      %v465 = vmul.f32 %v464, %v464
      %v466 = vsel %vm458, %v465, 0.0
      %467 = vadd.xlane.f32.xlu0 %v466
      %v468 = vpop.xlane.xlu0 %467
      %v469 = vmul.f32 %v468, %v462
      %v470 = vadd.f32 %v469, 1e-05
      %v471 = vrsqrt.pop %v470
      %v472 = vmul.f32 %v464, %v471
      %v474 = vlaneseq
      %v475 = vshrl.u32 %v474, 7
      %v476 = vsub.s32 0, %v475
      %v477 = vrot.slane %v455, %v476
      %v479 = vmul.f32 %v472, %v477
      %v481 = vlaneseq
      %v482 = vshrl.u32 %v481, 7
      %v483 = vsub.s32 0, %v482
      %v484 = vrot.slane %v456, %v483
      %v486 = vadd.f32 %v479, %v484
      %v487 = vpack.c.bf16 %v486, %v486
      %v488 = vld [vmem:[%s4] sm:$0xf]
      %v489 = vld [vmem:[%s4 + $0x4] sm:$0xf]
      %v490 = vld [vmem:[%s4 + $0x8] sm:$0xf]
      %v491 = vld [vmem:[%s4 + $0xc] sm:$0xf]
      %v492 = vld [vmem:[%s5] sm:$0x1]
      %v494 = vlaneseq
      %v495 = vshrl.u32 %v494, 7
      %v496 = vsub.s32 0, %v495
      %v497 = vrot.slane %v492, %v496
      %v503 = vunpack.c.l.b16 %v488
      %v504 = vunpack.c.l.b16 %v489
      %v505 = vunpack.c.l.b16 %v490
      %v506 = vunpack.c.l.b16 %v491
      %v507 = vpack.c.b16 %v504, %v503
      %v508 = vpack.c.b16 %v506, %v505
      %v512 = vsel %vm458, %v487, 0
      %514 = vmatprep.subr.bf16.mxu0 0
      %515 = vmatpush1.bf16.msra.mxu0 %v507
      %516 = vmatprep.subr.bf16.mxu0 0
      %517 = vmatpush1.bf16.msra.mxu0 %v508
      %518 = vmatprep.subr.bf16.mxu0 0
      %519 = vmatpush1.bf16.msra.mxu0 0
      %520 = vmatprep.subr.bf16.mxu0 0
      %521 = vmatpush1.bf16.msra.mxu0 0
      %522 = vmatprep.subr.bf16.mxu0 0
      %523 = vmatpush1.bf16.msra.mxu0 0
      %524 = vmatprep.subr.bf16.mxu0 0
      %525 = vmatpush1.bf16.msra.mxu0 0
      %526 = vmatprep.subr.bf16.mxu0 0
      %527 = vmatpush1.bf16.msra.mxu0 0
      %528 = vmatprep.subr.bf16.mxu0 0
      %529 = vmatpush1.bf16.msra.mxu0 0
      %530 = vmatprep.subr.bf16.mxu0 0
      %531 = vmatpush1.bf16.msra.mxu0 0
      %532 = vmatprep.subr.bf16.mxu0 0
      %533 = vmatpush1.bf16.msra.mxu0 0
      %534 = vmatprep.subr.bf16.mxu0 0
      %535 = vmatpush1.bf16.msra.mxu0 0
      %536 = vmatprep.subr.bf16.mxu0 0
      %537 = vmatpush1.bf16.msra.mxu0 0
      %538 = vmatprep.subr.bf16.mxu0 0
      %539 = vmatpush1.bf16.msra.mxu0 0
      %540 = vmatprep.subr.bf16.mxu0 0
      %541 = vmatpush1.bf16.msra.mxu0 0
      %542 = vmatprep.subr.bf16.mxu0 0
      %543 = vmatpush1.bf16.msra.mxu0 0
      %544 = vmatprep.subr.bf16.mxu0 0
      %545 = vmatpush1.bf16.msra.mxu0 0
      %546 = vmatprep.mubr.bf16.mxu0 0
      %547 = vmatmul.mubr.bf16.gmra.mrb[0].mxu0 %v512
      %v548 = vpop.f32.mrb[0].mxu0
      %v549 = vadd.f32 %v497, %v548
      %v550 = vpop.f32.mrb[0].mxu0
      %v551 = vpop.f32.mrb[0].mxu0
      %v552 = vpop.f32.mrb[0].mxu0
      %553 = vdwg.mxu0
      %v554 = vld [vmem:[%s6] sm:$0xf]
      %v555 = vld [vmem:[%s6 + $0x4] sm:$0xf]
      %v556 = vld [vmem:[%s6 + $0x8] sm:$0xf]
      %v557 = vld [vmem:[%s6 + $0xc] sm:$0xf]
      %v558 = vld [vmem:[%s7] sm:$0x1]
      %v560 = vlaneseq
      %v561 = vshrl.u32 %v560, 7
      %v562 = vsub.s32 0, %v561
      %v563 = vrot.slane %v558, %v562
      %v569 = vunpack.c.l.b16 %v554
      %v570 = vunpack.c.l.b16 %v555
      %v571 = vunpack.c.l.b16 %v556
      %v572 = vunpack.c.l.b16 %v557
      %v573 = vpack.c.b16 %v570, %v569
      %v574 = vpack.c.b16 %v572, %v571
      %577 = vmatprep.subr.bf16.mxu0 0
      %578 = vmatpush1.bf16.msra.mxu0 %v573
      %579 = vmatprep.subr.bf16.mxu0 0
      %580 = vmatpush1.bf16.msra.mxu0 %v574
      %581 = vmatprep.subr.bf16.mxu0 0
      %582 = vmatpush1.bf16.msra.mxu0 0
      %583 = vmatprep.subr.bf16.mxu0 0
      %584 = vmatpush1.bf16.msra.mxu0 0
      %585 = vmatprep.subr.bf16.mxu0 0
      %586 = vmatpush1.bf16.msra.mxu0 0
      %587 = vmatprep.subr.bf16.mxu0 0
      %588 = vmatpush1.bf16.msra.mxu0 0
      %589 = vmatprep.subr.bf16.mxu0 0
      %590 = vmatpush1.bf16.msra.mxu0 0
      %591 = vmatprep.subr.bf16.mxu0 0
      %592 = vmatpush1.bf16.msra.mxu0 0
      %593 = vmatprep.subr.bf16.mxu0 0
      %594 = vmatpush1.bf16.msra.mxu0 0
      %595 = vmatprep.subr.bf16.mxu0 0
      %596 = vmatpush1.bf16.msra.mxu0 0
      %597 = vmatprep.subr.bf16.mxu0 0
      %598 = vmatpush1.bf16.msra.mxu0 0
      %599 = vmatprep.subr.bf16.mxu0 0
      %600 = vmatpush1.bf16.msra.mxu0 0
      %601 = vmatprep.subr.bf16.mxu0 0
      %602 = vmatpush1.bf16.msra.mxu0 0
      %603 = vmatprep.subr.bf16.mxu0 0
      %604 = vmatpush1.bf16.msra.mxu0 0
      %605 = vmatprep.subr.bf16.mxu0 0
      %606 = vmatpush1.bf16.msra.mxu0 0
      %607 = vmatprep.subr.bf16.mxu0 0
      %608 = vmatpush1.bf16.msra.mxu0 0
      %609 = vmatprep.mubr.bf16.mxu0 0
      %610 = vmatmul.mubr.bf16.gmra.mrb[0].mxu0 %v512
      %v611 = vpop.f32.mrb[0].mxu0
      %v612 = vadd.f32 %v563, %v611
      %v613 = vpop.f32.mrb[0].mxu0
      %v614 = vpop.f32.mrb[0].mxu0
      %v615 = vpop.f32.mrb[0].mxu0
      %616 = vdwg.mxu0
      %v617 = vld [vmem:[%s8] sm:$0xf]
      %v618 = vld [vmem:[%s8 + $0x4] sm:$0xf]
      %v619 = vld [vmem:[%s8 + $0x8] sm:$0xf]
      %v620 = vld [vmem:[%s8 + $0xc] sm:$0xf]
      %v621 = vld [vmem:[%s9] sm:$0x1]
      %v623 = vlaneseq
      %v624 = vshrl.u32 %v623, 7
      %v625 = vsub.s32 0, %v624
      %v626 = vrot.slane %v621, %v625
      %v632 = vunpack.c.l.b16 %v617
      %v633 = vunpack.c.l.b16 %v618
      %v634 = vunpack.c.l.b16 %v619
      %v635 = vunpack.c.l.b16 %v620
      %v636 = vpack.c.b16 %v633, %v632
      %v637 = vpack.c.b16 %v635, %v634
      %640 = vmatprep.subr.bf16.mxu0 0
      %641 = vmatpush1.bf16.msra.mxu0 %v636
      %642 = vmatprep.subr.bf16.mxu0 0
      %643 = vmatpush1.bf16.msra.mxu0 %v637
      %644 = vmatprep.subr.bf16.mxu0 0
      %645 = vmatpush1.bf16.msra.mxu0 0
      %646 = vmatprep.subr.bf16.mxu0 0
      %647 = vmatpush1.bf16.msra.mxu0 0
      %648 = vmatprep.subr.bf16.mxu0 0
      %649 = vmatpush1.bf16.msra.mxu0 0
      %650 = vmatprep.subr.bf16.mxu0 0
      %651 = vmatpush1.bf16.msra.mxu0 0
      %652 = vmatprep.subr.bf16.mxu0 0
      %653 = vmatpush1.bf16.msra.mxu0 0
      %654 = vmatprep.subr.bf16.mxu0 0
      %655 = vmatpush1.bf16.msra.mxu0 0
      %656 = vmatprep.subr.bf16.mxu0 0
      %657 = vmatpush1.bf16.msra.mxu0 0
      %658 = vmatprep.subr.bf16.mxu0 0
      %659 = vmatpush1.bf16.msra.mxu0 0
      %660 = vmatprep.subr.bf16.mxu0 0
      %661 = vmatpush1.bf16.msra.mxu0 0
      %662 = vmatprep.subr.bf16.mxu0 0
      %663 = vmatpush1.bf16.msra.mxu0 0
      %664 = vmatprep.subr.bf16.mxu0 0
      %665 = vmatpush1.bf16.msra.mxu0 0
      %666 = vmatprep.subr.bf16.mxu0 0
      %667 = vmatpush1.bf16.msra.mxu0 0
      %668 = vmatprep.subr.bf16.mxu0 0
      %669 = vmatpush1.bf16.msra.mxu0 0
      %670 = vmatprep.subr.bf16.mxu0 0
      %671 = vmatpush1.bf16.msra.mxu0 0
      %672 = vmatprep.mubr.bf16.mxu0 0
      %673 = vmatmul.mubr.bf16.gmra.mrb[0].mxu0 %v512
      %v674 = vpop.f32.mrb[0].mxu0
      %v675 = vadd.f32 %v626, %v674
      %v676 = vpop.f32.mrb[0].mxu0
      %v677 = vpop.f32.mrb[0].mxu0
      %v678 = vpop.f32.mrb[0].mxu0
      %679 = vdwg.mxu0
      %v680 = vmul.f32 %v549, 0.35355338
      %v681 = vld [vmem:[%s446] sm:$0x1]
      %vm682 = vcmp.ne.f32.partialorder %v681, 0.0
      %v683 = vpack.c.bf16 %v680, %v680
      %v684 = vpack.c.bf16 %v612, %v612
      %v685 = vpack.c.bf16 %v675, %v675
      %vm686 = vcmask 64512
      %v688 = vsel %vm686, %v683, 0
      %v691 = vsel %vm686, %v684, 0
      %693 = vmatprep.subr.bf16.mxu0 0
      %694 = vmatpush1.bf16.xpose.msra.mxu0 %v691
      %695 = vmatprep.subr.bf16.mxu0 0
      %696 = vmatpush1.bf16.xpose.msra.mxu0 0
      %697 = vmatprep.subr.bf16.mxu0 0
      %698 = vmatpush1.bf16.xpose.msra.mxu0 0
      %699 = vmatprep.subr.bf16.mxu0 0
      %700 = vmatpush1.bf16.xpose.msra.mxu0 0
      %701 = vmatprep.subr.bf16.mxu0 0
      %702 = vmatpush1.bf16.xpose.msra.mxu0 0
      %703 = vmatprep.subr.bf16.mxu0 0
      %704 = vmatpush1.bf16.xpose.msra.mxu0 0
      %705 = vmatprep.subr.bf16.mxu0 0
      %706 = vmatpush1.bf16.xpose.msra.mxu0 0
      %707 = vmatprep.subr.bf16.mxu0 0
      %708 = vmatpush1.bf16.xpose.msra.mxu0 0
      %709 = vmatprep.subr.bf16.mxu0 0
      %710 = vmatpush1.bf16.xpose.msra.mxu0 0
      %711 = vmatprep.subr.bf16.mxu0 0
      %712 = vmatpush1.bf16.xpose.msra.mxu0 0
      %713 = vmatprep.subr.bf16.mxu0 0
      %714 = vmatpush1.bf16.xpose.msra.mxu0 0
      %715 = vmatprep.subr.bf16.mxu0 0
      %716 = vmatpush1.bf16.xpose.msra.mxu0 0
      %717 = vmatprep.subr.bf16.mxu0 0
      %718 = vmatpush1.bf16.xpose.msra.mxu0 0
      %719 = vmatprep.subr.bf16.mxu0 0
      %720 = vmatpush1.bf16.xpose.msra.mxu0 0
      %721 = vmatprep.subr.bf16.mxu0 0
      %722 = vmatpush1.bf16.xpose.msra.mxu0 0
      %723 = vmatprep.subr.bf16.mxu0 0
      %724 = vmatpush1.bf16.xpose.msra.mxu0 0
      %725 = vmatprep.mubr.bf16.mxu0 0
      %726 = vmatmul.mubr.bf16.gmra.mrb[0].mxu0 %v688
      %v727 = vpop.f32.mrb[0].mxu0
      %v728 = vadd.f32 0.0, %v727
      %v729 = vpop.f32.mrb[0].mxu0
      %v730 = vpop.f32.mrb[0].mxu0
      %v731 = vpop.f32.mrb[0].mxu0
      %732 = vdwg.mxu0
      %v733 = vsel %vm682, 1, 0
      %v734 = vlaneseq
      %v735 = vshrl.u32 %v734, 7
      %v736 = vsub.s32 0, %v735
      %v737 = vrot.slane %v733, %v736
      %vm738 = vcmp.eq.s32.totalorder %v737, 1
      %v739 = vsel %vm738, -1e+30, %v728
      %v740 = vsel %vm686, %v739, -inf
      %741 = vmax.xlane.f32.xlu0 %v740
      %v742 = vpop.xlane.xlu0 %741
      %v743 = vsub.f32 %v739, %v742
      %v744 = vmul.f32 %v743, 1.442695
      %v745 = vpow.pop %v744
      %v746 = vsel %vm686, %v745, 0.0
      %747 = vadd.xlane.f32.xlu0 %v746
      %v748 = vpop.xlane.xlu0 %747
      %v749 = vrcp.pop %v748
      %v750 = vmul.f32 %v745, %v749
      %v751 = vpack.c.bf16 %v750, %v750
      %v753 = vsel %vm686, %v751, 0
      %vm755 = vcmask 1043456
      %v757 = vsel %vm755, %v685, 0
      %759 = vmatprep.subr.bf16.mxu0 0
      %760 = vmatpush1.bf16.msra.mxu0 %v757
      %761 = vmatprep.subr.bf16.mxu0 0
      %762 = vmatpush1.bf16.msra.mxu0 0
      %763 = vmatprep.subr.bf16.mxu0 0
      %764 = vmatpush1.bf16.msra.mxu0 0
      %765 = vmatprep.subr.bf16.mxu0 0
      %766 = vmatpush1.bf16.msra.mxu0 0
      %767 = vmatprep.subr.bf16.mxu0 0
      %768 = vmatpush1.bf16.msra.mxu0 0
      %769 = vmatprep.subr.bf16.mxu0 0
      %770 = vmatpush1.bf16.msra.mxu0 0
      %771 = vmatprep.subr.bf16.mxu0 0
      %772 = vmatpush1.bf16.msra.mxu0 0
      %773 = vmatprep.subr.bf16.mxu0 0
      %774 = vmatpush1.bf16.msra.mxu0 0
      %775 = vmatprep.subr.bf16.mxu0 0
      %776 = vmatpush1.bf16.msra.mxu0 0
      %777 = vmatprep.subr.bf16.mxu0 0
      %778 = vmatpush1.bf16.msra.mxu0 0
      %779 = vmatprep.subr.bf16.mxu0 0
      %780 = vmatpush1.bf16.msra.mxu0 0
      %781 = vmatprep.subr.bf16.mxu0 0
      %782 = vmatpush1.bf16.msra.mxu0 0
      %783 = vmatprep.subr.bf16.mxu0 0
      %784 = vmatpush1.bf16.msra.mxu0 0
      %785 = vmatprep.subr.bf16.mxu0 0
      %786 = vmatpush1.bf16.msra.mxu0 0
      %787 = vmatprep.subr.bf16.mxu0 0
      %788 = vmatpush1.bf16.msra.mxu0 0
      %789 = vmatprep.subr.bf16.mxu0 0
      %790 = vmatpush1.bf16.msra.mxu0 0
      %791 = vmatprep.mubr.bf16.mxu0 0
      %792 = vmatmul.mubr.bf16.gmra.mrb[0].mxu0 %v753
      %v793 = vpop.f32.mrb[0].mxu0
      %v794 = vadd.f32 0.0, %v793
      %v795 = vpop.f32.mrb[0].mxu0
      %v796 = vpop.f32.mrb[0].mxu0
      %v797 = vpop.f32.mrb[0].mxu0
      %798 = vdwg.mxu0
      %800 = vrot.lane.b32.xlu0 %v683, 120
      %v801 = vpop.permute.xlu0 %800
      %803 = vrot.lane.b32.xlu0 %v684, 120
      %v804 = vpop.permute.xlu0 %803
      %v806 = vsel %vm686, %v801, 0
      %v809 = vsel %vm686, %v804, 0
      %811 = vmatprep.subr.bf16.mxu0 0
      %812 = vmatpush1.bf16.xpose.msra.mxu0 %v809
      %813 = vmatprep.subr.bf16.mxu0 0
      %814 = vmatpush1.bf16.xpose.msra.mxu0 0
      %815 = vmatprep.subr.bf16.mxu0 0
      %816 = vmatpush1.bf16.xpose.msra.mxu0 0
      %817 = vmatprep.subr.bf16.mxu0 0
      %818 = vmatpush1.bf16.xpose.msra.mxu0 0
      %819 = vmatprep.subr.bf16.mxu0 0
      %820 = vmatpush1.bf16.xpose.msra.mxu0 0
      %821 = vmatprep.subr.bf16.mxu0 0
      %822 = vmatpush1.bf16.xpose.msra.mxu0 0
      %823 = vmatprep.subr.bf16.mxu0 0
      %824 = vmatpush1.bf16.xpose.msra.mxu0 0
      %825 = vmatprep.subr.bf16.mxu0 0
      %826 = vmatpush1.bf16.xpose.msra.mxu0 0
      %827 = vmatprep.subr.bf16.mxu0 0
      %828 = vmatpush1.bf16.xpose.msra.mxu0 0
      %829 = vmatprep.subr.bf16.mxu0 0
      %830 = vmatpush1.bf16.xpose.msra.mxu0 0
      %831 = vmatprep.subr.bf16.mxu0 0
      %832 = vmatpush1.bf16.xpose.msra.mxu0 0
      %833 = vmatprep.subr.bf16.mxu0 0
      %834 = vmatpush1.bf16.xpose.msra.mxu0 0
      %835 = vmatprep.subr.bf16.mxu0 0
      %836 = vmatpush1.bf16.xpose.msra.mxu0 0
      %837 = vmatprep.subr.bf16.mxu0 0
      %838 = vmatpush1.bf16.xpose.msra.mxu0 0
      %839 = vmatprep.subr.bf16.mxu0 0
      %840 = vmatpush1.bf16.xpose.msra.mxu0 0
      %841 = vmatprep.subr.bf16.mxu0 0
      %842 = vmatpush1.bf16.xpose.msra.mxu0 0
      %843 = vmatprep.mubr.bf16.mxu0 0
      %844 = vmatmul.mubr.bf16.gmra.mrb[0].mxu0 %v806
      %v845 = vpop.f32.mrb[0].mxu0
      %v846 = vadd.f32 0.0, %v845
      %v847 = vpop.f32.mrb[0].mxu0
      %v848 = vpop.f32.mrb[0].mxu0
      %v849 = vpop.f32.mrb[0].mxu0
      %850 = vdwg.mxu0
      %v851 = vsel %vm738, -1e+30, %v846
      %v852 = vsel %vm686, %v851, -inf
      %853 = vmax.xlane.f32.xlu0 %v852
      %v854 = vpop.xlane.xlu0 %853
      %v855 = vsub.f32 %v851, %v854
      %v856 = vmul.f32 %v855, 1.442695
      %v857 = vpow.pop %v856
      %v858 = vsel %vm686, %v857, 0.0
      %859 = vadd.xlane.f32.xlu0 %v858
      %v860 = vpop.xlane.xlu0 %859
      %v861 = vrcp.pop %v860
      %v862 = vmul.f32 %v857, %v861
      %v863 = vpack.c.bf16 %v862, %v862
      %865 = vrot.lane.b32.xlu0 %v685, 120
      %v866 = vpop.permute.xlu0 %865
      %v868 = vsel %vm686, %v863, 0
      %v871 = vsel %vm755, %v866, 0
      %873 = vmatprep.subr.bf16.mxu0 0
      %874 = vmatpush1.bf16.msra.mxu0 %v871
      %875 = vmatprep.subr.bf16.mxu0 0
      %876 = vmatpush1.bf16.msra.mxu0 0
      %877 = vmatprep.subr.bf16.mxu0 0
      %878 = vmatpush1.bf16.msra.mxu0 0
      %879 = vmatprep.subr.bf16.mxu0 0
      %880 = vmatpush1.bf16.msra.mxu0 0
      %881 = vmatprep.subr.bf16.mxu0 0
      %882 = vmatpush1.bf16.msra.mxu0 0
      %883 = vmatprep.subr.bf16.mxu0 0
      %884 = vmatpush1.bf16.msra.mxu0 0
      %885 = vmatprep.subr.bf16.mxu0 0
      %886 = vmatpush1.bf16.msra.mxu0 0
      %887 = vmatprep.subr.bf16.mxu0 0
      %888 = vmatpush1.bf16.msra.mxu0 0
      %889 = vmatprep.subr.bf16.mxu0 0
      %890 = vmatpush1.bf16.msra.mxu0 0
      %891 = vmatprep.subr.bf16.mxu0 0
      %892 = vmatpush1.bf16.msra.mxu0 0
      %893 = vmatprep.subr.bf16.mxu0 0
      %894 = vmatpush1.bf16.msra.mxu0 0
      %895 = vmatprep.subr.bf16.mxu0 0
      %896 = vmatpush1.bf16.msra.mxu0 0
      %897 = vmatprep.subr.bf16.mxu0 0
      %898 = vmatpush1.bf16.msra.mxu0 0
      %899 = vmatprep.subr.bf16.mxu0 0
      %900 = vmatpush1.bf16.msra.mxu0 0
      %901 = vmatprep.subr.bf16.mxu0 0
      %902 = vmatpush1.bf16.msra.mxu0 0
      %903 = vmatprep.subr.bf16.mxu0 0
      %904 = vmatpush1.bf16.msra.mxu0 0
      %905 = vmatprep.mubr.bf16.mxu0 0
      %906 = vmatmul.mubr.bf16.gmra.mrb[0].mxu0 %v868
      %v907 = vpop.f32.mrb[0].mxu0
      %v908 = vadd.f32 0.0, %v907
      %v909 = vpop.f32.mrb[0].mxu0
      %v910 = vpop.f32.mrb[0].mxu0
      %v911 = vpop.f32.mrb[0].mxu0
      %912 = vdwg.mxu0
      %913 = vrot.lane.b32.xlu0 %v683, 112
      %v914 = vpop.permute.xlu0 %913
      %915 = vrot.lane.b32.xlu0 %v684, 112
      %v916 = vpop.permute.xlu0 %915
      %v918 = vsel %vm686, %v914, 0
      %v921 = vsel %vm686, %v916, 0
      %923 = vmatprep.subr.bf16.mxu0 0
      %924 = vmatpush1.bf16.xpose.msra.mxu0 %v921
      %925 = vmatprep.subr.bf16.mxu0 0
      %926 = vmatpush1.bf16.xpose.msra.mxu0 0
      %927 = vmatprep.subr.bf16.mxu0 0
      %928 = vmatpush1.bf16.xpose.msra.mxu0 0
      %929 = vmatprep.subr.bf16.mxu0 0
      %930 = vmatpush1.bf16.xpose.msra.mxu0 0
      %931 = vmatprep.subr.bf16.mxu0 0
      %932 = vmatpush1.bf16.xpose.msra.mxu0 0
      %933 = vmatprep.subr.bf16.mxu0 0
      %934 = vmatpush1.bf16.xpose.msra.mxu0 0
      %935 = vmatprep.subr.bf16.mxu0 0
      %936 = vmatpush1.bf16.xpose.msra.mxu0 0
      %937 = vmatprep.subr.bf16.mxu0 0
      %938 = vmatpush1.bf16.xpose.msra.mxu0 0
      %939 = vmatprep.subr.bf16.mxu0 0
      %940 = vmatpush1.bf16.xpose.msra.mxu0 0
      %941 = vmatprep.subr.bf16.mxu0 0
      %942 = vmatpush1.bf16.xpose.msra.mxu0 0
      %943 = vmatprep.subr.bf16.mxu0 0
      %944 = vmatpush1.bf16.xpose.msra.mxu0 0
      %945 = vmatprep.subr.bf16.mxu0 0
      %946 = vmatpush1.bf16.xpose.msra.mxu0 0
      %947 = vmatprep.subr.bf16.mxu0 0
      %948 = vmatpush1.bf16.xpose.msra.mxu0 0
      %949 = vmatprep.subr.bf16.mxu0 0
      %950 = vmatpush1.bf16.xpose.msra.mxu0 0
      %951 = vmatprep.subr.bf16.mxu0 0
      %952 = vmatpush1.bf16.xpose.msra.mxu0 0
      %953 = vmatprep.subr.bf16.mxu0 0
      %954 = vmatpush1.bf16.xpose.msra.mxu0 0
      %955 = vmatprep.mubr.bf16.mxu0 0
      %956 = vmatmul.mubr.bf16.gmra.mrb[0].mxu0 %v918
      %v957 = vpop.f32.mrb[0].mxu0
      %v958 = vadd.f32 0.0, %v957
      %v959 = vpop.f32.mrb[0].mxu0
      %v960 = vpop.f32.mrb[0].mxu0
      %v961 = vpop.f32.mrb[0].mxu0
      %962 = vdwg.mxu0
      %v963 = vsel %vm738, -1e+30, %v958
      %v964 = vsel %vm686, %v963, -inf
      %965 = vmax.xlane.f32.xlu0 %v964
      %v966 = vpop.xlane.xlu0 %965
      %v967 = vsub.f32 %v963, %v966
      %v968 = vmul.f32 %v967, 1.442695
      %v969 = vpow.pop %v968
      %v970 = vsel %vm686, %v969, 0.0
      %971 = vadd.xlane.f32.xlu0 %v970
      %v972 = vpop.xlane.xlu0 %971
      %v973 = vrcp.pop %v972
      %v974 = vmul.f32 %v969, %v973
      %v975 = vpack.c.bf16 %v974, %v974
      %976 = vrot.lane.b32.xlu0 %v685, 112
      %v977 = vpop.permute.xlu0 %976
      %v979 = vsel %vm686, %v975, 0
      %v982 = vsel %vm755, %v977, 0
      %984 = vmatprep.subr.bf16.mxu0 0
      %985 = vmatpush1.bf16.msra.mxu0 %v982
      %986 = vmatprep.subr.bf16.mxu0 0
      %987 = vmatpush1.bf16.msra.mxu0 0
      %988 = vmatprep.subr.bf16.mxu0 0
      %989 = vmatpush1.bf16.msra.mxu0 0
      %990 = vmatprep.subr.bf16.mxu0 0
      %991 = vmatpush1.bf16.msra.mxu0 0
      %992 = vmatprep.subr.bf16.mxu0 0
      %993 = vmatpush1.bf16.msra.mxu0 0
      %994 = vmatprep.subr.bf16.mxu0 0
      %995 = vmatpush1.bf16.msra.mxu0 0
      %996 = vmatprep.subr.bf16.mxu0 0
      %997 = vmatpush1.bf16.msra.mxu0 0
      %998 = vmatprep.subr.bf16.mxu0 0
      %999 = vmatpush1.bf16.msra.mxu0 0
      %1000 = vmatprep.subr.bf16.mxu0 0
      %1001 = vmatpush1.bf16.msra.mxu0 0
      %1002 = vmatprep.subr.bf16.mxu0 0
      %1003 = vmatpush1.bf16.msra.mxu0 0
      %1004 = vmatprep.subr.bf16.mxu0 0
      %1005 = vmatpush1.bf16.msra.mxu0 0
      %1006 = vmatprep.subr.bf16.mxu0 0
      %1007 = vmatpush1.bf16.msra.mxu0 0
      %1008 = vmatprep.subr.bf16.mxu0 0
      %1009 = vmatpush1.bf16.msra.mxu0 0
      %1010 = vmatprep.subr.bf16.mxu0 0
      %1011 = vmatpush1.bf16.msra.mxu0 0
      %1012 = vmatprep.subr.bf16.mxu0 0
      %1013 = vmatpush1.bf16.msra.mxu0 0
      %1014 = vmatprep.subr.bf16.mxu0 0
      %1015 = vmatpush1.bf16.msra.mxu0 0
      %1016 = vmatprep.mubr.bf16.mxu0 0
      %1017 = vmatmul.mubr.bf16.gmra.mrb[0].mxu0 %v979
      %v1018 = vpop.f32.mrb[0].mxu0
      %v1019 = vadd.f32 0.0, %v1018
      %v1020 = vpop.f32.mrb[0].mxu0
      %v1021 = vpop.f32.mrb[0].mxu0
      %v1022 = vpop.f32.mrb[0].mxu0
      %1023 = vdwg.mxu0
      %1024 = vrot.lane.b32.xlu0 %v683, 104
      %v1025 = vpop.permute.xlu0 %1024
      %1026 = vrot.lane.b32.xlu0 %v684, 104
      %v1027 = vpop.permute.xlu0 %1026
      %v1029 = vsel %vm686, %v1025, 0
      %v1032 = vsel %vm686, %v1027, 0
      %1034 = vmatprep.subr.bf16.mxu0 0
      %1035 = vmatpush1.bf16.xpose.msra.mxu0 %v1032
      %1036 = vmatprep.subr.bf16.mxu0 0
      %1037 = vmatpush1.bf16.xpose.msra.mxu0 0
      %1038 = vmatprep.subr.bf16.mxu0 0
      %1039 = vmatpush1.bf16.xpose.msra.mxu0 0
      %1040 = vmatprep.subr.bf16.mxu0 0
      %1041 = vmatpush1.bf16.xpose.msra.mxu0 0
      %1042 = vmatprep.subr.bf16.mxu0 0
      %1043 = vmatpush1.bf16.xpose.msra.mxu0 0
      %1044 = vmatprep.subr.bf16.mxu0 0
      %1045 = vmatpush1.bf16.xpose.msra.mxu0 0
      %1046 = vmatprep.subr.bf16.mxu0 0
      %1047 = vmatpush1.bf16.xpose.msra.mxu0 0
      %1048 = vmatprep.subr.bf16.mxu0 0
      %1049 = vmatpush1.bf16.xpose.msra.mxu0 0
      %1050 = vmatprep.subr.bf16.mxu0 0
      %1051 = vmatpush1.bf16.xpose.msra.mxu0 0
      %1052 = vmatprep.subr.bf16.mxu0 0
      %1053 = vmatpush1.bf16.xpose.msra.mxu0 0
      %1054 = vmatprep.subr.bf16.mxu0 0
      %1055 = vmatpush1.bf16.xpose.msra.mxu0 0
      %1056 = vmatprep.subr.bf16.mxu0 0
      %1057 = vmatpush1.bf16.xpose.msra.mxu0 0
      %1058 = vmatprep.subr.bf16.mxu0 0
      %1059 = vmatpush1.bf16.xpose.msra.mxu0 0
      %1060 = vmatprep.subr.bf16.mxu0 0
      %1061 = vmatpush1.bf16.xpose.msra.mxu0 0
      %1062 = vmatprep.subr.bf16.mxu0 0
      %1063 = vmatpush1.bf16.xpose.msra.mxu0 0
      %1064 = vmatprep.subr.bf16.mxu0 0
      %1065 = vmatpush1.bf16.xpose.msra.mxu0 0
      %1066 = vmatprep.mubr.bf16.mxu0 0
      %1067 = vmatmul.mubr.bf16.gmra.mrb[0].mxu0 %v1029
      %v1068 = vpop.f32.mrb[0].mxu0
      %v1069 = vadd.f32 0.0, %v1068
      %v1070 = vpop.f32.mrb[0].mxu0
      %v1071 = vpop.f32.mrb[0].mxu0
      %v1072 = vpop.f32.mrb[0].mxu0
      %1073 = vdwg.mxu0
      %v1074 = vsel %vm738, -1e+30, %v1069
      %v1075 = vsel %vm686, %v1074, -inf
      %1076 = vmax.xlane.f32.xlu0 %v1075
      %v1077 = vpop.xlane.xlu0 %1076
      %v1078 = vsub.f32 %v1074, %v1077
      %v1079 = vmul.f32 %v1078, 1.442695
      %v1080 = vpow.pop %v1079
      %v1081 = vsel %vm686, %v1080, 0.0
      %1082 = vadd.xlane.f32.xlu0 %v1081
      %v1083 = vpop.xlane.xlu0 %1082
      %v1084 = vrcp.pop %v1083
      %v1085 = vmul.f32 %v1080, %v1084
      %v1086 = vpack.c.bf16 %v1085, %v1085
      %1087 = vrot.lane.b32.xlu0 %v685, 104
      %v1088 = vpop.permute.xlu0 %1087
      %v1090 = vsel %vm686, %v1086, 0
      %v1093 = vsel %vm755, %v1088, 0
      %1095 = vmatprep.subr.bf16.mxu0 0
      %1096 = vmatpush1.bf16.msra.mxu0 %v1093
      %1097 = vmatprep.subr.bf16.mxu0 0
      %1098 = vmatpush1.bf16.msra.mxu0 0
      %1099 = vmatprep.subr.bf16.mxu0 0
      %1100 = vmatpush1.bf16.msra.mxu0 0
      %1101 = vmatprep.subr.bf16.mxu0 0
      %1102 = vmatpush1.bf16.msra.mxu0 0
      %1103 = vmatprep.subr.bf16.mxu0 0
      %1104 = vmatpush1.bf16.msra.mxu0 0
      %1105 = vmatprep.subr.bf16.mxu0 0
      %1106 = vmatpush1.bf16.msra.mxu0 0
      %1107 = vmatprep.subr.bf16.mxu0 0
      %1108 = vmatpush1.bf16.msra.mxu0 0
      %1109 = vmatprep.subr.bf16.mxu0 0
      %1110 = vmatpush1.bf16.msra.mxu0 0
      %1111 = vmatprep.subr.bf16.mxu0 0
      %1112 = vmatpush1.bf16.msra.mxu0 0
      %1113 = vmatprep.subr.bf16.mxu0 0
      %1114 = vmatpush1.bf16.msra.mxu0 0
      %1115 = vmatprep.subr.bf16.mxu0 0
      %1116 = vmatpush1.bf16.msra.mxu0 0
      %1117 = vmatprep.subr.bf16.mxu0 0
      %1118 = vmatpush1.bf16.msra.mxu0 0
      %1119 = vmatprep.subr.bf16.mxu0 0
      %1120 = vmatpush1.bf16.msra.mxu0 0
      %1121 = vmatprep.subr.bf16.mxu0 0
      %1122 = vmatpush1.bf16.msra.mxu0 0
      %1123 = vmatprep.subr.bf16.mxu0 0
      %1124 = vmatpush1.bf16.msra.mxu0 0
      %1125 = vmatprep.subr.bf16.mxu0 0
      %1126 = vmatpush1.bf16.msra.mxu0 0
      %1127 = vmatprep.mubr.bf16.mxu0 0
      %1128 = vmatmul.mubr.bf16.gmra.mrb[0].mxu0 %v1090
      %v1129 = vpop.f32.mrb[0].mxu0
      %v1130 = vadd.f32 0.0, %v1129
      %v1131 = vpop.f32.mrb[0].mxu0
      %v1132 = vpop.f32.mrb[0].mxu0
      %v1133 = vpop.f32.mrb[0].mxu0
      %1134 = vdwg.mxu0
      %1136 = vrot.lane.b32.xlu0 %v908, 8
      %v1137 = vpop.permute.xlu0 %1136
      %1140 = vrot.lane.b32.xlu0 %v1019, 16
      %v1141 = vpop.permute.xlu0 %1140
      %1144 = vrot.lane.b32.xlu0 %v1130, 24
      %v1145 = vpop.permute.xlu0 %1144
      %v1147 = vsel %vm686, %v794, %v1137
      %vm1148 = vcmask 130048
      %v1149 = vsel %vm1148, %v1147, %v1141
      %vm1150 = vcmask 195584
      %v1151 = vsel %vm1150, %v1149, %v1145
      %v1152 = vpack.c.bf16 %v1151, %v1151
      %v1153 = vld [vmem:[%s10] sm:$0xf]
      %v1154 = vld [vmem:[%s10 + $0x4] sm:$0xf]
      %v1155 = vld [vmem:[%s10 + $0x8] sm:$0xf]
      %v1156 = vld [vmem:[%s10 + $0xc] sm:$0xf]
      %v1157 = vld [vmem:[%s11] sm:$0x1]
      %v1159 = vlaneseq
      %v1160 = vshrl.u32 %v1159, 7
      %v1161 = vsub.s32 0, %v1160
      %v1162 = vrot.slane %v1157, %v1161
      %v1168 = vunpack.c.l.b16 %v1153
      %v1169 = vunpack.c.l.b16 %v1154
      %v1170 = vunpack.c.l.b16 %v1155
      %v1171 = vunpack.c.l.b16 %v1156
      %v1172 = vpack.c.b16 %v1169, %v1168
      %v1173 = vpack.c.b16 %v1171, %v1170
      %v1177 = vsel %vm458, %v1152, 0
      %1179 = vmatprep.subr.bf16.mxu0 0
      %1180 = vmatpush1.bf16.msra.mxu0 %v1172
      %1181 = vmatprep.subr.bf16.mxu0 0
      %1182 = vmatpush1.bf16.msra.mxu0 %v1173
      %1183 = vmatprep.subr.bf16.mxu0 0
      %1184 = vmatpush1.bf16.msra.mxu0 0
      %1185 = vmatprep.subr.bf16.mxu0 0
      %1186 = vmatpush1.bf16.msra.mxu0 0
      %1187 = vmatprep.subr.bf16.mxu0 0
      %1188 = vmatpush1.bf16.msra.mxu0 0
      %1189 = vmatprep.subr.bf16.mxu0 0
      %1190 = vmatpush1.bf16.msra.mxu0 0
      %1191 = vmatprep.subr.bf16.mxu0 0
      %1192 = vmatpush1.bf16.msra.mxu0 0
      %1193 = vmatprep.subr.bf16.mxu0 0
      %1194 = vmatpush1.bf16.msra.mxu0 0
      %1195 = vmatprep.subr.bf16.mxu0 0
      %1196 = vmatpush1.bf16.msra.mxu0 0
      %1197 = vmatprep.subr.bf16.mxu0 0
      %1198 = vmatpush1.bf16.msra.mxu0 0
      %1199 = vmatprep.subr.bf16.mxu0 0
      %1200 = vmatpush1.bf16.msra.mxu0 0
      %1201 = vmatprep.subr.bf16.mxu0 0
      %1202 = vmatpush1.bf16.msra.mxu0 0
      %1203 = vmatprep.subr.bf16.mxu0 0
      %1204 = vmatpush1.bf16.msra.mxu0 0
      %1205 = vmatprep.subr.bf16.mxu0 0
      %1206 = vmatpush1.bf16.msra.mxu0 0
      %1207 = vmatprep.subr.bf16.mxu0 0
      %1208 = vmatpush1.bf16.msra.mxu0 0
      %1209 = vmatprep.subr.bf16.mxu0 0
      %1210 = vmatpush1.bf16.msra.mxu0 0
      %1211 = vmatprep.mubr.bf16.mxu0 0
      %1212 = vmatmul.mubr.bf16.gmra.mrb[0].mxu0 %v1177
      %v1213 = vpop.f32.mrb[0].mxu0
      %v1214 = vadd.f32 %v1162, %v1213
      %v1215 = vpop.f32.mrb[0].mxu0
      %v1216 = vpop.f32.mrb[0].mxu0
      %v1217 = vpop.f32.mrb[0].mxu0
      %1218 = vdwg.mxu0
      %v1219 = vadd.f32 %v457, %v1214
      %1220 = vst.msk [vmem:[%s453] sm:$0xff] %vm458, %v1219
      %p1221 = scmp.lt.s32.totalorder %s27, 3
      %s1222 = scalar_select %p1221, %s27, 3
      %p1223 = scmp.lt.s32.totalorder %s28, 0
      %s1224 = scalar_select %p1223, %s28, 0
      %s1225 = sadd.s32 %s1224, %s1222
      %s1226 = smul.addr %s1225, 8
      %s1227 = scalar_lea.vmem %s12, %s1226
      // Predicated region
      $region69: #{_lambda_.7} parent=67 // pred_check
        %p1228 = pneg %p319
      $region70: #{_lambda_.7} parent=67 // pred_check_branch
        %1230 = sbr.rel (%p1228) target = $region72
      $region71: #{_lambda_.7} parent=67 // pred_region
        _
      $region72: #{_lambda_.7} parent=67 // pred_fallthru
        _
    $region68: #{_lambda_.7} parent=5 // pred_fallthru
      _
    %p1231 = scmp.le.s32.totalorder 2, %s18
    // Predicated region
    $region73: #{_lambda_.7} parent=5 // pred_check
      %p1232 = pneg %p1231
    $region74: #{_lambda_.7} parent=5 // pred_check_branch
      %1234 = sbr.rel (%p1232) target = $region76
    $region75: #{_lambda_.7} parent=5 // pred_region
      %s1235 = ssub.s32 %s18, 2
      // Predicated region
      $region77: #{_lambda_.7} parent=75 // pred_check
        %p1236 = pneg %p325
      $region78: #{_lambda_.7} parent=75 // pred_check_branch
        %1238 = sbr.rel (%p1236) target = $region80
      $region79: #{_lambda_.7} parent=75 // pred_region
        %p1239 = scmp.lt.s32.totalorder %s29, 3
        %s1240 = scalar_select %p1239, %s29, 3
        %p1241 = scmp.lt.s32.totalorder %s30, 0
        %s1242 = scalar_select %p1241, %s30, 0
        %s1243 = sadd.s32 %s1242, %s1240
        %s1244 = smul.addr %s1243, 8
        %s1245 = scalar_lea.vmem %s12, %s1244
      $region80: #{_lambda_.7} parent=75 // pred_fallthru
        _
    $region76: #{_lambda_.7} parent=5 // pred_fallthru
      _
  $region6: #{_lambda_.7} parent=0 // loop_footer
    %s22 = sadd.s32 1, %s18
  $region7: #{_lambda_.7} parent=0 // loop_footer_branch
    %17 = sbr.rel target = $region3
  $region8: #{_lambda_.7} parent=0 // loop_exit
    _

// kernel: _lambda_.6
$region0: #{_lambda_.6}
  #allocation0 [shape = 'u32[]', space=smem, size = 0x4, offset = 0x4, fixed_abs, tag = 'smem constant byte address 0x4 - core index']
  #allocation1 [shape = 'u32[144,128]{1,0:T(1,128)}', space=vmem, size = 0x12000, scoped, tag = 'internal scratch']
  %s0 = inlined_call_operand.vmem [shape: f32[2,8,32], index: 0, kind: input, shape index: {}]
  %s1 = inlined_call_operand.vmem [shape: f32[2,1,8], index: 1, kind: input, shape index: {}]
  %s2 = inlined_call_operand.vmem [shape: f32[1,32], index: 2, kind: input, shape index: {}]
  %s3 = inlined_call_operand.vmem [shape: f32[1,32], index: 3, kind: input, shape index: {}]
  %s4 = inlined_call_operand.vmem [shape: bf16[32,32], index: 4, kind: input, shape index: {}]
  %s5 = inlined_call_operand.vmem [shape: f32[1,32], index: 5, kind: input, shape index: {}]
  %s6 = inlined_call_operand.vmem [shape: bf16[32,32], index: 6, kind: input, shape index: {}]
  %s7 = inlined_call_operand.vmem [shape: f32[1,32], index: 7, kind: input, shape index: {}]
  %s8 = inlined_call_operand.vmem [shape: bf16[32,32], index: 8, kind: input, shape index: {}]
  %s9 = inlined_call_operand.vmem [shape: f32[1,32], index: 9, kind: input, shape index: {}]
  %s10 = inlined_call_operand.vmem [shape: bf16[32,32], index: 10, kind: input, shape index: {}]
  %s11 = inlined_call_operand.vmem [shape: f32[1,32], index: 11, kind: input, shape index: {}]
  %s12 = inlined_call_operand.vmem [shape: f32[2,8,32], index: 12, kind: output, shape index: {}]
  %s13 = sld [smem:[#allocation0]]
  $region81: #{_lambda_.6} parent=0
    _
  %s15 = ssub.s32 1, %s13
  %s16 = scalar_select 0, %s15, %s13
  loop: start=0, step=1, limit=4
  $region2: #{_lambda_.6} parent=0 // loop_pre_header
    _
  $region3: #{_lambda_.6} parent=0 // loop_header
    %s18 = sphi 0, %s22
    %p19 = scmp.ge.s32.totalorder %s18, 4
    %s25 = sphi 0, %s37
    %s26 = sphi 0, %s33
    %s27 = sphi 0, %s25
    %s28 = sphi 0, %s26
    %s29 = sphi 0, %s27
    %s30 = sphi 0, %s28
    %s42 = sphi 0, %s44
    %s45 = sphi 0, %s42
    %s46 = sphi 0, %s45
    %s62 = sphi 0, %s46
    %s68 = sphi 0, %s70
    %s71 = sphi 0, %s68
    %s72 = sphi 0, %s71
    %s88 = sphi 0, %s72
    %s92 = sphi 0, %s92
    %s94 = sphi 0, %s92
    %s95 = sphi 0, %s94
    %s109 = sphi 0, %s95
    %s113 = sphi 0, %s113
    %s115 = sphi 0, %s113
    %s116 = sphi 0, %s115
    %s130 = sphi 0, %s116
    %s134 = sphi 0, %s134
    %s136 = sphi 0, %s134
    %s137 = sphi 0, %s136
    %s151 = sphi 0, %s137
    %s155 = sphi 0, %s155
    %s157 = sphi 0, %s155
    %s158 = sphi 0, %s157
    %s172 = sphi 0, %s158
    %s176 = sphi 0, %s176
    %s178 = sphi 0, %s176
    %s179 = sphi 0, %s178
    %s193 = sphi 0, %s179
    %s197 = sphi 0, %s197
    %s199 = sphi 0, %s197
    %s200 = sphi 0, %s199
    %s214 = sphi 0, %s200
    %s218 = sphi 0, %s218
    %s220 = sphi 0, %s218
    %s221 = sphi 0, %s220
    %s235 = sphi 0, %s221
    %s239 = sphi 0, %s239
    %s241 = sphi 0, %s239
    %s242 = sphi 0, %s241
    %s256 = sphi 0, %s242
    %s260 = sphi 0, %s260
    %s262 = sphi 0, %s260
    %s263 = sphi 0, %s262
    %s277 = sphi 0, %s263
    %s281 = sphi 0, %s281
    %s283 = sphi 0, %s281
    %s284 = sphi 0, %s283
    %s298 = sphi 0, %s284
    %s306 = sphi 0, %s308
    %s309 = sphi 0, %s306
    %s310 = sphi 0, %s309
    %s326 = sphi 0, %s310
  $region4: #{_lambda_.6} parent=0 // loop_header_branch
    %21 = sbr.rel (%p19) target = $region8
  $region5: #{_lambda_.6} parent=0 // loop_body
    %s23 = ssub.s32 %s18, 1
    %s24 = ssub.s32 %s18, 2
    %s31 = sadd.s32 1, %s26
    %p32 = scmp.ge.s32.totalorder %s31, 1
    %s33 = scalar_select %p32, 0, %s31
    %s34 = sadd.s32 1, %s25
    %s35 = scalar_select %p32, %s34, %s25
    %p36 = scmp.ge.s32.totalorder %s35, 2
    %s37 = scalar_select %p36, 0, %s35
    %s38 = ssub.s32 %s25, %s37
    %s39 = ssub.s32 %s26, %s33
    %s40 = sor.u32 %s38, %s39
    %p41 = scmp.eq.s32.totalorder %s40, 0
    %s43 = sadd.s32 %s42, 1
    %s44 = scalar_select %p41, %s42, %s43
    %p47 = pneg %p41
    %p48 = scmp.eq.s32.totalorder %s18, 1
    %p49 = por %p47, %p48
    %p50 = scmp.ne.s32.totalorder %s42, %s45
    %p51 = scmp.eq.s32.totalorder %s18, 0
    %p52 = por %p50, %p51
    %p53 = scmp.ne.s32.totalorder %s42, %s45
    %p54 = scmp.eq.s32.totalorder %s23, 1
    %p55 = por %p53, %p54
    %p56 = scmp.ne.s32.totalorder %s45, %s46
    %p57 = scmp.eq.s32.totalorder %s23, 0
    %p58 = por %p56, %p57
    %p59 = scmp.ne.s32.totalorder %s45, %s46
    %p60 = scmp.eq.s32.totalorder %s24, 1
    %p61 = por %p59, %p60
    %p63 = scmp.ne.s32.totalorder %s46, %s62
    %p64 = scmp.eq.s32.totalorder %s24, 0
    %p65 = por %p63, %p64
    %s66 = ssub.s32 %s25, %s37
    %p67 = scmp.eq.s32.totalorder %s66, 0
    %s69 = sadd.s32 %s68, 1
    %s70 = scalar_select %p67, %s68, %s69
    %p73 = pneg %p67
    %p74 = scmp.eq.s32.totalorder %s18, 1
    %p75 = por %p73, %p74
    %p76 = scmp.ne.s32.totalorder %s68, %s71
    %p77 = scmp.eq.s32.totalorder %s18, 0
    %p78 = por %p76, %p77
    %p79 = scmp.ne.s32.totalorder %s68, %s71
    %p80 = scmp.eq.s32.totalorder %s23, 1
    %p81 = por %p79, %p80
    %p82 = scmp.ne.s32.totalorder %s71, %s72
    %p83 = scmp.eq.s32.totalorder %s23, 0
    %p84 = por %p82, %p83
    %p85 = scmp.ne.s32.totalorder %s71, %s72
    %p86 = scmp.eq.s32.totalorder %s24, 1
    %p87 = por %p85, %p86
    %p89 = scmp.ne.s32.totalorder %s72, %s88
    %p90 = scmp.eq.s32.totalorder %s24, 0
    %p91 = por %p89, %p90
    %s93 = sadd.s32 %s92, 1
    %p96 = scmp.eq.s32.totalorder %s18, 1
    %p97 = scmp.ne.s32.totalorder %s92, %s94
    %p98 = scmp.eq.s32.totalorder %s18, 0
    %p99 = por %p97, %p98
    %p100 = scmp.ne.s32.totalorder %s92, %s94
    %p101 = scmp.eq.s32.totalorder %s23, 1
    %p102 = por %p100, %p101
    %p103 = scmp.ne.s32.totalorder %s94, %s95
    %p104 = scmp.eq.s32.totalorder %s23, 0
    %p105 = por %p103, %p104
    %p106 = scmp.ne.s32.totalorder %s94, %s95
    %p107 = scmp.eq.s32.totalorder %s24, 1
    %p108 = por %p106, %p107
    %p110 = scmp.ne.s32.totalorder %s95, %s109
    %p111 = scmp.eq.s32.totalorder %s24, 0
    %p112 = por %p110, %p111
    %s114 = sadd.s32 %s113, 1
    %p117 = scmp.eq.s32.totalorder %s18, 1
    %p118 = scmp.ne.s32.totalorder %s113, %s115
    %p119 = scmp.eq.s32.totalorder %s18, 0
    %p120 = por %p118, %p119
    %p121 = scmp.ne.s32.totalorder %s113, %s115
    %p122 = scmp.eq.s32.totalorder %s23, 1
    %p123 = por %p121, %p122
    %p124 = scmp.ne.s32.totalorder %s115, %s116
    %p125 = scmp.eq.s32.totalorder %s23, 0
    %p126 = por %p124, %p125
    %p127 = scmp.ne.s32.totalorder %s115, %s116
    %p128 = scmp.eq.s32.totalorder %s24, 1
    %p129 = por %p127, %p128
    %p131 = scmp.ne.s32.totalorder %s116, %s130
    %p132 = scmp.eq.s32.totalorder %s24, 0
    %p133 = por %p131, %p132
    %s135 = sadd.s32 %s134, 1
    %p138 = scmp.eq.s32.totalorder %s18, 1
    %p139 = scmp.ne.s32.totalorder %s134, %s136
    %p140 = scmp.eq.s32.totalorder %s18, 0
    %p141 = por %p139, %p140
    %p142 = scmp.ne.s32.totalorder %s134, %s136
    %p143 = scmp.eq.s32.totalorder %s23, 1
    %p144 = por %p142, %p143
    %p145 = scmp.ne.s32.totalorder %s136, %s137
    %p146 = scmp.eq.s32.totalorder %s23, 0
    %p147 = por %p145, %p146
    %p148 = scmp.ne.s32.totalorder %s136, %s137
    %p149 = scmp.eq.s32.totalorder %s24, 1
    %p150 = por %p148, %p149
    %p152 = scmp.ne.s32.totalorder %s137, %s151
    %p153 = scmp.eq.s32.totalorder %s24, 0
    %p154 = por %p152, %p153
    %s156 = sadd.s32 %s155, 1
    %p159 = scmp.eq.s32.totalorder %s18, 1
    %p160 = scmp.ne.s32.totalorder %s155, %s157
    %p161 = scmp.eq.s32.totalorder %s18, 0
    %p162 = por %p160, %p161
    %p163 = scmp.ne.s32.totalorder %s155, %s157
    %p164 = scmp.eq.s32.totalorder %s23, 1
    %p165 = por %p163, %p164
    %p166 = scmp.ne.s32.totalorder %s157, %s158
    %p167 = scmp.eq.s32.totalorder %s23, 0
    %p168 = por %p166, %p167
    %p169 = scmp.ne.s32.totalorder %s157, %s158
    %p170 = scmp.eq.s32.totalorder %s24, 1
    %p171 = por %p169, %p170
    %p173 = scmp.ne.s32.totalorder %s158, %s172
    %p174 = scmp.eq.s32.totalorder %s24, 0
    %p175 = por %p173, %p174
    %s177 = sadd.s32 %s176, 1
    %p180 = scmp.eq.s32.totalorder %s18, 1
    %p181 = scmp.ne.s32.totalorder %s176, %s178
    %p182 = scmp.eq.s32.totalorder %s18, 0
    %p183 = por %p181, %p182
    %p184 = scmp.ne.s32.totalorder %s176, %s178
    %p185 = scmp.eq.s32.totalorder %s23, 1
    %p186 = por %p184, %p185
    %p187 = scmp.ne.s32.totalorder %s178, %s179
    %p188 = scmp.eq.s32.totalorder %s23, 0
    %p189 = por %p187, %p188
    %p190 = scmp.ne.s32.totalorder %s178, %s179
    %p191 = scmp.eq.s32.totalorder %s24, 1
    %p192 = por %p190, %p191
    %p194 = scmp.ne.s32.totalorder %s179, %s193
    %p195 = scmp.eq.s32.totalorder %s24, 0
    %p196 = por %p194, %p195
    %s198 = sadd.s32 %s197, 1
    %p201 = scmp.eq.s32.totalorder %s18, 1
    %p202 = scmp.ne.s32.totalorder %s197, %s199
    %p203 = scmp.eq.s32.totalorder %s18, 0
    %p204 = por %p202, %p203
    %p205 = scmp.ne.s32.totalorder %s197, %s199
    %p206 = scmp.eq.s32.totalorder %s23, 1
    %p207 = por %p205, %p206
    %p208 = scmp.ne.s32.totalorder %s199, %s200
    %p209 = scmp.eq.s32.totalorder %s23, 0
    %p210 = por %p208, %p209
    %p211 = scmp.ne.s32.totalorder %s199, %s200
    %p212 = scmp.eq.s32.totalorder %s24, 1
    %p213 = por %p211, %p212
    %p215 = scmp.ne.s32.totalorder %s200, %s214
    %p216 = scmp.eq.s32.totalorder %s24, 0
    %p217 = por %p215, %p216
    %s219 = sadd.s32 %s218, 1
    %p222 = scmp.eq.s32.totalorder %s18, 1
    %p223 = scmp.ne.s32.totalorder %s218, %s220
    %p224 = scmp.eq.s32.totalorder %s18, 0
    %p225 = por %p223, %p224
    %p226 = scmp.ne.s32.totalorder %s218, %s220
    %p227 = scmp.eq.s32.totalorder %s23, 1
    %p228 = por %p226, %p227
    %p229 = scmp.ne.s32.totalorder %s220, %s221
    %p230 = scmp.eq.s32.totalorder %s23, 0
    %p231 = por %p229, %p230
    %p232 = scmp.ne.s32.totalorder %s220, %s221
    %p233 = scmp.eq.s32.totalorder %s24, 1
    %p234 = por %p232, %p233
    %p236 = scmp.ne.s32.totalorder %s221, %s235
    %p237 = scmp.eq.s32.totalorder %s24, 0
    %p238 = por %p236, %p237
    %s240 = sadd.s32 %s239, 1
    %p243 = scmp.eq.s32.totalorder %s18, 1
    %p244 = scmp.ne.s32.totalorder %s239, %s241
    %p245 = scmp.eq.s32.totalorder %s18, 0
    %p246 = por %p244, %p245
    %p247 = scmp.ne.s32.totalorder %s239, %s241
    %p248 = scmp.eq.s32.totalorder %s23, 1
    %p249 = por %p247, %p248
    %p250 = scmp.ne.s32.totalorder %s241, %s242
    %p251 = scmp.eq.s32.totalorder %s23, 0
    %p252 = por %p250, %p251
    %p253 = scmp.ne.s32.totalorder %s241, %s242
    %p254 = scmp.eq.s32.totalorder %s24, 1
    %p255 = por %p253, %p254
    %p257 = scmp.ne.s32.totalorder %s242, %s256
    %p258 = scmp.eq.s32.totalorder %s24, 0
    %p259 = por %p257, %p258
    %s261 = sadd.s32 %s260, 1
    %p264 = scmp.eq.s32.totalorder %s18, 1
    %p265 = scmp.ne.s32.totalorder %s260, %s262
    %p266 = scmp.eq.s32.totalorder %s18, 0
    %p267 = por %p265, %p266
    %p268 = scmp.ne.s32.totalorder %s260, %s262
    %p269 = scmp.eq.s32.totalorder %s23, 1
    %p270 = por %p268, %p269
    %p271 = scmp.ne.s32.totalorder %s262, %s263
    %p272 = scmp.eq.s32.totalorder %s23, 0
    %p273 = por %p271, %p272
    %p274 = scmp.ne.s32.totalorder %s262, %s263
    %p275 = scmp.eq.s32.totalorder %s24, 1
    %p276 = por %p274, %p275
    %p278 = scmp.ne.s32.totalorder %s263, %s277
    %p279 = scmp.eq.s32.totalorder %s24, 0
    %p280 = por %p278, %p279
    %s282 = sadd.s32 %s281, 1
    %p285 = scmp.eq.s32.totalorder %s18, 1
    %p286 = scmp.ne.s32.totalorder %s281, %s283
    %p287 = scmp.eq.s32.totalorder %s18, 0
    %p288 = por %p286, %p287
    %p289 = scmp.ne.s32.totalorder %s281, %s283
    %p290 = scmp.eq.s32.totalorder %s23, 1
    %p291 = por %p289, %p290
    %p292 = scmp.ne.s32.totalorder %s283, %s284
    %p293 = scmp.eq.s32.totalorder %s23, 0
    %p294 = por %p292, %p293
    %p295 = scmp.ne.s32.totalorder %s283, %s284
    %p296 = scmp.eq.s32.totalorder %s24, 1
    %p297 = por %p295, %p296
    %p299 = scmp.ne.s32.totalorder %s284, %s298
    %p300 = scmp.eq.s32.totalorder %s24, 0
    %p301 = por %p299, %p300
    %s302 = ssub.s32 %s25, %s37
    %s303 = ssub.s32 %s26, %s33
    %s304 = sor.u32 %s302, %s303
    %p305 = scmp.eq.s32.totalorder %s304, 0
    %s307 = sadd.s32 %s306, 1
    %s308 = scalar_select %p305, %s306, %s307
    %p311 = pneg %p305
    %p312 = scmp.eq.s32.totalorder %s18, 1
    %p313 = por %p311, %p312
    %p314 = scmp.ne.s32.totalorder %s306, %s309
    %p315 = scmp.eq.s32.totalorder %s18, 0
    %p316 = por %p314, %p315
    %p317 = scmp.ne.s32.totalorder %s306, %s309
    %p318 = scmp.eq.s32.totalorder %s23, 1
    %p319 = por %p317, %p318
    %p320 = scmp.ne.s32.totalorder %s309, %s310
    %p321 = scmp.eq.s32.totalorder %s23, 0
    %p322 = por %p320, %p321
    %p323 = scmp.ne.s32.totalorder %s309, %s310
    %p324 = scmp.eq.s32.totalorder %s24, 1
    %p325 = por %p323, %p324
    %p327 = scmp.ne.s32.totalorder %s310, %s326
    %p328 = scmp.eq.s32.totalorder %s24, 0
    %p329 = por %p327, %p328
    %p330 = scmp.le.s32.totalorder 1, %s18
    %p331 = scmp.lt.s32.totalorder %s18, 3
    %p332 = pnand %p330, %p331
    %p333 = pneg %p332
    // Predicated region
    $region9: #{_lambda_.6} parent=5 // pred_check
      _
    $region10: #{_lambda_.6} parent=5 // pred_check_branch
      %335 = sbr.rel (%p332) target = $region12
    $region11: #{_lambda_.6} parent=5 // pred_region
      %s336 = ssub.s32 %s18, 1
      // Predicated region
      $region13: #{_lambda_.6} parent=11 // pred_check
        %p337 = pneg %p105
      $region14: #{_lambda_.6} parent=11 // pred_check_branch
        %339 = sbr.rel (%p337) target = $region16
      $region15: #{_lambda_.6} parent=11 // pred_region
        _
      $region16: #{_lambda_.6} parent=11 // pred_fallthru
        _
      // Predicated region
      $region17: #{_lambda_.6} parent=11 // pred_check
        %p340 = pneg %p126
      $region18: #{_lambda_.6} parent=11 // pred_check_branch
        %342 = sbr.rel (%p340) target = $region20
      $region19: #{_lambda_.6} parent=11 // pred_region
        _
      $region20: #{_lambda_.6} parent=11 // pred_fallthru
        _
      // Predicated region
      $region21: #{_lambda_.6} parent=11 // pred_check
        %p343 = pneg %p147
      $region22: #{_lambda_.6} parent=11 // pred_check_branch
        %345 = sbr.rel (%p343) target = $region24
      $region23: #{_lambda_.6} parent=11 // pred_region
        _
      $region24: #{_lambda_.6} parent=11 // pred_fallthru
        _
      // Predicated region
      $region25: #{_lambda_.6} parent=11 // pred_check
        %p346 = pneg %p168
      $region26: #{_lambda_.6} parent=11 // pred_check_branch
        %348 = sbr.rel (%p346) target = $region28
      $region27: #{_lambda_.6} parent=11 // pred_region
        _
      $region28: #{_lambda_.6} parent=11 // pred_fallthru
        _
      // Predicated region
      $region29: #{_lambda_.6} parent=11 // pred_check
        %p349 = pneg %p189
      $region30: #{_lambda_.6} parent=11 // pred_check_branch
        %351 = sbr.rel (%p349) target = $region32
      $region31: #{_lambda_.6} parent=11 // pred_region
        _
      $region32: #{_lambda_.6} parent=11 // pred_fallthru
        _
      // Predicated region
      $region33: #{_lambda_.6} parent=11 // pred_check
        %p352 = pneg %p210
      $region34: #{_lambda_.6} parent=11 // pred_check_branch
        %354 = sbr.rel (%p352) target = $region36
      $region35: #{_lambda_.6} parent=11 // pred_region
        _
      $region36: #{_lambda_.6} parent=11 // pred_fallthru
        _
      // Predicated region
      $region37: #{_lambda_.6} parent=11 // pred_check
        %p355 = pneg %p231
      $region38: #{_lambda_.6} parent=11 // pred_check_branch
        %357 = sbr.rel (%p355) target = $region40
      $region39: #{_lambda_.6} parent=11 // pred_region
        _
      $region40: #{_lambda_.6} parent=11 // pred_fallthru
        _
      // Predicated region
      $region41: #{_lambda_.6} parent=11 // pred_check
        %p358 = pneg %p252
      $region42: #{_lambda_.6} parent=11 // pred_check_branch
        %360 = sbr.rel (%p358) target = $region44
      $region43: #{_lambda_.6} parent=11 // pred_region
        _
      $region44: #{_lambda_.6} parent=11 // pred_fallthru
        _
      // Predicated region
      $region45: #{_lambda_.6} parent=11 // pred_check
        %p361 = pneg %p273
      $region46: #{_lambda_.6} parent=11 // pred_check_branch
        %363 = sbr.rel (%p361) target = $region48
      $region47: #{_lambda_.6} parent=11 // pred_region
        _
      $region48: #{_lambda_.6} parent=11 // pred_fallthru
        _
      // Predicated region
      $region49: #{_lambda_.6} parent=11 // pred_check
        %p364 = pneg %p294
      $region50: #{_lambda_.6} parent=11 // pred_check_branch
        %366 = sbr.rel (%p364) target = $region52
      $region51: #{_lambda_.6} parent=11 // pred_region
        _
      $region52: #{_lambda_.6} parent=11 // pred_fallthru
        _
    $region12: #{_lambda_.6} parent=5 // pred_fallthru
      _
    %p367 = scmp.lt.s32.totalorder %s18, 2
    // Predicated region
    $region53: #{_lambda_.6} parent=5 // pred_check
      %p368 = pneg %p367
    $region54: #{_lambda_.6} parent=5 // pred_check_branch
      %370 = sbr.rel (%p368) target = $region56
    $region55: #{_lambda_.6} parent=5 // pred_region
      // Predicated region
      $region57: #{_lambda_.6} parent=55 // pred_check
        %p371 = pneg %p52
      $region58: #{_lambda_.6} parent=55 // pred_check_branch
        %373 = sbr.rel (%p371) target = $region60
      $region59: #{_lambda_.6} parent=55 // pred_region
        %p374 = scmp.lt.s32.totalorder %s25, 1
        %s375 = scalar_select %p374, %s25, 1
        %p376 = scmp.lt.s32.totalorder %s26, 0
        %s377 = scalar_select %p376, %s26, 0
        %s378 = sadd.s32 %s377, %s375
        %s379 = smul.addr %s378, 8
        %s380 = scalar_lea.vmem %s0, %s379
      $region60: #{_lambda_.6} parent=55 // pred_fallthru
        _
      // Predicated region
      $region61: #{_lambda_.6} parent=55 // pred_check
        %p381 = pneg %p78
      $region62: #{_lambda_.6} parent=55 // pred_check_branch
        %383 = sbr.rel (%p381) target = $region64
      $region63: #{_lambda_.6} parent=55 // pred_region
        %p384 = scmp.lt.s32.totalorder %s25, 1
        %s385 = scalar_select %p384, %s25, 1
        %s386 = scalar_lea.vmem %s1, %s385
      $region64: #{_lambda_.6} parent=55 // pred_fallthru
        _
    $region56: #{_lambda_.6} parent=5 // pred_fallthru
      _
    %p387 = scmp.le.s32.totalorder 1, %s18
    %p388 = scmp.lt.s32.totalorder %s18, 3
    %p389 = pnand %p387, %p388
    %p390 = pneg %p389
    // Predicated region
    $region65: #{_lambda_.6} parent=5 // pred_check
      _
    $region66: #{_lambda_.6} parent=5 // pred_check_branch
      %392 = sbr.rel (%p389) target = $region68
    $region67: #{_lambda_.6} parent=5 // pred_region
      %s393 = ssub.s32 %s18, 1
      %p394 = scmp.lt.s32.totalorder %s27, 1
      %s395 = scalar_select %p394, %s27, 1
      %p396 = scmp.lt.s32.totalorder %s28, 0
      %s397 = scalar_select %p396, %s28, 0
      %s398 = sadd.s32 %s397, %s395
      %s399 = smul.addr %s398, 8
      %s400 = scalar_lea.vmem %s0, %s399
      %p401 = pneg %p58
      %p402 = pneg %p55
      %p403 = scmp.lt.s32.totalorder %s27, 1
      %s404 = scalar_select %p403, %s27, 1
      %s405 = scalar_lea.vmem %s1, %s404
      %p406 = pneg %p84
      %p407 = pneg %p81
      %p408 = pneg %p105
      %p409 = pneg %p102
      %p410 = pneg %p126
      %p411 = pneg %p123
      %p412 = pneg %p147
      %p413 = pneg %p144
      %p414 = pneg %p168
      %p415 = pneg %p165
      %p416 = pneg %p189
      %p417 = pneg %p186
      %p418 = pneg %p210
      %p419 = pneg %p207
      %p420 = pneg %p231
      %p421 = pneg %p228
      %p422 = pneg %p252
      %p423 = pneg %p249
      %p424 = pneg %p273
      %p425 = pneg %p270
      %p426 = pneg %p294
      %p427 = pneg %p291
      %p428 = pneg %p322
      %p429 = pneg %p319
      %p430 = scmp.lt.s32.totalorder %s27, 1
      %s431 = scalar_select %p430, %s27, 1
      %p432 = scmp.lt.s32.totalorder %s28, 0
      %s433 = scalar_select %p432, %s28, 0
      %s434 = sadd.s32 %s433, %s431
      %s435 = smul.addr %s434, 8
      %s436 = scalar_lea.vmem %s12, %s435
      %p437 = scmp.lt.s32.totalorder %s27, 1
      %s438 = scalar_select %p437, %s27, 1
      %p439 = scmp.lt.s32.totalorder %s28, 0
      %s440 = scalar_select %p439, %s28, 0
      %s441 = sadd.s32 %s440, %s438
      %s442 = smul.addr %s441, 8
      %s443 = scalar_lea.vmem %s0, %s442
      %p444 = scmp.lt.s32.totalorder %s27, 1
      %s445 = scalar_select %p444, %s27, 1
      %s446 = scalar_lea.vmem %s1, %s445
      %p447 = scmp.lt.s32.totalorder %s27, 1
      %s448 = scalar_select %p447, %s27, 1
      %p449 = scmp.lt.s32.totalorder %s28, 0
      %s450 = scalar_select %p449, %s28, 0
      %s451 = sadd.s32 %s450, %s448
      %s452 = smul.addr %s451, 8
      %s453 = scalar_lea.vmem %s12, %s452
      %v455 = vld [vmem:[%s2] sm:$0x1]
      %v456 = vld [vmem:[%s3] sm:$0x1]
      %v457 = vld [vmem:[%s443] sm:$0xff]
      %vm458 = vcmask 261120
      %v459 = vsel %vm458, %v457, 0.0
      %460 = vadd.xlane.f32.xlu0 %v459
      %v461 = vpop.xlane.xlu0 %460
      %v462 = vrcp.pop 32.0
      %v463 = vmul.f32 %v461, %v462
      %v464 = vsub.f32 %v457, %v463
      %v465 = vmul.f32 %v464, %v464
      %v466 = vsel %vm458, %v465, 0.0
      %467 = vadd.xlane.f32.xlu0 %v466
      %v468 = vpop.xlane.xlu0 %467
      %v469 = vmul.f32 %v468, %v462
      %v470 = vadd.f32 %v469, 1e-05
      %v471 = vrsqrt.pop %v470
      %v472 = vmul.f32 %v464, %v471
      %v474 = vlaneseq
      %v475 = vshrl.u32 %v474, 7
      %v476 = vsub.s32 0, %v475
      %v477 = vrot.slane %v455, %v476
      %v479 = vmul.f32 %v472, %v477
      %v481 = vlaneseq
      %v482 = vshrl.u32 %v481, 7
      %v483 = vsub.s32 0, %v482
      %v484 = vrot.slane %v456, %v483
      %v486 = vadd.f32 %v479, %v484
      %v487 = vpack.c.bf16 %v486, %v486
      %v488 = vld [vmem:[%s4] sm:$0xf]
      %v489 = vld [vmem:[%s4 + $0x4] sm:$0xf]
      %v490 = vld [vmem:[%s4 + $0x8] sm:$0xf]
      %v491 = vld [vmem:[%s4 + $0xc] sm:$0xf]
      %v492 = vld [vmem:[%s5] sm:$0x1]
      %v494 = vlaneseq
      %v495 = vshrl.u32 %v494, 7
      %v496 = vsub.s32 0, %v495
      %v497 = vrot.slane %v492, %v496
      %v503 = vunpack.c.l.b16 %v488
      %v504 = vunpack.c.l.b16 %v489
      %v505 = vunpack.c.l.b16 %v490
      %v506 = vunpack.c.l.b16 %v491
      %v507 = vpack.c.b16 %v504, %v503
      %v508 = vpack.c.b16 %v506, %v505
      %v512 = vsel %vm458, %v487, 0
      %514 = vmatprep.subr.bf16.mxu0 0
      %515 = vmatpush1.bf16.msra.mxu0 %v507
      %516 = vmatprep.subr.bf16.mxu0 0
      %517 = vmatpush1.bf16.msra.mxu0 %v508
      %518 = vmatprep.subr.bf16.mxu0 0
      %519 = vmatpush1.bf16.msra.mxu0 0
      %520 = vmatprep.subr.bf16.mxu0 0
      %521 = vmatpush1.bf16.msra.mxu0 0
      %522 = vmatprep.subr.bf16.mxu0 0
      %523 = vmatpush1.bf16.msra.mxu0 0
      %524 = vmatprep.subr.bf16.mxu0 0
      %525 = vmatpush1.bf16.msra.mxu0 0
      %526 = vmatprep.subr.bf16.mxu0 0
      %527 = vmatpush1.bf16.msra.mxu0 0
      %528 = vmatprep.subr.bf16.mxu0 0
      %529 = vmatpush1.bf16.msra.mxu0 0
      %530 = vmatprep.subr.bf16.mxu0 0
      %531 = vmatpush1.bf16.msra.mxu0 0
      %532 = vmatprep.subr.bf16.mxu0 0
      %533 = vmatpush1.bf16.msra.mxu0 0
      %534 = vmatprep.subr.bf16.mxu0 0
      %535 = vmatpush1.bf16.msra.mxu0 0
      %536 = vmatprep.subr.bf16.mxu0 0
      %537 = vmatpush1.bf16.msra.mxu0 0
      %538 = vmatprep.subr.bf16.mxu0 0
      %539 = vmatpush1.bf16.msra.mxu0 0
      %540 = vmatprep.subr.bf16.mxu0 0
      %541 = vmatpush1.bf16.msra.mxu0 0
      %542 = vmatprep.subr.bf16.mxu0 0
      %543 = vmatpush1.bf16.msra.mxu0 0
      %544 = vmatprep.subr.bf16.mxu0 0
      %545 = vmatpush1.bf16.msra.mxu0 0
      %546 = vmatprep.mubr.bf16.mxu0 0
      %547 = vmatmul.mubr.bf16.gmra.mrb[0].mxu0 %v512
      %v548 = vpop.f32.mrb[0].mxu0
      %v549 = vadd.f32 %v497, %v548
      %v550 = vpop.f32.mrb[0].mxu0
      %v551 = vpop.f32.mrb[0].mxu0
      %v552 = vpop.f32.mrb[0].mxu0
      %553 = vdwg.mxu0
      %v554 = vld [vmem:[%s6] sm:$0xf]
      %v555 = vld [vmem:[%s6 + $0x4] sm:$0xf]
      %v556 = vld [vmem:[%s6 + $0x8] sm:$0xf]
      %v557 = vld [vmem:[%s6 + $0xc] sm:$0xf]
      %v558 = vld [vmem:[%s7] sm:$0x1]
      %v560 = vlaneseq
      %v561 = vshrl.u32 %v560, 7
      %v562 = vsub.s32 0, %v561
      %v563 = vrot.slane %v558, %v562
      %v569 = vunpack.c.l.b16 %v554
      %v570 = vunpack.c.l.b16 %v555
      %v571 = vunpack.c.l.b16 %v556
      %v572 = vunpack.c.l.b16 %v557
      %v573 = vpack.c.b16 %v570, %v569
      %v574 = vpack.c.b16 %v572, %v571
      %577 = vmatprep.subr.bf16.mxu0 0
      %578 = vmatpush1.bf16.msra.mxu0 %v573
      %579 = vmatprep.subr.bf16.mxu0 0
      %580 = vmatpush1.bf16.msra.mxu0 %v574
      %581 = vmatprep.subr.bf16.mxu0 0
      %582 = vmatpush1.bf16.msra.mxu0 0
      %583 = vmatprep.subr.bf16.mxu0 0
      %584 = vmatpush1.bf16.msra.mxu0 0
      %585 = vmatprep.subr.bf16.mxu0 0
      %586 = vmatpush1.bf16.msra.mxu0 0
      %587 = vmatprep.subr.bf16.mxu0 0
      %588 = vmatpush1.bf16.msra.mxu0 0
      %589 = vmatprep.subr.bf16.mxu0 0
      %590 = vmatpush1.bf16.msra.mxu0 0
      %591 = vmatprep.subr.bf16.mxu0 0
      %592 = vmatpush1.bf16.msra.mxu0 0
      %593 = vmatprep.subr.bf16.mxu0 0
      %594 = vmatpush1.bf16.msra.mxu0 0
      %595 = vmatprep.subr.bf16.mxu0 0
      %596 = vmatpush1.bf16.msra.mxu0 0
      %597 = vmatprep.subr.bf16.mxu0 0
      %598 = vmatpush1.bf16.msra.mxu0 0
      %599 = vmatprep.subr.bf16.mxu0 0
      %600 = vmatpush1.bf16.msra.mxu0 0
      %601 = vmatprep.subr.bf16.mxu0 0
      %602 = vmatpush1.bf16.msra.mxu0 0
      %603 = vmatprep.subr.bf16.mxu0 0
      %604 = vmatpush1.bf16.msra.mxu0 0
      %605 = vmatprep.subr.bf16.mxu0 0
      %606 = vmatpush1.bf16.msra.mxu0 0
      %607 = vmatprep.subr.bf16.mxu0 0
      %608 = vmatpush1.bf16.msra.mxu0 0
      %609 = vmatprep.mubr.bf16.mxu0 0
      %610 = vmatmul.mubr.bf16.gmra.mrb[0].mxu0 %v512
      %v611 = vpop.f32.mrb[0].mxu0
      %v612 = vadd.f32 %v563, %v611
      %v613 = vpop.f32.mrb[0].mxu0
      %v614 = vpop.f32.mrb[0].mxu0
      %v615 = vpop.f32.mrb[0].mxu0
      %616 = vdwg.mxu0
      %v617 = vld [vmem:[%s8] sm:$0xf]
      %v618 = vld [vmem:[%s8 + $0x4] sm:$0xf]
      %v619 = vld [vmem:[%s8 + $0x8] sm:$0xf]
      %v620 = vld [vmem:[%s8 + $0xc] sm:$0xf]
      %v621 = vld [vmem:[%s9] sm:$0x1]
      %v623 = vlaneseq
      %v624 = vshrl.u32 %v623, 7
      %v625 = vsub.s32 0, %v624
      %v626 = vrot.slane %v621, %v625
      %v632 = vunpack.c.l.b16 %v617
      %v633 = vunpack.c.l.b16 %v618
      %v634 = vunpack.c.l.b16 %v619
      %v635 = vunpack.c.l.b16 %v620
      %v636 = vpack.c.b16 %v633, %v632
      %v637 = vpack.c.b16 %v635, %v634
      %640 = vmatprep.subr.bf16.mxu0 0
      %641 = vmatpush1.bf16.msra.mxu0 %v636
      %642 = vmatprep.subr.bf16.mxu0 0
      %643 = vmatpush1.bf16.msra.mxu0 %v637
      %644 = vmatprep.subr.bf16.mxu0 0
      %645 = vmatpush1.bf16.msra.mxu0 0
      %646 = vmatprep.subr.bf16.mxu0 0
      %647 = vmatpush1.bf16.msra.mxu0 0
      %648 = vmatprep.subr.bf16.mxu0 0
      %649 = vmatpush1.bf16.msra.mxu0 0
      %650 = vmatprep.subr.bf16.mxu0 0
      %651 = vmatpush1.bf16.msra.mxu0 0
      %652 = vmatprep.subr.bf16.mxu0 0
      %653 = vmatpush1.bf16.msra.mxu0 0
      %654 = vmatprep.subr.bf16.mxu0 0
      %655 = vmatpush1.bf16.msra.mxu0 0
      %656 = vmatprep.subr.bf16.mxu0 0
      %657 = vmatpush1.bf16.msra.mxu0 0
      %658 = vmatprep.subr.bf16.mxu0 0
      %659 = vmatpush1.bf16.msra.mxu0 0
      %660 = vmatprep.subr.bf16.mxu0 0
      %661 = vmatpush1.bf16.msra.mxu0 0
      %662 = vmatprep.subr.bf16.mxu0 0
      %663 = vmatpush1.bf16.msra.mxu0 0
      %664 = vmatprep.subr.bf16.mxu0 0
      %665 = vmatpush1.bf16.msra.mxu0 0
      %666 = vmatprep.subr.bf16.mxu0 0
      %667 = vmatpush1.bf16.msra.mxu0 0
      %668 = vmatprep.subr.bf16.mxu0 0
      %669 = vmatpush1.bf16.msra.mxu0 0
      %670 = vmatprep.subr.bf16.mxu0 0
      %671 = vmatpush1.bf16.msra.mxu0 0
      %672 = vmatprep.mubr.bf16.mxu0 0
      %673 = vmatmul.mubr.bf16.gmra.mrb[0].mxu0 %v512
      %v674 = vpop.f32.mrb[0].mxu0
      %v675 = vadd.f32 %v626, %v674
      %v676 = vpop.f32.mrb[0].mxu0
      %v677 = vpop.f32.mrb[0].mxu0
      %v678 = vpop.f32.mrb[0].mxu0
      %679 = vdwg.mxu0
      %v680 = vmul.f32 %v549, 0.35355338
      %v681 = vld [vmem:[%s446] sm:$0x1]
      %vm682 = vcmp.ne.f32.partialorder %v681, 0.0
      %v683 = vpack.c.bf16 %v680, %v680
      %v684 = vpack.c.bf16 %v612, %v612
      %v685 = vpack.c.bf16 %v675, %v675
      %vm686 = vcmask 64512
      %v688 = vsel %vm686, %v683, 0
      %v691 = vsel %vm686, %v684, 0
      %693 = vmatprep.subr.bf16.mxu0 0
      %694 = vmatpush1.bf16.xpose.msra.mxu0 %v691
      %695 = vmatprep.subr.bf16.mxu0 0
      %696 = vmatpush1.bf16.xpose.msra.mxu0 0
      %697 = vmatprep.subr.bf16.mxu0 0
      %698 = vmatpush1.bf16.xpose.msra.mxu0 0
      %699 = vmatprep.subr.bf16.mxu0 0
      %700 = vmatpush1.bf16.xpose.msra.mxu0 0
      %701 = vmatprep.subr.bf16.mxu0 0
      %702 = vmatpush1.bf16.xpose.msra.mxu0 0
      %703 = vmatprep.subr.bf16.mxu0 0
      %704 = vmatpush1.bf16.xpose.msra.mxu0 0
      %705 = vmatprep.subr.bf16.mxu0 0
      %706 = vmatpush1.bf16.xpose.msra.mxu0 0
      %707 = vmatprep.subr.bf16.mxu0 0
      %708 = vmatpush1.bf16.xpose.msra.mxu0 0
      %709 = vmatprep.subr.bf16.mxu0 0
      %710 = vmatpush1.bf16.xpose.msra.mxu0 0
      %711 = vmatprep.subr.bf16.mxu0 0
      %712 = vmatpush1.bf16.xpose.msra.mxu0 0
      %713 = vmatprep.subr.bf16.mxu0 0
      %714 = vmatpush1.bf16.xpose.msra.mxu0 0
      %715 = vmatprep.subr.bf16.mxu0 0
      %716 = vmatpush1.bf16.xpose.msra.mxu0 0
      %717 = vmatprep.subr.bf16.mxu0 0
      %718 = vmatpush1.bf16.xpose.msra.mxu0 0
      %719 = vmatprep.subr.bf16.mxu0 0
      %720 = vmatpush1.bf16.xpose.msra.mxu0 0
      %721 = vmatprep.subr.bf16.mxu0 0
      %722 = vmatpush1.bf16.xpose.msra.mxu0 0
      %723 = vmatprep.subr.bf16.mxu0 0
      %724 = vmatpush1.bf16.xpose.msra.mxu0 0
      %725 = vmatprep.mubr.bf16.mxu0 0
      %726 = vmatmul.mubr.bf16.gmra.mrb[0].mxu0 %v688
      %v727 = vpop.f32.mrb[0].mxu0
      %v728 = vadd.f32 0.0, %v727
      %v729 = vpop.f32.mrb[0].mxu0
      %v730 = vpop.f32.mrb[0].mxu0
      %v731 = vpop.f32.mrb[0].mxu0
      %732 = vdwg.mxu0
      %v733 = vsel %vm682, 1, 0
      %v734 = vlaneseq
      %v735 = vshrl.u32 %v734, 7
      %v736 = vsub.s32 0, %v735
      %v737 = vrot.slane %v733, %v736
      %vm738 = vcmp.eq.s32.totalorder %v737, 1
      %v739 = vsel %vm738, -1e+30, %v728
      %v740 = vsel %vm686, %v739, -inf
      %741 = vmax.xlane.f32.xlu0 %v740
      %v742 = vpop.xlane.xlu0 %741
      %v743 = vsub.f32 %v739, %v742
      %v744 = vmul.f32 %v743, 1.442695
      %v745 = vpow.pop %v744
      %v746 = vsel %vm686, %v745, 0.0
      %747 = vadd.xlane.f32.xlu0 %v746
      %v748 = vpop.xlane.xlu0 %747
      %v749 = vrcp.pop %v748
      %v750 = vmul.f32 %v745, %v749
      %v751 = vpack.c.bf16 %v750, %v750
      %v753 = vsel %vm686, %v751, 0
      %vm755 = vcmask 1043456
      %v757 = vsel %vm755, %v685, 0
      %759 = vmatprep.subr.bf16.mxu0 0
      %760 = vmatpush1.bf16.msra.mxu0 %v757
      %761 = vmatprep.subr.bf16.mxu0 0
      %762 = vmatpush1.bf16.msra.mxu0 0
      %763 = vmatprep.subr.bf16.mxu0 0
      %764 = vmatpush1.bf16.msra.mxu0 0
      %765 = vmatprep.subr.bf16.mxu0 0
      %766 = vmatpush1.bf16.msra.mxu0 0
      %767 = vmatprep.subr.bf16.mxu0 0
      %768 = vmatpush1.bf16.msra.mxu0 0
      %769 = vmatprep.subr.bf16.mxu0 0
      %770 = vmatpush1.bf16.msra.mxu0 0
      %771 = vmatprep.subr.bf16.mxu0 0
      %772 = vmatpush1.bf16.msra.mxu0 0
      %773 = vmatprep.subr.bf16.mxu0 0
      %774 = vmatpush1.bf16.msra.mxu0 0
      %775 = vmatprep.subr.bf16.mxu0 0
      %776 = vmatpush1.bf16.msra.mxu0 0
      %777 = vmatprep.subr.bf16.mxu0 0
      %778 = vmatpush1.bf16.msra.mxu0 0
      %779 = vmatprep.subr.bf16.mxu0 0
      %780 = vmatpush1.bf16.msra.mxu0 0
      %781 = vmatprep.subr.bf16.mxu0 0
      %782 = vmatpush1.bf16.msra.mxu0 0
      %783 = vmatprep.subr.bf16.mxu0 0
      %784 = vmatpush1.bf16.msra.mxu0 0
      %785 = vmatprep.subr.bf16.mxu0 0
      %786 = vmatpush1.bf16.msra.mxu0 0
      %787 = vmatprep.subr.bf16.mxu0 0
      %788 = vmatpush1.bf16.msra.mxu0 0
      %789 = vmatprep.subr.bf16.mxu0 0
      %790 = vmatpush1.bf16.msra.mxu0 0
      %791 = vmatprep.mubr.bf16.mxu0 0
      %792 = vmatmul.mubr.bf16.gmra.mrb[0].mxu0 %v753
      %v793 = vpop.f32.mrb[0].mxu0
      %v794 = vadd.f32 0.0, %v793
      %v795 = vpop.f32.mrb[0].mxu0
      %v796 = vpop.f32.mrb[0].mxu0
      %v797 = vpop.f32.mrb[0].mxu0
      %798 = vdwg.mxu0
      %800 = vrot.lane.b32.xlu0 %v683, 120
      %v801 = vpop.permute.xlu0 %800
      %803 = vrot.lane.b32.xlu0 %v684, 120
      %v804 = vpop.permute.xlu0 %803
      %v806 = vsel %vm686, %v801, 0
      %v809 = vsel %vm686, %v804, 0
      %811 = vmatprep.subr.bf16.mxu0 0
      %812 = vmatpush1.bf16.xpose.msra.mxu0 %v809
      %813 = vmatprep.subr.bf16.mxu0 0
      %814 = vmatpush1.bf16.xpose.msra.mxu0 0
      %815 = vmatprep.subr.bf16.mxu0 0
      %816 = vmatpush1.bf16.xpose.msra.mxu0 0
      %817 = vmatprep.subr.bf16.mxu0 0
      %818 = vmatpush1.bf16.xpose.msra.mxu0 0
      %819 = vmatprep.subr.bf16.mxu0 0
      %820 = vmatpush1.bf16.xpose.msra.mxu0 0
      %821 = vmatprep.subr.bf16.mxu0 0
      %822 = vmatpush1.bf16.xpose.msra.mxu0 0
      %823 = vmatprep.subr.bf16.mxu0 0
      %824 = vmatpush1.bf16.xpose.msra.mxu0 0
      %825 = vmatprep.subr.bf16.mxu0 0
      %826 = vmatpush1.bf16.xpose.msra.mxu0 0
      %827 = vmatprep.subr.bf16.mxu0 0
      %828 = vmatpush1.bf16.xpose.msra.mxu0 0
      %829 = vmatprep.subr.bf16.mxu0 0
      %830 = vmatpush1.bf16.xpose.msra.mxu0 0
      %831 = vmatprep.subr.bf16.mxu0 0
      %832 = vmatpush1.bf16.xpose.msra.mxu0 0
      %833 = vmatprep.subr.bf16.mxu0 0
      %834 = vmatpush1.bf16.xpose.msra.mxu0 0
      %835 = vmatprep.subr.bf16.mxu0 0
      %836 = vmatpush1.bf16.xpose.msra.mxu0 0
      %837 = vmatprep.subr.bf16.mxu0 0
      %838 = vmatpush1.bf16.xpose.msra.mxu0 0
      %839 = vmatprep.subr.bf16.mxu0 0
      %840 = vmatpush1.bf16.xpose.msra.mxu0 0
      %841 = vmatprep.subr.bf16.mxu0 0
      %842 = vmatpush1.bf16.xpose.msra.mxu0 0
      %843 = vmatprep.mubr.bf16.mxu0 0
      %844 = vmatmul.mubr.bf16.gmra.mrb[0].mxu0 %v806
      %v845 = vpop.f32.mrb[0].mxu0
      %v846 = vadd.f32 0.0, %v845
      %v847 = vpop.f32.mrb[0].mxu0
      %v848 = vpop.f32.mrb[0].mxu0
      %v849 = vpop.f32.mrb[0].mxu0
      %850 = vdwg.mxu0
      %v851 = vsel %vm738, -1e+30, %v846
      %v852 = vsel %vm686, %v851, -inf
      %853 = vmax.xlane.f32.xlu0 %v852
      %v854 = vpop.xlane.xlu0 %853
      %v855 = vsub.f32 %v851, %v854
      %v856 = vmul.f32 %v855, 1.442695
      %v857 = vpow.pop %v856
      %v858 = vsel %vm686, %v857, 0.0
      %859 = vadd.xlane.f32.xlu0 %v858
      %v860 = vpop.xlane.xlu0 %859
      %v861 = vrcp.pop %v860
      %v862 = vmul.f32 %v857, %v861
      %v863 = vpack.c.bf16 %v862, %v862
      %865 = vrot.lane.b32.xlu0 %v685, 120
      %v866 = vpop.permute.xlu0 %865
      %v868 = vsel %vm686, %v863, 0
      %v871 = vsel %vm755, %v866, 0
      %873 = vmatprep.subr.bf16.mxu0 0
      %874 = vmatpush1.bf16.msra.mxu0 %v871
      %875 = vmatprep.subr.bf16.mxu0 0
      %876 = vmatpush1.bf16.msra.mxu0 0
      %877 = vmatprep.subr.bf16.mxu0 0
      %878 = vmatpush1.bf16.msra.mxu0 0
      %879 = vmatprep.subr.bf16.mxu0 0
      %880 = vmatpush1.bf16.msra.mxu0 0
      %881 = vmatprep.subr.bf16.mxu0 0
      %882 = vmatpush1.bf16.msra.mxu0 0
      %883 = vmatprep.subr.bf16.mxu0 0
      %884 = vmatpush1.bf16.msra.mxu0 0
      %885 = vmatprep.subr.bf16.mxu0 0
      %886 = vmatpush1.bf16.msra.mxu0 0
      %887 = vmatprep.subr.bf16.mxu0 0
      %888 = vmatpush1.bf16.msra.mxu0 0
      %889 = vmatprep.subr.bf16.mxu0 0
      %890 = vmatpush1.bf16.msra.mxu0 0
      %891 = vmatprep.subr.bf16.mxu0 0
      %892 = vmatpush1.bf16.msra.mxu0 0
      %893 = vmatprep.subr.bf16.mxu0 0
      %894 = vmatpush1.bf16.msra.mxu0 0
      %895 = vmatprep.subr.bf16.mxu0 0
      %896 = vmatpush1.bf16.msra.mxu0 0
      %897 = vmatprep.subr.bf16.mxu0 0
      %898 = vmatpush1.bf16.msra.mxu0 0
      %899 = vmatprep.subr.bf16.mxu0 0
      %900 = vmatpush1.bf16.msra.mxu0 0
      %901 = vmatprep.subr.bf16.mxu0 0
      %902 = vmatpush1.bf16.msra.mxu0 0
      %903 = vmatprep.subr.bf16.mxu0 0
      %904 = vmatpush1.bf16.msra.mxu0 0
      %905 = vmatprep.mubr.bf16.mxu0 0
      %906 = vmatmul.mubr.bf16.gmra.mrb[0].mxu0 %v868
      %v907 = vpop.f32.mrb[0].mxu0
      %v908 = vadd.f32 0.0, %v907
      %v909 = vpop.f32.mrb[0].mxu0
      %v910 = vpop.f32.mrb[0].mxu0
      %v911 = vpop.f32.mrb[0].mxu0
      %912 = vdwg.mxu0
      %913 = vrot.lane.b32.xlu0 %v683, 112
      %v914 = vpop.permute.xlu0 %913
      %915 = vrot.lane.b32.xlu0 %v684, 112
      %v916 = vpop.permute.xlu0 %915
      %v918 = vsel %vm686, %v914, 0
      %v921 = vsel %vm686, %v916, 0
      %923 = vmatprep.subr.bf16.mxu0 0
      %924 = vmatpush1.bf16.xpose.msra.mxu0 %v921
      %925 = vmatprep.subr.bf16.mxu0 0
      %926 = vmatpush1.bf16.xpose.msra.mxu0 0
      %927 = vmatprep.subr.bf16.mxu0 0
      %928 = vmatpush1.bf16.xpose.msra.mxu0 0
      %929 = vmatprep.subr.bf16.mxu0 0
      %930 = vmatpush1.bf16.xpose.msra.mxu0 0
      %931 = vmatprep.subr.bf16.mxu0 0
      %932 = vmatpush1.bf16.xpose.msra.mxu0 0
      %933 = vmatprep.subr.bf16.mxu0 0
      %934 = vmatpush1.bf16.xpose.msra.mxu0 0
      %935 = vmatprep.subr.bf16.mxu0 0
      %936 = vmatpush1.bf16.xpose.msra.mxu0 0
      %937 = vmatprep.subr.bf16.mxu0 0
      %938 = vmatpush1.bf16.xpose.msra.mxu0 0
      %939 = vmatprep.subr.bf16.mxu0 0
      %940 = vmatpush1.bf16.xpose.msra.mxu0 0
      %941 = vmatprep.subr.bf16.mxu0 0
      %942 = vmatpush1.bf16.xpose.msra.mxu0 0
      %943 = vmatprep.subr.bf16.mxu0 0
      %944 = vmatpush1.bf16.xpose.msra.mxu0 0
      %945 = vmatprep.subr.bf16.mxu0 0
      %946 = vmatpush1.bf16.xpose.msra.mxu0 0
      %947 = vmatprep.subr.bf16.mxu0 0
      %948 = vmatpush1.bf16.xpose.msra.mxu0 0
      %949 = vmatprep.subr.bf16.mxu0 0
      %950 = vmatpush1.bf16.xpose.msra.mxu0 0
      %951 = vmatprep.subr.bf16.mxu0 0
      %952 = vmatpush1.bf16.xpose.msra.mxu0 0
      %953 = vmatprep.subr.bf16.mxu0 0
      %954 = vmatpush1.bf16.xpose.msra.mxu0 0
      %955 = vmatprep.mubr.bf16.mxu0 0
      %956 = vmatmul.mubr.bf16.gmra.mrb[0].mxu0 %v918
      %v957 = vpop.f32.mrb[0].mxu0
      %v958 = vadd.f32 0.0, %v957
      %v959 = vpop.f32.mrb[0].mxu0
      %v960 = vpop.f32.mrb[0].mxu0
      %v961 = vpop.f32.mrb[0].mxu0
      %962 = vdwg.mxu0
      %v963 = vsel %vm738, -1e+30, %v958
      %v964 = vsel %vm686, %v963, -inf
      %965 = vmax.xlane.f32.xlu0 %v964
      %v966 = vpop.xlane.xlu0 %965
      %v967 = vsub.f32 %v963, %v966
      %v968 = vmul.f32 %v967, 1.442695
      %v969 = vpow.pop %v968
      %v970 = vsel %vm686, %v969, 0.0
      %971 = vadd.xlane.f32.xlu0 %v970
      %v972 = vpop.xlane.xlu0 %971
      %v973 = vrcp.pop %v972
      %v974 = vmul.f32 %v969, %v973
      %v975 = vpack.c.bf16 %v974, %v974
      %976 = vrot.lane.b32.xlu0 %v685, 112
      %v977 = vpop.permute.xlu0 %976
      %v979 = vsel %vm686, %v975, 0
      %v982 = vsel %vm755, %v977, 0
      %984 = vmatprep.subr.bf16.mxu0 0
      %985 = vmatpush1.bf16.msra.mxu0 %v982
      %986 = vmatprep.subr.bf16.mxu0 0
      %987 = vmatpush1.bf16.msra.mxu0 0
      %988 = vmatprep.subr.bf16.mxu0 0
      %989 = vmatpush1.bf16.msra.mxu0 0
      %990 = vmatprep.subr.bf16.mxu0 0
      %991 = vmatpush1.bf16.msra.mxu0 0
      %992 = vmatprep.subr.bf16.mxu0 0
      %993 = vmatpush1.bf16.msra.mxu0 0
      %994 = vmatprep.subr.bf16.mxu0 0
      %995 = vmatpush1.bf16.msra.mxu0 0
      %996 = vmatprep.subr.bf16.mxu0 0
      %997 = vmatpush1.bf16.msra.mxu0 0
      %998 = vmatprep.subr.bf16.mxu0 0
      %999 = vmatpush1.bf16.msra.mxu0 0
      %1000 = vmatprep.subr.bf16.mxu0 0
      %1001 = vmatpush1.bf16.msra.mxu0 0
      %1002 = vmatprep.subr.bf16.mxu0 0
      %1003 = vmatpush1.bf16.msra.mxu0 0
      %1004 = vmatprep.subr.bf16.mxu0 0
      %1005 = vmatpush1.bf16.msra.mxu0 0
      %1006 = vmatprep.subr.bf16.mxu0 0
      %1007 = vmatpush1.bf16.msra.mxu0 0
      %1008 = vmatprep.subr.bf16.mxu0 0
      %1009 = vmatpush1.bf16.msra.mxu0 0
      %1010 = vmatprep.subr.bf16.mxu0 0
      %1011 = vmatpush1.bf16.msra.mxu0 0
      %1012 = vmatprep.subr.bf16.mxu0 0
      %1013 = vmatpush1.bf16.msra.mxu0 0
      %1014 = vmatprep.subr.bf16.mxu0 0
      %1015 = vmatpush1.bf16.msra.mxu0 0
      %1016 = vmatprep.mubr.bf16.mxu0 0
      %1017 = vmatmul.mubr.bf16.gmra.mrb[0].mxu0 %v979
      %v1018 = vpop.f32.mrb[0].mxu0
      %v1019 = vadd.f32 0.0, %v1018
      %v1020 = vpop.f32.mrb[0].mxu0
      %v1021 = vpop.f32.mrb[0].mxu0
      %v1022 = vpop.f32.mrb[0].mxu0
      %1023 = vdwg.mxu0
      %1024 = vrot.lane.b32.xlu0 %v683, 104
      %v1025 = vpop.permute.xlu0 %1024
      %1026 = vrot.lane.b32.xlu0 %v684, 104
      %v1027 = vpop.permute.xlu0 %1026
      %v1029 = vsel %vm686, %v1025, 0
      %v1032 = vsel %vm686, %v1027, 0
      %1034 = vmatprep.subr.bf16.mxu0 0
      %1035 = vmatpush1.bf16.xpose.msra.mxu0 %v1032
      %1036 = vmatprep.subr.bf16.mxu0 0
      %1037 = vmatpush1.bf16.xpose.msra.mxu0 0
      %1038 = vmatprep.subr.bf16.mxu0 0
      %1039 = vmatpush1.bf16.xpose.msra.mxu0 0
      %1040 = vmatprep.subr.bf16.mxu0 0
      %1041 = vmatpush1.bf16.xpose.msra.mxu0 0
      %1042 = vmatprep.subr.bf16.mxu0 0
      %1043 = vmatpush1.bf16.xpose.msra.mxu0 0
      %1044 = vmatprep.subr.bf16.mxu0 0
      %1045 = vmatpush1.bf16.xpose.msra.mxu0 0
      %1046 = vmatprep.subr.bf16.mxu0 0
      %1047 = vmatpush1.bf16.xpose.msra.mxu0 0
      %1048 = vmatprep.subr.bf16.mxu0 0
      %1049 = vmatpush1.bf16.xpose.msra.mxu0 0
      %1050 = vmatprep.subr.bf16.mxu0 0
      %1051 = vmatpush1.bf16.xpose.msra.mxu0 0
      %1052 = vmatprep.subr.bf16.mxu0 0
      %1053 = vmatpush1.bf16.xpose.msra.mxu0 0
      %1054 = vmatprep.subr.bf16.mxu0 0
      %1055 = vmatpush1.bf16.xpose.msra.mxu0 0
      %1056 = vmatprep.subr.bf16.mxu0 0
      %1057 = vmatpush1.bf16.xpose.msra.mxu0 0
      %1058 = vmatprep.subr.bf16.mxu0 0
      %1059 = vmatpush1.bf16.xpose.msra.mxu0 0
      %1060 = vmatprep.subr.bf16.mxu0 0
      %1061 = vmatpush1.bf16.xpose.msra.mxu0 0
      %1062 = vmatprep.subr.bf16.mxu0 0
      %1063 = vmatpush1.bf16.xpose.msra.mxu0 0
      %1064 = vmatprep.subr.bf16.mxu0 0
      %1065 = vmatpush1.bf16.xpose.msra.mxu0 0
      %1066 = vmatprep.mubr.bf16.mxu0 0
      %1067 = vmatmul.mubr.bf16.gmra.mrb[0].mxu0 %v1029
      %v1068 = vpop.f32.mrb[0].mxu0
      %v1069 = vadd.f32 0.0, %v1068
      %v1070 = vpop.f32.mrb[0].mxu0
      %v1071 = vpop.f32.mrb[0].mxu0
      %v1072 = vpop.f32.mrb[0].mxu0
      %1073 = vdwg.mxu0
      %v1074 = vsel %vm738, -1e+30, %v1069
      %v1075 = vsel %vm686, %v1074, -inf
      %1076 = vmax.xlane.f32.xlu0 %v1075
      %v1077 = vpop.xlane.xlu0 %1076
      %v1078 = vsub.f32 %v1074, %v1077
      %v1079 = vmul.f32 %v1078, 1.442695
      %v1080 = vpow.pop %v1079
      %v1081 = vsel %vm686, %v1080, 0.0
      %1082 = vadd.xlane.f32.xlu0 %v1081
      %v1083 = vpop.xlane.xlu0 %1082
      %v1084 = vrcp.pop %v1083
      %v1085 = vmul.f32 %v1080, %v1084
      %v1086 = vpack.c.bf16 %v1085, %v1085
      %1087 = vrot.lane.b32.xlu0 %v685, 104
      %v1088 = vpop.permute.xlu0 %1087
      %v1090 = vsel %vm686, %v1086, 0
      %v1093 = vsel %vm755, %v1088, 0
      %1095 = vmatprep.subr.bf16.mxu0 0
      %1096 = vmatpush1.bf16.msra.mxu0 %v1093
      %1097 = vmatprep.subr.bf16.mxu0 0
      %1098 = vmatpush1.bf16.msra.mxu0 0
      %1099 = vmatprep.subr.bf16.mxu0 0
      %1100 = vmatpush1.bf16.msra.mxu0 0
      %1101 = vmatprep.subr.bf16.mxu0 0
      %1102 = vmatpush1.bf16.msra.mxu0 0
      %1103 = vmatprep.subr.bf16.mxu0 0
      %1104 = vmatpush1.bf16.msra.mxu0 0
      %1105 = vmatprep.subr.bf16.mxu0 0
      %1106 = vmatpush1.bf16.msra.mxu0 0
      %1107 = vmatprep.subr.bf16.mxu0 0
      %1108 = vmatpush1.bf16.msra.mxu0 0
      %1109 = vmatprep.subr.bf16.mxu0 0
      %1110 = vmatpush1.bf16.msra.mxu0 0
      %1111 = vmatprep.subr.bf16.mxu0 0
      %1112 = vmatpush1.bf16.msra.mxu0 0
      %1113 = vmatprep.subr.bf16.mxu0 0
      %1114 = vmatpush1.bf16.msra.mxu0 0
      %1115 = vmatprep.subr.bf16.mxu0 0
      %1116 = vmatpush1.bf16.msra.mxu0 0
      %1117 = vmatprep.subr.bf16.mxu0 0
      %1118 = vmatpush1.bf16.msra.mxu0 0
      %1119 = vmatprep.subr.bf16.mxu0 0
      %1120 = vmatpush1.bf16.msra.mxu0 0
      %1121 = vmatprep.subr.bf16.mxu0 0
      %1122 = vmatpush1.bf16.msra.mxu0 0
      %1123 = vmatprep.subr.bf16.mxu0 0
      %1124 = vmatpush1.bf16.msra.mxu0 0
      %1125 = vmatprep.subr.bf16.mxu0 0
      %1126 = vmatpush1.bf16.msra.mxu0 0
      %1127 = vmatprep.mubr.bf16.mxu0 0
      %1128 = vmatmul.mubr.bf16.gmra.mrb[0].mxu0 %v1090
      %v1129 = vpop.f32.mrb[0].mxu0
      %v1130 = vadd.f32 0.0, %v1129
      %v1131 = vpop.f32.mrb[0].mxu0
      %v1132 = vpop.f32.mrb[0].mxu0
      %v1133 = vpop.f32.mrb[0].mxu0
      %1134 = vdwg.mxu0
      %1136 = vrot.lane.b32.xlu0 %v908, 8
      %v1137 = vpop.permute.xlu0 %1136
      %1140 = vrot.lane.b32.xlu0 %v1019, 16
      %v1141 = vpop.permute.xlu0 %1140
      %1144 = vrot.lane.b32.xlu0 %v1130, 24
      %v1145 = vpop.permute.xlu0 %1144
      %v1147 = vsel %vm686, %v794, %v1137
      %vm1148 = vcmask 130048
      %v1149 = vsel %vm1148, %v1147, %v1141
      %vm1150 = vcmask 195584
      %v1151 = vsel %vm1150, %v1149, %v1145
      %v1152 = vpack.c.bf16 %v1151, %v1151
      %v1153 = vld [vmem:[%s10] sm:$0xf]
      %v1154 = vld [vmem:[%s10 + $0x4] sm:$0xf]
      %v1155 = vld [vmem:[%s10 + $0x8] sm:$0xf]
      %v1156 = vld [vmem:[%s10 + $0xc] sm:$0xf]
      %v1157 = vld [vmem:[%s11] sm:$0x1]
      %v1159 = vlaneseq
      %v1160 = vshrl.u32 %v1159, 7
      %v1161 = vsub.s32 0, %v1160
      %v1162 = vrot.slane %v1157, %v1161
      %v1168 = vunpack.c.l.b16 %v1153
      %v1169 = vunpack.c.l.b16 %v1154
      %v1170 = vunpack.c.l.b16 %v1155
      %v1171 = vunpack.c.l.b16 %v1156
      %v1172 = vpack.c.b16 %v1169, %v1168
      %v1173 = vpack.c.b16 %v1171, %v1170
      %v1177 = vsel %vm458, %v1152, 0
      %1179 = vmatprep.subr.bf16.mxu0 0
      %1180 = vmatpush1.bf16.msra.mxu0 %v1172
      %1181 = vmatprep.subr.bf16.mxu0 0
      %1182 = vmatpush1.bf16.msra.mxu0 %v1173
      %1183 = vmatprep.subr.bf16.mxu0 0
      %1184 = vmatpush1.bf16.msra.mxu0 0
      %1185 = vmatprep.subr.bf16.mxu0 0
      %1186 = vmatpush1.bf16.msra.mxu0 0
      %1187 = vmatprep.subr.bf16.mxu0 0
      %1188 = vmatpush1.bf16.msra.mxu0 0
      %1189 = vmatprep.subr.bf16.mxu0 0
      %1190 = vmatpush1.bf16.msra.mxu0 0
      %1191 = vmatprep.subr.bf16.mxu0 0
      %1192 = vmatpush1.bf16.msra.mxu0 0
      %1193 = vmatprep.subr.bf16.mxu0 0
      %1194 = vmatpush1.bf16.msra.mxu0 0
      %1195 = vmatprep.subr.bf16.mxu0 0
      %1196 = vmatpush1.bf16.msra.mxu0 0
      %1197 = vmatprep.subr.bf16.mxu0 0
      %1198 = vmatpush1.bf16.msra.mxu0 0
      %1199 = vmatprep.subr.bf16.mxu0 0
      %1200 = vmatpush1.bf16.msra.mxu0 0
      %1201 = vmatprep.subr.bf16.mxu0 0
      %1202 = vmatpush1.bf16.msra.mxu0 0
      %1203 = vmatprep.subr.bf16.mxu0 0
      %1204 = vmatpush1.bf16.msra.mxu0 0
      %1205 = vmatprep.subr.bf16.mxu0 0
      %1206 = vmatpush1.bf16.msra.mxu0 0
      %1207 = vmatprep.subr.bf16.mxu0 0
      %1208 = vmatpush1.bf16.msra.mxu0 0
      %1209 = vmatprep.subr.bf16.mxu0 0
      %1210 = vmatpush1.bf16.msra.mxu0 0
      %1211 = vmatprep.mubr.bf16.mxu0 0
      %1212 = vmatmul.mubr.bf16.gmra.mrb[0].mxu0 %v1177
      %v1213 = vpop.f32.mrb[0].mxu0
      %v1214 = vadd.f32 %v1162, %v1213
      %v1215 = vpop.f32.mrb[0].mxu0
      %v1216 = vpop.f32.mrb[0].mxu0
      %v1217 = vpop.f32.mrb[0].mxu0
      %1218 = vdwg.mxu0
      %v1219 = vadd.f32 %v457, %v1214
      %1220 = vst.msk [vmem:[%s453] sm:$0xff] %vm458, %v1219
      %p1221 = scmp.lt.s32.totalorder %s27, 1
      %s1222 = scalar_select %p1221, %s27, 1
      %p1223 = scmp.lt.s32.totalorder %s28, 0
      %s1224 = scalar_select %p1223, %s28, 0
      %s1225 = sadd.s32 %s1224, %s1222
      %s1226 = smul.addr %s1225, 8
      %s1227 = scalar_lea.vmem %s12, %s1226
      // Predicated region
      $region69: #{_lambda_.6} parent=67 // pred_check
        %p1228 = pneg %p319
      $region70: #{_lambda_.6} parent=67 // pred_check_branch
        %1230 = sbr.rel (%p1228) target = $region72
      $region71: #{_lambda_.6} parent=67 // pred_region
        _
      $region72: #{_lambda_.6} parent=67 // pred_fallthru
        _
    $region68: #{_lambda_.6} parent=5 // pred_fallthru
      _
    %p1231 = scmp.le.s32.totalorder 2, %s18
    // Predicated region
    $region73: #{_lambda_.6} parent=5 // pred_check
      %p1232 = pneg %p1231
    $region74: #{_lambda_.6} parent=5 // pred_check_branch
      %1234 = sbr.rel (%p1232) target = $region76
    $region75: #{_lambda_.6} parent=5 // pred_region
      %s1235 = ssub.s32 %s18, 2
      // Predicated region
      $region77: #{_lambda_.6} parent=75 // pred_check
        %p1236 = pneg %p325
      $region78: #{_lambda_.6} parent=75 // pred_check_branch
        %1238 = sbr.rel (%p1236) target = $region80
      $region79: #{_lambda_.6} parent=75 // pred_region
        %p1239 = scmp.lt.s32.totalorder %s29, 1
        %s1240 = scalar_select %p1239, %s29, 1
        %p1241 = scmp.lt.s32.totalorder %s30, 0
        %s1242 = scalar_select %p1241, %s30, 0
        %s1243 = sadd.s32 %s1242, %s1240
        %s1244 = smul.addr %s1243, 8
        %s1245 = scalar_lea.vmem %s12, %s1244
      $region80: #{_lambda_.6} parent=75 // pred_fallthru
        _
    $region76: #{_lambda_.6} parent=5 // pred_fallthru
      _
  $region6: #{_lambda_.6} parent=0 // loop_footer
    %s22 = sadd.s32 1, %s18
  $region7: #{_lambda_.6} parent=0 // loop_footer_branch
    %17 = sbr.rel target = $region3
  $region8: #{_lambda_.6} parent=0 // loop_exit
    _

// kernel: _lambda_.11
$region0: #{_lambda_.11}
  #allocation0 [shape = 'u32[]', space=smem, size = 0x4, offset = 0x4, fixed_abs, tag = 'smem constant byte address 0x4 - core index']
  #allocation1 [shape = 'u32[144,128]{1,0:T(1,128)}', space=vmem, size = 0x12000, scoped, tag = 'internal scratch']
  %s0 = inlined_call_operand.vmem [shape: f32[16,32], index: 0, kind: input, shape index: {}]
  %s1 = inlined_call_operand.vmem [shape: f32[1,32], index: 1, kind: input, shape index: {}]
  %s2 = inlined_call_operand.vmem [shape: f32[1,32], index: 2, kind: input, shape index: {}]
  %s3 = inlined_call_operand.vmem [shape: bf16[32,64], index: 3, kind: input, shape index: {}]
  %s4 = inlined_call_operand.vmem [shape: f32[1,64], index: 4, kind: input, shape index: {}]
  %s5 = inlined_call_operand.vmem [shape: bf16[64,32], index: 5, kind: input, shape index: {}]
  %s6 = inlined_call_operand.vmem [shape: f32[1,32], index: 6, kind: input, shape index: {}]
  %s7 = inlined_call_operand.vmem [shape: f32[16,32], index: 7, kind: output, shape index: {}]
  %s8 = sld [smem:[#allocation0]]
  $region38: #{_lambda_.11} parent=0
    _
  %s10 = ssub.s32 1, %s8
  %s11 = scalar_select 0, %s10, %s8
  // Predicated region
  $region2: #{_lambda_.11} parent=0 // pred_check
    _
  $region3: #{_lambda_.11} parent=0 // pred_check_branch
    %13 = sbr.rel (0) target = $region5
  $region4: #{_lambda_.11} parent=0 // pred_region
    _
  $region5: #{_lambda_.11} parent=0 // pred_fallthru
    _
  // Predicated region
  $region6: #{_lambda_.11} parent=0 // pred_check
    _
  $region7: #{_lambda_.11} parent=0 // pred_check_branch
    %15 = sbr.rel (0) target = $region9
  $region8: #{_lambda_.11} parent=0 // pred_region
    _
  $region9: #{_lambda_.11} parent=0 // pred_fallthru
    _
  // Predicated region
  $region10: #{_lambda_.11} parent=0 // pred_check
    _
  $region11: #{_lambda_.11} parent=0 // pred_check_branch
    %17 = sbr.rel (0) target = $region13
  $region12: #{_lambda_.11} parent=0 // pred_region
    _
  $region13: #{_lambda_.11} parent=0 // pred_fallthru
    _
  // Predicated region
  $region14: #{_lambda_.11} parent=0 // pred_check
    _
  $region15: #{_lambda_.11} parent=0 // pred_check_branch
    %19 = sbr.rel (0) target = $region17
  $region16: #{_lambda_.11} parent=0 // pred_region
    _
  $region17: #{_lambda_.11} parent=0 // pred_fallthru
    _
  // Predicated region
  $region18: #{_lambda_.11} parent=0 // pred_check
    _
  $region19: #{_lambda_.11} parent=0 // pred_check_branch
    %21 = sbr.rel (0) target = $region21
  $region20: #{_lambda_.11} parent=0 // pred_region
    _
  $region21: #{_lambda_.11} parent=0 // pred_fallthru
    _
  // Predicated region
  $region22: #{_lambda_.11} parent=0 // pred_check
    _
  $region23: #{_lambda_.11} parent=0 // pred_check_branch
    %23 = sbr.rel (0) target = $region25
  $region24: #{_lambda_.11} parent=0 // pred_region
    _
  $region25: #{_lambda_.11} parent=0 // pred_fallthru
    _
  // Predicated region
  $region26: #{_lambda_.11} parent=0 // pred_check
    _
  $region27: #{_lambda_.11} parent=0 // pred_check_branch
    %25 = sbr.rel (0) target = $region29
  $region28: #{_lambda_.11} parent=0 // pred_region
    _
  $region29: #{_lambda_.11} parent=0 // pred_fallthru
    _
  %v27 = vld [vmem:[%s0] sm:$0xff]
  %v28 = vld [vmem:[%s0 + $0x8] sm:$0xff]
  %v29 = vld [vmem:[%s1] sm:$0x1]
  %v30 = vld [vmem:[%s2] sm:$0x1]
  %vm31 = vcmask 261120
  %v32 = vsel %vm31, %v27, 0.0
  %33 = vadd.xlane.f32.xlu0 %v32
  %v34 = vpop.xlane.xlu0 %33
  %v35 = vsel %vm31, %v28, 0.0
  %36 = vadd.xlane.f32.xlu0 %v35
  %v37 = vpop.xlane.xlu0 %36
  %v38 = vrcp.pop 32.0
  %v39 = vmul.f32 %v34, %v38
  %v40 = vmul.f32 %v37, %v38
  %v41 = vsub.f32 %v27, %v39
  %v42 = vsub.f32 %v28, %v40
  %v43 = vmul.f32 %v41, %v41
  %v44 = vmul.f32 %v42, %v42
  %v45 = vsel %vm31, %v43, 0.0
  %46 = vadd.xlane.f32.xlu0 %v45
  %v47 = vpop.xlane.xlu0 %46
  %v48 = vsel %vm31, %v44, 0.0
  %49 = vadd.xlane.f32.xlu0 %v48
  %v50 = vpop.xlane.xlu0 %49
  %v51 = vmul.f32 %v47, %v38
  %v52 = vmul.f32 %v50, %v38
  %v53 = vadd.f32 %v51, 1e-05
  %v54 = vadd.f32 %v52, 1e-05
  %v55 = vrsqrt.pop %v53
  %v56 = vrsqrt.pop %v54
  %v57 = vmul.f32 %v41, %v55
  %v58 = vmul.f32 %v42, %v56
  %v60 = vlaneseq
  %v61 = vshrl.u32 %v60, 7
  %v62 = vsub.s32 0, %v61
  %v63 = vrot.slane %v29, %v62
  %v65 = vmul.f32 %v57, %v63
  %v66 = vmul.f32 %v58, %v63
  %v68 = vlaneseq
  %v69 = vshrl.u32 %v68, 7
  %v70 = vsub.s32 0, %v69
  %v71 = vrot.slane %v30, %v70
  %v73 = vadd.f32 %v65, %v71
  %v74 = vadd.f32 %v66, %v71
  %v75 = vpack.c.bf16 %v74, %v73
  %v76 = vld [vmem:[%s3] sm:$0xf]
  %v77 = vld [vmem:[%s3 + $0x4] sm:$0xf]
  %v78 = vld [vmem:[%s3 + $0x8] sm:$0xf]
  %v79 = vld [vmem:[%s3 + $0xc] sm:$0xf]
  %v80 = vld [vmem:[%s4] sm:$0x1]
  %v82 = vlaneseq
  %v83 = vshrl.u32 %v82, 7
  %v84 = vsub.s32 0, %v83
  %v85 = vrot.slane %v80, %v84
  %v91 = vunpack.c.l.b16 %v76
  %v92 = vunpack.c.l.b16 %v77
  %v93 = vunpack.c.l.b16 %v78
  %v94 = vunpack.c.l.b16 %v79
  %v95 = vpack.c.b16 %v92, %v91
  %v96 = vpack.c.b16 %v94, %v93
  %v100 = vsel %vm31, %v75, 0
  %102 = vmatprep.subr.bf16.mxu0 0
  %103 = vmatpush1.bf16.msra.mxu0 %v95
  %104 = vmatprep.subr.bf16.mxu0 0
  %105 = vmatpush1.bf16.msra.mxu0 %v96
  %106 = vmatprep.subr.bf16.mxu0 0
  %107 = vmatpush1.bf16.msra.mxu0 0
  %108 = vmatprep.subr.bf16.mxu0 0
  %109 = vmatpush1.bf16.msra.mxu0 0
  %110 = vmatprep.subr.bf16.mxu0 0
  %111 = vmatpush1.bf16.msra.mxu0 0
  %112 = vmatprep.subr.bf16.mxu0 0
  %113 = vmatpush1.bf16.msra.mxu0 0
  %114 = vmatprep.subr.bf16.mxu0 0
  %115 = vmatpush1.bf16.msra.mxu0 0
  %116 = vmatprep.subr.bf16.mxu0 0
  %117 = vmatpush1.bf16.msra.mxu0 0
  %118 = vmatprep.subr.bf16.mxu0 0
  %119 = vmatpush1.bf16.msra.mxu0 0
  %120 = vmatprep.subr.bf16.mxu0 0
  %121 = vmatpush1.bf16.msra.mxu0 0
  %122 = vmatprep.subr.bf16.mxu0 0
  %123 = vmatpush1.bf16.msra.mxu0 0
  %124 = vmatprep.subr.bf16.mxu0 0
  %125 = vmatpush1.bf16.msra.mxu0 0
  %126 = vmatprep.subr.bf16.mxu0 0
  %127 = vmatpush1.bf16.msra.mxu0 0
  %128 = vmatprep.subr.bf16.mxu0 0
  %129 = vmatpush1.bf16.msra.mxu0 0
  %130 = vmatprep.subr.bf16.mxu0 0
  %131 = vmatpush1.bf16.msra.mxu0 0
  %132 = vmatprep.subr.bf16.mxu0 0
  %133 = vmatpush1.bf16.msra.mxu0 0
  %134 = vmatprep.mubr.bf16.mxu0 0
  %135 = vmatmul.mubr.bf16.gmra.mrb[0].mxu0 %v100
  %v136 = vpop.f32.mrb[0].mxu0
  %v137 = vadd.f32 %v85, %v136
  %v138 = vpop.f32.mrb[0].mxu0
  %v139 = vpop.f32.mrb[0].mxu0
  %v140 = vadd.f32 %v85, %v139
  %v141 = vpop.f32.mrb[0].mxu0
  %142 = vdwg.mxu0
  %v143 = vmax.f32 %v137, 0.0
  %v144 = vmax.f32 %v140, 0.0
  %v145 = vpack.c.bf16 %v144, %v143
  %v146 = vld [vmem:[%s5] sm:$0xf]
  %v147 = vld [vmem:[%s5 + $0x4] sm:$0xf]
  %v148 = vld [vmem:[%s5 + $0x8] sm:$0xf]
  %v149 = vld [vmem:[%s5 + $0xc] sm:$0xf]
  %v150 = vld [vmem:[%s5 + $0x10] sm:$0xf]
  %v151 = vld [vmem:[%s5 + $0x14] sm:$0xf]
  %v152 = vld [vmem:[%s5 + $0x18] sm:$0xf]
  %v153 = vld [vmem:[%s5 + $0x1c] sm:$0xf]
  %v154 = vld [vmem:[%s6] sm:$0x1]
  %v156 = vlaneseq
  %v157 = vshrl.u32 %v156, 7
  %v158 = vsub.s32 0, %v157
  %v159 = vrot.slane %v154, %v158
  %v169 = vunpack.c.l.b16 %v146
  %v170 = vunpack.c.l.b16 %v147
  %v171 = vunpack.c.l.b16 %v148
  %v172 = vunpack.c.l.b16 %v149
  %v173 = vunpack.c.l.b16 %v150
  %v174 = vunpack.c.l.b16 %v151
  %v175 = vunpack.c.l.b16 %v152
  %v176 = vunpack.c.l.b16 %v153
  %v177 = vpack.c.b16 %v170, %v169
  %v178 = vpack.c.b16 %v172, %v171
  %v179 = vpack.c.b16 %v174, %v173
  %v180 = vpack.c.b16 %v176, %v175
  %vm185 = vcmask 523264
  %v187 = vsel %vm185, %v145, 0
  %189 = vmatprep.subr.bf16.mxu0 0
  %190 = vmatpush1.bf16.msra.mxu0 %v177
  %191 = vmatprep.subr.bf16.mxu0 0
  %192 = vmatpush1.bf16.msra.mxu0 %v178
  %193 = vmatprep.subr.bf16.mxu0 0
  %194 = vmatpush1.bf16.msra.mxu0 %v179
  %195 = vmatprep.subr.bf16.mxu0 0
  %196 = vmatpush1.bf16.msra.mxu0 %v180
  %197 = vmatprep.subr.bf16.mxu0 0
  %198 = vmatpush1.bf16.msra.mxu0 0
  %199 = vmatprep.subr.bf16.mxu0 0
  %200 = vmatpush1.bf16.msra.mxu0 0
  %201 = vmatprep.subr.bf16.mxu0 0
  %202 = vmatpush1.bf16.msra.mxu0 0
  %203 = vmatprep.subr.bf16.mxu0 0
  %204 = vmatpush1.bf16.msra.mxu0 0
  %205 = vmatprep.subr.bf16.mxu0 0
  %206 = vmatpush1.bf16.msra.mxu0 0
  %207 = vmatprep.subr.bf16.mxu0 0
  %208 = vmatpush1.bf16.msra.mxu0 0
  %209 = vmatprep.subr.bf16.mxu0 0
  %210 = vmatpush1.bf16.msra.mxu0 0
  %211 = vmatprep.subr.bf16.mxu0 0
  %212 = vmatpush1.bf16.msra.mxu0 0
  %213 = vmatprep.subr.bf16.mxu0 0
  %214 = vmatpush1.bf16.msra.mxu0 0
  %215 = vmatprep.subr.bf16.mxu0 0
  %216 = vmatpush1.bf16.msra.mxu0 0
  %217 = vmatprep.subr.bf16.mxu0 0
  %218 = vmatpush1.bf16.msra.mxu0 0
  %219 = vmatprep.subr.bf16.mxu0 0
  %220 = vmatpush1.bf16.msra.mxu0 0
  %221 = vmatprep.mubr.bf16.mxu0 0
  %222 = vmatmul.mubr.bf16.gmra.mrb[0].mxu0 %v187
  %v223 = vpop.f32.mrb[0].mxu0
  %v224 = vadd.f32 %v159, %v223
  %v225 = vpop.f32.mrb[0].mxu0
  %v226 = vpop.f32.mrb[0].mxu0
  %v227 = vadd.f32 %v159, %v226
  %v228 = vpop.f32.mrb[0].mxu0
  %229 = vdwg.mxu0
  %v230 = vadd.f32 %v27, %v224
  %v231 = vadd.f32 %v28, %v227
  %232 = vst.msk [vmem:[%s7] sm:$0xff] %vm31, %v230
  %233 = vst.msk [vmem:[%s7 + $0x8] sm:$0xff] %vm31, %v231
  // Predicated region
  $region30: #{_lambda_.11} parent=0 // pred_check
    _
  $region31: #{_lambda_.11} parent=0 // pred_check_branch
    %235 = sbr.rel (0) target = $region33
  $region32: #{_lambda_.11} parent=0 // pred_region
    _
  $region33: #{_lambda_.11} parent=0 // pred_fallthru
    _
  // Predicated region
  $region34: #{_lambda_.11} parent=0 // pred_check
    _
  $region35: #{_lambda_.11} parent=0 // pred_check_branch
    %237 = sbr.rel (0) target = $region37
  $region36: #{_lambda_.11} parent=0 // pred_region
    _
  $region37: #{_lambda_.11} parent=0 // pred_fallthru
    _

// kernel: _lambda_.10
$region0: #{_lambda_.10}
  #allocation0 [shape = 'u32[]', space=smem, size = 0x4, offset = 0x4, fixed_abs, tag = 'smem constant byte address 0x4 - core index']
  #allocation1 [shape = 'u32[144,128]{1,0:T(1,128)}', space=vmem, size = 0x12000, scoped, tag = 'internal scratch']
  %s0 = inlined_call_operand.vmem [shape: f32[2,8,32], index: 0, kind: input, shape index: {}]
  %s1 = inlined_call_operand.vmem [shape: f32[2,8,32], index: 1, kind: input, shape index: {}]
  %s2 = inlined_call_operand.vmem [shape: f32[2,1,8], index: 2, kind: input, shape index: {}]
  %s3 = inlined_call_operand.vmem [shape: f32[1,32], index: 3, kind: input, shape index: {}]
  %s4 = inlined_call_operand.vmem [shape: f32[1,32], index: 4, kind: input, shape index: {}]
  %s5 = inlined_call_operand.vmem [shape: bf16[32,32], index: 5, kind: input, shape index: {}]
  %s6 = inlined_call_operand.vmem [shape: f32[1,32], index: 6, kind: input, shape index: {}]
  %s7 = inlined_call_operand.vmem [shape: bf16[32,32], index: 7, kind: input, shape index: {}]
  %s8 = inlined_call_operand.vmem [shape: f32[1,32], index: 8, kind: input, shape index: {}]
  %s9 = inlined_call_operand.vmem [shape: bf16[32,32], index: 9, kind: input, shape index: {}]
  %s10 = inlined_call_operand.vmem [shape: f32[1,32], index: 10, kind: input, shape index: {}]
  %s11 = inlined_call_operand.vmem [shape: bf16[32,32], index: 11, kind: input, shape index: {}]
  %s12 = inlined_call_operand.vmem [shape: f32[1,32], index: 12, kind: input, shape index: {}]
  %s13 = inlined_call_operand.vmem [shape: f32[2,8,32], index: 13, kind: output, shape index: {}]
  %s14 = sld [smem:[#allocation0]]
  $region85: #{_lambda_.10} parent=0
    _
  %s16 = ssub.s32 1, %s14
  %s17 = scalar_select 0, %s16, %s14
  loop: start=0, step=1, limit=4
  $region2: #{_lambda_.10} parent=0 // loop_pre_header
    _
  $region3: #{_lambda_.10} parent=0 // loop_header
    %s19 = sphi 0, %s23
    %p20 = scmp.ge.s32.totalorder %s19, 4
    %s26 = sphi 0, %s38
    %s27 = sphi 0, %s34
    %s28 = sphi 0, %s26
    %s29 = sphi 0, %s27
    %s30 = sphi 0, %s28
    %s31 = sphi 0, %s29
    %s43 = sphi 0, %s45
    %s46 = sphi 0, %s43
    %s47 = sphi 0, %s46
    %s63 = sphi 0, %s47
    %s69 = sphi 0, %s71
    %s72 = sphi 0, %s69
    %s73 = sphi 0, %s72
    %s89 = sphi 0, %s73
    %s95 = sphi 0, %s97
    %s98 = sphi 0, %s95
    %s99 = sphi 0, %s98
    %s115 = sphi 0, %s99
    %s119 = sphi 0, %s119
    %s121 = sphi 0, %s119
    %s122 = sphi 0, %s121
    %s136 = sphi 0, %s122
    %s140 = sphi 0, %s140
    %s142 = sphi 0, %s140
    %s143 = sphi 0, %s142
    %s157 = sphi 0, %s143
    %s161 = sphi 0, %s161
    %s163 = sphi 0, %s161
    %s164 = sphi 0, %s163
    %s178 = sphi 0, %s164
    %s182 = sphi 0, %s182
    %s184 = sphi 0, %s182
    %s185 = sphi 0, %s184
    %s199 = sphi 0, %s185
    %s203 = sphi 0, %s203
    %s205 = sphi 0, %s203
    %s206 = sphi 0, %s205
    %s220 = sphi 0, %s206
    %s224 = sphi 0, %s224
    %s226 = sphi 0, %s224
    %s227 = sphi 0, %s226
    %s241 = sphi 0, %s227
    %s245 = sphi 0, %s245
    %s247 = sphi 0, %s245
    %s248 = sphi 0, %s247
    %s262 = sphi 0, %s248
    %s266 = sphi 0, %s266
    %s268 = sphi 0, %s266
    %s269 = sphi 0, %s268
    %s283 = sphi 0, %s269
    %s287 = sphi 0, %s287
    %s289 = sphi 0, %s287
    %s290 = sphi 0, %s289
    %s304 = sphi 0, %s290
    %s308 = sphi 0, %s308
    %s310 = sphi 0, %s308
    %s311 = sphi 0, %s310
    %s325 = sphi 0, %s311
    %s333 = sphi 0, %s335
    %s336 = sphi 0, %s333
    %s337 = sphi 0, %s336
    %s353 = sphi 0, %s337
  $region4: #{_lambda_.10} parent=0 // loop_header_branch
    %22 = sbr.rel (%p20) target = $region8
  $region5: #{_lambda_.10} parent=0 // loop_body
    %s24 = ssub.s32 %s19, 1
    %s25 = ssub.s32 %s19, 2
    %s32 = sadd.s32 1, %s27
    %p33 = scmp.ge.s32.totalorder %s32, 1
    %s34 = scalar_select %p33, 0, %s32
    %s35 = sadd.s32 1, %s26
    %s36 = scalar_select %p33, %s35, %s26
    %p37 = scmp.ge.s32.totalorder %s36, 2
    %s38 = scalar_select %p37, 0, %s36
    %s39 = ssub.s32 %s26, %s38
    %s40 = ssub.s32 %s27, %s34
    %s41 = sor.u32 %s39, %s40
    %p42 = scmp.eq.s32.totalorder %s41, 0
    %s44 = sadd.s32 %s43, 1
    %s45 = scalar_select %p42, %s43, %s44
    %p48 = pneg %p42
    %p49 = scmp.eq.s32.totalorder %s19, 1
    %p50 = por %p48, %p49
    %p51 = scmp.ne.s32.totalorder %s43, %s46
    %p52 = scmp.eq.s32.totalorder %s19, 0
    %p53 = por %p51, %p52
    %p54 = scmp.ne.s32.totalorder %s43, %s46
    %p55 = scmp.eq.s32.totalorder %s24, 1
    %p56 = por %p54, %p55
    %p57 = scmp.ne.s32.totalorder %s46, %s47
    %p58 = scmp.eq.s32.totalorder %s24, 0
    %p59 = por %p57, %p58
    %p60 = scmp.ne.s32.totalorder %s46, %s47
    %p61 = scmp.eq.s32.totalorder %s25, 1
    %p62 = por %p60, %p61
    %p64 = scmp.ne.s32.totalorder %s47, %s63
    %p65 = scmp.eq.s32.totalorder %s25, 0
    %p66 = por %p64, %p65
    %s67 = ssub.s32 %s26, %s38
    %p68 = scmp.eq.s32.totalorder %s67, 0
    %s70 = sadd.s32 %s69, 1
    %s71 = scalar_select %p68, %s69, %s70
    %p74 = pneg %p68
    %p75 = scmp.eq.s32.totalorder %s19, 1
    %p76 = por %p74, %p75
    %p77 = scmp.ne.s32.totalorder %s69, %s72
    %p78 = scmp.eq.s32.totalorder %s19, 0
    %p79 = por %p77, %p78
    %p80 = scmp.ne.s32.totalorder %s69, %s72
    %p81 = scmp.eq.s32.totalorder %s24, 1
    %p82 = por %p80, %p81
    %p83 = scmp.ne.s32.totalorder %s72, %s73
    %p84 = scmp.eq.s32.totalorder %s24, 0
    %p85 = por %p83, %p84
    %p86 = scmp.ne.s32.totalorder %s72, %s73
    %p87 = scmp.eq.s32.totalorder %s25, 1
    %p88 = por %p86, %p87
    %p90 = scmp.ne.s32.totalorder %s73, %s89
    %p91 = scmp.eq.s32.totalorder %s25, 0
    %p92 = por %p90, %p91
    %s93 = ssub.s32 %s26, %s38
    %p94 = scmp.eq.s32.totalorder %s93, 0
    %s96 = sadd.s32 %s95, 1
    %s97 = scalar_select %p94, %s95, %s96
    %p100 = pneg %p94
    %p101 = scmp.eq.s32.totalorder %s19, 1
    %p102 = por %p100, %p101
    %p103 = scmp.ne.s32.totalorder %s95, %s98
    %p104 = scmp.eq.s32.totalorder %s19, 0
    %p105 = por %p103, %p104
    %p106 = scmp.ne.s32.totalorder %s95, %s98
    %p107 = scmp.eq.s32.totalorder %s24, 1
    %p108 = por %p106, %p107
    %p109 = scmp.ne.s32.totalorder %s98, %s99
    %p110 = scmp.eq.s32.totalorder %s24, 0
    %p111 = por %p109, %p110
    %p112 = scmp.ne.s32.totalorder %s98, %s99
    %p113 = scmp.eq.s32.totalorder %s25, 1
    %p114 = por %p112, %p113
    %p116 = scmp.ne.s32.totalorder %s99, %s115
    %p117 = scmp.eq.s32.totalorder %s25, 0
    %p118 = por %p116, %p117
    %s120 = sadd.s32 %s119, 1
    %p123 = scmp.eq.s32.totalorder %s19, 1
    %p124 = scmp.ne.s32.totalorder %s119, %s121
    %p125 = scmp.eq.s32.totalorder %s19, 0
    %p126 = por %p124, %p125
    %p127 = scmp.ne.s32.totalorder %s119, %s121
    %p128 = scmp.eq.s32.totalorder %s24, 1
    %p129 = por %p127, %p128
    %p130 = scmp.ne.s32.totalorder %s121, %s122
    %p131 = scmp.eq.s32.totalorder %s24, 0
    %p132 = por %p130, %p131
    %p133 = scmp.ne.s32.totalorder %s121, %s122
    %p134 = scmp.eq.s32.totalorder %s25, 1
    %p135 = por %p133, %p134
    %p137 = scmp.ne.s32.totalorder %s122, %s136
    %p138 = scmp.eq.s32.totalorder %s25, 0
    %p139 = por %p137, %p138
    %s141 = sadd.s32 %s140, 1
    %p144 = scmp.eq.s32.totalorder %s19, 1
    %p145 = scmp.ne.s32.totalorder %s140, %s142
    %p146 = scmp.eq.s32.totalorder %s19, 0
    %p147 = por %p145, %p146
    %p148 = scmp.ne.s32.totalorder %s140, %s142
    %p149 = scmp.eq.s32.totalorder %s24, 1
    %p150 = por %p148, %p149
    %p151 = scmp.ne.s32.totalorder %s142, %s143
    %p152 = scmp.eq.s32.totalorder %s24, 0
    %p153 = por %p151, %p152
    %p154 = scmp.ne.s32.totalorder %s142, %s143
    %p155 = scmp.eq.s32.totalorder %s25, 1
    %p156 = por %p154, %p155
    %p158 = scmp.ne.s32.totalorder %s143, %s157
    %p159 = scmp.eq.s32.totalorder %s25, 0
    %p160 = por %p158, %p159
    %s162 = sadd.s32 %s161, 1
    %p165 = scmp.eq.s32.totalorder %s19, 1
    %p166 = scmp.ne.s32.totalorder %s161, %s163
    %p167 = scmp.eq.s32.totalorder %s19, 0
    %p168 = por %p166, %p167
    %p169 = scmp.ne.s32.totalorder %s161, %s163
    %p170 = scmp.eq.s32.totalorder %s24, 1
    %p171 = por %p169, %p170
    %p172 = scmp.ne.s32.totalorder %s163, %s164
    %p173 = scmp.eq.s32.totalorder %s24, 0
    %p174 = por %p172, %p173
    %p175 = scmp.ne.s32.totalorder %s163, %s164
    %p176 = scmp.eq.s32.totalorder %s25, 1
    %p177 = por %p175, %p176
    %p179 = scmp.ne.s32.totalorder %s164, %s178
    %p180 = scmp.eq.s32.totalorder %s25, 0
    %p181 = por %p179, %p180
    %s183 = sadd.s32 %s182, 1
    %p186 = scmp.eq.s32.totalorder %s19, 1
    %p187 = scmp.ne.s32.totalorder %s182, %s184
    %p188 = scmp.eq.s32.totalorder %s19, 0
    %p189 = por %p187, %p188
    %p190 = scmp.ne.s32.totalorder %s182, %s184
    %p191 = scmp.eq.s32.totalorder %s24, 1
    %p192 = por %p190, %p191
    %p193 = scmp.ne.s32.totalorder %s184, %s185
    %p194 = scmp.eq.s32.totalorder %s24, 0
    %p195 = por %p193, %p194
    %p196 = scmp.ne.s32.totalorder %s184, %s185
    %p197 = scmp.eq.s32.totalorder %s25, 1
    %p198 = por %p196, %p197
    %p200 = scmp.ne.s32.totalorder %s185, %s199
    %p201 = scmp.eq.s32.totalorder %s25, 0
    %p202 = por %p200, %p201
    %s204 = sadd.s32 %s203, 1
    %p207 = scmp.eq.s32.totalorder %s19, 1
    %p208 = scmp.ne.s32.totalorder %s203, %s205
    %p209 = scmp.eq.s32.totalorder %s19, 0
    %p210 = por %p208, %p209
    %p211 = scmp.ne.s32.totalorder %s203, %s205
    %p212 = scmp.eq.s32.totalorder %s24, 1
    %p213 = por %p211, %p212
    %p214 = scmp.ne.s32.totalorder %s205, %s206
    %p215 = scmp.eq.s32.totalorder %s24, 0
    %p216 = por %p214, %p215
    %p217 = scmp.ne.s32.totalorder %s205, %s206
    %p218 = scmp.eq.s32.totalorder %s25, 1
    %p219 = por %p217, %p218
    %p221 = scmp.ne.s32.totalorder %s206, %s220
    %p222 = scmp.eq.s32.totalorder %s25, 0
    %p223 = por %p221, %p222
    %s225 = sadd.s32 %s224, 1
    %p228 = scmp.eq.s32.totalorder %s19, 1
    %p229 = scmp.ne.s32.totalorder %s224, %s226
    %p230 = scmp.eq.s32.totalorder %s19, 0
    %p231 = por %p229, %p230
    %p232 = scmp.ne.s32.totalorder %s224, %s226
    %p233 = scmp.eq.s32.totalorder %s24, 1
    %p234 = por %p232, %p233
    %p235 = scmp.ne.s32.totalorder %s226, %s227
    %p236 = scmp.eq.s32.totalorder %s24, 0
    %p237 = por %p235, %p236
    %p238 = scmp.ne.s32.totalorder %s226, %s227
    %p239 = scmp.eq.s32.totalorder %s25, 1
    %p240 = por %p238, %p239
    %p242 = scmp.ne.s32.totalorder %s227, %s241
    %p243 = scmp.eq.s32.totalorder %s25, 0
    %p244 = por %p242, %p243
    %s246 = sadd.s32 %s245, 1
    %p249 = scmp.eq.s32.totalorder %s19, 1
    %p250 = scmp.ne.s32.totalorder %s245, %s247
    %p251 = scmp.eq.s32.totalorder %s19, 0
    %p252 = por %p250, %p251
    %p253 = scmp.ne.s32.totalorder %s245, %s247
    %p254 = scmp.eq.s32.totalorder %s24, 1
    %p255 = por %p253, %p254
    %p256 = scmp.ne.s32.totalorder %s247, %s248
    %p257 = scmp.eq.s32.totalorder %s24, 0
    %p258 = por %p256, %p257
    %p259 = scmp.ne.s32.totalorder %s247, %s248
    %p260 = scmp.eq.s32.totalorder %s25, 1
    %p261 = por %p259, %p260
    %p263 = scmp.ne.s32.totalorder %s248, %s262
    %p264 = scmp.eq.s32.totalorder %s25, 0
    %p265 = por %p263, %p264
    %s267 = sadd.s32 %s266, 1
    %p270 = scmp.eq.s32.totalorder %s19, 1
    %p271 = scmp.ne.s32.totalorder %s266, %s268
    %p272 = scmp.eq.s32.totalorder %s19, 0
    %p273 = por %p271, %p272
    %p274 = scmp.ne.s32.totalorder %s266, %s268
    %p275 = scmp.eq.s32.totalorder %s24, 1
    %p276 = por %p274, %p275
    %p277 = scmp.ne.s32.totalorder %s268, %s269
    %p278 = scmp.eq.s32.totalorder %s24, 0
    %p279 = por %p277, %p278
    %p280 = scmp.ne.s32.totalorder %s268, %s269
    %p281 = scmp.eq.s32.totalorder %s25, 1
    %p282 = por %p280, %p281
    %p284 = scmp.ne.s32.totalorder %s269, %s283
    %p285 = scmp.eq.s32.totalorder %s25, 0
    %p286 = por %p284, %p285
    %s288 = sadd.s32 %s287, 1
    %p291 = scmp.eq.s32.totalorder %s19, 1
    %p292 = scmp.ne.s32.totalorder %s287, %s289
    %p293 = scmp.eq.s32.totalorder %s19, 0
    %p294 = por %p292, %p293
    %p295 = scmp.ne.s32.totalorder %s287, %s289
    %p296 = scmp.eq.s32.totalorder %s24, 1
    %p297 = por %p295, %p296
    %p298 = scmp.ne.s32.totalorder %s289, %s290
    %p299 = scmp.eq.s32.totalorder %s24, 0
    %p300 = por %p298, %p299
    %p301 = scmp.ne.s32.totalorder %s289, %s290
    %p302 = scmp.eq.s32.totalorder %s25, 1
    %p303 = por %p301, %p302
    %p305 = scmp.ne.s32.totalorder %s290, %s304
    %p306 = scmp.eq.s32.totalorder %s25, 0
    %p307 = por %p305, %p306
    %s309 = sadd.s32 %s308, 1
    %p312 = scmp.eq.s32.totalorder %s19, 1
    %p313 = scmp.ne.s32.totalorder %s308, %s310
    %p314 = scmp.eq.s32.totalorder %s19, 0
    %p315 = por %p313, %p314
    %p316 = scmp.ne.s32.totalorder %s308, %s310
    %p317 = scmp.eq.s32.totalorder %s24, 1
    %p318 = por %p316, %p317
    %p319 = scmp.ne.s32.totalorder %s310, %s311
    %p320 = scmp.eq.s32.totalorder %s24, 0
    %p321 = por %p319, %p320
    %p322 = scmp.ne.s32.totalorder %s310, %s311
    %p323 = scmp.eq.s32.totalorder %s25, 1
    %p324 = por %p322, %p323
    %p326 = scmp.ne.s32.totalorder %s311, %s325
    %p327 = scmp.eq.s32.totalorder %s25, 0
    %p328 = por %p326, %p327
    %s329 = ssub.s32 %s26, %s38
    %s330 = ssub.s32 %s27, %s34
    %s331 = sor.u32 %s329, %s330
    %p332 = scmp.eq.s32.totalorder %s331, 0
    %s334 = sadd.s32 %s333, 1
    %s335 = scalar_select %p332, %s333, %s334
    %p338 = pneg %p332
    %p339 = scmp.eq.s32.totalorder %s19, 1
    %p340 = por %p338, %p339
    %p341 = scmp.ne.s32.totalorder %s333, %s336
    %p342 = scmp.eq.s32.totalorder %s19, 0
    %p343 = por %p341, %p342
    %p344 = scmp.ne.s32.totalorder %s333, %s336
    %p345 = scmp.eq.s32.totalorder %s24, 1
    %p346 = por %p344, %p345
    %p347 = scmp.ne.s32.totalorder %s336, %s337
    %p348 = scmp.eq.s32.totalorder %s24, 0
    %p349 = por %p347, %p348
    %p350 = scmp.ne.s32.totalorder %s336, %s337
    %p351 = scmp.eq.s32.totalorder %s25, 1
    %p352 = por %p350, %p351
    %p354 = scmp.ne.s32.totalorder %s337, %s353
    %p355 = scmp.eq.s32.totalorder %s25, 0
    %p356 = por %p354, %p355
    %p357 = scmp.le.s32.totalorder 1, %s19
    %p358 = scmp.lt.s32.totalorder %s19, 3
    %p359 = pnand %p357, %p358
    %p360 = pneg %p359
    // Predicated region
    $region9: #{_lambda_.10} parent=5 // pred_check
      _
    $region10: #{_lambda_.10} parent=5 // pred_check_branch
      %362 = sbr.rel (%p359) target = $region12
    $region11: #{_lambda_.10} parent=5 // pred_region
      %s363 = ssub.s32 %s19, 1
      // Predicated region
      $region13: #{_lambda_.10} parent=11 // pred_check
        %p364 = pneg %p132
      $region14: #{_lambda_.10} parent=11 // pred_check_branch
        %366 = sbr.rel (%p364) target = $region16
      $region15: #{_lambda_.10} parent=11 // pred_region
        _
      $region16: #{_lambda_.10} parent=11 // pred_fallthru
        _
      // Predicated region
      $region17: #{_lambda_.10} parent=11 // pred_check
        %p367 = pneg %p153
      $region18: #{_lambda_.10} parent=11 // pred_check_branch
        %369 = sbr.rel (%p367) target = $region20
      $region19: #{_lambda_.10} parent=11 // pred_region
        _
      $region20: #{_lambda_.10} parent=11 // pred_fallthru
        _
      // Predicated region
      $region21: #{_lambda_.10} parent=11 // pred_check
        %p370 = pneg %p174
      $region22: #{_lambda_.10} parent=11 // pred_check_branch
        %372 = sbr.rel (%p370) target = $region24
      $region23: #{_lambda_.10} parent=11 // pred_region
        _
      $region24: #{_lambda_.10} parent=11 // pred_fallthru
        _
      // Predicated region
      $region25: #{_lambda_.10} parent=11 // pred_check
        %p373 = pneg %p195
      $region26: #{_lambda_.10} parent=11 // pred_check_branch
        %375 = sbr.rel (%p373) target = $region28
      $region27: #{_lambda_.10} parent=11 // pred_region
        _
      $region28: #{_lambda_.10} parent=11 // pred_fallthru
        _
      // Predicated region
      $region29: #{_lambda_.10} parent=11 // pred_check
        %p376 = pneg %p216
      $region30: #{_lambda_.10} parent=11 // pred_check_branch
        %378 = sbr.rel (%p376) target = $region32
      $region31: #{_lambda_.10} parent=11 // pred_region
        _
      $region32: #{_lambda_.10} parent=11 // pred_fallthru
        _
      // Predicated region
      $region33: #{_lambda_.10} parent=11 // pred_check
        %p379 = pneg %p237
      $region34: #{_lambda_.10} parent=11 // pred_check_branch
        %381 = sbr.rel (%p379) target = $region36
      $region35: #{_lambda_.10} parent=11 // pred_region
        _
      $region36: #{_lambda_.10} parent=11 // pred_fallthru
        _
      // Predicated region
      $region37: #{_lambda_.10} parent=11 // pred_check
        %p382 = pneg %p258
      $region38: #{_lambda_.10} parent=11 // pred_check_branch
        %384 = sbr.rel (%p382) target = $region40
      $region39: #{_lambda_.10} parent=11 // pred_region
        _
      $region40: #{_lambda_.10} parent=11 // pred_fallthru
        _
      // Predicated region
      $region41: #{_lambda_.10} parent=11 // pred_check
        %p385 = pneg %p279
      $region42: #{_lambda_.10} parent=11 // pred_check_branch
        %387 = sbr.rel (%p385) target = $region44
      $region43: #{_lambda_.10} parent=11 // pred_region
        _
      $region44: #{_lambda_.10} parent=11 // pred_fallthru
        _
      // Predicated region
      $region45: #{_lambda_.10} parent=11 // pred_check
        %p388 = pneg %p300
      $region46: #{_lambda_.10} parent=11 // pred_check_branch
        %390 = sbr.rel (%p388) target = $region48
      $region47: #{_lambda_.10} parent=11 // pred_region
        _
      $region48: #{_lambda_.10} parent=11 // pred_fallthru
        _
      // Predicated region
      $region49: #{_lambda_.10} parent=11 // pred_check
        %p391 = pneg %p321
      $region50: #{_lambda_.10} parent=11 // pred_check_branch
        %393 = sbr.rel (%p391) target = $region52
      $region51: #{_lambda_.10} parent=11 // pred_region
        _
      $region52: #{_lambda_.10} parent=11 // pred_fallthru
        _
    $region12: #{_lambda_.10} parent=5 // pred_fallthru
      _
    %p394 = scmp.lt.s32.totalorder %s19, 2
    // Predicated region
    $region53: #{_lambda_.10} parent=5 // pred_check
      %p395 = pneg %p394
    $region54: #{_lambda_.10} parent=5 // pred_check_branch
      %397 = sbr.rel (%p395) target = $region56
    $region55: #{_lambda_.10} parent=5 // pred_region
      // Predicated region
      $region57: #{_lambda_.10} parent=55 // pred_check
        %p398 = pneg %p53
      $region58: #{_lambda_.10} parent=55 // pred_check_branch
        %400 = sbr.rel (%p398) target = $region60
      $region59: #{_lambda_.10} parent=55 // pred_region
        %p401 = scmp.lt.s32.totalorder %s26, 1
        %s402 = scalar_select %p401, %s26, 1
        %p403 = scmp.lt.s32.totalorder %s27, 0
        %s404 = scalar_select %p403, %s27, 0
        %s405 = sadd.s32 %s404, %s402
        %s406 = smul.addr %s405, 8
        %s407 = scalar_lea.vmem %s0, %s406
      $region60: #{_lambda_.10} parent=55 // pred_fallthru
        _
      // Predicated region
      $region61: #{_lambda_.10} parent=55 // pred_check
        %p408 = pneg %p79
      $region62: #{_lambda_.10} parent=55 // pred_check_branch
        %410 = sbr.rel (%p408) target = $region64
      $region63: #{_lambda_.10} parent=55 // pred_region
        %p411 = scmp.lt.s32.totalorder %s26, 1
        %s412 = scalar_select %p411, %s26, 1
        %s413 = smul.addr %s412, 8
        %s414 = scalar_lea.vmem %s1, %s413
      $region64: #{_lambda_.10} parent=55 // pred_fallthru
        _
      // Predicated region
      $region65: #{_lambda_.10} parent=55 // pred_check
        %p415 = pneg %p105
      $region66: #{_lambda_.10} parent=55 // pred_check_branch
        %417 = sbr.rel (%p415) target = $region68
      $region67: #{_lambda_.10} parent=55 // pred_region
        %p418 = scmp.lt.s32.totalorder %s26, 1
        %s419 = scalar_select %p418, %s26, 1
        %s420 = scalar_lea.vmem %s2, %s419
      $region68: #{_lambda_.10} parent=55 // pred_fallthru
        _
    $region56: #{_lambda_.10} parent=5 // pred_fallthru
      _
    %p421 = scmp.le.s32.totalorder 1, %s19
    %p422 = scmp.lt.s32.totalorder %s19, 3
    %p423 = pnand %p421, %p422
    %p424 = pneg %p423
    // Predicated region
    $region69: #{_lambda_.10} parent=5 // pred_check
      _
    $region70: #{_lambda_.10} parent=5 // pred_check_branch
      %426 = sbr.rel (%p423) target = $region72
    $region71: #{_lambda_.10} parent=5 // pred_region
      %s427 = ssub.s32 %s19, 1
      %p428 = scmp.lt.s32.totalorder %s28, 1
      %s429 = scalar_select %p428, %s28, 1
      %p430 = scmp.lt.s32.totalorder %s29, 0
      %s431 = scalar_select %p430, %s29, 0
      %s432 = sadd.s32 %s431, %s429
      %s433 = smul.addr %s432, 8
      %s434 = scalar_lea.vmem %s0, %s433
      %p435 = pneg %p59
      %p436 = pneg %p56
      %p437 = scmp.lt.s32.totalorder %s28, 1
      %s438 = scalar_select %p437, %s28, 1
      %s439 = smul.addr %s438, 8
      %s440 = scalar_lea.vmem %s1, %s439
      %p441 = pneg %p85
      %p442 = pneg %p82
      %p443 = scmp.lt.s32.totalorder %s28, 1
      %s444 = scalar_select %p443, %s28, 1
      %s445 = scalar_lea.vmem %s2, %s444
      %p446 = pneg %p111
      %p447 = pneg %p108
      %p448 = pneg %p132
      %p449 = pneg %p129
      %p450 = pneg %p153
      %p451 = pneg %p150
      %p452 = pneg %p174
      %p453 = pneg %p171
      %p454 = pneg %p195
      %p455 = pneg %p192
      %p456 = pneg %p216
      %p457 = pneg %p213
      %p458 = pneg %p237
      %p459 = pneg %p234
      %p460 = pneg %p258
      %p461 = pneg %p255
      %p462 = pneg %p279
      %p463 = pneg %p276
      %p464 = pneg %p300
      %p465 = pneg %p297
      %p466 = pneg %p321
      %p467 = pneg %p318
      %p468 = pneg %p349
      %p469 = pneg %p346
      %p470 = scmp.lt.s32.totalorder %s28, 1
      %s471 = scalar_select %p470, %s28, 1
      %p472 = scmp.lt.s32.totalorder %s29, 0
      %s473 = scalar_select %p472, %s29, 0
      %s474 = sadd.s32 %s473, %s471
      %s475 = smul.addr %s474, 8
      %s476 = scalar_lea.vmem %s13, %s475
      %p477 = scmp.lt.s32.totalorder %s28, 1
      %s478 = scalar_select %p477, %s28, 1
      %p479 = scmp.lt.s32.totalorder %s29, 0
      %s480 = scalar_select %p479, %s29, 0
      %s481 = sadd.s32 %s480, %s478
      %s482 = smul.addr %s481, 8
      %s483 = scalar_lea.vmem %s0, %s482
      %p484 = scmp.lt.s32.totalorder %s28, 1
      %s485 = scalar_select %p484, %s28, 1
      %s486 = smul.addr %s485, 8
      %s487 = scalar_lea.vmem %s1, %s486
      %p488 = scmp.lt.s32.totalorder %s28, 1
      %s489 = scalar_select %p488, %s28, 1
      %s490 = scalar_lea.vmem %s2, %s489
      %p491 = scmp.lt.s32.totalorder %s28, 1
      %s492 = scalar_select %p491, %s28, 1
      %p493 = scmp.lt.s32.totalorder %s29, 0
      %s494 = scalar_select %p493, %s29, 0
      %s495 = sadd.s32 %s494, %s492
      %s496 = smul.addr %s495, 8
      %s497 = scalar_lea.vmem %s13, %s496
      %v499 = vld [vmem:[%s3] sm:$0x1]
      %v500 = vld [vmem:[%s4] sm:$0x1]
      %v501 = vld [vmem:[%s483] sm:$0xff]
      %vm502 = vcmask 261120
      %v503 = vsel %vm502, %v501, 0.0
      %504 = vadd.xlane.f32.xlu0 %v503
      %v505 = vpop.xlane.xlu0 %504
      %v506 = vrcp.pop 32.0
      %v507 = vmul.f32 %v505, %v506
      %v508 = vsub.f32 %v501, %v507
      %v509 = vmul.f32 %v508, %v508
      %v510 = vsel %vm502, %v509, 0.0
      %511 = vadd.xlane.f32.xlu0 %v510
      %v512 = vpop.xlane.xlu0 %511
      %v513 = vmul.f32 %v512, %v506
      %v514 = vadd.f32 %v513, 1e-05
      %v515 = vrsqrt.pop %v514
      %v516 = vmul.f32 %v508, %v515
      %v518 = vlaneseq
      %v519 = vshrl.u32 %v518, 7
      %v520 = vsub.s32 0, %v519
      %v521 = vrot.slane %v499, %v520
      %v523 = vmul.f32 %v516, %v521
      %v525 = vlaneseq
      %v526 = vshrl.u32 %v525, 7
      %v527 = vsub.s32 0, %v526
      %v528 = vrot.slane %v500, %v527
      %v530 = vadd.f32 %v523, %v528
      %v531 = vpack.c.bf16 %v530, %v530
      %v532 = vld [vmem:[%s487] sm:$0xff]
      %v533 = vpack.c.bf16 %v532, %v532
      %v534 = vld [vmem:[%s5] sm:$0xf]
      %v535 = vld [vmem:[%s5 + $0x4] sm:$0xf]
      %v536 = vld [vmem:[%s5 + $0x8] sm:$0xf]
      %v537 = vld [vmem:[%s5 + $0xc] sm:$0xf]
      %v538 = vld [vmem:[%s6] sm:$0x1]
      %v540 = vlaneseq
      %v541 = vshrl.u32 %v540, 7
      %v542 = vsub.s32 0, %v541
      %v543 = vrot.slane %v538, %v542
      %v549 = vunpack.c.l.b16 %v534
      %v550 = vunpack.c.l.b16 %v535
      %v551 = vunpack.c.l.b16 %v536
      %v552 = vunpack.c.l.b16 %v537
      %v553 = vpack.c.b16 %v550, %v549
      %v554 = vpack.c.b16 %v552, %v551
      %v558 = vsel %vm502, %v531, 0
      %560 = vmatprep.subr.bf16.mxu0 0
      %561 = vmatpush1.bf16.msra.mxu0 %v553
      %562 = vmatprep.subr.bf16.mxu0 0
      %563 = vmatpush1.bf16.msra.mxu0 %v554
      %564 = vmatprep.subr.bf16.mxu0 0
      %565 = vmatpush1.bf16.msra.mxu0 0
      %566 = vmatprep.subr.bf16.mxu0 0
      %567 = vmatpush1.bf16.msra.mxu0 0
      %568 = vmatprep.subr.bf16.mxu0 0
      %569 = vmatpush1.bf16.msra.mxu0 0
      %570 = vmatprep.subr.bf16.mxu0 0
      %571 = vmatpush1.bf16.msra.mxu0 0
      %572 = vmatprep.subr.bf16.mxu0 0
      %573 = vmatpush1.bf16.msra.mxu0 0
      %574 = vmatprep.subr.bf16.mxu0 0
      %575 = vmatpush1.bf16.msra.mxu0 0
      %576 = vmatprep.subr.bf16.mxu0 0
      %577 = vmatpush1.bf16.msra.mxu0 0
      %578 = vmatprep.subr.bf16.mxu0 0
      %579 = vmatpush1.bf16.msra.mxu0 0
      %580 = vmatprep.subr.bf16.mxu0 0
      %581 = vmatpush1.bf16.msra.mxu0 0
      %582 = vmatprep.subr.bf16.mxu0 0
      %583 = vmatpush1.bf16.msra.mxu0 0
      %584 = vmatprep.subr.bf16.mxu0 0
      %585 = vmatpush1.bf16.msra.mxu0 0
      %586 = vmatprep.subr.bf16.mxu0 0
      %587 = vmatpush1.bf16.msra.mxu0 0
      %588 = vmatprep.subr.bf16.mxu0 0
      %589 = vmatpush1.bf16.msra.mxu0 0
      %590 = vmatprep.subr.bf16.mxu0 0
      %591 = vmatpush1.bf16.msra.mxu0 0
      %592 = vmatprep.mubr.bf16.mxu0 0
      %593 = vmatmul.mubr.bf16.gmra.mrb[0].mxu0 %v558
      %v594 = vpop.f32.mrb[0].mxu0
      %v595 = vadd.f32 %v543, %v594
      %v596 = vpop.f32.mrb[0].mxu0
      %v597 = vpop.f32.mrb[0].mxu0
      %v598 = vpop.f32.mrb[0].mxu0
      %599 = vdwg.mxu0
      %v600 = vld [vmem:[%s7] sm:$0xf]
      %v601 = vld [vmem:[%s7 + $0x4] sm:$0xf]
      %v602 = vld [vmem:[%s7 + $0x8] sm:$0xf]
      %v603 = vld [vmem:[%s7 + $0xc] sm:$0xf]
      %v604 = vld [vmem:[%s8] sm:$0x1]
      %v606 = vlaneseq
      %v607 = vshrl.u32 %v606, 7
      %v608 = vsub.s32 0, %v607
      %v609 = vrot.slane %v604, %v608
      %v615 = vunpack.c.l.b16 %v600
      %v616 = vunpack.c.l.b16 %v601
      %v617 = vunpack.c.l.b16 %v602
      %v618 = vunpack.c.l.b16 %v603
      %v619 = vpack.c.b16 %v616, %v615
      %v620 = vpack.c.b16 %v618, %v617
      %v624 = vsel %vm502, %v533, 0
      %626 = vmatprep.subr.bf16.mxu0 0
      %627 = vmatpush1.bf16.msra.mxu0 %v619
      %628 = vmatprep.subr.bf16.mxu0 0
      %629 = vmatpush1.bf16.msra.mxu0 %v620
      %630 = vmatprep.subr.bf16.mxu0 0
      %631 = vmatpush1.bf16.msra.mxu0 0
      %632 = vmatprep.subr.bf16.mxu0 0
      %633 = vmatpush1.bf16.msra.mxu0 0
      %634 = vmatprep.subr.bf16.mxu0 0
      %635 = vmatpush1.bf16.msra.mxu0 0
      %636 = vmatprep.subr.bf16.mxu0 0
      %637 = vmatpush1.bf16.msra.mxu0 0
      %638 = vmatprep.subr.bf16.mxu0 0
      %639 = vmatpush1.bf16.msra.mxu0 0
      %640 = vmatprep.subr.bf16.mxu0 0
      %641 = vmatpush1.bf16.msra.mxu0 0
      %642 = vmatprep.subr.bf16.mxu0 0
      %643 = vmatpush1.bf16.msra.mxu0 0
      %644 = vmatprep.subr.bf16.mxu0 0
      %645 = vmatpush1.bf16.msra.mxu0 0
      %646 = vmatprep.subr.bf16.mxu0 0
      %647 = vmatpush1.bf16.msra.mxu0 0
      %648 = vmatprep.subr.bf16.mxu0 0
      %649 = vmatpush1.bf16.msra.mxu0 0
      %650 = vmatprep.subr.bf16.mxu0 0
      %651 = vmatpush1.bf16.msra.mxu0 0
      %652 = vmatprep.subr.bf16.mxu0 0
      %653 = vmatpush1.bf16.msra.mxu0 0
      %654 = vmatprep.subr.bf16.mxu0 0
      %655 = vmatpush1.bf16.msra.mxu0 0
      %656 = vmatprep.subr.bf16.mxu0 0
      %657 = vmatpush1.bf16.msra.mxu0 0
      %658 = vmatprep.mubr.bf16.mxu0 0
      %659 = vmatmul.mubr.bf16.gmra.mrb[0].mxu0 %v624
      %v660 = vpop.f32.mrb[0].mxu0
      %v661 = vadd.f32 %v609, %v660
      %v662 = vpop.f32.mrb[0].mxu0
      %v663 = vpop.f32.mrb[0].mxu0
      %v664 = vpop.f32.mrb[0].mxu0
      %665 = vdwg.mxu0
      %v666 = vld [vmem:[%s9] sm:$0xf]
      %v667 = vld [vmem:[%s9 + $0x4] sm:$0xf]
      %v668 = vld [vmem:[%s9 + $0x8] sm:$0xf]
      %v669 = vld [vmem:[%s9 + $0xc] sm:$0xf]
      %v670 = vld [vmem:[%s10] sm:$0x1]
      %v672 = vlaneseq
      %v673 = vshrl.u32 %v672, 7
      %v674 = vsub.s32 0, %v673
      %v675 = vrot.slane %v670, %v674
      %v681 = vunpack.c.l.b16 %v666
      %v682 = vunpack.c.l.b16 %v667
      %v683 = vunpack.c.l.b16 %v668
      %v684 = vunpack.c.l.b16 %v669
      %v685 = vpack.c.b16 %v682, %v681
      %v686 = vpack.c.b16 %v684, %v683
      %689 = vmatprep.subr.bf16.mxu0 0
      %690 = vmatpush1.bf16.msra.mxu0 %v685
      %691 = vmatprep.subr.bf16.mxu0 0
      %692 = vmatpush1.bf16.msra.mxu0 %v686
      %693 = vmatprep.subr.bf16.mxu0 0
      %694 = vmatpush1.bf16.msra.mxu0 0
      %695 = vmatprep.subr.bf16.mxu0 0
      %696 = vmatpush1.bf16.msra.mxu0 0
      %697 = vmatprep.subr.bf16.mxu0 0
      %698 = vmatpush1.bf16.msra.mxu0 0
      %699 = vmatprep.subr.bf16.mxu0 0
      %700 = vmatpush1.bf16.msra.mxu0 0
      %701 = vmatprep.subr.bf16.mxu0 0
      %702 = vmatpush1.bf16.msra.mxu0 0
      %703 = vmatprep.subr.bf16.mxu0 0
      %704 = vmatpush1.bf16.msra.mxu0 0
      %705 = vmatprep.subr.bf16.mxu0 0
      %706 = vmatpush1.bf16.msra.mxu0 0
      %707 = vmatprep.subr.bf16.mxu0 0
      %708 = vmatpush1.bf16.msra.mxu0 0
      %709 = vmatprep.subr.bf16.mxu0 0
      %710 = vmatpush1.bf16.msra.mxu0 0
      %711 = vmatprep.subr.bf16.mxu0 0
      %712 = vmatpush1.bf16.msra.mxu0 0
      %713 = vmatprep.subr.bf16.mxu0 0
      %714 = vmatpush1.bf16.msra.mxu0 0
      %715 = vmatprep.subr.bf16.mxu0 0
      %716 = vmatpush1.bf16.msra.mxu0 0
      %717 = vmatprep.subr.bf16.mxu0 0
      %718 = vmatpush1.bf16.msra.mxu0 0
      %719 = vmatprep.subr.bf16.mxu0 0
      %720 = vmatpush1.bf16.msra.mxu0 0
      %721 = vmatprep.mubr.bf16.mxu0 0
      %722 = vmatmul.mubr.bf16.gmra.mrb[0].mxu0 %v624
      %v723 = vpop.f32.mrb[0].mxu0
      %v724 = vadd.f32 %v675, %v723
      %v725 = vpop.f32.mrb[0].mxu0
      %v726 = vpop.f32.mrb[0].mxu0
      %v727 = vpop.f32.mrb[0].mxu0
      %728 = vdwg.mxu0
      %v729 = vmul.f32 %v595, 0.35355338
      %v730 = vld [vmem:[%s490] sm:$0x1]
      %vm731 = vcmp.ne.f32.partialorder %v730, 0.0
      %v732 = vpack.c.bf16 %v729, %v729
      %v733 = vpack.c.bf16 %v661, %v661
      %v734 = vpack.c.bf16 %v724, %v724
      %vm735 = vcmask 64512
      %v737 = vsel %vm735, %v732, 0
      %v740 = vsel %vm735, %v733, 0
      %742 = vmatprep.subr.bf16.mxu0 0
      %743 = vmatpush1.bf16.xpose.msra.mxu0 %v740
      %744 = vmatprep.subr.bf16.mxu0 0
      %745 = vmatpush1.bf16.xpose.msra.mxu0 0
      %746 = vmatprep.subr.bf16.mxu0 0
      %747 = vmatpush1.bf16.xpose.msra.mxu0 0
      %748 = vmatprep.subr.bf16.mxu0 0
      %749 = vmatpush1.bf16.xpose.msra.mxu0 0
      %750 = vmatprep.subr.bf16.mxu0 0
      %751 = vmatpush1.bf16.xpose.msra.mxu0 0
      %752 = vmatprep.subr.bf16.mxu0 0
      %753 = vmatpush1.bf16.xpose.msra.mxu0 0
      %754 = vmatprep.subr.bf16.mxu0 0
      %755 = vmatpush1.bf16.xpose.msra.mxu0 0
      %756 = vmatprep.subr.bf16.mxu0 0
      %757 = vmatpush1.bf16.xpose.msra.mxu0 0
      %758 = vmatprep.subr.bf16.mxu0 0
      %759 = vmatpush1.bf16.xpose.msra.mxu0 0
      %760 = vmatprep.subr.bf16.mxu0 0
      %761 = vmatpush1.bf16.xpose.msra.mxu0 0
      %762 = vmatprep.subr.bf16.mxu0 0
      %763 = vmatpush1.bf16.xpose.msra.mxu0 0
      %764 = vmatprep.subr.bf16.mxu0 0
      %765 = vmatpush1.bf16.xpose.msra.mxu0 0
      %766 = vmatprep.subr.bf16.mxu0 0
      %767 = vmatpush1.bf16.xpose.msra.mxu0 0
      %768 = vmatprep.subr.bf16.mxu0 0
      %769 = vmatpush1.bf16.xpose.msra.mxu0 0
      %770 = vmatprep.subr.bf16.mxu0 0
      %771 = vmatpush1.bf16.xpose.msra.mxu0 0
      %772 = vmatprep.subr.bf16.mxu0 0
      %773 = vmatpush1.bf16.xpose.msra.mxu0 0
      %774 = vmatprep.mubr.bf16.mxu0 0
      %775 = vmatmul.mubr.bf16.gmra.mrb[0].mxu0 %v737
      %v776 = vpop.f32.mrb[0].mxu0
      %v777 = vadd.f32 0.0, %v776
      %v778 = vpop.f32.mrb[0].mxu0
      %v779 = vpop.f32.mrb[0].mxu0
      %v780 = vpop.f32.mrb[0].mxu0
      %781 = vdwg.mxu0
      %v782 = vsel %vm731, 1, 0
      %v783 = vlaneseq
      %v784 = vshrl.u32 %v783, 7
      %v785 = vsub.s32 0, %v784
      %v786 = vrot.slane %v782, %v785
      %vm787 = vcmp.eq.s32.totalorder %v786, 1
      %v788 = vsel %vm787, -1e+30, %v777
      %v789 = vsel %vm735, %v788, -inf
      %790 = vmax.xlane.f32.xlu0 %v789
      %v791 = vpop.xlane.xlu0 %790
      %v792 = vsub.f32 %v788, %v791
      %v793 = vmul.f32 %v792, 1.442695
      %v794 = vpow.pop %v793
      %v795 = vsel %vm735, %v794, 0.0
      %796 = vadd.xlane.f32.xlu0 %v795
      %v797 = vpop.xlane.xlu0 %796
      %v798 = vrcp.pop %v797
      %v799 = vmul.f32 %v794, %v798
      %v800 = vpack.c.bf16 %v799, %v799
      %v802 = vsel %vm735, %v800, 0
      %vm804 = vcmask 1043456
      %v806 = vsel %vm804, %v734, 0
      %808 = vmatprep.subr.bf16.mxu0 0
      %809 = vmatpush1.bf16.msra.mxu0 %v806
      %810 = vmatprep.subr.bf16.mxu0 0
      %811 = vmatpush1.bf16.msra.mxu0 0
      %812 = vmatprep.subr.bf16.mxu0 0
      %813 = vmatpush1.bf16.msra.mxu0 0
      %814 = vmatprep.subr.bf16.mxu0 0
      %815 = vmatpush1.bf16.msra.mxu0 0
      %816 = vmatprep.subr.bf16.mxu0 0
      %817 = vmatpush1.bf16.msra.mxu0 0
      %818 = vmatprep.subr.bf16.mxu0 0
      %819 = vmatpush1.bf16.msra.mxu0 0
      %820 = vmatprep.subr.bf16.mxu0 0
      %821 = vmatpush1.bf16.msra.mxu0 0
      %822 = vmatprep.subr.bf16.mxu0 0
      %823 = vmatpush1.bf16.msra.mxu0 0
      %824 = vmatprep.subr.bf16.mxu0 0
      %825 = vmatpush1.bf16.msra.mxu0 0
      %826 = vmatprep.subr.bf16.mxu0 0
      %827 = vmatpush1.bf16.msra.mxu0 0
      %828 = vmatprep.subr.bf16.mxu0 0
      %829 = vmatpush1.bf16.msra.mxu0 0
      %830 = vmatprep.subr.bf16.mxu0 0
      %831 = vmatpush1.bf16.msra.mxu0 0
      %832 = vmatprep.subr.bf16.mxu0 0
      %833 = vmatpush1.bf16.msra.mxu0 0
      %834 = vmatprep.subr.bf16.mxu0 0
      %835 = vmatpush1.bf16.msra.mxu0 0
      %836 = vmatprep.subr.bf16.mxu0 0
      %837 = vmatpush1.bf16.msra.mxu0 0
      %838 = vmatprep.subr.bf16.mxu0 0
      %839 = vmatpush1.bf16.msra.mxu0 0
      %840 = vmatprep.mubr.bf16.mxu0 0
      %841 = vmatmul.mubr.bf16.gmra.mrb[0].mxu0 %v802
      %v842 = vpop.f32.mrb[0].mxu0
      %v843 = vadd.f32 0.0, %v842
      %v844 = vpop.f32.mrb[0].mxu0
      %v845 = vpop.f32.mrb[0].mxu0
      %v846 = vpop.f32.mrb[0].mxu0
      %847 = vdwg.mxu0
      %849 = vrot.lane.b32.xlu0 %v732, 120
      %v850 = vpop.permute.xlu0 %849
      %852 = vrot.lane.b32.xlu0 %v733, 120
      %v853 = vpop.permute.xlu0 %852
      %v855 = vsel %vm735, %v850, 0
      %v858 = vsel %vm735, %v853, 0
      %860 = vmatprep.subr.bf16.mxu0 0
      %861 = vmatpush1.bf16.xpose.msra.mxu0 %v858
      %862 = vmatprep.subr.bf16.mxu0 0
      %863 = vmatpush1.bf16.xpose.msra.mxu0 0
      %864 = vmatprep.subr.bf16.mxu0 0
      %865 = vmatpush1.bf16.xpose.msra.mxu0 0
      %866 = vmatprep.subr.bf16.mxu0 0
      %867 = vmatpush1.bf16.xpose.msra.mxu0 0
      %868 = vmatprep.subr.bf16.mxu0 0
      %869 = vmatpush1.bf16.xpose.msra.mxu0 0
      %870 = vmatprep.subr.bf16.mxu0 0
      %871 = vmatpush1.bf16.xpose.msra.mxu0 0
      %872 = vmatprep.subr.bf16.mxu0 0
      %873 = vmatpush1.bf16.xpose.msra.mxu0 0
      %874 = vmatprep.subr.bf16.mxu0 0
      %875 = vmatpush1.bf16.xpose.msra.mxu0 0
      %876 = vmatprep.subr.bf16.mxu0 0
      %877 = vmatpush1.bf16.xpose.msra.mxu0 0
      %878 = vmatprep.subr.bf16.mxu0 0
      %879 = vmatpush1.bf16.xpose.msra.mxu0 0
      %880 = vmatprep.subr.bf16.mxu0 0
      %881 = vmatpush1.bf16.xpose.msra.mxu0 0
      %882 = vmatprep.subr.bf16.mxu0 0
      %883 = vmatpush1.bf16.xpose.msra.mxu0 0
      %884 = vmatprep.subr.bf16.mxu0 0
      %885 = vmatpush1.bf16.xpose.msra.mxu0 0
      %886 = vmatprep.subr.bf16.mxu0 0
      %887 = vmatpush1.bf16.xpose.msra.mxu0 0
      %888 = vmatprep.subr.bf16.mxu0 0
      %889 = vmatpush1.bf16.xpose.msra.mxu0 0
      %890 = vmatprep.subr.bf16.mxu0 0
      %891 = vmatpush1.bf16.xpose.msra.mxu0 0
      %892 = vmatprep.mubr.bf16.mxu0 0
      %893 = vmatmul.mubr.bf16.gmra.mrb[0].mxu0 %v855
      %v894 = vpop.f32.mrb[0].mxu0
      %v895 = vadd.f32 0.0, %v894
      %v896 = vpop.f32.mrb[0].mxu0
      %v897 = vpop.f32.mrb[0].mxu0
      %v898 = vpop.f32.mrb[0].mxu0
      %899 = vdwg.mxu0
      %v900 = vsel %vm787, -1e+30, %v895
      %v901 = vsel %vm735, %v900, -inf
      %902 = vmax.xlane.f32.xlu0 %v901
      %v903 = vpop.xlane.xlu0 %902
      %v904 = vsub.f32 %v900, %v903
      %v905 = vmul.f32 %v904, 1.442695
      %v906 = vpow.pop %v905
      %v907 = vsel %vm735, %v906, 0.0
      %908 = vadd.xlane.f32.xlu0 %v907
      %v909 = vpop.xlane.xlu0 %908
      %v910 = vrcp.pop %v909
      %v911 = vmul.f32 %v906, %v910
      %v912 = vpack.c.bf16 %v911, %v911
      %914 = vrot.lane.b32.xlu0 %v734, 120
      %v915 = vpop.permute.xlu0 %914
      %v917 = vsel %vm735, %v912, 0
      %v920 = vsel %vm804, %v915, 0
      %922 = vmatprep.subr.bf16.mxu0 0
      %923 = vmatpush1.bf16.msra.mxu0 %v920
      %924 = vmatprep.subr.bf16.mxu0 0
      %925 = vmatpush1.bf16.msra.mxu0 0
      %926 = vmatprep.subr.bf16.mxu0 0
      %927 = vmatpush1.bf16.msra.mxu0 0
      %928 = vmatprep.subr.bf16.mxu0 0
      %929 = vmatpush1.bf16.msra.mxu0 0
      %930 = vmatprep.subr.bf16.mxu0 0
      %931 = vmatpush1.bf16.msra.mxu0 0
      %932 = vmatprep.subr.bf16.mxu0 0
      %933 = vmatpush1.bf16.msra.mxu0 0
      %934 = vmatprep.subr.bf16.mxu0 0
      %935 = vmatpush1.bf16.msra.mxu0 0
      %936 = vmatprep.subr.bf16.mxu0 0
      %937 = vmatpush1.bf16.msra.mxu0 0
      %938 = vmatprep.subr.bf16.mxu0 0
      %939 = vmatpush1.bf16.msra.mxu0 0
      %940 = vmatprep.subr.bf16.mxu0 0
      %941 = vmatpush1.bf16.msra.mxu0 0
      %942 = vmatprep.subr.bf16.mxu0 0
      %943 = vmatpush1.bf16.msra.mxu0 0
      %944 = vmatprep.subr.bf16.mxu0 0
      %945 = vmatpush1.bf16.msra.mxu0 0
      %946 = vmatprep.subr.bf16.mxu0 0
      %947 = vmatpush1.bf16.msra.mxu0 0
      %948 = vmatprep.subr.bf16.mxu0 0
      %949 = vmatpush1.bf16.msra.mxu0 0
      %950 = vmatprep.subr.bf16.mxu0 0
      %951 = vmatpush1.bf16.msra.mxu0 0
      %952 = vmatprep.subr.bf16.mxu0 0
      %953 = vmatpush1.bf16.msra.mxu0 0
      %954 = vmatprep.mubr.bf16.mxu0 0
      %955 = vmatmul.mubr.bf16.gmra.mrb[0].mxu0 %v917
      %v956 = vpop.f32.mrb[0].mxu0
      %v957 = vadd.f32 0.0, %v956
      %v958 = vpop.f32.mrb[0].mxu0
      %v959 = vpop.f32.mrb[0].mxu0
      %v960 = vpop.f32.mrb[0].mxu0
      %961 = vdwg.mxu0
      %962 = vrot.lane.b32.xlu0 %v732, 112
      %v963 = vpop.permute.xlu0 %962
      %964 = vrot.lane.b32.xlu0 %v733, 112
      %v965 = vpop.permute.xlu0 %964
      %v967 = vsel %vm735, %v963, 0
      %v970 = vsel %vm735, %v965, 0
      %972 = vmatprep.subr.bf16.mxu0 0
      %973 = vmatpush1.bf16.xpose.msra.mxu0 %v970
      %974 = vmatprep.subr.bf16.mxu0 0
      %975 = vmatpush1.bf16.xpose.msra.mxu0 0
      %976 = vmatprep.subr.bf16.mxu0 0
      %977 = vmatpush1.bf16.xpose.msra.mxu0 0
      %978 = vmatprep.subr.bf16.mxu0 0
      %979 = vmatpush1.bf16.xpose.msra.mxu0 0
      %980 = vmatprep.subr.bf16.mxu0 0
      %981 = vmatpush1.bf16.xpose.msra.mxu0 0
      %982 = vmatprep.subr.bf16.mxu0 0
      %983 = vmatpush1.bf16.xpose.msra.mxu0 0
      %984 = vmatprep.subr.bf16.mxu0 0
      %985 = vmatpush1.bf16.xpose.msra.mxu0 0
      %986 = vmatprep.subr.bf16.mxu0 0
      %987 = vmatpush1.bf16.xpose.msra.mxu0 0
      %988 = vmatprep.subr.bf16.mxu0 0
      %989 = vmatpush1.bf16.xpose.msra.mxu0 0
      %990 = vmatprep.subr.bf16.mxu0 0
      %991 = vmatpush1.bf16.xpose.msra.mxu0 0
      %992 = vmatprep.subr.bf16.mxu0 0
      %993 = vmatpush1.bf16.xpose.msra.mxu0 0
      %994 = vmatprep.subr.bf16.mxu0 0
      %995 = vmatpush1.bf16.xpose.msra.mxu0 0
      %996 = vmatprep.subr.bf16.mxu0 0
      %997 = vmatpush1.bf16.xpose.msra.mxu0 0
      %998 = vmatprep.subr.bf16.mxu0 0
      %999 = vmatpush1.bf16.xpose.msra.mxu0 0
      %1000 = vmatprep.subr.bf16.mxu0 0
      %1001 = vmatpush1.bf16.xpose.msra.mxu0 0
      %1002 = vmatprep.subr.bf16.mxu0 0
      %1003 = vmatpush1.bf16.xpose.msra.mxu0 0
      %1004 = vmatprep.mubr.bf16.mxu0 0
      %1005 = vmatmul.mubr.bf16.gmra.mrb[0].mxu0 %v967
      %v1006 = vpop.f32.mrb[0].mxu0
      %v1007 = vadd.f32 0.0, %v1006
      %v1008 = vpop.f32.mrb[0].mxu0
      %v1009 = vpop.f32.mrb[0].mxu0
      %v1010 = vpop.f32.mrb[0].mxu0
      %1011 = vdwg.mxu0
      %v1012 = vsel %vm787, -1e+30, %v1007
      %v1013 = vsel %vm735, %v1012, -inf
      %1014 = vmax.xlane.f32.xlu0 %v1013
      %v1015 = vpop.xlane.xlu0 %1014
      %v1016 = vsub.f32 %v1012, %v1015
      %v1017 = vmul.f32 %v1016, 1.442695
      %v1018 = vpow.pop %v1017
      %v1019 = vsel %vm735, %v1018, 0.0
      %1020 = vadd.xlane.f32.xlu0 %v1019
      %v1021 = vpop.xlane.xlu0 %1020
      %v1022 = vrcp.pop %v1021
      %v1023 = vmul.f32 %v1018, %v1022
      %v1024 = vpack.c.bf16 %v1023, %v1023
      %1025 = vrot.lane.b32.xlu0 %v734, 112
      %v1026 = vpop.permute.xlu0 %1025
      %v1028 = vsel %vm735, %v1024, 0
      %v1031 = vsel %vm804, %v1026, 0
      %1033 = vmatprep.subr.bf16.mxu0 0
      %1034 = vmatpush1.bf16.msra.mxu0 %v1031
      %1035 = vmatprep.subr.bf16.mxu0 0
      %1036 = vmatpush1.bf16.msra.mxu0 0
      %1037 = vmatprep.subr.bf16.mxu0 0
      %1038 = vmatpush1.bf16.msra.mxu0 0
      %1039 = vmatprep.subr.bf16.mxu0 0
      %1040 = vmatpush1.bf16.msra.mxu0 0
      %1041 = vmatprep.subr.bf16.mxu0 0
      %1042 = vmatpush1.bf16.msra.mxu0 0
      %1043 = vmatprep.subr.bf16.mxu0 0
      %1044 = vmatpush1.bf16.msra.mxu0 0
      %1045 = vmatprep.subr.bf16.mxu0 0
      %1046 = vmatpush1.bf16.msra.mxu0 0
      %1047 = vmatprep.subr.bf16.mxu0 0
      %1048 = vmatpush1.bf16.msra.mxu0 0
      %1049 = vmatprep.subr.bf16.mxu0 0
      %1050 = vmatpush1.bf16.msra.mxu0 0
      %1051 = vmatprep.subr.bf16.mxu0 0
      %1052 = vmatpush1.bf16.msra.mxu0 0
      %1053 = vmatprep.subr.bf16.mxu0 0
      %1054 = vmatpush1.bf16.msra.mxu0 0
      %1055 = vmatprep.subr.bf16.mxu0 0
      %1056 = vmatpush1.bf16.msra.mxu0 0
      %1057 = vmatprep.subr.bf16.mxu0 0
      %1058 = vmatpush1.bf16.msra.mxu0 0
      %1059 = vmatprep.subr.bf16.mxu0 0
      %1060 = vmatpush1.bf16.msra.mxu0 0
      %1061 = vmatprep.subr.bf16.mxu0 0
      %1062 = vmatpush1.bf16.msra.mxu0 0
      %1063 = vmatprep.subr.bf16.mxu0 0
      %1064 = vmatpush1.bf16.msra.mxu0 0
      %1065 = vmatprep.mubr.bf16.mxu0 0
      %1066 = vmatmul.mubr.bf16.gmra.mrb[0].mxu0 %v1028
      %v1067 = vpop.f32.mrb[0].mxu0
      %v1068 = vadd.f32 0.0, %v1067
      %v1069 = vpop.f32.mrb[0].mxu0
      %v1070 = vpop.f32.mrb[0].mxu0
      %v1071 = vpop.f32.mrb[0].mxu0
      %1072 = vdwg.mxu0
      %1073 = vrot.lane.b32.xlu0 %v732, 104
      %v1074 = vpop.permute.xlu0 %1073
      %1075 = vrot.lane.b32.xlu0 %v733, 104
      %v1076 = vpop.permute.xlu0 %1075
      %v1078 = vsel %vm735, %v1074, 0
      %v1081 = vsel %vm735, %v1076, 0
      %1083 = vmatprep.subr.bf16.mxu0 0
      %1084 = vmatpush1.bf16.xpose.msra.mxu0 %v1081
      %1085 = vmatprep.subr.bf16.mxu0 0
      %1086 = vmatpush1.bf16.xpose.msra.mxu0 0
      %1087 = vmatprep.subr.bf16.mxu0 0
      %1088 = vmatpush1.bf16.xpose.msra.mxu0 0
      %1089 = vmatprep.subr.bf16.mxu0 0
      %1090 = vmatpush1.bf16.xpose.msra.mxu0 0
      %1091 = vmatprep.subr.bf16.mxu0 0
      %1092 = vmatpush1.bf16.xpose.msra.mxu0 0
      %1093 = vmatprep.subr.bf16.mxu0 0
      %1094 = vmatpush1.bf16.xpose.msra.mxu0 0
      %1095 = vmatprep.subr.bf16.mxu0 0
      %1096 = vmatpush1.bf16.xpose.msra.mxu0 0
      %1097 = vmatprep.subr.bf16.mxu0 0
      %1098 = vmatpush1.bf16.xpose.msra.mxu0 0
      %1099 = vmatprep.subr.bf16.mxu0 0
      %1100 = vmatpush1.bf16.xpose.msra.mxu0 0
      %1101 = vmatprep.subr.bf16.mxu0 0
      %1102 = vmatpush1.bf16.xpose.msra.mxu0 0
      %1103 = vmatprep.subr.bf16.mxu0 0
      %1104 = vmatpush1.bf16.xpose.msra.mxu0 0
      %1105 = vmatprep.subr.bf16.mxu0 0
      %1106 = vmatpush1.bf16.xpose.msra.mxu0 0
      %1107 = vmatprep.subr.bf16.mxu0 0
      %1108 = vmatpush1.bf16.xpose.msra.mxu0 0
      %1109 = vmatprep.subr.bf16.mxu0 0
      %1110 = vmatpush1.bf16.xpose.msra.mxu0 0
      %1111 = vmatprep.subr.bf16.mxu0 0
      %1112 = vmatpush1.bf16.xpose.msra.mxu0 0
      %1113 = vmatprep.subr.bf16.mxu0 0
      %1114 = vmatpush1.bf16.xpose.msra.mxu0 0
      %1115 = vmatprep.mubr.bf16.mxu0 0
      %1116 = vmatmul.mubr.bf16.gmra.mrb[0].mxu0 %v1078
      %v1117 = vpop.f32.mrb[0].mxu0
      %v1118 = vadd.f32 0.0, %v1117
      %v1119 = vpop.f32.mrb[0].mxu0
      %v1120 = vpop.f32.mrb[0].mxu0
      %v1121 = vpop.f32.mrb[0].mxu0
      %1122 = vdwg.mxu0
      %v1123 = vsel %vm787, -1e+30, %v1118
      %v1124 = vsel %vm735, %v1123, -inf
      %1125 = vmax.xlane.f32.xlu0 %v1124
      %v1126 = vpop.xlane.xlu0 %1125
      %v1127 = vsub.f32 %v1123, %v1126
      %v1128 = vmul.f32 %v1127, 1.442695
      %v1129 = vpow.pop %v1128
      %v1130 = vsel %vm735, %v1129, 0.0
      %1131 = vadd.xlane.f32.xlu0 %v1130
      %v1132 = vpop.xlane.xlu0 %1131
      %v1133 = vrcp.pop %v1132
      %v1134 = vmul.f32 %v1129, %v1133
      %v1135 = vpack.c.bf16 %v1134, %v1134
      %1136 = vrot.lane.b32.xlu0 %v734, 104
      %v1137 = vpop.permute.xlu0 %1136
      %v1139 = vsel %vm735, %v1135, 0
      %v1142 = vsel %vm804, %v1137, 0
      %1144 = vmatprep.subr.bf16.mxu0 0
      %1145 = vmatpush1.bf16.msra.mxu0 %v1142
      %1146 = vmatprep.subr.bf16.mxu0 0
      %1147 = vmatpush1.bf16.msra.mxu0 0
      %1148 = vmatprep.subr.bf16.mxu0 0
      %1149 = vmatpush1.bf16.msra.mxu0 0
      %1150 = vmatprep.subr.bf16.mxu0 0
      %1151 = vmatpush1.bf16.msra.mxu0 0
      %1152 = vmatprep.subr.bf16.mxu0 0
      %1153 = vmatpush1.bf16.msra.mxu0 0
      %1154 = vmatprep.subr.bf16.mxu0 0
      %1155 = vmatpush1.bf16.msra.mxu0 0
      %1156 = vmatprep.subr.bf16.mxu0 0
      %1157 = vmatpush1.bf16.msra.mxu0 0
      %1158 = vmatprep.subr.bf16.mxu0 0
      %1159 = vmatpush1.bf16.msra.mxu0 0
      %1160 = vmatprep.subr.bf16.mxu0 0
      %1161 = vmatpush1.bf16.msra.mxu0 0
      %1162 = vmatprep.subr.bf16.mxu0 0
      %1163 = vmatpush1.bf16.msra.mxu0 0
      %1164 = vmatprep.subr.bf16.mxu0 0
      %1165 = vmatpush1.bf16.msra.mxu0 0
      %1166 = vmatprep.subr.bf16.mxu0 0
      %1167 = vmatpush1.bf16.msra.mxu0 0
      %1168 = vmatprep.subr.bf16.mxu0 0
      %1169 = vmatpush1.bf16.msra.mxu0 0
      %1170 = vmatprep.subr.bf16.mxu0 0
      %1171 = vmatpush1.bf16.msra.mxu0 0
      %1172 = vmatprep.subr.bf16.mxu0 0
      %1173 = vmatpush1.bf16.msra.mxu0 0
      %1174 = vmatprep.subr.bf16.mxu0 0
      %1175 = vmatpush1.bf16.msra.mxu0 0
      %1176 = vmatprep.mubr.bf16.mxu0 0
      %1177 = vmatmul.mubr.bf16.gmra.mrb[0].mxu0 %v1139
      %v1178 = vpop.f32.mrb[0].mxu0
      %v1179 = vadd.f32 0.0, %v1178
      %v1180 = vpop.f32.mrb[0].mxu0
      %v1181 = vpop.f32.mrb[0].mxu0
      %v1182 = vpop.f32.mrb[0].mxu0
      %1183 = vdwg.mxu0
      %1185 = vrot.lane.b32.xlu0 %v957, 8
      %v1186 = vpop.permute.xlu0 %1185
      %1189 = vrot.lane.b32.xlu0 %v1068, 16
      %v1190 = vpop.permute.xlu0 %1189
      %1193 = vrot.lane.b32.xlu0 %v1179, 24
      %v1194 = vpop.permute.xlu0 %1193
      %v1196 = vsel %vm735, %v843, %v1186
      %vm1197 = vcmask 130048
      %v1198 = vsel %vm1197, %v1196, %v1190
      %vm1199 = vcmask 195584
      %v1200 = vsel %vm1199, %v1198, %v1194
      %v1201 = vpack.c.bf16 %v1200, %v1200
      %v1202 = vld [vmem:[%s11] sm:$0xf]
      %v1203 = vld [vmem:[%s11 + $0x4] sm:$0xf]
      %v1204 = vld [vmem:[%s11 + $0x8] sm:$0xf]
      %v1205 = vld [vmem:[%s11 + $0xc] sm:$0xf]
      %v1206 = vld [vmem:[%s12] sm:$0x1]
      %v1208 = vlaneseq
      %v1209 = vshrl.u32 %v1208, 7
      %v1210 = vsub.s32 0, %v1209
      %v1211 = vrot.slane %v1206, %v1210
      %v1217 = vunpack.c.l.b16 %v1202
      %v1218 = vunpack.c.l.b16 %v1203
      %v1219 = vunpack.c.l.b16 %v1204
      %v1220 = vunpack.c.l.b16 %v1205
      %v1221 = vpack.c.b16 %v1218, %v1217
      %v1222 = vpack.c.b16 %v1220, %v1219
      %v1226 = vsel %vm502, %v1201, 0
      %1228 = vmatprep.subr.bf16.mxu0 0
      %1229 = vmatpush1.bf16.msra.mxu0 %v1221
      %1230 = vmatprep.subr.bf16.mxu0 0
      %1231 = vmatpush1.bf16.msra.mxu0 %v1222
      %1232 = vmatprep.subr.bf16.mxu0 0
      %1233 = vmatpush1.bf16.msra.mxu0 0
      %1234 = vmatprep.subr.bf16.mxu0 0
      %1235 = vmatpush1.bf16.msra.mxu0 0
      %1236 = vmatprep.subr.bf16.mxu0 0
      %1237 = vmatpush1.bf16.msra.mxu0 0
      %1238 = vmatprep.subr.bf16.mxu0 0
      %1239 = vmatpush1.bf16.msra.mxu0 0
      %1240 = vmatprep.subr.bf16.mxu0 0
      %1241 = vmatpush1.bf16.msra.mxu0 0
      %1242 = vmatprep.subr.bf16.mxu0 0
      %1243 = vmatpush1.bf16.msra.mxu0 0
      %1244 = vmatprep.subr.bf16.mxu0 0
      %1245 = vmatpush1.bf16.msra.mxu0 0
      %1246 = vmatprep.subr.bf16.mxu0 0
      %1247 = vmatpush1.bf16.msra.mxu0 0
      %1248 = vmatprep.subr.bf16.mxu0 0
      %1249 = vmatpush1.bf16.msra.mxu0 0
      %1250 = vmatprep.subr.bf16.mxu0 0
      %1251 = vmatpush1.bf16.msra.mxu0 0
      %1252 = vmatprep.subr.bf16.mxu0 0
      %1253 = vmatpush1.bf16.msra.mxu0 0
      %1254 = vmatprep.subr.bf16.mxu0 0
      %1255 = vmatpush1.bf16.msra.mxu0 0
      %1256 = vmatprep.subr.bf16.mxu0 0
      %1257 = vmatpush1.bf16.msra.mxu0 0
      %1258 = vmatprep.subr.bf16.mxu0 0
      %1259 = vmatpush1.bf16.msra.mxu0 0
      %1260 = vmatprep.mubr.bf16.mxu0 0
      %1261 = vmatmul.mubr.bf16.gmra.mrb[0].mxu0 %v1226
      %v1262 = vpop.f32.mrb[0].mxu0
      %v1263 = vadd.f32 %v1211, %v1262
      %v1264 = vpop.f32.mrb[0].mxu0
      %v1265 = vpop.f32.mrb[0].mxu0
      %v1266 = vpop.f32.mrb[0].mxu0
      %1267 = vdwg.mxu0
      %v1268 = vadd.f32 %v501, %v1263
      %1269 = vst.msk [vmem:[%s497] sm:$0xff] %vm502, %v1268
      %p1270 = scmp.lt.s32.totalorder %s28, 1
      %s1271 = scalar_select %p1270, %s28, 1
      %p1272 = scmp.lt.s32.totalorder %s29, 0
      %s1273 = scalar_select %p1272, %s29, 0
      %s1274 = sadd.s32 %s1273, %s1271
      %s1275 = smul.addr %s1274, 8
      %s1276 = scalar_lea.vmem %s13, %s1275
      // Predicated region
      $region73: #{_lambda_.10} parent=71 // pred_check
        %p1277 = pneg %p346
      $region74: #{_lambda_.10} parent=71 // pred_check_branch
        %1279 = sbr.rel (%p1277) target = $region76
      $region75: #{_lambda_.10} parent=71 // pred_region
        _
      $region76: #{_lambda_.10} parent=71 // pred_fallthru
        _
    $region72: #{_lambda_.10} parent=5 // pred_fallthru
      _
    %p1280 = scmp.le.s32.totalorder 2, %s19
    // Predicated region
    $region77: #{_lambda_.10} parent=5 // pred_check
      %p1281 = pneg %p1280
    $region78: #{_lambda_.10} parent=5 // pred_check_branch
      %1283 = sbr.rel (%p1281) target = $region80
    $region79: #{_lambda_.10} parent=5 // pred_region
      %s1284 = ssub.s32 %s19, 2
      // Predicated region
      $region81: #{_lambda_.10} parent=79 // pred_check
        %p1285 = pneg %p352
      $region82: #{_lambda_.10} parent=79 // pred_check_branch
        %1287 = sbr.rel (%p1285) target = $region84
      $region83: #{_lambda_.10} parent=79 // pred_region
        %p1288 = scmp.lt.s32.totalorder %s30, 1
        %s1289 = scalar_select %p1288, %s30, 1
        %p1290 = scmp.lt.s32.totalorder %s31, 0
        %s1291 = scalar_select %p1290, %s31, 0
        %s1292 = sadd.s32 %s1291, %s1289
        %s1293 = smul.addr %s1292, 8
        %s1294 = scalar_lea.vmem %s13, %s1293
      $region84: #{_lambda_.10} parent=79 // pred_fallthru
        _
    $region80: #{_lambda_.10} parent=5 // pred_fallthru
      _
  $region6: #{_lambda_.10} parent=0 // loop_footer
    %s23 = sadd.s32 1, %s19
  $region7: #{_lambda_.10} parent=0 // loop_footer_branch
    %18 = sbr.rel target = $region3
  $region8: #{_lambda_.10} parent=0 // loop_exit
    _

</llo_original>
